<compile_context>
chip_gen: v6e
topology: v6e:2x2x1
jax: 0.10.0
libtpu: 0.0.40
codegen_flags: <defaults>
</compile_context>

<pallas_src>
import jax
import jax.numpy as jnp
from jax.experimental import pallas as pl
from jax.experimental.pallas import tpu as pltpu

_F = 19    # fixed feature count of the module (torch.nn.Linear(19, 1))
_S = 128   # samples packed per reshaped row (lane / MXU width)


def _lr_kernel(x_ref, w2_ref, b_ref, o_ref):
    # x_ref : (TBr, S*F) f32 -- TBr*S samples, features packed along lanes.
    # w2_ref: (S*F, S)   f32 -- block-diagonal weight, resident in VMEM.
    # b_ref : (1,)       f32 -- bias scalar in SMEM.
    # o_ref : (TBr, S)   f32 -- lane-dense output block (sigmoid(logits)).
    logits = jnp.dot(
        x_ref[...], w2_ref[...],
        preferred_element_type=jnp.float32,
        precision=jax.lax.Precision.HIGHEST,   # fp32-accurate MXU path
    )
    o_ref[...] = jax.nn.sigmoid(logits + b_ref[0]).astype(o_ref.dtype)


def _round_up(n, m):
    return ((n + m - 1) // m) * m


def lr_forward(x, weight, bias, *, block_rows=512):
    """x: [B, 19], weight: [1, 19] (PyTorch Linear layout), bias: [1].

    block_rows = rows of the reshaped [B/128, 19*128] matrix per grid step.
    Default 512 moves ~4.8 MiB of useful x per step (amortizes the ~0.35 us
    per-step overhead on all chip generations).
    """
    B, F = x.shape
    assert weight.shape == (1, F) and bias.shape == (1,)
    assert block_rows % 8 == 0

    S = _S
    x = x.astype(jnp.float32)
    w = weight.astype(jnp.float32).reshape(F)
    b = bias.astype(jnp.float32)

    # Pad the sample axis only to the next multiple of S (=128). Callers with
    # B % 128 == 0 pay nothing extra.
    B_pad = _round_up(B, S)
    if B_pad != B:
        x = jnp.pad(x, ((0, B_pad - B), (0, 0)))

    # Free row-major reshape: row r holds samples r*S .. r*S+S-1, each with F
    # contiguous features -> fully lane-dense DMA rows (19*128 f32 = 9.5 KiB).
    num_rows = B_pad // S
    x2 = x.reshape(num_rows, S * F)

    # Block-diagonal weight: W2[s*F + f, s] = w[f]; then (x2 @ W2)[r, s] is the
    # logit of sample r*S+s. ~1.2 MiB, resident in VMEM across the grid.
    eye = jnp.eye(S, dtype=jnp.float32)
    w2 = (eye[:, None, :] * w.reshape(1, F, 1)).reshape(S * F, S)

    # Batch tile: full array if small, else block_rows (multiple of 8).
    TBr = num_rows if num_rows <= block_rows else block_rows
    grid = (pl.cdiv(num_rows, TBr),)   # partial edge block masked by Pallas

    out2 = pl.pallas_call(
        _lr_kernel,
        out_shape=jax.ShapeDtypeStruct((num_rows, S), jnp.float32),
        grid_spec=pltpu.PrefetchScalarGridSpec(
            num_scalar_prefetch=0,
            grid=grid,
            in_specs=[
                pl.BlockSpec((TBr, S * F), lambda i: (i, 0)),        # x: tiled
                pl.BlockSpec((S * F, S), lambda i: (0, 0)),          # W2: resident
                pl.BlockSpec(memory_space=pltpu.MemorySpace.SMEM),   # bias scalar
            ],
            out_specs=pl.BlockSpec((TBr, S), lambda i: (i, 0)),      # lane-dense
        ),
        compiler_params=pltpu.CompilerParams(
            dimension_semantics=("parallel",),   # batch axis shards across TCs
            vmem_limit_bytes=32 * 1024 * 1024,   # safe on v5e/v6e/v7x
        ),
    )(x2, w2, b)

    # Row r, lane s  <->  sample r*S+s: flatten and drop padded samples.
    return out2.reshape(B_pad)[:B].reshape(B, 1)


if __name__ == "__main__":
    key = jax.random.PRNGKey(0)
    kx, kw, kb = jax.random.split(key, 3)

    B, F = 2500, _F
    x = jax.random.normal(kx, (B, F), dtype=jnp.float32)

    # Deterministic init mimicking torch.nn.Linear default:
    # uniform(-1/sqrt(fan_in), 1/sqrt(fan_in)).
    bound = 1.0 / jnp.sqrt(jnp.float32(F))
    weight = jax.random.uniform(kw, (1, F), minval=-bound, maxval=bound,
                                dtype=jnp.float32)
    bias = jax.random.uniform(kb, (1,), minval=-bound, maxval=bound,
                              dtype=jnp.float32)

    # Small block_rows so the demo exercises the multi-tile grid AND a masked
    # partial edge block (B=2500 -> B_pad=2560 -> num_rows=20, grid=(3,)).
    # Production use keeps the 512-row (~5 MiB/step) default.
    out = lr_forward(x, weight, bias, block_rows=8)
    out = jax.block_until_ready(out)

    # Pure-f32 VPU reference (no matmul, so no default-precision truncation):
    # checks true fp32 parity with the PyTorch Linear + Sigmoid.
    ref = jax.nn.sigmoid(jnp.sum(x * weight, axis=-1, keepdims=True) + bias)
    assert out.shape == (B, 1)
    err = float(jnp.max(jnp.abs(out - ref)))
    assert jnp.allclose(out, ref, atol=1e-4, rtol=1e-4), err

    print("KERNEL_OK")
</pallas_src>

<mosaic_0001>
module attributes {stable_mosaic.version = 11 : i64} {
  func.func @_lr_kernel(%arg0: i32, %arg1: memref<8x2432xf32, #tpu.memory_space<vmem>>, %arg2: memref<2432x128xf32, #tpu.memory_space<vmem>>, %arg3: memref<1xf32, #tpu.memory_space<smem>>, %arg4: memref<8x128xf32, #tpu.memory_space<vmem>>) attributes {dimension_semantics = [#tpu.dimension_semantics<parallel>], iteration_bounds = array<i64: 3>, scalar_prefetch = 0 : i64, scratch_operands = 0 : i64, tpu.core_type = #tpu.core_type<tc>, window_params = [{transform_indices = @transform_0, window_bounds = array<i64: 8, 2432>}, {pipeline_mode = #tpu.pipeline_mode<synchronous>, transform_indices = @transform_1, window_bounds = array<i64: 2432, 128>}, {transform_indices = @transform_2, window_bounds = array<i64: 1>}, {transform_indices = @transform_3, window_bounds = array<i64: 8, 128>}]} {
    %c0 = arith.constant 0 : index
    %c0_0 = arith.constant 0 : index
    %0 = vector.load %arg1[%c0, %c0_0] : memref<8x2432xf32, #tpu.memory_space<vmem>>, vector<8x2432xf32>
    %c0_1 = arith.constant 0 : index
    %c0_2 = arith.constant 0 : index
    %1 = vector.load %arg2[%c0_1, %c0_2] : memref<2432x128xf32, #tpu.memory_space<vmem>>, vector<2432x128xf32>
    %cst = arith.constant dense<0.000000e+00> : vector<8x128xf32>
    %2 = tpu.matmul %0, %1, %cst {dimension_numbers = #tpu.dot_dimension_numbers<[1], [0], [0], [1], [0, 0, 1, 1], [], []>, precision = #tpu.contract_precision<fp32>} : vector<8x2432xf32>, vector<2432x128xf32>, vector<8x128xf32> -> vector<8x128xf32>
    %c0_3 = arith.constant 0 : index
    %3 = memref.load %arg3[%c0_3] : memref<1xf32, #tpu.memory_space<smem>>
    %4 = vector.broadcast %3 : f32 to vector<8x128xf32>
    %5 = arith.addf %2, %4 : vector<8x128xf32>
    %6 = arith.negf %5 : vector<8x128xf32>
    %7 = math.exp %6 : vector<8x128xf32>
    %cst_4 = arith.constant 1.000000e+00 : f32
    %8 = vector.broadcast %cst_4 : f32 to vector<8x128xf32>
    %9 = arith.addf %8, %7 : vector<8x128xf32>
    %10 = arith.divf %8, %9 : vector<8x128xf32>
    %c0_5 = arith.constant 0 : index
    %c0_6 = arith.constant 0 : index
    %11 = vector.load %arg4[%c0_5, %c0_6] : memref<8x128xf32, #tpu.memory_space<vmem>>, vector<8x128xf32>
    tpu.vector_store %arg4[%c0_5, %c0_6], %10 {strides = array<i32>} : memref<8x128xf32, #tpu.memory_space<vmem>>, vector<8x128xf32>,
    return
  }
  func.func @transform_0(%arg0: i32) -> (i32, i32) {
    %c0_i32 = arith.constant 0 : i32
    %c0_i32_0 = arith.constant 0 : i32
    return %arg0, %c0_i32 : i32, i32
  }
  func.func @transform_1(%arg0: i32) -> (i32, i32) {
    %c0_i32 = arith.constant 0 : i32
    %c0_i32_0 = arith.constant 0 : i32
    %c0_i32_1 = arith.constant 0 : i32
    return %c0_i32, %c0_i32_0 : i32, i32
  }
  func.func @transform_2(%arg0: i32) -> i32 {
    %c0_i32 = arith.constant 0 : i32
    %c0_i32_0 = arith.constant 0 : i32
    return %c0_i32 : i32
  }
  func.func @transform_3(%arg0: i32) -> (i32, i32) {
    %c0_i32 = arith.constant 0 : i32
    %c0_i32_0 = arith.constant 0 : i32
    return %arg0, %c0_i32 : i32, i32
  }
}

</mosaic_0001>

<llo_original>
// kernel: tpu_custom_call.1
$region0: #{tpu_custom_call.1}
  #allocation0 [shape = 'u32[]', space=smem, size = 0x4, offset = 0x4, fixed_abs, tag = 'smem constant byte address 0x4 - core index']
  #allocation1 [shape = 'u32[144,128]{1,0:T(1,128)}', space=vmem, size = 0x12000, scoped, tag = 'internal scratch']
  #allocation2 [shape = 'f32[1]{0:T(128)S(6)}', space=smem, size = 0x200, scoped, tag = 'scoped memory for tpu_custom_call.1']
  %s0 = inlined_call_operand.hbm [shape: f32[20,2432], index: 0, kind: input, shape index: {}]
  %s1 = inlined_call_operand.hbm [shape: f32[2432,128], index: 1, kind: input, shape index: {}]
  %s2 = inlined_call_operand.<no memory space> [shape: f32[1], index: 2, kind: input, shape index: {}]
  %s3 = inlined_call_operand.hbm [shape: f32[20,128], index: 3, kind: output, shape index: {}]
  %s4 = sld [smem:[#allocation0]]
  $region53: #{tpu_custom_call.1} parent=0
    _
  %s6 = ssub.s32 1, %s4
  %s7 = scalar_select 0, %s6, %s4
  %8 = sst [smem:[#allocation2]] %s2
  $region1: #{tpu_custom_call.1} parent=0
    #allocation3 [shape = 'u8[155648]{0}', space=vmem, size = 0x26000, scoped, tag = 'input window, operand 0']
    #allocation4 [shape = 's32[2]{0}', space=sflag, size = 0x8, scoped, tag = 'scoped memory for tpu_custom_call.1']
    #allocation5 [shape = 's32[2]{0}', space=sflag, size = 0x8, scoped, tag = 'scoped memory for tpu_custom_call.1']
    #allocation6 [shape = 'u8[1245184]{0}', space=vmem, size = 0x130000, scoped, tag = 'input window, operand 1, single buffered']
    #allocation7 [shape = 's32[1]{0}', space=sflag, size = 0x4, scoped, tag = 'scoped memory for tpu_custom_call.1']
    #allocation8 [shape = 'u8[8192]{0}', space=vmem, size = 0x2000, scoped, tag = 'output window, operand 0']
    %9 = vsyncpa [#allocation4], 0
    %s10 = scalar_lea.sflag [#allocation4], 1
    %11 = vsyncpa %s10, 0
    %12 = vsyncpa [#allocation7], 0
    %13 = vsyncpa [#allocation5], 0
    %s14 = scalar_lea.sflag [#allocation5], 1
    %15 = vsyncpa %s14, 0
    loop: start=0, step=1, limit=5
    $region2: #{tpu_custom_call.1} parent=1 // loop_pre_header
      _
    $region3: #{tpu_custom_call.1} parent=1 // loop_header
      %s17 = sphi 0, %s21
      %p18 = scmp.ge.s32.totalorder %s17, 5
      %s27 = sphi 0, %s29
      %s30 = sphi 0, %s27
      %s31 = sphi 0, %s30
      %s47 = sphi 0, %s31
      %s51 = sphi 0, %s51
      %s53 = sphi 0, %s51
      %s54 = sphi 0, %s53
      %s68 = sphi 0, %s54
      %s72 = sphi 0, %s72
      %s74 = sphi 0, %s72
      %s75 = sphi 0, %s74
      %s89 = sphi 0, %s75
      %s95 = sphi 0, %s97
      %s98 = sphi 0, %s95
      %s99 = sphi 0, %s98
      %s115 = sphi 0, %s99
    $region4: #{tpu_custom_call.1} parent=1 // loop_header_branch
      %20 = sbr.rel (%p18) target = $region8
    $region5: #{tpu_custom_call.1} parent=1 // loop_body
      %s22 = ssub.s32 %s17, 1
      %s23 = ssub.s32 %s17, 2
      %s24 = sadd.s32 %s17, 1
      %s25 = ssub.s32 %s17, %s24
      %p26 = scmp.eq.s32.totalorder %s25, 0
      %s28 = sadd.s32 %s27, 1
      %s29 = scalar_select %p26, %s27, %s28
      %p32 = pneg %p26
      %p33 = scmp.eq.s32.totalorder %s17, 2
      %p34 = por %p32, %p33
      %p35 = scmp.ne.s32.totalorder %s27, %s30
      %p36 = scmp.eq.s32.totalorder %s17, 0
      %p37 = por %p35, %p36
      %p38 = scmp.ne.s32.totalorder %s27, %s30
      %p39 = scmp.eq.s32.totalorder %s22, 2
      %p40 = por %p38, %p39
      %p41 = scmp.ne.s32.totalorder %s30, %s31
      %p42 = scmp.eq.s32.totalorder %s22, 0
      %p43 = por %p41, %p42
      %p44 = scmp.ne.s32.totalorder %s30, %s31
      %p45 = scmp.eq.s32.totalorder %s23, 2
      %p46 = por %p44, %p45
      %p48 = scmp.ne.s32.totalorder %s31, %s47
      %p49 = scmp.eq.s32.totalorder %s23, 0
      %p50 = por %p48, %p49
      %s52 = sadd.s32 %s51, 1
      %p55 = scmp.eq.s32.totalorder %s17, 2
      %p56 = scmp.ne.s32.totalorder %s51, %s53
      %p57 = scmp.eq.s32.totalorder %s17, 0
      %p58 = por %p56, %p57
      %p59 = scmp.ne.s32.totalorder %s51, %s53
      %p60 = scmp.eq.s32.totalorder %s22, 2
      %p61 = por %p59, %p60
      %p62 = scmp.ne.s32.totalorder %s53, %s54
      %p63 = scmp.eq.s32.totalorder %s22, 0
      %p64 = por %p62, %p63
      %p65 = scmp.ne.s32.totalorder %s53, %s54
      %p66 = scmp.eq.s32.totalorder %s23, 2
      %p67 = por %p65, %p66
      %p69 = scmp.ne.s32.totalorder %s54, %s68
      %p70 = scmp.eq.s32.totalorder %s23, 0
      %p71 = por %p69, %p70
      %s73 = sadd.s32 %s72, 1
      %p76 = scmp.eq.s32.totalorder %s17, 2
      %p77 = scmp.ne.s32.totalorder %s72, %s74
      %p78 = scmp.eq.s32.totalorder %s17, 0
      %p79 = por %p77, %p78
      %p80 = scmp.ne.s32.totalorder %s72, %s74
      %p81 = scmp.eq.s32.totalorder %s22, 2
      %p82 = por %p80, %p81
      %p83 = scmp.ne.s32.totalorder %s74, %s75
      %p84 = scmp.eq.s32.totalorder %s22, 0
      %p85 = por %p83, %p84
      %p86 = scmp.ne.s32.totalorder %s74, %s75
      %p87 = scmp.eq.s32.totalorder %s23, 2
      %p88 = por %p86, %p87
      %p90 = scmp.ne.s32.totalorder %s75, %s89
      %p91 = scmp.eq.s32.totalorder %s23, 0
      %p92 = por %p90, %p91
      %s93 = ssub.s32 %s17, %s24
      %p94 = scmp.eq.s32.totalorder %s93, 0
      %s96 = sadd.s32 %s95, 1
      %s97 = scalar_select %p94, %s95, %s96
      %p100 = pneg %p94
      %p101 = scmp.eq.s32.totalorder %s17, 2
      %p102 = por %p100, %p101
      %p103 = scmp.ne.s32.totalorder %s95, %s98
      %p104 = scmp.eq.s32.totalorder %s17, 0
      %p105 = por %p103, %p104
      %p106 = scmp.ne.s32.totalorder %s95, %s98
      %p107 = scmp.eq.s32.totalorder %s22, 2
      %p108 = por %p106, %p107
      %p109 = scmp.ne.s32.totalorder %s98, %s99
      %p110 = scmp.eq.s32.totalorder %s22, 0
      %p111 = por %p109, %p110
      %p112 = scmp.ne.s32.totalorder %s98, %s99
      %p113 = scmp.eq.s32.totalorder %s23, 2
      %p114 = por %p112, %p113
      %p116 = scmp.ne.s32.totalorder %s99, %s115
      %p117 = scmp.eq.s32.totalorder %s23, 0
      %p118 = por %p116, %p117
      %p119 = scmp.le.s32.totalorder 1, %s17
      %p120 = scmp.lt.s32.totalorder %s17, 4
      %p121 = pnand %p119, %p120
      %p122 = pneg %p121
      // Predicated region
      $region9: #{tpu_custom_call.1} parent=5 // pred_check
        _
      $region10: #{tpu_custom_call.1} parent=5 // pred_check_branch
        %124 = sbr.rel (%p121) target = $region12
      $region11: #{tpu_custom_call.1} parent=5 // pred_region
        %s125 = ssub.s32 %s17, 1
        // Predicated region
        $region13: #{tpu_custom_call.1} parent=11 // pred_check
          %p126 = pneg %p64
        $region14: #{tpu_custom_call.1} parent=11 // pred_check_branch
          %128 = sbr.rel (%p126) target = $region16
        $region15: #{tpu_custom_call.1} parent=11 // pred_region
          %s130 = ssub.s32 38912, 38912
          %131 = vsyncadd [#allocation7], %s130
          %s132 = sshll.u32 [#allocation6], 4
          %s133 = int_to_ptr.vmem [resolvable:$true] %s132
          %138 = dma.hbm_to_vmem [thread:$0]  %s1, 38912, %s133, [#allocation7], 128, 128, 8
        $region16: #{tpu_custom_call.1} parent=11 // pred_fallthru
          _
        // Predicated region
        $region17: #{tpu_custom_call.1} parent=11 // pred_check
          %p139 = pneg %p85
        $region18: #{tpu_custom_call.1} parent=11 // pred_check_branch
          %141 = sbr.rel (%p139) target = $region20
        $region19: #{tpu_custom_call.1} parent=11 // pred_region
          _
        $region20: #{tpu_custom_call.1} parent=11 // pred_fallthru
          _
      $region12: #{tpu_custom_call.1} parent=5 // pred_fallthru
        _
      %p142 = scmp.lt.s32.totalorder %s17, 3
      // Predicated region
      $region21: #{tpu_custom_call.1} parent=5 // pred_check
        %p143 = pneg %p142
      $region22: #{tpu_custom_call.1} parent=5 // pred_check_branch
        %145 = sbr.rel (%p143) target = $region24
      $region23: #{tpu_custom_call.1} parent=5 // pred_region
        // Predicated region
        $region25: #{tpu_custom_call.1} parent=23 // pred_check
          %p146 = pneg %p37
        $region26: #{tpu_custom_call.1} parent=23 // pred_check_branch
          %148 = sbr.rel (%p146) target = $region28
        $region27: #{tpu_custom_call.1} parent=23 // pred_region
          %s149 = sand.u32 %s27, 1
          %s150 = scalar_lea.sflag [#allocation4], %s149
          %s151 = sand.u32 %s27, 1
          %s152 = smul.addr %s151, 152
          %s153 = scalar_lea.vmem [#allocation3], %s152
          %s155 = ssub.s32 2432, 2432
          %156 = vsyncadd %s150, %s155
          %s157 = smul.addr %s17, 19
          %s158 = smul.addr %s157, 128
          %s159 = scalar_lea.hbm %s0, %s158
          %s161 = sshll.u32 %s153, 4
          %s162 = int_to_ptr.vmem [resolvable:$true] %s161
          %164 = dma.hbm_to_vmem [thread:$0]  %s159, 2432, %s162, %s150
        $region28: #{tpu_custom_call.1} parent=23 // pred_fallthru
          _
      $region24: #{tpu_custom_call.1} parent=5 // pred_fallthru
        _
      %p165 = scmp.le.s32.totalorder 1, %s17
      %p166 = scmp.lt.s32.totalorder %s17, 4
      %p167 = pnand %p165, %p166
      %p168 = pneg %p167
      // Predicated region
      $region29: #{tpu_custom_call.1} parent=5 // pred_check
        _
      $region30: #{tpu_custom_call.1} parent=5 // pred_check_branch
        %170 = sbr.rel (%p167) target = $region32
      $region31: #{tpu_custom_call.1} parent=5 // pred_region
        %s171 = ssub.s32 %s17, 1
        %s172 = sand.u32 %s30, 1
        %s173 = scalar_lea.sflag [#allocation4], %s172
        %s174 = sand.u32 %s30, 1
        %s175 = smul.addr %s174, 152
        %s176 = scalar_lea.vmem [#allocation3], %s175
        // Predicated region
        $region33: #{tpu_custom_call.1} parent=31 // pred_check
          %p177 = pneg %p43
        $region34: #{tpu_custom_call.1} parent=31 // pred_check_branch
          %179 = sbr.rel (%p177) target = $region36
        $region35: #{tpu_custom_call.1} parent=31 // pred_region
          %180 = dma.done %s173, 2432
        $region36: #{tpu_custom_call.1} parent=31 // pred_fallthru
          _
        // Predicated region
        $region37: #{tpu_custom_call.1} parent=31 // pred_check
          %p181 = pneg %p64
        $region38: #{tpu_custom_call.1} parent=31 // pred_check_branch
          %183 = sbr.rel (%p181) target = $region40
        $region39: #{tpu_custom_call.1} parent=31 // pred_region
          %184 = dma.done [#allocation7], 38912
        $region40: #{tpu_custom_call.1} parent=31 // pred_fallthru
          _
        %s185 = sand.u32 %s30, 1
        %s186 = scalar_lea.sflag [#allocation4], %s185
        %s187 = sand.u32 %s30, 1
        %s188 = smul.addr %s187, 152
        %s189 = scalar_lea.vmem [#allocation3], %s188
        %p190 = pneg %p43
        %p191 = pneg %p40
        %p192 = pneg %p64
        %p193 = pneg %p61
        %p194 = pneg %p85
        %p195 = pneg %p82
        %p196 = pneg %p111
        %p197 = pneg %p108
        %s198 = sand.u32 %s98, 1
        %s199 = scalar_lea.sflag [#allocation5], %s198
        %s200 = sand.u32 %s98, 1
        %s201 = smul.addr %s200, 8
        %s202 = scalar_lea.vmem [#allocation8], %s201
        %v203 = vld [vmem:[%s176] sm:$0xff]
        %v204 = vld [vmem:[%s176 + $0x8] sm:$0xff]
        %v205 = vld [vmem:[%s176 + $0x10] sm:$0xff]
        %v206 = vld [vmem:[%s176 + $0x18] sm:$0xff]
        %v207 = vld [vmem:[%s176 + $0x20] sm:$0xff]
        %v208 = vld [vmem:[%s176 + $0x28] sm:$0xff]
        %v209 = vld [vmem:[%s176 + $0x30] sm:$0xff]
        %v210 = vld [vmem:[%s176 + $0x38] sm:$0xff]
        %v211 = vld [vmem:[%s176 + $0x40] sm:$0xff]
        %v212 = vld [vmem:[%s176 + $0x48] sm:$0xff]
        %v213 = vld [vmem:[%s176 + $0x50] sm:$0xff]
        %v214 = vld [vmem:[%s176 + $0x58] sm:$0xff]
        %v215 = vld [vmem:[%s176 + $0x60] sm:$0xff]
        %v216 = vld [vmem:[%s176 + $0x68] sm:$0xff]
        %v217 = vld [vmem:[%s176 + $0x70] sm:$0xff]
        %v218 = vld [vmem:[%s176 + $0x78] sm:$0xff]
        %v219 = vld [vmem:[%s176 + $0x80] sm:$0xff]
        %v220 = vld [vmem:[%s176 + $0x88] sm:$0xff]
        %v221 = vld [vmem:[%s176 + $0x90] sm:$0xff]
        %v222 = vld [vmem:[#allocation6] sm:$0xff]
        %v223 = vld [vmem:[#allocation6 + $0x8] sm:$0xff]
        %v224 = vld [vmem:[#allocation6 + $0x10] sm:$0xff]
        %v225 = vld [vmem:[#allocation6 + $0x18] sm:$0xff]
        %v226 = vld [vmem:[#allocation6 + $0x20] sm:$0xff]
        %v227 = vld [vmem:[#allocation6 + $0x28] sm:$0xff]
        %v228 = vld [vmem:[#allocation6 + $0x30] sm:$0xff]
        %v229 = vld [vmem:[#allocation6 + $0x38] sm:$0xff]
        %v230 = vld [vmem:[#allocation6 + $0x40] sm:$0xff]
        %v231 = vld [vmem:[#allocation6 + $0x48] sm:$0xff]
        %v232 = vld [vmem:[#allocation6 + $0x50] sm:$0xff]
        %v233 = vld [vmem:[#allocation6 + $0x58] sm:$0xff]
        %v234 = vld [vmem:[#allocation6 + $0x60] sm:$0xff]
        %v235 = vld [vmem:[#allocation6 + $0x68] sm:$0xff]
        %v236 = vld [vmem:[#allocation6 + $0x70] sm:$0xff]
        %v237 = vld [vmem:[#allocation6 + $0x78] sm:$0xff]
        %v238 = vld [vmem:[#allocation6 + $0x80] sm:$0xff]
        %v239 = vld [vmem:[#allocation6 + $0x88] sm:$0xff]
        %v240 = vld [vmem:[#allocation6 + $0x90] sm:$0xff]
        %v241 = vld [vmem:[#allocation6 + $0x98] sm:$0xff]
        %v242 = vld [vmem:[#allocation6 + $0xa0] sm:$0xff]
        %v243 = vld [vmem:[#allocation6 + $0xa8] sm:$0xff]
        %v244 = vld [vmem:[#allocation6 + $0xb0] sm:$0xff]
        %v245 = vld [vmem:[#allocation6 + $0xb8] sm:$0xff]
        %v246 = vld [vmem:[#allocation6 + $0xc0] sm:$0xff]
        %v247 = vld [vmem:[#allocation6 + $0xc8] sm:$0xff]
        %v248 = vld [vmem:[#allocation6 + $0xd0] sm:$0xff]
        %v249 = vld [vmem:[#allocation6 + $0xd8] sm:$0xff]
        %v250 = vld [vmem:[#allocation6 + $0xe0] sm:$0xff]
        %v251 = vld [vmem:[#allocation6 + $0xe8] sm:$0xff]
        %v252 = vld [vmem:[#allocation6 + $0xf0] sm:$0xff]
        %v253 = vld [vmem:[#allocation6 + $0xf8] sm:$0xff]
        %v254 = vld [vmem:[#allocation6 + $0x100] sm:$0xff]
        %v255 = vld [vmem:[#allocation6 + $0x108] sm:$0xff]
        %v256 = vld [vmem:[#allocation6 + $0x110] sm:$0xff]
        %v257 = vld [vmem:[#allocation6 + $0x118] sm:$0xff]
        %v258 = vld [vmem:[#allocation6 + $0x120] sm:$0xff]
        %v259 = vld [vmem:[#allocation6 + $0x128] sm:$0xff]
        %v260 = vld [vmem:[#allocation6 + $0x130] sm:$0xff]
        %v261 = vld [vmem:[#allocation6 + $0x138] sm:$0xff]
        %v262 = vld [vmem:[#allocation6 + $0x140] sm:$0xff]
        %v263 = vld [vmem:[#allocation6 + $0x148] sm:$0xff]
        %v264 = vld [vmem:[#allocation6 + $0x150] sm:$0xff]
        %v265 = vld [vmem:[#allocation6 + $0x158] sm:$0xff]
        %v266 = vld [vmem:[#allocation6 + $0x160] sm:$0xff]
        %v267 = vld [vmem:[#allocation6 + $0x168] sm:$0xff]
        %v268 = vld [vmem:[#allocation6 + $0x170] sm:$0xff]
        %v269 = vld [vmem:[#allocation6 + $0x178] sm:$0xff]
        %v270 = vld [vmem:[#allocation6 + $0x180] sm:$0xff]
        %v271 = vld [vmem:[#allocation6 + $0x188] sm:$0xff]
        %v272 = vld [vmem:[#allocation6 + $0x190] sm:$0xff]
        %v273 = vld [vmem:[#allocation6 + $0x198] sm:$0xff]
        %v274 = vld [vmem:[#allocation6 + $0x1a0] sm:$0xff]
        %v275 = vld [vmem:[#allocation6 + $0x1a8] sm:$0xff]
        %v276 = vld [vmem:[#allocation6 + $0x1b0] sm:$0xff]
        %v277 = vld [vmem:[#allocation6 + $0x1b8] sm:$0xff]
        %v278 = vld [vmem:[#allocation6 + $0x1c0] sm:$0xff]
        %v279 = vld [vmem:[#allocation6 + $0x1c8] sm:$0xff]
        %v280 = vld [vmem:[#allocation6 + $0x1d0] sm:$0xff]
        %v281 = vld [vmem:[#allocation6 + $0x1d8] sm:$0xff]
        %v282 = vld [vmem:[#allocation6 + $0x1e0] sm:$0xff]
        %v283 = vld [vmem:[#allocation6 + $0x1e8] sm:$0xff]
        %v284 = vld [vmem:[#allocation6 + $0x1f0] sm:$0xff]
        %v285 = vld [vmem:[#allocation6 + $0x1f8] sm:$0xff]
        %v286 = vld [vmem:[#allocation6 + $0x200] sm:$0xff]
        %v287 = vld [vmem:[#allocation6 + $0x208] sm:$0xff]
        %v288 = vld [vmem:[#allocation6 + $0x210] sm:$0xff]
        %v289 = vld [vmem:[#allocation6 + $0x218] sm:$0xff]
        %v290 = vld [vmem:[#allocation6 + $0x220] sm:$0xff]
        %v291 = vld [vmem:[#allocation6 + $0x228] sm:$0xff]
        %v292 = vld [vmem:[#allocation6 + $0x230] sm:$0xff]
        %v293 = vld [vmem:[#allocation6 + $0x238] sm:$0xff]
        %v294 = vld [vmem:[#allocation6 + $0x240] sm:$0xff]
        %v295 = vld [vmem:[#allocation6 + $0x248] sm:$0xff]
        %v296 = vld [vmem:[#allocation6 + $0x250] sm:$0xff]
        %v297 = vld [vmem:[#allocation6 + $0x258] sm:$0xff]
        %v298 = vld [vmem:[#allocation6 + $0x260] sm:$0xff]
        %v299 = vld [vmem:[#allocation6 + $0x268] sm:$0xff]
        %v300 = vld [vmem:[#allocation6 + $0x270] sm:$0xff]
        %v301 = vld [vmem:[#allocation6 + $0x278] sm:$0xff]
        %v302 = vld [vmem:[#allocation6 + $0x280] sm:$0xff]
        %v303 = vld [vmem:[#allocation6 + $0x288] sm:$0xff]
        %v304 = vld [vmem:[#allocation6 + $0x290] sm:$0xff]
        %v305 = vld [vmem:[#allocation6 + $0x298] sm:$0xff]
        %v306 = vld [vmem:[#allocation6 + $0x2a0] sm:$0xff]
        %v307 = vld [vmem:[#allocation6 + $0x2a8] sm:$0xff]
        %v308 = vld [vmem:[#allocation6 + $0x2b0] sm:$0xff]
        %v309 = vld [vmem:[#allocation6 + $0x2b8] sm:$0xff]
        %v310 = vld [vmem:[#allocation6 + $0x2c0] sm:$0xff]
        %v311 = vld [vmem:[#allocation6 + $0x2c8] sm:$0xff]
        %v312 = vld [vmem:[#allocation6 + $0x2d0] sm:$0xff]
        %v313 = vld [vmem:[#allocation6 + $0x2d8] sm:$0xff]
        %v314 = vld [vmem:[#allocation6 + $0x2e0] sm:$0xff]
        %v315 = vld [vmem:[#allocation6 + $0x2e8] sm:$0xff]
        %v316 = vld [vmem:[#allocation6 + $0x2f0] sm:$0xff]
        %v317 = vld [vmem:[#allocation6 + $0x2f8] sm:$0xff]
        %v318 = vld [vmem:[#allocation6 + $0x300] sm:$0xff]
        %v319 = vld [vmem:[#allocation6 + $0x308] sm:$0xff]
        %v320 = vld [vmem:[#allocation6 + $0x310] sm:$0xff]
        %v321 = vld [vmem:[#allocation6 + $0x318] sm:$0xff]
        %v322 = vld [vmem:[#allocation6 + $0x320] sm:$0xff]
        %v323 = vld [vmem:[#allocation6 + $0x328] sm:$0xff]
        %v324 = vld [vmem:[#allocation6 + $0x330] sm:$0xff]
        %v325 = vld [vmem:[#allocation6 + $0x338] sm:$0xff]
        %v326 = vld [vmem:[#allocation6 + $0x340] sm:$0xff]
        %v327 = vld [vmem:[#allocation6 + $0x348] sm:$0xff]
        %v328 = vld [vmem:[#allocation6 + $0x350] sm:$0xff]
        %v329 = vld [vmem:[#allocation6 + $0x358] sm:$0xff]
        %v330 = vld [vmem:[#allocation6 + $0x360] sm:$0xff]
        %v331 = vld [vmem:[#allocation6 + $0x368] sm:$0xff]
        %v332 = vld [vmem:[#allocation6 + $0x370] sm:$0xff]
        %v333 = vld [vmem:[#allocation6 + $0x378] sm:$0xff]
        %v334 = vld [vmem:[#allocation6 + $0x380] sm:$0xff]
        %v335 = vld [vmem:[#allocation6 + $0x388] sm:$0xff]
        %v336 = vld [vmem:[#allocation6 + $0x390] sm:$0xff]
        %v337 = vld [vmem:[#allocation6 + $0x398] sm:$0xff]
        %v338 = vld [vmem:[#allocation6 + $0x3a0] sm:$0xff]
        %v339 = vld [vmem:[#allocation6 + $0x3a8] sm:$0xff]
        %v340 = vld [vmem:[#allocation6 + $0x3b0] sm:$0xff]
        %v341 = vld [vmem:[#allocation6 + $0x3b8] sm:$0xff]
        %v342 = vld [vmem:[#allocation6 + $0x3c0] sm:$0xff]
        %v343 = vld [vmem:[#allocation6 + $0x3c8] sm:$0xff]
        %v344 = vld [vmem:[#allocation6 + $0x3d0] sm:$0xff]
        %v345 = vld [vmem:[#allocation6 + $0x3d8] sm:$0xff]
        %v346 = vld [vmem:[#allocation6 + $0x3e0] sm:$0xff]
        %v347 = vld [vmem:[#allocation6 + $0x3e8] sm:$0xff]
        %v348 = vld [vmem:[#allocation6 + $0x3f0] sm:$0xff]
        %v349 = vld [vmem:[#allocation6 + $0x3f8] sm:$0xff]
        %v350 = vld [vmem:[#allocation6 + $0x400] sm:$0xff]
        %v351 = vld [vmem:[#allocation6 + $0x408] sm:$0xff]
        %v352 = vld [vmem:[#allocation6 + $0x410] sm:$0xff]
        %v353 = vld [vmem:[#allocation6 + $0x418] sm:$0xff]
        %v354 = vld [vmem:[#allocation6 + $0x420] sm:$0xff]
        %v355 = vld [vmem:[#allocation6 + $0x428] sm:$0xff]
        %v356 = vld [vmem:[#allocation6 + $0x430] sm:$0xff]
        %v357 = vld [vmem:[#allocation6 + $0x438] sm:$0xff]
        %v358 = vld [vmem:[#allocation6 + $0x440] sm:$0xff]
        %v359 = vld [vmem:[#allocation6 + $0x448] sm:$0xff]
        %v360 = vld [vmem:[#allocation6 + $0x450] sm:$0xff]
        %v361 = vld [vmem:[#allocation6 + $0x458] sm:$0xff]
        %v362 = vld [vmem:[#allocation6 + $0x460] sm:$0xff]
        %v363 = vld [vmem:[#allocation6 + $0x468] sm:$0xff]
        %v364 = vld [vmem:[#allocation6 + $0x470] sm:$0xff]
        %v365 = vld [vmem:[#allocation6 + $0x478] sm:$0xff]
        %v366 = vld [vmem:[#allocation6 + $0x480] sm:$0xff]
        %v367 = vld [vmem:[#allocation6 + $0x488] sm:$0xff]
        %v368 = vld [vmem:[#allocation6 + $0x490] sm:$0xff]
        %v369 = vld [vmem:[#allocation6 + $0x498] sm:$0xff]
        %v370 = vld [vmem:[#allocation6 + $0x4a0] sm:$0xff]
        %v371 = vld [vmem:[#allocation6 + $0x4a8] sm:$0xff]
        %v372 = vld [vmem:[#allocation6 + $0x4b0] sm:$0xff]
        %v373 = vld [vmem:[#allocation6 + $0x4b8] sm:$0xff]
        %v374 = vld [vmem:[#allocation6 + $0x4c0] sm:$0xff]
        %v375 = vld [vmem:[#allocation6 + $0x4c8] sm:$0xff]
        %v376 = vld [vmem:[#allocation6 + $0x4d0] sm:$0xff]
        %v377 = vld [vmem:[#allocation6 + $0x4d8] sm:$0xff]
        %v378 = vld [vmem:[#allocation6 + $0x4e0] sm:$0xff]
        %v379 = vld [vmem:[#allocation6 + $0x4e8] sm:$0xff]
        %v380 = vld [vmem:[#allocation6 + $0x4f0] sm:$0xff]
        %v381 = vld [vmem:[#allocation6 + $0x4f8] sm:$0xff]
        %v382 = vld [vmem:[#allocation6 + $0x500] sm:$0xff]
        %v383 = vld [vmem:[#allocation6 + $0x508] sm:$0xff]
        %v384 = vld [vmem:[#allocation6 + $0x510] sm:$0xff]
        %v385 = vld [vmem:[#allocation6 + $0x518] sm:$0xff]
        %v386 = vld [vmem:[#allocation6 + $0x520] sm:$0xff]
        %v387 = vld [vmem:[#allocation6 + $0x528] sm:$0xff]
        %v388 = vld [vmem:[#allocation6 + $0x530] sm:$0xff]
        %v389 = vld [vmem:[#allocation6 + $0x538] sm:$0xff]
        %v390 = vld [vmem:[#allocation6 + $0x540] sm:$0xff]
        %v391 = vld [vmem:[#allocation6 + $0x548] sm:$0xff]
        %v392 = vld [vmem:[#allocation6 + $0x550] sm:$0xff]
        %v393 = vld [vmem:[#allocation6 + $0x558] sm:$0xff]
        %v394 = vld [vmem:[#allocation6 + $0x560] sm:$0xff]
        %v395 = vld [vmem:[#allocation6 + $0x568] sm:$0xff]
        %v396 = vld [vmem:[#allocation6 + $0x570] sm:$0xff]
        %v397 = vld [vmem:[#allocation6 + $0x578] sm:$0xff]
        %v398 = vld [vmem:[#allocation6 + $0x580] sm:$0xff]
        %v399 = vld [vmem:[#allocation6 + $0x588] sm:$0xff]
        %v400 = vld [vmem:[#allocation6 + $0x590] sm:$0xff]
        %v401 = vld [vmem:[#allocation6 + $0x598] sm:$0xff]
        %v402 = vld [vmem:[#allocation6 + $0x5a0] sm:$0xff]
        %v403 = vld [vmem:[#allocation6 + $0x5a8] sm:$0xff]
        %v404 = vld [vmem:[#allocation6 + $0x5b0] sm:$0xff]
        %v405 = vld [vmem:[#allocation6 + $0x5b8] sm:$0xff]
        %v406 = vld [vmem:[#allocation6 + $0x5c0] sm:$0xff]
        %v407 = vld [vmem:[#allocation6 + $0x5c8] sm:$0xff]
        %v408 = vld [vmem:[#allocation6 + $0x5d0] sm:$0xff]
        %v409 = vld [vmem:[#allocation6 + $0x5d8] sm:$0xff]
        %v410 = vld [vmem:[#allocation6 + $0x5e0] sm:$0xff]
        %v411 = vld [vmem:[#allocation6 + $0x5e8] sm:$0xff]
        %v412 = vld [vmem:[#allocation6 + $0x5f0] sm:$0xff]
        %v413 = vld [vmem:[#allocation6 + $0x5f8] sm:$0xff]
        %v414 = vld [vmem:[#allocation6 + $0x600] sm:$0xff]
        %v415 = vld [vmem:[#allocation6 + $0x608] sm:$0xff]
        %v416 = vld [vmem:[#allocation6 + $0x610] sm:$0xff]
        %v417 = vld [vmem:[#allocation6 + $0x618] sm:$0xff]
        %v418 = vld [vmem:[#allocation6 + $0x620] sm:$0xff]
        %v419 = vld [vmem:[#allocation6 + $0x628] sm:$0xff]
        %v420 = vld [vmem:[#allocation6 + $0x630] sm:$0xff]
        %v421 = vld [vmem:[#allocation6 + $0x638] sm:$0xff]
        %v422 = vld [vmem:[#allocation6 + $0x640] sm:$0xff]
        %v423 = vld [vmem:[#allocation6 + $0x648] sm:$0xff]
        %v424 = vld [vmem:[#allocation6 + $0x650] sm:$0xff]
        %v425 = vld [vmem:[#allocation6 + $0x658] sm:$0xff]
        %v426 = vld [vmem:[#allocation6 + $0x660] sm:$0xff]
        %v427 = vld [vmem:[#allocation6 + $0x668] sm:$0xff]
        %v428 = vld [vmem:[#allocation6 + $0x670] sm:$0xff]
        %v429 = vld [vmem:[#allocation6 + $0x678] sm:$0xff]
        %v430 = vld [vmem:[#allocation6 + $0x680] sm:$0xff]
        %v431 = vld [vmem:[#allocation6 + $0x688] sm:$0xff]
        %v432 = vld [vmem:[#allocation6 + $0x690] sm:$0xff]
        %v433 = vld [vmem:[#allocation6 + $0x698] sm:$0xff]
        %v434 = vld [vmem:[#allocation6 + $0x6a0] sm:$0xff]
        %v435 = vld [vmem:[#allocation6 + $0x6a8] sm:$0xff]
        %v436 = vld [vmem:[#allocation6 + $0x6b0] sm:$0xff]
        %v437 = vld [vmem:[#allocation6 + $0x6b8] sm:$0xff]
        %v438 = vld [vmem:[#allocation6 + $0x6c0] sm:$0xff]
        %v439 = vld [vmem:[#allocation6 + $0x6c8] sm:$0xff]
        %v440 = vld [vmem:[#allocation6 + $0x6d0] sm:$0xff]
        %v441 = vld [vmem:[#allocation6 + $0x6d8] sm:$0xff]
        %v442 = vld [vmem:[#allocation6 + $0x6e0] sm:$0xff]
        %v443 = vld [vmem:[#allocation6 + $0x6e8] sm:$0xff]
        %v444 = vld [vmem:[#allocation6 + $0x6f0] sm:$0xff]
        %v445 = vld [vmem:[#allocation6 + $0x6f8] sm:$0xff]
        %v446 = vld [vmem:[#allocation6 + $0x700] sm:$0xff]
        %v447 = vld [vmem:[#allocation6 + $0x708] sm:$0xff]
        %v448 = vld [vmem:[#allocation6 + $0x710] sm:$0xff]
        %v449 = vld [vmem:[#allocation6 + $0x718] sm:$0xff]
        %v450 = vld [vmem:[#allocation6 + $0x720] sm:$0xff]
        %v451 = vld [vmem:[#allocation6 + $0x728] sm:$0xff]
        %v452 = vld [vmem:[#allocation6 + $0x730] sm:$0xff]
        %v453 = vld [vmem:[#allocation6 + $0x738] sm:$0xff]
        %v454 = vld [vmem:[#allocation6 + $0x740] sm:$0xff]
        %v455 = vld [vmem:[#allocation6 + $0x748] sm:$0xff]
        %v456 = vld [vmem:[#allocation6 + $0x750] sm:$0xff]
        %v457 = vld [vmem:[#allocation6 + $0x758] sm:$0xff]
        %v458 = vld [vmem:[#allocation6 + $0x760] sm:$0xff]
        %v459 = vld [vmem:[#allocation6 + $0x768] sm:$0xff]
        %v460 = vld [vmem:[#allocation6 + $0x770] sm:$0xff]
        %v461 = vld [vmem:[#allocation6 + $0x778] sm:$0xff]
        %v462 = vld [vmem:[#allocation6 + $0x780] sm:$0xff]
        %v463 = vld [vmem:[#allocation6 + $0x788] sm:$0xff]
        %v464 = vld [vmem:[#allocation6 + $0x790] sm:$0xff]
        %v465 = vld [vmem:[#allocation6 + $0x798] sm:$0xff]
        %v466 = vld [vmem:[#allocation6 + $0x7a0] sm:$0xff]
        %v467 = vld [vmem:[#allocation6 + $0x7a8] sm:$0xff]
        %v468 = vld [vmem:[#allocation6 + $0x7b0] sm:$0xff]
        %v469 = vld [vmem:[#allocation6 + $0x7b8] sm:$0xff]
        %v470 = vld [vmem:[#allocation6 + $0x7c0] sm:$0xff]
        %v471 = vld [vmem:[#allocation6 + $0x7c8] sm:$0xff]
        %v472 = vld [vmem:[#allocation6 + $0x7d0] sm:$0xff]
        %v473 = vld [vmem:[#allocation6 + $0x7d8] sm:$0xff]
        %v474 = vld [vmem:[#allocation6 + $0x7e0] sm:$0xff]
        %v475 = vld [vmem:[#allocation6 + $0x7e8] sm:$0xff]
        %v476 = vld [vmem:[#allocation6 + $0x7f0] sm:$0xff]
        %v477 = vld [vmem:[#allocation6 + $0x7f8] sm:$0xff]
        %v478 = vld [vmem:[#allocation6 + $0x800] sm:$0xff]
        %v479 = vld [vmem:[#allocation6 + $0x808] sm:$0xff]
        %v480 = vld [vmem:[#allocation6 + $0x810] sm:$0xff]
        %v481 = vld [vmem:[#allocation6 + $0x818] sm:$0xff]
        %v482 = vld [vmem:[#allocation6 + $0x820] sm:$0xff]
        %v483 = vld [vmem:[#allocation6 + $0x828] sm:$0xff]
        %v484 = vld [vmem:[#allocation6 + $0x830] sm:$0xff]
        %v485 = vld [vmem:[#allocation6 + $0x838] sm:$0xff]
        %v486 = vld [vmem:[#allocation6 + $0x840] sm:$0xff]
        %v487 = vld [vmem:[#allocation6 + $0x848] sm:$0xff]
        %v488 = vld [vmem:[#allocation6 + $0x850] sm:$0xff]
        %v489 = vld [vmem:[#allocation6 + $0x858] sm:$0xff]
        %v490 = vld [vmem:[#allocation6 + $0x860] sm:$0xff]
        %v491 = vld [vmem:[#allocation6 + $0x868] sm:$0xff]
        %v492 = vld [vmem:[#allocation6 + $0x870] sm:$0xff]
        %v493 = vld [vmem:[#allocation6 + $0x878] sm:$0xff]
        %v494 = vld [vmem:[#allocation6 + $0x880] sm:$0xff]
        %v495 = vld [vmem:[#allocation6 + $0x888] sm:$0xff]
        %v496 = vld [vmem:[#allocation6 + $0x890] sm:$0xff]
        %v497 = vld [vmem:[#allocation6 + $0x898] sm:$0xff]
        %v498 = vld [vmem:[#allocation6 + $0x8a0] sm:$0xff]
        %v499 = vld [vmem:[#allocation6 + $0x8a8] sm:$0xff]
        %v500 = vld [vmem:[#allocation6 + $0x8b0] sm:$0xff]
        %v501 = vld [vmem:[#allocation6 + $0x8b8] sm:$0xff]
        %v502 = vld [vmem:[#allocation6 + $0x8c0] sm:$0xff]
        %v503 = vld [vmem:[#allocation6 + $0x8c8] sm:$0xff]
        %v504 = vld [vmem:[#allocation6 + $0x8d0] sm:$0xff]
        %v505 = vld [vmem:[#allocation6 + $0x8d8] sm:$0xff]
        %v506 = vld [vmem:[#allocation6 + $0x8e0] sm:$0xff]
        %v507 = vld [vmem:[#allocation6 + $0x8e8] sm:$0xff]
        %v508 = vld [vmem:[#allocation6 + $0x8f0] sm:$0xff]
        %v509 = vld [vmem:[#allocation6 + $0x8f8] sm:$0xff]
        %v510 = vld [vmem:[#allocation6 + $0x900] sm:$0xff]
        %v511 = vld [vmem:[#allocation6 + $0x908] sm:$0xff]
        %v512 = vld [vmem:[#allocation6 + $0x910] sm:$0xff]
        %v513 = vld [vmem:[#allocation6 + $0x918] sm:$0xff]
        %v514 = vld [vmem:[#allocation6 + $0x920] sm:$0xff]
        %v515 = vld [vmem:[#allocation6 + $0x928] sm:$0xff]
        %v516 = vld [vmem:[#allocation6 + $0x930] sm:$0xff]
        %v517 = vld [vmem:[#allocation6 + $0x938] sm:$0xff]
        %v518 = vld [vmem:[#allocation6 + $0x940] sm:$0xff]
        %v519 = vld [vmem:[#allocation6 + $0x948] sm:$0xff]
        %v520 = vld [vmem:[#allocation6 + $0x950] sm:$0xff]
        %v521 = vld [vmem:[#allocation6 + $0x958] sm:$0xff]
        %v522 = vld [vmem:[#allocation6 + $0x960] sm:$0xff]
        %v523 = vld [vmem:[#allocation6 + $0x968] sm:$0xff]
        %v524 = vld [vmem:[#allocation6 + $0x970] sm:$0xff]
        %v525 = vld [vmem:[#allocation6 + $0x978] sm:$0xff]
        %s526 = sld [smem:[#allocation2]]
        %v527 = vstv %s526
        %528 = vmatprep.subr.mxu0 0.0
        %v529 = vand.u32 %v237, 4294901760
        %530 = vmatpush1.msra.mxu0 %v529
        %531 = vmatprep.subr.mxu0 0.0
        %v532 = vand.u32 %v236, 4294901760
        %533 = vmatpush1.msra.mxu0 %v532
        %534 = vmatprep.subr.mxu0 0.0
        %v535 = vand.u32 %v235, 4294901760
        %536 = vmatpush1.msra.mxu0 %v535
        %537 = vmatprep.subr.mxu0 0.0
        %v538 = vand.u32 %v234, 4294901760
        %539 = vmatpush1.msra.mxu0 %v538
        %540 = vmatprep.subr.mxu0 0.0
        %v541 = vand.u32 %v233, 4294901760
        %542 = vmatpush1.msra.mxu0 %v541
        %543 = vmatprep.subr.mxu0 0.0
        %v544 = vand.u32 %v232, 4294901760
        %545 = vmatpush1.msra.mxu0 %v544
        %546 = vmatprep.subr.mxu0 0.0
        %v547 = vand.u32 %v231, 4294901760
        %548 = vmatpush1.msra.mxu0 %v547
        %549 = vmatprep.subr.mxu0 0.0
        %v550 = vand.u32 %v230, 4294901760
        %551 = vmatpush1.msra.mxu0 %v550
        %552 = vmatprep.subr.mxu0 0.0
        %v553 = vand.u32 %v229, 4294901760
        %554 = vmatpush1.msra.mxu0 %v553
        %555 = vmatprep.subr.mxu0 0.0
        %v556 = vand.u32 %v228, 4294901760
        %557 = vmatpush1.msra.mxu0 %v556
        %558 = vmatprep.subr.mxu0 0.0
        %v559 = vand.u32 %v227, 4294901760
        %560 = vmatpush1.msra.mxu0 %v559
        %561 = vmatprep.subr.mxu0 0.0
        %v562 = vand.u32 %v226, 4294901760
        %563 = vmatpush1.msra.mxu0 %v562
        %564 = vmatprep.subr.mxu0 0.0
        %v565 = vand.u32 %v225, 4294901760
        %566 = vmatpush1.msra.mxu0 %v565
        %567 = vmatprep.subr.mxu0 0.0
        %v568 = vand.u32 %v224, 4294901760
        %569 = vmatpush1.msra.mxu0 %v568
        %570 = vmatprep.subr.mxu0 0.0
        %v571 = vand.u32 %v223, 4294901760
        %572 = vmatpush1.msra.mxu0 %v571
        %573 = vmatprep.subr.mxu0 0.0
        %v574 = vand.u32 %v222, 4294901760
        %575 = vmatpush1.msra.mxu0 %v574
        %576 = vmatprep.subr.mxu0 0.0
        %v577 = vand.u32 %v253, 4294901760
        %578 = vmatpush2.msra.mxu0 %v577
        %579 = vmatprep.subr.mxu0 0.0
        %v580 = vand.u32 %v252, 4294901760
        %581 = vmatpush2.msra.mxu0 %v580
        %582 = vmatprep.subr.mxu0 0.0
        %v583 = vand.u32 %v251, 4294901760
        %584 = vmatpush2.msra.mxu0 %v583
        %585 = vmatprep.subr.mxu0 0.0
        %v586 = vand.u32 %v250, 4294901760
        %587 = vmatpush2.msra.mxu0 %v586
        %588 = vmatprep.subr.mxu0 0.0
        %v589 = vand.u32 %v249, 4294901760
        %590 = vmatpush2.msra.mxu0 %v589
        %591 = vmatprep.subr.mxu0 0.0
        %v592 = vand.u32 %v248, 4294901760
        %593 = vmatpush2.msra.mxu0 %v592
        %594 = vmatprep.subr.mxu0 0.0
        %v595 = vand.u32 %v247, 4294901760
        %596 = vmatpush2.msra.mxu0 %v595
        %597 = vmatprep.subr.mxu0 0.0
        %v598 = vand.u32 %v246, 4294901760
        %599 = vmatpush2.msra.mxu0 %v598
        %600 = vmatprep.subr.mxu0 0.0
        %v601 = vand.u32 %v245, 4294901760
        %602 = vmatpush2.msra.mxu0 %v601
        %603 = vmatprep.subr.mxu0 0.0
        %v604 = vand.u32 %v244, 4294901760
        %605 = vmatpush2.msra.mxu0 %v604
        %606 = vmatprep.subr.mxu0 0.0
        %v607 = vand.u32 %v243, 4294901760
        %608 = vmatpush2.msra.mxu0 %v607
        %609 = vmatprep.subr.mxu0 0.0
        %v610 = vand.u32 %v242, 4294901760
        %611 = vmatpush2.msra.mxu0 %v610
        %612 = vmatprep.subr.mxu0 0.0
        %v613 = vand.u32 %v241, 4294901760
        %614 = vmatpush2.msra.mxu0 %v613
        %615 = vmatprep.subr.mxu0 0.0
        %v616 = vand.u32 %v240, 4294901760
        %617 = vmatpush2.msra.mxu0 %v616
        %618 = vmatprep.subr.mxu0 0.0
        %v619 = vand.u32 %v239, 4294901760
        %620 = vmatpush2.msra.mxu0 %v619
        %621 = vmatprep.subr.mxu0 0.0
        %v622 = vand.u32 %v238, 4294901760
        %623 = vmatpush2.msra.mxu0 %v622
        %v624 = vand.u32 %v204, 4294901760
        %v625 = vsub.f32 %v204, %v624
        %v626 = vand.u32 %v625, 4294901760
        %v627 = vsub.f32 %v625, %v626
        %v628 = vand.u32 %v627, 4294901760
        %629 = vmatprep.mubr.f32.mxu0 %v628
        %v630 = vand.u32 %v203, 4294901760
        %v631 = vsub.f32 %v203, %v630
        %v632 = vand.u32 %v631, 4294901760
        %v633 = vsub.f32 %v631, %v632
        %v634 = vand.u32 %v633, 4294901760
        %635 = vmatmul.mubr.f32.gmra.mxu0 %v634
        %v636 = vpop.f32.mrf.mxu0
        %v637 = vadd.f32 %v527, %v636
        %v638 = vpop.f32.mrf.mxu0
        %639 = vdwg.mxu0
        %640 = vmatprep.subr.mxu0 0.0
        %v641 = vand.u32 %v237, 4294901760
        %v642 = vsub.f32 %v237, %v641
        %v643 = vand.u32 %v642, 4294901760
        %v644 = vsub.f32 %v642, %v643
        %v645 = vand.u32 %v644, 4294901760
        %646 = vmatpush1.msra.mxu0 %v645
        %647 = vmatprep.subr.mxu0 0.0
        %v648 = vand.u32 %v236, 4294901760
        %v649 = vsub.f32 %v236, %v648
        %v650 = vand.u32 %v649, 4294901760
        %v651 = vsub.f32 %v649, %v650
        %v652 = vand.u32 %v651, 4294901760
        %653 = vmatpush1.msra.mxu0 %v652
        %654 = vmatprep.subr.mxu0 0.0
        %v655 = vand.u32 %v235, 4294901760
        %v656 = vsub.f32 %v235, %v655
        %v657 = vand.u32 %v656, 4294901760
        %v658 = vsub.f32 %v656, %v657
        %v659 = vand.u32 %v658, 4294901760
        %660 = vmatpush1.msra.mxu0 %v659
        %661 = vmatprep.subr.mxu0 0.0
        %v662 = vand.u32 %v234, 4294901760
        %v663 = vsub.f32 %v234, %v662
        %v664 = vand.u32 %v663, 4294901760
        %v665 = vsub.f32 %v663, %v664
        %v666 = vand.u32 %v665, 4294901760
        %667 = vmatpush1.msra.mxu0 %v666
        %668 = vmatprep.subr.mxu0 0.0
        %v669 = vand.u32 %v233, 4294901760
        %v670 = vsub.f32 %v233, %v669
        %v671 = vand.u32 %v670, 4294901760
        %v672 = vsub.f32 %v670, %v671
        %v673 = vand.u32 %v672, 4294901760
        %674 = vmatpush1.msra.mxu0 %v673
        %675 = vmatprep.subr.mxu0 0.0
        %v676 = vand.u32 %v232, 4294901760
        %v677 = vsub.f32 %v232, %v676
        %v678 = vand.u32 %v677, 4294901760
        %v679 = vsub.f32 %v677, %v678
        %v680 = vand.u32 %v679, 4294901760
        %681 = vmatpush1.msra.mxu0 %v680
        %682 = vmatprep.subr.mxu0 0.0
        %v683 = vand.u32 %v231, 4294901760
        %v684 = vsub.f32 %v231, %v683
        %v685 = vand.u32 %v684, 4294901760
        %v686 = vsub.f32 %v684, %v685
        %v687 = vand.u32 %v686, 4294901760
        %688 = vmatpush1.msra.mxu0 %v687
        %689 = vmatprep.subr.mxu0 0.0
        %v690 = vand.u32 %v230, 4294901760
        %v691 = vsub.f32 %v230, %v690
        %v692 = vand.u32 %v691, 4294901760
        %v693 = vsub.f32 %v691, %v692
        %v694 = vand.u32 %v693, 4294901760
        %695 = vmatpush1.msra.mxu0 %v694
        %696 = vmatprep.subr.mxu0 0.0
        %v697 = vand.u32 %v229, 4294901760
        %v698 = vsub.f32 %v229, %v697
        %v699 = vand.u32 %v698, 4294901760
        %v700 = vsub.f32 %v698, %v699
        %v701 = vand.u32 %v700, 4294901760
        %702 = vmatpush1.msra.mxu0 %v701
        %703 = vmatprep.subr.mxu0 0.0
        %v704 = vand.u32 %v228, 4294901760
        %v705 = vsub.f32 %v228, %v704
        %v706 = vand.u32 %v705, 4294901760
        %v707 = vsub.f32 %v705, %v706
        %v708 = vand.u32 %v707, 4294901760
        %709 = vmatpush1.msra.mxu0 %v708
        %710 = vmatprep.subr.mxu0 0.0
        %v711 = vand.u32 %v227, 4294901760
        %v712 = vsub.f32 %v227, %v711
        %v713 = vand.u32 %v712, 4294901760
        %v714 = vsub.f32 %v712, %v713
        %v715 = vand.u32 %v714, 4294901760
        %716 = vmatpush1.msra.mxu0 %v715
        %717 = vmatprep.subr.mxu0 0.0
        %v718 = vand.u32 %v226, 4294901760
        %v719 = vsub.f32 %v226, %v718
        %v720 = vand.u32 %v719, 4294901760
        %v721 = vsub.f32 %v719, %v720
        %v722 = vand.u32 %v721, 4294901760
        %723 = vmatpush1.msra.mxu0 %v722
        %724 = vmatprep.subr.mxu0 0.0
        %v725 = vand.u32 %v225, 4294901760
        %v726 = vsub.f32 %v225, %v725
        %v727 = vand.u32 %v726, 4294901760
        %v728 = vsub.f32 %v726, %v727
        %v729 = vand.u32 %v728, 4294901760
        %730 = vmatpush1.msra.mxu0 %v729
        %731 = vmatprep.subr.mxu0 0.0
        %v732 = vand.u32 %v224, 4294901760
        %v733 = vsub.f32 %v224, %v732
        %v734 = vand.u32 %v733, 4294901760
        %v735 = vsub.f32 %v733, %v734
        %v736 = vand.u32 %v735, 4294901760
        %737 = vmatpush1.msra.mxu0 %v736
        %738 = vmatprep.subr.mxu0 0.0
        %v739 = vand.u32 %v223, 4294901760
        %v740 = vsub.f32 %v223, %v739
        %v741 = vand.u32 %v740, 4294901760
        %v742 = vsub.f32 %v740, %v741
        %v743 = vand.u32 %v742, 4294901760
        %744 = vmatpush1.msra.mxu0 %v743
        %745 = vmatprep.subr.mxu0 0.0
        %v746 = vand.u32 %v222, 4294901760
        %v747 = vsub.f32 %v222, %v746
        %v748 = vand.u32 %v747, 4294901760
        %v749 = vsub.f32 %v747, %v748
        %v750 = vand.u32 %v749, 4294901760
        %751 = vmatpush1.msra.mxu0 %v750
        %752 = vmatprep.subr.mxu0 0.0
        %v753 = vand.u32 %v253, 4294901760
        %v754 = vsub.f32 %v253, %v753
        %v755 = vand.u32 %v754, 4294901760
        %v756 = vsub.f32 %v754, %v755
        %v757 = vand.u32 %v756, 4294901760
        %758 = vmatpush2.msra.mxu0 %v757
        %759 = vmatprep.subr.mxu0 0.0
        %v760 = vand.u32 %v252, 4294901760
        %v761 = vsub.f32 %v252, %v760
        %v762 = vand.u32 %v761, 4294901760
        %v763 = vsub.f32 %v761, %v762
        %v764 = vand.u32 %v763, 4294901760
        %765 = vmatpush2.msra.mxu0 %v764
        %766 = vmatprep.subr.mxu0 0.0
        %v767 = vand.u32 %v251, 4294901760
        %v768 = vsub.f32 %v251, %v767
        %v769 = vand.u32 %v768, 4294901760
        %v770 = vsub.f32 %v768, %v769
        %v771 = vand.u32 %v770, 4294901760
        %772 = vmatpush2.msra.mxu0 %v771
        %773 = vmatprep.subr.mxu0 0.0
        %v774 = vand.u32 %v250, 4294901760
        %v775 = vsub.f32 %v250, %v774
        %v776 = vand.u32 %v775, 4294901760
        %v777 = vsub.f32 %v775, %v776
        %v778 = vand.u32 %v777, 4294901760
        %779 = vmatpush2.msra.mxu0 %v778
        %780 = vmatprep.subr.mxu0 0.0
        %v781 = vand.u32 %v249, 4294901760
        %v782 = vsub.f32 %v249, %v781
        %v783 = vand.u32 %v782, 4294901760
        %v784 = vsub.f32 %v782, %v783
        %v785 = vand.u32 %v784, 4294901760
        %786 = vmatpush2.msra.mxu0 %v785
        %787 = vmatprep.subr.mxu0 0.0
        %v788 = vand.u32 %v248, 4294901760
        %v789 = vsub.f32 %v248, %v788
        %v790 = vand.u32 %v789, 4294901760
        %v791 = vsub.f32 %v789, %v790
        %v792 = vand.u32 %v791, 4294901760
        %793 = vmatpush2.msra.mxu0 %v792
        %794 = vmatprep.subr.mxu0 0.0
        %v795 = vand.u32 %v247, 4294901760
        %v796 = vsub.f32 %v247, %v795
        %v797 = vand.u32 %v796, 4294901760
        %v798 = vsub.f32 %v796, %v797
        %v799 = vand.u32 %v798, 4294901760
        %800 = vmatpush2.msra.mxu0 %v799
        %801 = vmatprep.subr.mxu0 0.0
        %v802 = vand.u32 %v246, 4294901760
        %v803 = vsub.f32 %v246, %v802
        %v804 = vand.u32 %v803, 4294901760
        %v805 = vsub.f32 %v803, %v804
        %v806 = vand.u32 %v805, 4294901760
        %807 = vmatpush2.msra.mxu0 %v806
        %808 = vmatprep.subr.mxu0 0.0
        %v809 = vand.u32 %v245, 4294901760
        %v810 = vsub.f32 %v245, %v809
        %v811 = vand.u32 %v810, 4294901760
        %v812 = vsub.f32 %v810, %v811
        %v813 = vand.u32 %v812, 4294901760
        %814 = vmatpush2.msra.mxu0 %v813
        %815 = vmatprep.subr.mxu0 0.0
        %v816 = vand.u32 %v244, 4294901760
        %v817 = vsub.f32 %v244, %v816
        %v818 = vand.u32 %v817, 4294901760
        %v819 = vsub.f32 %v817, %v818
        %v820 = vand.u32 %v819, 4294901760
        %821 = vmatpush2.msra.mxu0 %v820
        %822 = vmatprep.subr.mxu0 0.0
        %v823 = vand.u32 %v243, 4294901760
        %v824 = vsub.f32 %v243, %v823
        %v825 = vand.u32 %v824, 4294901760
        %v826 = vsub.f32 %v824, %v825
        %v827 = vand.u32 %v826, 4294901760
        %828 = vmatpush2.msra.mxu0 %v827
        %829 = vmatprep.subr.mxu0 0.0
        %v830 = vand.u32 %v242, 4294901760
        %v831 = vsub.f32 %v242, %v830
        %v832 = vand.u32 %v831, 4294901760
        %v833 = vsub.f32 %v831, %v832
        %v834 = vand.u32 %v833, 4294901760
        %835 = vmatpush2.msra.mxu0 %v834
        %836 = vmatprep.subr.mxu0 0.0
        %v837 = vand.u32 %v241, 4294901760
        %v838 = vsub.f32 %v241, %v837
        %v839 = vand.u32 %v838, 4294901760
        %v840 = vsub.f32 %v838, %v839
        %v841 = vand.u32 %v840, 4294901760
        %842 = vmatpush2.msra.mxu0 %v841
        %843 = vmatprep.subr.mxu0 0.0
        %v844 = vand.u32 %v240, 4294901760
        %v845 = vsub.f32 %v240, %v844
        %v846 = vand.u32 %v845, 4294901760
        %v847 = vsub.f32 %v845, %v846
        %v848 = vand.u32 %v847, 4294901760
        %849 = vmatpush2.msra.mxu0 %v848
        %850 = vmatprep.subr.mxu0 0.0
        %v851 = vand.u32 %v239, 4294901760
        %v852 = vsub.f32 %v239, %v851
        %v853 = vand.u32 %v852, 4294901760
        %v854 = vsub.f32 %v852, %v853
        %v855 = vand.u32 %v854, 4294901760
        %856 = vmatpush2.msra.mxu0 %v855
        %857 = vmatprep.subr.mxu0 0.0
        %v858 = vand.u32 %v238, 4294901760
        %v859 = vsub.f32 %v238, %v858
        %v860 = vand.u32 %v859, 4294901760
        %v861 = vsub.f32 %v859, %v860
        %v862 = vand.u32 %v861, 4294901760
        %863 = vmatpush2.msra.mxu0 %v862
        %v864 = vand.u32 %v204, 4294901760
        %865 = vmatprep.mubr.f32.mxu0 %v864
        %v866 = vand.u32 %v203, 4294901760
        %867 = vmatmul.mubr.f32.gmra.mxu0 %v866
        %v868 = vpop.f32.mrf.mxu0
        %v869 = vadd.f32 %v637, %v868
        %v870 = vpop.f32.mrf.mxu0
        %871 = vdwg.mxu0
        %872 = vmatprep.subr.mxu0 0.0
        %v873 = vand.u32 %v237, 4294901760
        %v874 = vsub.f32 %v237, %v873
        %875 = vmatpush1.msra.mxu0 %v874
        %876 = vmatprep.subr.mxu0 0.0
        %v877 = vand.u32 %v236, 4294901760
        %v878 = vsub.f32 %v236, %v877
        %879 = vmatpush1.msra.mxu0 %v878
        %880 = vmatprep.subr.mxu0 0.0
        %v881 = vand.u32 %v235, 4294901760
        %v882 = vsub.f32 %v235, %v881
        %883 = vmatpush1.msra.mxu0 %v882
        %884 = vmatprep.subr.mxu0 0.0
        %v885 = vand.u32 %v234, 4294901760
        %v886 = vsub.f32 %v234, %v885
        %887 = vmatpush1.msra.mxu0 %v886
        %888 = vmatprep.subr.mxu0 0.0
        %v889 = vand.u32 %v233, 4294901760
        %v890 = vsub.f32 %v233, %v889
        %891 = vmatpush1.msra.mxu0 %v890
        %892 = vmatprep.subr.mxu0 0.0
        %v893 = vand.u32 %v232, 4294901760
        %v894 = vsub.f32 %v232, %v893
        %895 = vmatpush1.msra.mxu0 %v894
        %896 = vmatprep.subr.mxu0 0.0
        %v897 = vand.u32 %v231, 4294901760
        %v898 = vsub.f32 %v231, %v897
        %899 = vmatpush1.msra.mxu0 %v898
        %900 = vmatprep.subr.mxu0 0.0
        %v901 = vand.u32 %v230, 4294901760
        %v902 = vsub.f32 %v230, %v901
        %903 = vmatpush1.msra.mxu0 %v902
        %904 = vmatprep.subr.mxu0 0.0
        %v905 = vand.u32 %v229, 4294901760
        %v906 = vsub.f32 %v229, %v905
        %907 = vmatpush1.msra.mxu0 %v906
        %908 = vmatprep.subr.mxu0 0.0
        %v909 = vand.u32 %v228, 4294901760
        %v910 = vsub.f32 %v228, %v909
        %911 = vmatpush1.msra.mxu0 %v910
        %912 = vmatprep.subr.mxu0 0.0
        %v913 = vand.u32 %v227, 4294901760
        %v914 = vsub.f32 %v227, %v913
        %915 = vmatpush1.msra.mxu0 %v914
        %916 = vmatprep.subr.mxu0 0.0
        %v917 = vand.u32 %v226, 4294901760
        %v918 = vsub.f32 %v226, %v917
        %919 = vmatpush1.msra.mxu0 %v918
        %920 = vmatprep.subr.mxu0 0.0
        %v921 = vand.u32 %v225, 4294901760
        %v922 = vsub.f32 %v225, %v921
        %923 = vmatpush1.msra.mxu0 %v922
        %924 = vmatprep.subr.mxu0 0.0
        %v925 = vand.u32 %v224, 4294901760
        %v926 = vsub.f32 %v224, %v925
        %927 = vmatpush1.msra.mxu0 %v926
        %928 = vmatprep.subr.mxu0 0.0
        %v929 = vand.u32 %v223, 4294901760
        %v930 = vsub.f32 %v223, %v929
        %931 = vmatpush1.msra.mxu0 %v930
        %932 = vmatprep.subr.mxu0 0.0
        %v933 = vand.u32 %v222, 4294901760
        %v934 = vsub.f32 %v222, %v933
        %935 = vmatpush1.msra.mxu0 %v934
        %936 = vmatprep.subr.mxu0 0.0
        %v937 = vand.u32 %v253, 4294901760
        %v938 = vsub.f32 %v253, %v937
        %939 = vmatpush2.msra.mxu0 %v938
        %940 = vmatprep.subr.mxu0 0.0
        %v941 = vand.u32 %v252, 4294901760
        %v942 = vsub.f32 %v252, %v941
        %943 = vmatpush2.msra.mxu0 %v942
        %944 = vmatprep.subr.mxu0 0.0
        %v945 = vand.u32 %v251, 4294901760
        %v946 = vsub.f32 %v251, %v945
        %947 = vmatpush2.msra.mxu0 %v946
        %948 = vmatprep.subr.mxu0 0.0
        %v949 = vand.u32 %v250, 4294901760
        %v950 = vsub.f32 %v250, %v949
        %951 = vmatpush2.msra.mxu0 %v950
        %952 = vmatprep.subr.mxu0 0.0
        %v953 = vand.u32 %v249, 4294901760
        %v954 = vsub.f32 %v249, %v953
        %955 = vmatpush2.msra.mxu0 %v954
        %956 = vmatprep.subr.mxu0 0.0
        %v957 = vand.u32 %v248, 4294901760
        %v958 = vsub.f32 %v248, %v957
        %959 = vmatpush2.msra.mxu0 %v958
        %960 = vmatprep.subr.mxu0 0.0
        %v961 = vand.u32 %v247, 4294901760
        %v962 = vsub.f32 %v247, %v961
        %963 = vmatpush2.msra.mxu0 %v962
        %964 = vmatprep.subr.mxu0 0.0
        %v965 = vand.u32 %v246, 4294901760
        %v966 = vsub.f32 %v246, %v965
        %967 = vmatpush2.msra.mxu0 %v966
        %968 = vmatprep.subr.mxu0 0.0
        %v969 = vand.u32 %v245, 4294901760
        %v970 = vsub.f32 %v245, %v969
        %971 = vmatpush2.msra.mxu0 %v970
        %972 = vmatprep.subr.mxu0 0.0
        %v973 = vand.u32 %v244, 4294901760
        %v974 = vsub.f32 %v244, %v973
        %975 = vmatpush2.msra.mxu0 %v974
        %976 = vmatprep.subr.mxu0 0.0
        %v977 = vand.u32 %v243, 4294901760
        %v978 = vsub.f32 %v243, %v977
        %979 = vmatpush2.msra.mxu0 %v978
        %980 = vmatprep.subr.mxu0 0.0
        %v981 = vand.u32 %v242, 4294901760
        %v982 = vsub.f32 %v242, %v981
        %983 = vmatpush2.msra.mxu0 %v982
        %984 = vmatprep.subr.mxu0 0.0
        %v985 = vand.u32 %v241, 4294901760
        %v986 = vsub.f32 %v241, %v985
        %987 = vmatpush2.msra.mxu0 %v986
        %988 = vmatprep.subr.mxu0 0.0
        %v989 = vand.u32 %v240, 4294901760
        %v990 = vsub.f32 %v240, %v989
        %991 = vmatpush2.msra.mxu0 %v990
        %992 = vmatprep.subr.mxu0 0.0
        %v993 = vand.u32 %v239, 4294901760
        %v994 = vsub.f32 %v239, %v993
        %995 = vmatpush2.msra.mxu0 %v994
        %996 = vmatprep.subr.mxu0 0.0
        %v997 = vand.u32 %v238, 4294901760
        %v998 = vsub.f32 %v238, %v997
        %999 = vmatpush2.msra.mxu0 %v998
        %v1000 = vand.u32 %v204, 4294901760
        %v1001 = vsub.f32 %v204, %v1000
        %1002 = vmatprep.mubr.f32.mxu0 %v1001
        %v1003 = vand.u32 %v203, 4294901760
        %v1004 = vsub.f32 %v203, %v1003
        %1005 = vmatmul.mubr.f32.gmra.mxu0 %v1004
        %v1006 = vpop.f32.mrf.mxu0
        %v1007 = vadd.f32 %v869, %v1006
        %v1008 = vpop.f32.mrf.mxu0
        %1009 = vdwg.mxu0
        %1010 = vmatprep.subr.mxu0 0.0
        %v1011 = vand.u32 %v237, 4294901760
        %1012 = vmatpush1.msra.mxu0 %v1011
        %1013 = vmatprep.subr.mxu0 0.0
        %v1014 = vand.u32 %v236, 4294901760
        %1015 = vmatpush1.msra.mxu0 %v1014
        %1016 = vmatprep.subr.mxu0 0.0
        %v1017 = vand.u32 %v235, 4294901760
        %1018 = vmatpush1.msra.mxu0 %v1017
        %1019 = vmatprep.subr.mxu0 0.0
        %v1020 = vand.u32 %v234, 4294901760
        %1021 = vmatpush1.msra.mxu0 %v1020
        %1022 = vmatprep.subr.mxu0 0.0
        %v1023 = vand.u32 %v233, 4294901760
        %1024 = vmatpush1.msra.mxu0 %v1023
        %1025 = vmatprep.subr.mxu0 0.0
        %v1026 = vand.u32 %v232, 4294901760
        %1027 = vmatpush1.msra.mxu0 %v1026
        %1028 = vmatprep.subr.mxu0 0.0
        %v1029 = vand.u32 %v231, 4294901760
        %1030 = vmatpush1.msra.mxu0 %v1029
        %1031 = vmatprep.subr.mxu0 0.0
        %v1032 = vand.u32 %v230, 4294901760
        %1033 = vmatpush1.msra.mxu0 %v1032
        %1034 = vmatprep.subr.mxu0 0.0
        %v1035 = vand.u32 %v229, 4294901760
        %1036 = vmatpush1.msra.mxu0 %v1035
        %1037 = vmatprep.subr.mxu0 0.0
        %v1038 = vand.u32 %v228, 4294901760
        %1039 = vmatpush1.msra.mxu0 %v1038
        %1040 = vmatprep.subr.mxu0 0.0
        %v1041 = vand.u32 %v227, 4294901760
        %1042 = vmatpush1.msra.mxu0 %v1041
        %1043 = vmatprep.subr.mxu0 0.0
        %v1044 = vand.u32 %v226, 4294901760
        %1045 = vmatpush1.msra.mxu0 %v1044
        %1046 = vmatprep.subr.mxu0 0.0
        %v1047 = vand.u32 %v225, 4294901760
        %1048 = vmatpush1.msra.mxu0 %v1047
        %1049 = vmatprep.subr.mxu0 0.0
        %v1050 = vand.u32 %v224, 4294901760
        %1051 = vmatpush1.msra.mxu0 %v1050
        %1052 = vmatprep.subr.mxu0 0.0
        %v1053 = vand.u32 %v223, 4294901760
        %1054 = vmatpush1.msra.mxu0 %v1053
        %1055 = vmatprep.subr.mxu0 0.0
        %v1056 = vand.u32 %v222, 4294901760
        %1057 = vmatpush1.msra.mxu0 %v1056
        %1058 = vmatprep.subr.mxu0 0.0
        %v1059 = vand.u32 %v253, 4294901760
        %1060 = vmatpush2.msra.mxu0 %v1059
        %1061 = vmatprep.subr.mxu0 0.0
        %v1062 = vand.u32 %v252, 4294901760
        %1063 = vmatpush2.msra.mxu0 %v1062
        %1064 = vmatprep.subr.mxu0 0.0
        %v1065 = vand.u32 %v251, 4294901760
        %1066 = vmatpush2.msra.mxu0 %v1065
        %1067 = vmatprep.subr.mxu0 0.0
        %v1068 = vand.u32 %v250, 4294901760
        %1069 = vmatpush2.msra.mxu0 %v1068
        %1070 = vmatprep.subr.mxu0 0.0
        %v1071 = vand.u32 %v249, 4294901760
        %1072 = vmatpush2.msra.mxu0 %v1071
        %1073 = vmatprep.subr.mxu0 0.0
        %v1074 = vand.u32 %v248, 4294901760
        %1075 = vmatpush2.msra.mxu0 %v1074
        %1076 = vmatprep.subr.mxu0 0.0
        %v1077 = vand.u32 %v247, 4294901760
        %1078 = vmatpush2.msra.mxu0 %v1077
        %1079 = vmatprep.subr.mxu0 0.0
        %v1080 = vand.u32 %v246, 4294901760
        %1081 = vmatpush2.msra.mxu0 %v1080
        %1082 = vmatprep.subr.mxu0 0.0
        %v1083 = vand.u32 %v245, 4294901760
        %1084 = vmatpush2.msra.mxu0 %v1083
        %1085 = vmatprep.subr.mxu0 0.0
        %v1086 = vand.u32 %v244, 4294901760
        %1087 = vmatpush2.msra.mxu0 %v1086
        %1088 = vmatprep.subr.mxu0 0.0
        %v1089 = vand.u32 %v243, 4294901760
        %1090 = vmatpush2.msra.mxu0 %v1089
        %1091 = vmatprep.subr.mxu0 0.0
        %v1092 = vand.u32 %v242, 4294901760
        %1093 = vmatpush2.msra.mxu0 %v1092
        %1094 = vmatprep.subr.mxu0 0.0
        %v1095 = vand.u32 %v241, 4294901760
        %1096 = vmatpush2.msra.mxu0 %v1095
        %1097 = vmatprep.subr.mxu0 0.0
        %v1098 = vand.u32 %v240, 4294901760
        %1099 = vmatpush2.msra.mxu0 %v1098
        %1100 = vmatprep.subr.mxu0 0.0
        %v1101 = vand.u32 %v239, 4294901760
        %1102 = vmatpush2.msra.mxu0 %v1101
        %1103 = vmatprep.subr.mxu0 0.0
        %v1104 = vand.u32 %v238, 4294901760
        %1105 = vmatpush2.msra.mxu0 %v1104
        %v1106 = vand.u32 %v204, 4294901760
        %v1107 = vsub.f32 %v204, %v1106
        %v1108 = vand.u32 %v1107, 4294901760
        %1109 = vmatprep.mubr.f32.mxu0 %v1108
        %v1110 = vand.u32 %v203, 4294901760
        %v1111 = vsub.f32 %v203, %v1110
        %v1112 = vand.u32 %v1111, 4294901760
        %1113 = vmatmul.mubr.f32.gmra.mxu0 %v1112
        %v1114 = vpop.f32.mrf.mxu0
        %v1115 = vadd.f32 %v1007, %v1114
        %v1116 = vpop.f32.mrf.mxu0
        %1117 = vdwg.mxu0
        %1118 = vmatprep.subr.mxu0 0.0
        %v1119 = vand.u32 %v237, 4294901760
        %v1120 = vsub.f32 %v237, %v1119
        %v1121 = vand.u32 %v1120, 4294901760
        %1122 = vmatpush1.msra.mxu0 %v1121
        %1123 = vmatprep.subr.mxu0 0.0
        %v1124 = vand.u32 %v236, 4294901760
        %v1125 = vsub.f32 %v236, %v1124
        %v1126 = vand.u32 %v1125, 4294901760
        %1127 = vmatpush1.msra.mxu0 %v1126
        %1128 = vmatprep.subr.mxu0 0.0
        %v1129 = vand.u32 %v235, 4294901760
        %v1130 = vsub.f32 %v235, %v1129
        %v1131 = vand.u32 %v1130, 4294901760
        %1132 = vmatpush1.msra.mxu0 %v1131
        %1133 = vmatprep.subr.mxu0 0.0
        %v1134 = vand.u32 %v234, 4294901760
        %v1135 = vsub.f32 %v234, %v1134
        %v1136 = vand.u32 %v1135, 4294901760
        %1137 = vmatpush1.msra.mxu0 %v1136
        %1138 = vmatprep.subr.mxu0 0.0
        %v1139 = vand.u32 %v233, 4294901760
        %v1140 = vsub.f32 %v233, %v1139
        %v1141 = vand.u32 %v1140, 4294901760
        %1142 = vmatpush1.msra.mxu0 %v1141
        %1143 = vmatprep.subr.mxu0 0.0
        %v1144 = vand.u32 %v232, 4294901760
        %v1145 = vsub.f32 %v232, %v1144
        %v1146 = vand.u32 %v1145, 4294901760
        %1147 = vmatpush1.msra.mxu0 %v1146
        %1148 = vmatprep.subr.mxu0 0.0
        %v1149 = vand.u32 %v231, 4294901760
        %v1150 = vsub.f32 %v231, %v1149
        %v1151 = vand.u32 %v1150, 4294901760
        %1152 = vmatpush1.msra.mxu0 %v1151
        %1153 = vmatprep.subr.mxu0 0.0
        %v1154 = vand.u32 %v230, 4294901760
        %v1155 = vsub.f32 %v230, %v1154
        %v1156 = vand.u32 %v1155, 4294901760
        %1157 = vmatpush1.msra.mxu0 %v1156
        %1158 = vmatprep.subr.mxu0 0.0
        %v1159 = vand.u32 %v229, 4294901760
        %v1160 = vsub.f32 %v229, %v1159
        %v1161 = vand.u32 %v1160, 4294901760
        %1162 = vmatpush1.msra.mxu0 %v1161
        %1163 = vmatprep.subr.mxu0 0.0
        %v1164 = vand.u32 %v228, 4294901760
        %v1165 = vsub.f32 %v228, %v1164
        %v1166 = vand.u32 %v1165, 4294901760
        %1167 = vmatpush1.msra.mxu0 %v1166
        %1168 = vmatprep.subr.mxu0 0.0
        %v1169 = vand.u32 %v227, 4294901760
        %v1170 = vsub.f32 %v227, %v1169
        %v1171 = vand.u32 %v1170, 4294901760
        %1172 = vmatpush1.msra.mxu0 %v1171
        %1173 = vmatprep.subr.mxu0 0.0
        %v1174 = vand.u32 %v226, 4294901760
        %v1175 = vsub.f32 %v226, %v1174
        %v1176 = vand.u32 %v1175, 4294901760
        %1177 = vmatpush1.msra.mxu0 %v1176
        %1178 = vmatprep.subr.mxu0 0.0
        %v1179 = vand.u32 %v225, 4294901760
        %v1180 = vsub.f32 %v225, %v1179
        %v1181 = vand.u32 %v1180, 4294901760
        %1182 = vmatpush1.msra.mxu0 %v1181
        %1183 = vmatprep.subr.mxu0 0.0
        %v1184 = vand.u32 %v224, 4294901760
        %v1185 = vsub.f32 %v224, %v1184
        %v1186 = vand.u32 %v1185, 4294901760
        %1187 = vmatpush1.msra.mxu0 %v1186
        %1188 = vmatprep.subr.mxu0 0.0
        %v1189 = vand.u32 %v223, 4294901760
        %v1190 = vsub.f32 %v223, %v1189
        %v1191 = vand.u32 %v1190, 4294901760
        %1192 = vmatpush1.msra.mxu0 %v1191
        %1193 = vmatprep.subr.mxu0 0.0
        %v1194 = vand.u32 %v222, 4294901760
        %v1195 = vsub.f32 %v222, %v1194
        %v1196 = vand.u32 %v1195, 4294901760
        %1197 = vmatpush1.msra.mxu0 %v1196
        %1198 = vmatprep.subr.mxu0 0.0
        %v1199 = vand.u32 %v253, 4294901760
        %v1200 = vsub.f32 %v253, %v1199
        %v1201 = vand.u32 %v1200, 4294901760
        %1202 = vmatpush2.msra.mxu0 %v1201
        %1203 = vmatprep.subr.mxu0 0.0
        %v1204 = vand.u32 %v252, 4294901760
        %v1205 = vsub.f32 %v252, %v1204
        %v1206 = vand.u32 %v1205, 4294901760
        %1207 = vmatpush2.msra.mxu0 %v1206
        %1208 = vmatprep.subr.mxu0 0.0
        %v1209 = vand.u32 %v251, 4294901760
        %v1210 = vsub.f32 %v251, %v1209
        %v1211 = vand.u32 %v1210, 4294901760
        %1212 = vmatpush2.msra.mxu0 %v1211
        %1213 = vmatprep.subr.mxu0 0.0
        %v1214 = vand.u32 %v250, 4294901760
        %v1215 = vsub.f32 %v250, %v1214
        %v1216 = vand.u32 %v1215, 4294901760
        %1217 = vmatpush2.msra.mxu0 %v1216
        %1218 = vmatprep.subr.mxu0 0.0
        %v1219 = vand.u32 %v249, 4294901760
        %v1220 = vsub.f32 %v249, %v1219
        %v1221 = vand.u32 %v1220, 4294901760
        %1222 = vmatpush2.msra.mxu0 %v1221
        %1223 = vmatprep.subr.mxu0 0.0
        %v1224 = vand.u32 %v248, 4294901760
        %v1225 = vsub.f32 %v248, %v1224
        %v1226 = vand.u32 %v1225, 4294901760
        %1227 = vmatpush2.msra.mxu0 %v1226
        %1228 = vmatprep.subr.mxu0 0.0
        %v1229 = vand.u32 %v247, 4294901760
        %v1230 = vsub.f32 %v247, %v1229
        %v1231 = vand.u32 %v1230, 4294901760
        %1232 = vmatpush2.msra.mxu0 %v1231
        %1233 = vmatprep.subr.mxu0 0.0
        %v1234 = vand.u32 %v246, 4294901760
        %v1235 = vsub.f32 %v246, %v1234
        %v1236 = vand.u32 %v1235, 4294901760
        %1237 = vmatpush2.msra.mxu0 %v1236
        %1238 = vmatprep.subr.mxu0 0.0
        %v1239 = vand.u32 %v245, 4294901760
        %v1240 = vsub.f32 %v245, %v1239
        %v1241 = vand.u32 %v1240, 4294901760
        %1242 = vmatpush2.msra.mxu0 %v1241
        %1243 = vmatprep.subr.mxu0 0.0
        %v1244 = vand.u32 %v244, 4294901760
        %v1245 = vsub.f32 %v244, %v1244
        %v1246 = vand.u32 %v1245, 4294901760
        %1247 = vmatpush2.msra.mxu0 %v1246
        %1248 = vmatprep.subr.mxu0 0.0
        %v1249 = vand.u32 %v243, 4294901760
        %v1250 = vsub.f32 %v243, %v1249
        %v1251 = vand.u32 %v1250, 4294901760
        %1252 = vmatpush2.msra.mxu0 %v1251
        %1253 = vmatprep.subr.mxu0 0.0
        %v1254 = vand.u32 %v242, 4294901760
        %v1255 = vsub.f32 %v242, %v1254
        %v1256 = vand.u32 %v1255, 4294901760
        %1257 = vmatpush2.msra.mxu0 %v1256
        %1258 = vmatprep.subr.mxu0 0.0
        %v1259 = vand.u32 %v241, 4294901760
        %v1260 = vsub.f32 %v241, %v1259
        %v1261 = vand.u32 %v1260, 4294901760
        %1262 = vmatpush2.msra.mxu0 %v1261
        %1263 = vmatprep.subr.mxu0 0.0
        %v1264 = vand.u32 %v240, 4294901760
        %v1265 = vsub.f32 %v240, %v1264
        %v1266 = vand.u32 %v1265, 4294901760
        %1267 = vmatpush2.msra.mxu0 %v1266
        %1268 = vmatprep.subr.mxu0 0.0
        %v1269 = vand.u32 %v239, 4294901760
        %v1270 = vsub.f32 %v239, %v1269
        %v1271 = vand.u32 %v1270, 4294901760
        %1272 = vmatpush2.msra.mxu0 %v1271
        %1273 = vmatprep.subr.mxu0 0.0
        %v1274 = vand.u32 %v238, 4294901760
        %v1275 = vsub.f32 %v238, %v1274
        %v1276 = vand.u32 %v1275, 4294901760
        %1277 = vmatpush2.msra.mxu0 %v1276
        %v1278 = vand.u32 %v204, 4294901760
        %1279 = vmatprep.mubr.f32.mxu0 %v1278
        %v1280 = vand.u32 %v203, 4294901760
        %1281 = vmatmul.mubr.f32.gmra.mxu0 %v1280
        %v1282 = vpop.f32.mrf.mxu0
        %v1283 = vadd.f32 %v1115, %v1282
        %v1284 = vpop.f32.mrf.mxu0
        %1285 = vdwg.mxu0
        %1286 = vmatprep.subr.mxu0 0.0
        %v1287 = vand.u32 %v237, 4294901760
        %1288 = vmatpush1.msra.mxu0 %v1287
        %1289 = vmatprep.subr.mxu0 0.0
        %v1290 = vand.u32 %v236, 4294901760
        %1291 = vmatpush1.msra.mxu0 %v1290
        %1292 = vmatprep.subr.mxu0 0.0
        %v1293 = vand.u32 %v235, 4294901760
        %1294 = vmatpush1.msra.mxu0 %v1293
        %1295 = vmatprep.subr.mxu0 0.0
        %v1296 = vand.u32 %v234, 4294901760
        %1297 = vmatpush1.msra.mxu0 %v1296
        %1298 = vmatprep.subr.mxu0 0.0
        %v1299 = vand.u32 %v233, 4294901760
        %1300 = vmatpush1.msra.mxu0 %v1299
        %1301 = vmatprep.subr.mxu0 0.0
        %v1302 = vand.u32 %v232, 4294901760
        %1303 = vmatpush1.msra.mxu0 %v1302
        %1304 = vmatprep.subr.mxu0 0.0
        %v1305 = vand.u32 %v231, 4294901760
        %1306 = vmatpush1.msra.mxu0 %v1305
        %1307 = vmatprep.subr.mxu0 0.0
        %v1308 = vand.u32 %v230, 4294901760
        %1309 = vmatpush1.msra.mxu0 %v1308
        %1310 = vmatprep.subr.mxu0 0.0
        %v1311 = vand.u32 %v229, 4294901760
        %1312 = vmatpush1.msra.mxu0 %v1311
        %1313 = vmatprep.subr.mxu0 0.0
        %v1314 = vand.u32 %v228, 4294901760
        %1315 = vmatpush1.msra.mxu0 %v1314
        %1316 = vmatprep.subr.mxu0 0.0
        %v1317 = vand.u32 %v227, 4294901760
        %1318 = vmatpush1.msra.mxu0 %v1317
        %1319 = vmatprep.subr.mxu0 0.0
        %v1320 = vand.u32 %v226, 4294901760
        %1321 = vmatpush1.msra.mxu0 %v1320
        %1322 = vmatprep.subr.mxu0 0.0
        %v1323 = vand.u32 %v225, 4294901760
        %1324 = vmatpush1.msra.mxu0 %v1323
        %1325 = vmatprep.subr.mxu0 0.0
        %v1326 = vand.u32 %v224, 4294901760
        %1327 = vmatpush1.msra.mxu0 %v1326
        %1328 = vmatprep.subr.mxu0 0.0
        %v1329 = vand.u32 %v223, 4294901760
        %1330 = vmatpush1.msra.mxu0 %v1329
        %1331 = vmatprep.subr.mxu0 0.0
        %v1332 = vand.u32 %v222, 4294901760
        %1333 = vmatpush1.msra.mxu0 %v1332
        %1334 = vmatprep.subr.mxu0 0.0
        %v1335 = vand.u32 %v253, 4294901760
        %1336 = vmatpush2.msra.mxu0 %v1335
        %1337 = vmatprep.subr.mxu0 0.0
        %v1338 = vand.u32 %v252, 4294901760
        %1339 = vmatpush2.msra.mxu0 %v1338
        %1340 = vmatprep.subr.mxu0 0.0
        %v1341 = vand.u32 %v251, 4294901760
        %1342 = vmatpush2.msra.mxu0 %v1341
        %1343 = vmatprep.subr.mxu0 0.0
        %v1344 = vand.u32 %v250, 4294901760
        %1345 = vmatpush2.msra.mxu0 %v1344
        %1346 = vmatprep.subr.mxu0 0.0
        %v1347 = vand.u32 %v249, 4294901760
        %1348 = vmatpush2.msra.mxu0 %v1347
        %1349 = vmatprep.subr.mxu0 0.0
        %v1350 = vand.u32 %v248, 4294901760
        %1351 = vmatpush2.msra.mxu0 %v1350
        %1352 = vmatprep.subr.mxu0 0.0
        %v1353 = vand.u32 %v247, 4294901760
        %1354 = vmatpush2.msra.mxu0 %v1353
        %1355 = vmatprep.subr.mxu0 0.0
        %v1356 = vand.u32 %v246, 4294901760
        %1357 = vmatpush2.msra.mxu0 %v1356
        %1358 = vmatprep.subr.mxu0 0.0
        %v1359 = vand.u32 %v245, 4294901760
        %1360 = vmatpush2.msra.mxu0 %v1359
        %1361 = vmatprep.subr.mxu0 0.0
        %v1362 = vand.u32 %v244, 4294901760
        %1363 = vmatpush2.msra.mxu0 %v1362
        %1364 = vmatprep.subr.mxu0 0.0
        %v1365 = vand.u32 %v243, 4294901760
        %1366 = vmatpush2.msra.mxu0 %v1365
        %1367 = vmatprep.subr.mxu0 0.0
        %v1368 = vand.u32 %v242, 4294901760
        %1369 = vmatpush2.msra.mxu0 %v1368
        %1370 = vmatprep.subr.mxu0 0.0
        %v1371 = vand.u32 %v241, 4294901760
        %1372 = vmatpush2.msra.mxu0 %v1371
        %1373 = vmatprep.subr.mxu0 0.0
        %v1374 = vand.u32 %v240, 4294901760
        %1375 = vmatpush2.msra.mxu0 %v1374
        %1376 = vmatprep.subr.mxu0 0.0
        %v1377 = vand.u32 %v239, 4294901760
        %1378 = vmatpush2.msra.mxu0 %v1377
        %1379 = vmatprep.subr.mxu0 0.0
        %v1380 = vand.u32 %v238, 4294901760
        %1381 = vmatpush2.msra.mxu0 %v1380
        %v1382 = vand.u32 %v204, 4294901760
        %1383 = vmatprep.mubr.f32.mxu0 %v1382
        %v1384 = vand.u32 %v203, 4294901760
        %1385 = vmatmul.mubr.f32.gmra.mxu0 %v1384
        %v1386 = vpop.f32.mrf.mxu0
        %v1387 = vadd.f32 %v1283, %v1386
        %v1388 = vpop.f32.mrf.mxu0
        %1389 = vdwg.mxu0
        %1390 = vmatprep.subr.mxu0 0.0
        %v1391 = vand.u32 %v269, 4294901760
        %1392 = vmatpush1.msra.mxu0 %v1391
        %1393 = vmatprep.subr.mxu0 0.0
        %v1394 = vand.u32 %v268, 4294901760
        %1395 = vmatpush1.msra.mxu0 %v1394
        %1396 = vmatprep.subr.mxu0 0.0
        %v1397 = vand.u32 %v267, 4294901760
        %1398 = vmatpush1.msra.mxu0 %v1397
        %1399 = vmatprep.subr.mxu0 0.0
        %v1400 = vand.u32 %v266, 4294901760
        %1401 = vmatpush1.msra.mxu0 %v1400
        %1402 = vmatprep.subr.mxu0 0.0
        %v1403 = vand.u32 %v265, 4294901760
        %1404 = vmatpush1.msra.mxu0 %v1403
        %1405 = vmatprep.subr.mxu0 0.0
        %v1406 = vand.u32 %v264, 4294901760
        %1407 = vmatpush1.msra.mxu0 %v1406
        %1408 = vmatprep.subr.mxu0 0.0
        %v1409 = vand.u32 %v263, 4294901760
        %1410 = vmatpush1.msra.mxu0 %v1409
        %1411 = vmatprep.subr.mxu0 0.0
        %v1412 = vand.u32 %v262, 4294901760
        %1413 = vmatpush1.msra.mxu0 %v1412
        %1414 = vmatprep.subr.mxu0 0.0
        %v1415 = vand.u32 %v261, 4294901760
        %1416 = vmatpush1.msra.mxu0 %v1415
        %1417 = vmatprep.subr.mxu0 0.0
        %v1418 = vand.u32 %v260, 4294901760
        %1419 = vmatpush1.msra.mxu0 %v1418
        %1420 = vmatprep.subr.mxu0 0.0
        %v1421 = vand.u32 %v259, 4294901760
        %1422 = vmatpush1.msra.mxu0 %v1421
        %1423 = vmatprep.subr.mxu0 0.0
        %v1424 = vand.u32 %v258, 4294901760
        %1425 = vmatpush1.msra.mxu0 %v1424
        %1426 = vmatprep.subr.mxu0 0.0
        %v1427 = vand.u32 %v257, 4294901760
        %1428 = vmatpush1.msra.mxu0 %v1427
        %1429 = vmatprep.subr.mxu0 0.0
        %v1430 = vand.u32 %v256, 4294901760
        %1431 = vmatpush1.msra.mxu0 %v1430
        %1432 = vmatprep.subr.mxu0 0.0
        %v1433 = vand.u32 %v255, 4294901760
        %1434 = vmatpush1.msra.mxu0 %v1433
        %1435 = vmatprep.subr.mxu0 0.0
        %v1436 = vand.u32 %v254, 4294901760
        %1437 = vmatpush1.msra.mxu0 %v1436
        %1438 = vmatprep.subr.mxu0 0.0
        %v1439 = vand.u32 %v285, 4294901760
        %1440 = vmatpush2.msra.mxu0 %v1439
        %1441 = vmatprep.subr.mxu0 0.0
        %v1442 = vand.u32 %v284, 4294901760
        %1443 = vmatpush2.msra.mxu0 %v1442
        %1444 = vmatprep.subr.mxu0 0.0
        %v1445 = vand.u32 %v283, 4294901760
        %1446 = vmatpush2.msra.mxu0 %v1445
        %1447 = vmatprep.subr.mxu0 0.0
        %v1448 = vand.u32 %v282, 4294901760
        %1449 = vmatpush2.msra.mxu0 %v1448
        %1450 = vmatprep.subr.mxu0 0.0
        %v1451 = vand.u32 %v281, 4294901760
        %1452 = vmatpush2.msra.mxu0 %v1451
        %1453 = vmatprep.subr.mxu0 0.0
        %v1454 = vand.u32 %v280, 4294901760
        %1455 = vmatpush2.msra.mxu0 %v1454
        %1456 = vmatprep.subr.mxu0 0.0
        %v1457 = vand.u32 %v279, 4294901760
        %1458 = vmatpush2.msra.mxu0 %v1457
        %1459 = vmatprep.subr.mxu0 0.0
        %v1460 = vand.u32 %v278, 4294901760
        %1461 = vmatpush2.msra.mxu0 %v1460
        %1462 = vmatprep.subr.mxu0 0.0
        %v1463 = vand.u32 %v277, 4294901760
        %1464 = vmatpush2.msra.mxu0 %v1463
        %1465 = vmatprep.subr.mxu0 0.0
        %v1466 = vand.u32 %v276, 4294901760
        %1467 = vmatpush2.msra.mxu0 %v1466
        %1468 = vmatprep.subr.mxu0 0.0
        %v1469 = vand.u32 %v275, 4294901760
        %1470 = vmatpush2.msra.mxu0 %v1469
        %1471 = vmatprep.subr.mxu0 0.0
        %v1472 = vand.u32 %v274, 4294901760
        %1473 = vmatpush2.msra.mxu0 %v1472
        %1474 = vmatprep.subr.mxu0 0.0
        %v1475 = vand.u32 %v273, 4294901760
        %1476 = vmatpush2.msra.mxu0 %v1475
        %1477 = vmatprep.subr.mxu0 0.0
        %v1478 = vand.u32 %v272, 4294901760
        %1479 = vmatpush2.msra.mxu0 %v1478
        %1480 = vmatprep.subr.mxu0 0.0
        %v1481 = vand.u32 %v271, 4294901760
        %1482 = vmatpush2.msra.mxu0 %v1481
        %1483 = vmatprep.subr.mxu0 0.0
        %v1484 = vand.u32 %v270, 4294901760
        %1485 = vmatpush2.msra.mxu0 %v1484
        %v1486 = vand.u32 %v206, 4294901760
        %v1487 = vsub.f32 %v206, %v1486
        %v1488 = vand.u32 %v1487, 4294901760
        %v1489 = vsub.f32 %v1487, %v1488
        %v1490 = vand.u32 %v1489, 4294901760
        %1491 = vmatprep.mubr.f32.mxu0 %v1490
        %v1492 = vand.u32 %v205, 4294901760
        %v1493 = vsub.f32 %v205, %v1492
        %v1494 = vand.u32 %v1493, 4294901760
        %v1495 = vsub.f32 %v1493, %v1494
        %v1496 = vand.u32 %v1495, 4294901760
        %1497 = vmatmul.mubr.f32.gmra.mxu0 %v1496
        %v1498 = vpop.f32.mrf.mxu0
        %v1499 = vadd.f32 %v1387, %v1498
        %v1500 = vpop.f32.mrf.mxu0
        %1501 = vdwg.mxu0
        %1502 = vmatprep.subr.mxu0 0.0
        %v1503 = vand.u32 %v269, 4294901760
        %v1504 = vsub.f32 %v269, %v1503
        %v1505 = vand.u32 %v1504, 4294901760
        %v1506 = vsub.f32 %v1504, %v1505
        %v1507 = vand.u32 %v1506, 4294901760
        %1508 = vmatpush1.msra.mxu0 %v1507
        %1509 = vmatprep.subr.mxu0 0.0
        %v1510 = vand.u32 %v268, 4294901760
        %v1511 = vsub.f32 %v268, %v1510
        %v1512 = vand.u32 %v1511, 4294901760
        %v1513 = vsub.f32 %v1511, %v1512
        %v1514 = vand.u32 %v1513, 4294901760
        %1515 = vmatpush1.msra.mxu0 %v1514
        %1516 = vmatprep.subr.mxu0 0.0
        %v1517 = vand.u32 %v267, 4294901760
        %v1518 = vsub.f32 %v267, %v1517
        %v1519 = vand.u32 %v1518, 4294901760
        %v1520 = vsub.f32 %v1518, %v1519
        %v1521 = vand.u32 %v1520, 4294901760
        %1522 = vmatpush1.msra.mxu0 %v1521
        %1523 = vmatprep.subr.mxu0 0.0
        %v1524 = vand.u32 %v266, 4294901760
        %v1525 = vsub.f32 %v266, %v1524
        %v1526 = vand.u32 %v1525, 4294901760
        %v1527 = vsub.f32 %v1525, %v1526
        %v1528 = vand.u32 %v1527, 4294901760
        %1529 = vmatpush1.msra.mxu0 %v1528
        %1530 = vmatprep.subr.mxu0 0.0
        %v1531 = vand.u32 %v265, 4294901760
        %v1532 = vsub.f32 %v265, %v1531
        %v1533 = vand.u32 %v1532, 4294901760
        %v1534 = vsub.f32 %v1532, %v1533
        %v1535 = vand.u32 %v1534, 4294901760
        %1536 = vmatpush1.msra.mxu0 %v1535
        %1537 = vmatprep.subr.mxu0 0.0
        %v1538 = vand.u32 %v264, 4294901760
        %v1539 = vsub.f32 %v264, %v1538
        %v1540 = vand.u32 %v1539, 4294901760
        %v1541 = vsub.f32 %v1539, %v1540
        %v1542 = vand.u32 %v1541, 4294901760
        %1543 = vmatpush1.msra.mxu0 %v1542
        %1544 = vmatprep.subr.mxu0 0.0
        %v1545 = vand.u32 %v263, 4294901760
        %v1546 = vsub.f32 %v263, %v1545
        %v1547 = vand.u32 %v1546, 4294901760
        %v1548 = vsub.f32 %v1546, %v1547
        %v1549 = vand.u32 %v1548, 4294901760
        %1550 = vmatpush1.msra.mxu0 %v1549
        %1551 = vmatprep.subr.mxu0 0.0
        %v1552 = vand.u32 %v262, 4294901760
        %v1553 = vsub.f32 %v262, %v1552
        %v1554 = vand.u32 %v1553, 4294901760
        %v1555 = vsub.f32 %v1553, %v1554
        %v1556 = vand.u32 %v1555, 4294901760
        %1557 = vmatpush1.msra.mxu0 %v1556
        %1558 = vmatprep.subr.mxu0 0.0
        %v1559 = vand.u32 %v261, 4294901760
        %v1560 = vsub.f32 %v261, %v1559
        %v1561 = vand.u32 %v1560, 4294901760
        %v1562 = vsub.f32 %v1560, %v1561
        %v1563 = vand.u32 %v1562, 4294901760
        %1564 = vmatpush1.msra.mxu0 %v1563
        %1565 = vmatprep.subr.mxu0 0.0
        %v1566 = vand.u32 %v260, 4294901760
        %v1567 = vsub.f32 %v260, %v1566
        %v1568 = vand.u32 %v1567, 4294901760
        %v1569 = vsub.f32 %v1567, %v1568
        %v1570 = vand.u32 %v1569, 4294901760
        %1571 = vmatpush1.msra.mxu0 %v1570
        %1572 = vmatprep.subr.mxu0 0.0
        %v1573 = vand.u32 %v259, 4294901760
        %v1574 = vsub.f32 %v259, %v1573
        %v1575 = vand.u32 %v1574, 4294901760
        %v1576 = vsub.f32 %v1574, %v1575
        %v1577 = vand.u32 %v1576, 4294901760
        %1578 = vmatpush1.msra.mxu0 %v1577
        %1579 = vmatprep.subr.mxu0 0.0
        %v1580 = vand.u32 %v258, 4294901760
        %v1581 = vsub.f32 %v258, %v1580
        %v1582 = vand.u32 %v1581, 4294901760
        %v1583 = vsub.f32 %v1581, %v1582
        %v1584 = vand.u32 %v1583, 4294901760
        %1585 = vmatpush1.msra.mxu0 %v1584
        %1586 = vmatprep.subr.mxu0 0.0
        %v1587 = vand.u32 %v257, 4294901760
        %v1588 = vsub.f32 %v257, %v1587
        %v1589 = vand.u32 %v1588, 4294901760
        %v1590 = vsub.f32 %v1588, %v1589
        %v1591 = vand.u32 %v1590, 4294901760
        %1592 = vmatpush1.msra.mxu0 %v1591
        %1593 = vmatprep.subr.mxu0 0.0
        %v1594 = vand.u32 %v256, 4294901760
        %v1595 = vsub.f32 %v256, %v1594
        %v1596 = vand.u32 %v1595, 4294901760
        %v1597 = vsub.f32 %v1595, %v1596
        %v1598 = vand.u32 %v1597, 4294901760
        %1599 = vmatpush1.msra.mxu0 %v1598
        %1600 = vmatprep.subr.mxu0 0.0
        %v1601 = vand.u32 %v255, 4294901760
        %v1602 = vsub.f32 %v255, %v1601
        %v1603 = vand.u32 %v1602, 4294901760
        %v1604 = vsub.f32 %v1602, %v1603
        %v1605 = vand.u32 %v1604, 4294901760
        %1606 = vmatpush1.msra.mxu0 %v1605
        %1607 = vmatprep.subr.mxu0 0.0
        %v1608 = vand.u32 %v254, 4294901760
        %v1609 = vsub.f32 %v254, %v1608
        %v1610 = vand.u32 %v1609, 4294901760
        %v1611 = vsub.f32 %v1609, %v1610
        %v1612 = vand.u32 %v1611, 4294901760
        %1613 = vmatpush1.msra.mxu0 %v1612
        %1614 = vmatprep.subr.mxu0 0.0
        %v1615 = vand.u32 %v285, 4294901760
        %v1616 = vsub.f32 %v285, %v1615
        %v1617 = vand.u32 %v1616, 4294901760
        %v1618 = vsub.f32 %v1616, %v1617
        %v1619 = vand.u32 %v1618, 4294901760
        %1620 = vmatpush2.msra.mxu0 %v1619
        %1621 = vmatprep.subr.mxu0 0.0
        %v1622 = vand.u32 %v284, 4294901760
        %v1623 = vsub.f32 %v284, %v1622
        %v1624 = vand.u32 %v1623, 4294901760
        %v1625 = vsub.f32 %v1623, %v1624
        %v1626 = vand.u32 %v1625, 4294901760
        %1627 = vmatpush2.msra.mxu0 %v1626
        %1628 = vmatprep.subr.mxu0 0.0
        %v1629 = vand.u32 %v283, 4294901760
        %v1630 = vsub.f32 %v283, %v1629
        %v1631 = vand.u32 %v1630, 4294901760
        %v1632 = vsub.f32 %v1630, %v1631
        %v1633 = vand.u32 %v1632, 4294901760
        %1634 = vmatpush2.msra.mxu0 %v1633
        %1635 = vmatprep.subr.mxu0 0.0
        %v1636 = vand.u32 %v282, 4294901760
        %v1637 = vsub.f32 %v282, %v1636
        %v1638 = vand.u32 %v1637, 4294901760
        %v1639 = vsub.f32 %v1637, %v1638
        %v1640 = vand.u32 %v1639, 4294901760
        %1641 = vmatpush2.msra.mxu0 %v1640
        %1642 = vmatprep.subr.mxu0 0.0
        %v1643 = vand.u32 %v281, 4294901760
        %v1644 = vsub.f32 %v281, %v1643
        %v1645 = vand.u32 %v1644, 4294901760
        %v1646 = vsub.f32 %v1644, %v1645
        %v1647 = vand.u32 %v1646, 4294901760
        %1648 = vmatpush2.msra.mxu0 %v1647
        %1649 = vmatprep.subr.mxu0 0.0
        %v1650 = vand.u32 %v280, 4294901760
        %v1651 = vsub.f32 %v280, %v1650
        %v1652 = vand.u32 %v1651, 4294901760
        %v1653 = vsub.f32 %v1651, %v1652
        %v1654 = vand.u32 %v1653, 4294901760
        %1655 = vmatpush2.msra.mxu0 %v1654
        %1656 = vmatprep.subr.mxu0 0.0
        %v1657 = vand.u32 %v279, 4294901760
        %v1658 = vsub.f32 %v279, %v1657
        %v1659 = vand.u32 %v1658, 4294901760
        %v1660 = vsub.f32 %v1658, %v1659
        %v1661 = vand.u32 %v1660, 4294901760
        %1662 = vmatpush2.msra.mxu0 %v1661
        %1663 = vmatprep.subr.mxu0 0.0
        %v1664 = vand.u32 %v278, 4294901760
        %v1665 = vsub.f32 %v278, %v1664
        %v1666 = vand.u32 %v1665, 4294901760
        %v1667 = vsub.f32 %v1665, %v1666
        %v1668 = vand.u32 %v1667, 4294901760
        %1669 = vmatpush2.msra.mxu0 %v1668
        %1670 = vmatprep.subr.mxu0 0.0
        %v1671 = vand.u32 %v277, 4294901760
        %v1672 = vsub.f32 %v277, %v1671
        %v1673 = vand.u32 %v1672, 4294901760
        %v1674 = vsub.f32 %v1672, %v1673
        %v1675 = vand.u32 %v1674, 4294901760
        %1676 = vmatpush2.msra.mxu0 %v1675
        %1677 = vmatprep.subr.mxu0 0.0
        %v1678 = vand.u32 %v276, 4294901760
        %v1679 = vsub.f32 %v276, %v1678
        %v1680 = vand.u32 %v1679, 4294901760
        %v1681 = vsub.f32 %v1679, %v1680
        %v1682 = vand.u32 %v1681, 4294901760
        %1683 = vmatpush2.msra.mxu0 %v1682
        %1684 = vmatprep.subr.mxu0 0.0
        %v1685 = vand.u32 %v275, 4294901760
        %v1686 = vsub.f32 %v275, %v1685
        %v1687 = vand.u32 %v1686, 4294901760
        %v1688 = vsub.f32 %v1686, %v1687
        %v1689 = vand.u32 %v1688, 4294901760
        %1690 = vmatpush2.msra.mxu0 %v1689
        %1691 = vmatprep.subr.mxu0 0.0
        %v1692 = vand.u32 %v274, 4294901760
        %v1693 = vsub.f32 %v274, %v1692
        %v1694 = vand.u32 %v1693, 4294901760
        %v1695 = vsub.f32 %v1693, %v1694
        %v1696 = vand.u32 %v1695, 4294901760
        %1697 = vmatpush2.msra.mxu0 %v1696
        %1698 = vmatprep.subr.mxu0 0.0
        %v1699 = vand.u32 %v273, 4294901760
        %v1700 = vsub.f32 %v273, %v1699
        %v1701 = vand.u32 %v1700, 4294901760
        %v1702 = vsub.f32 %v1700, %v1701
        %v1703 = vand.u32 %v1702, 4294901760
        %1704 = vmatpush2.msra.mxu0 %v1703
        %1705 = vmatprep.subr.mxu0 0.0
        %v1706 = vand.u32 %v272, 4294901760
        %v1707 = vsub.f32 %v272, %v1706
        %v1708 = vand.u32 %v1707, 4294901760
        %v1709 = vsub.f32 %v1707, %v1708
        %v1710 = vand.u32 %v1709, 4294901760
        %1711 = vmatpush2.msra.mxu0 %v1710
        %1712 = vmatprep.subr.mxu0 0.0
        %v1713 = vand.u32 %v271, 4294901760
        %v1714 = vsub.f32 %v271, %v1713
        %v1715 = vand.u32 %v1714, 4294901760
        %v1716 = vsub.f32 %v1714, %v1715
        %v1717 = vand.u32 %v1716, 4294901760
        %1718 = vmatpush2.msra.mxu0 %v1717
        %1719 = vmatprep.subr.mxu0 0.0
        %v1720 = vand.u32 %v270, 4294901760
        %v1721 = vsub.f32 %v270, %v1720
        %v1722 = vand.u32 %v1721, 4294901760
        %v1723 = vsub.f32 %v1721, %v1722
        %v1724 = vand.u32 %v1723, 4294901760
        %1725 = vmatpush2.msra.mxu0 %v1724
        %v1726 = vand.u32 %v206, 4294901760
        %1727 = vmatprep.mubr.f32.mxu0 %v1726
        %v1728 = vand.u32 %v205, 4294901760
        %1729 = vmatmul.mubr.f32.gmra.mxu0 %v1728
        %v1730 = vpop.f32.mrf.mxu0
        %v1731 = vadd.f32 %v1499, %v1730
        %v1732 = vpop.f32.mrf.mxu0
        %1733 = vdwg.mxu0
        %1734 = vmatprep.subr.mxu0 0.0
        %v1735 = vand.u32 %v269, 4294901760
        %v1736 = vsub.f32 %v269, %v1735
        %1737 = vmatpush1.msra.mxu0 %v1736
        %1738 = vmatprep.subr.mxu0 0.0
        %v1739 = vand.u32 %v268, 4294901760
        %v1740 = vsub.f32 %v268, %v1739
        %1741 = vmatpush1.msra.mxu0 %v1740
        %1742 = vmatprep.subr.mxu0 0.0
        %v1743 = vand.u32 %v267, 4294901760
        %v1744 = vsub.f32 %v267, %v1743
        %1745 = vmatpush1.msra.mxu0 %v1744
        %1746 = vmatprep.subr.mxu0 0.0
        %v1747 = vand.u32 %v266, 4294901760
        %v1748 = vsub.f32 %v266, %v1747
        %1749 = vmatpush1.msra.mxu0 %v1748
        %1750 = vmatprep.subr.mxu0 0.0
        %v1751 = vand.u32 %v265, 4294901760
        %v1752 = vsub.f32 %v265, %v1751
        %1753 = vmatpush1.msra.mxu0 %v1752
        %1754 = vmatprep.subr.mxu0 0.0
        %v1755 = vand.u32 %v264, 4294901760
        %v1756 = vsub.f32 %v264, %v1755
        %1757 = vmatpush1.msra.mxu0 %v1756
        %1758 = vmatprep.subr.mxu0 0.0
        %v1759 = vand.u32 %v263, 4294901760
        %v1760 = vsub.f32 %v263, %v1759
        %1761 = vmatpush1.msra.mxu0 %v1760
        %1762 = vmatprep.subr.mxu0 0.0
        %v1763 = vand.u32 %v262, 4294901760
        %v1764 = vsub.f32 %v262, %v1763
        %1765 = vmatpush1.msra.mxu0 %v1764
        %1766 = vmatprep.subr.mxu0 0.0
        %v1767 = vand.u32 %v261, 4294901760
        %v1768 = vsub.f32 %v261, %v1767
        %1769 = vmatpush1.msra.mxu0 %v1768
        %1770 = vmatprep.subr.mxu0 0.0
        %v1771 = vand.u32 %v260, 4294901760
        %v1772 = vsub.f32 %v260, %v1771
        %1773 = vmatpush1.msra.mxu0 %v1772
        %1774 = vmatprep.subr.mxu0 0.0
        %v1775 = vand.u32 %v259, 4294901760
        %v1776 = vsub.f32 %v259, %v1775
        %1777 = vmatpush1.msra.mxu0 %v1776
        %1778 = vmatprep.subr.mxu0 0.0
        %v1779 = vand.u32 %v258, 4294901760
        %v1780 = vsub.f32 %v258, %v1779
        %1781 = vmatpush1.msra.mxu0 %v1780
        %1782 = vmatprep.subr.mxu0 0.0
        %v1783 = vand.u32 %v257, 4294901760
        %v1784 = vsub.f32 %v257, %v1783
        %1785 = vmatpush1.msra.mxu0 %v1784
        %1786 = vmatprep.subr.mxu0 0.0
        %v1787 = vand.u32 %v256, 4294901760
        %v1788 = vsub.f32 %v256, %v1787
        %1789 = vmatpush1.msra.mxu0 %v1788
        %1790 = vmatprep.subr.mxu0 0.0
        %v1791 = vand.u32 %v255, 4294901760
        %v1792 = vsub.f32 %v255, %v1791
        %1793 = vmatpush1.msra.mxu0 %v1792
        %1794 = vmatprep.subr.mxu0 0.0
        %v1795 = vand.u32 %v254, 4294901760
        %v1796 = vsub.f32 %v254, %v1795
        %1797 = vmatpush1.msra.mxu0 %v1796
        %1798 = vmatprep.subr.mxu0 0.0
        %v1799 = vand.u32 %v285, 4294901760
        %v1800 = vsub.f32 %v285, %v1799
        %1801 = vmatpush2.msra.mxu0 %v1800
        %1802 = vmatprep.subr.mxu0 0.0
        %v1803 = vand.u32 %v284, 4294901760
        %v1804 = vsub.f32 %v284, %v1803
        %1805 = vmatpush2.msra.mxu0 %v1804
        %1806 = vmatprep.subr.mxu0 0.0
        %v1807 = vand.u32 %v283, 4294901760
        %v1808 = vsub.f32 %v283, %v1807
        %1809 = vmatpush2.msra.mxu0 %v1808
        %1810 = vmatprep.subr.mxu0 0.0
        %v1811 = vand.u32 %v282, 4294901760
        %v1812 = vsub.f32 %v282, %v1811
        %1813 = vmatpush2.msra.mxu0 %v1812
        %1814 = vmatprep.subr.mxu0 0.0
        %v1815 = vand.u32 %v281, 4294901760
        %v1816 = vsub.f32 %v281, %v1815
        %1817 = vmatpush2.msra.mxu0 %v1816
        %1818 = vmatprep.subr.mxu0 0.0
        %v1819 = vand.u32 %v280, 4294901760
        %v1820 = vsub.f32 %v280, %v1819
        %1821 = vmatpush2.msra.mxu0 %v1820
        %1822 = vmatprep.subr.mxu0 0.0
        %v1823 = vand.u32 %v279, 4294901760
        %v1824 = vsub.f32 %v279, %v1823
        %1825 = vmatpush2.msra.mxu0 %v1824
        %1826 = vmatprep.subr.mxu0 0.0
        %v1827 = vand.u32 %v278, 4294901760
        %v1828 = vsub.f32 %v278, %v1827
        %1829 = vmatpush2.msra.mxu0 %v1828
        %1830 = vmatprep.subr.mxu0 0.0
        %v1831 = vand.u32 %v277, 4294901760
        %v1832 = vsub.f32 %v277, %v1831
        %1833 = vmatpush2.msra.mxu0 %v1832
        %1834 = vmatprep.subr.mxu0 0.0
        %v1835 = vand.u32 %v276, 4294901760
        %v1836 = vsub.f32 %v276, %v1835
        %1837 = vmatpush2.msra.mxu0 %v1836
        %1838 = vmatprep.subr.mxu0 0.0
        %v1839 = vand.u32 %v275, 4294901760
        %v1840 = vsub.f32 %v275, %v1839
        %1841 = vmatpush2.msra.mxu0 %v1840
        %1842 = vmatprep.subr.mxu0 0.0
        %v1843 = vand.u32 %v274, 4294901760
        %v1844 = vsub.f32 %v274, %v1843
        %1845 = vmatpush2.msra.mxu0 %v1844
        %1846 = vmatprep.subr.mxu0 0.0
        %v1847 = vand.u32 %v273, 4294901760
        %v1848 = vsub.f32 %v273, %v1847
        %1849 = vmatpush2.msra.mxu0 %v1848
        %1850 = vmatprep.subr.mxu0 0.0
        %v1851 = vand.u32 %v272, 4294901760
        %v1852 = vsub.f32 %v272, %v1851
        %1853 = vmatpush2.msra.mxu0 %v1852
        %1854 = vmatprep.subr.mxu0 0.0
        %v1855 = vand.u32 %v271, 4294901760
        %v1856 = vsub.f32 %v271, %v1855
        %1857 = vmatpush2.msra.mxu0 %v1856
        %1858 = vmatprep.subr.mxu0 0.0
        %v1859 = vand.u32 %v270, 4294901760
        %v1860 = vsub.f32 %v270, %v1859
        %1861 = vmatpush2.msra.mxu0 %v1860
        %v1862 = vand.u32 %v206, 4294901760
        %v1863 = vsub.f32 %v206, %v1862
        %1864 = vmatprep.mubr.f32.mxu0 %v1863
        %v1865 = vand.u32 %v205, 4294901760
        %v1866 = vsub.f32 %v205, %v1865
        %1867 = vmatmul.mubr.f32.gmra.mxu0 %v1866
        %v1868 = vpop.f32.mrf.mxu0
        %v1869 = vadd.f32 %v1731, %v1868
        %v1870 = vpop.f32.mrf.mxu0
        %1871 = vdwg.mxu0
        %1872 = vmatprep.subr.mxu0 0.0
        %v1873 = vand.u32 %v269, 4294901760
        %1874 = vmatpush1.msra.mxu0 %v1873
        %1875 = vmatprep.subr.mxu0 0.0
        %v1876 = vand.u32 %v268, 4294901760
        %1877 = vmatpush1.msra.mxu0 %v1876
        %1878 = vmatprep.subr.mxu0 0.0
        %v1879 = vand.u32 %v267, 4294901760
        %1880 = vmatpush1.msra.mxu0 %v1879
        %1881 = vmatprep.subr.mxu0 0.0
        %v1882 = vand.u32 %v266, 4294901760
        %1883 = vmatpush1.msra.mxu0 %v1882
        %1884 = vmatprep.subr.mxu0 0.0
        %v1885 = vand.u32 %v265, 4294901760
        %1886 = vmatpush1.msra.mxu0 %v1885
        %1887 = vmatprep.subr.mxu0 0.0
        %v1888 = vand.u32 %v264, 4294901760
        %1889 = vmatpush1.msra.mxu0 %v1888
        %1890 = vmatprep.subr.mxu0 0.0
        %v1891 = vand.u32 %v263, 4294901760
        %1892 = vmatpush1.msra.mxu0 %v1891
        %1893 = vmatprep.subr.mxu0 0.0
        %v1894 = vand.u32 %v262, 4294901760
        %1895 = vmatpush1.msra.mxu0 %v1894
        %1896 = vmatprep.subr.mxu0 0.0
        %v1897 = vand.u32 %v261, 4294901760
        %1898 = vmatpush1.msra.mxu0 %v1897
        %1899 = vmatprep.subr.mxu0 0.0
        %v1900 = vand.u32 %v260, 4294901760
        %1901 = vmatpush1.msra.mxu0 %v1900
        %1902 = vmatprep.subr.mxu0 0.0
        %v1903 = vand.u32 %v259, 4294901760
        %1904 = vmatpush1.msra.mxu0 %v1903
        %1905 = vmatprep.subr.mxu0 0.0
        %v1906 = vand.u32 %v258, 4294901760
        %1907 = vmatpush1.msra.mxu0 %v1906
        %1908 = vmatprep.subr.mxu0 0.0
        %v1909 = vand.u32 %v257, 4294901760
        %1910 = vmatpush1.msra.mxu0 %v1909
        %1911 = vmatprep.subr.mxu0 0.0
        %v1912 = vand.u32 %v256, 4294901760
        %1913 = vmatpush1.msra.mxu0 %v1912
        %1914 = vmatprep.subr.mxu0 0.0
        %v1915 = vand.u32 %v255, 4294901760
        %1916 = vmatpush1.msra.mxu0 %v1915
        %1917 = vmatprep.subr.mxu0 0.0
        %v1918 = vand.u32 %v254, 4294901760
        %1919 = vmatpush1.msra.mxu0 %v1918
        %1920 = vmatprep.subr.mxu0 0.0
        %v1921 = vand.u32 %v285, 4294901760
        %1922 = vmatpush2.msra.mxu0 %v1921
        %1923 = vmatprep.subr.mxu0 0.0
        %v1924 = vand.u32 %v284, 4294901760
        %1925 = vmatpush2.msra.mxu0 %v1924
        %1926 = vmatprep.subr.mxu0 0.0
        %v1927 = vand.u32 %v283, 4294901760
        %1928 = vmatpush2.msra.mxu0 %v1927
        %1929 = vmatprep.subr.mxu0 0.0
        %v1930 = vand.u32 %v282, 4294901760
        %1931 = vmatpush2.msra.mxu0 %v1930
        %1932 = vmatprep.subr.mxu0 0.0
        %v1933 = vand.u32 %v281, 4294901760
        %1934 = vmatpush2.msra.mxu0 %v1933
        %1935 = vmatprep.subr.mxu0 0.0
        %v1936 = vand.u32 %v280, 4294901760
        %1937 = vmatpush2.msra.mxu0 %v1936
        %1938 = vmatprep.subr.mxu0 0.0
        %v1939 = vand.u32 %v279, 4294901760
        %1940 = vmatpush2.msra.mxu0 %v1939
        %1941 = vmatprep.subr.mxu0 0.0
        %v1942 = vand.u32 %v278, 4294901760
        %1943 = vmatpush2.msra.mxu0 %v1942
        %1944 = vmatprep.subr.mxu0 0.0
        %v1945 = vand.u32 %v277, 4294901760
        %1946 = vmatpush2.msra.mxu0 %v1945
        %1947 = vmatprep.subr.mxu0 0.0
        %v1948 = vand.u32 %v276, 4294901760
        %1949 = vmatpush2.msra.mxu0 %v1948
        %1950 = vmatprep.subr.mxu0 0.0
        %v1951 = vand.u32 %v275, 4294901760
        %1952 = vmatpush2.msra.mxu0 %v1951
        %1953 = vmatprep.subr.mxu0 0.0
        %v1954 = vand.u32 %v274, 4294901760
        %1955 = vmatpush2.msra.mxu0 %v1954
        %1956 = vmatprep.subr.mxu0 0.0
        %v1957 = vand.u32 %v273, 4294901760
        %1958 = vmatpush2.msra.mxu0 %v1957
        %1959 = vmatprep.subr.mxu0 0.0
        %v1960 = vand.u32 %v272, 4294901760
        %1961 = vmatpush2.msra.mxu0 %v1960
        %1962 = vmatprep.subr.mxu0 0.0
        %v1963 = vand.u32 %v271, 4294901760
        %1964 = vmatpush2.msra.mxu0 %v1963
        %1965 = vmatprep.subr.mxu0 0.0
        %v1966 = vand.u32 %v270, 4294901760
        %1967 = vmatpush2.msra.mxu0 %v1966
        %v1968 = vand.u32 %v206, 4294901760
        %v1969 = vsub.f32 %v206, %v1968
        %v1970 = vand.u32 %v1969, 4294901760
        %1971 = vmatprep.mubr.f32.mxu0 %v1970
        %v1972 = vand.u32 %v205, 4294901760
        %v1973 = vsub.f32 %v205, %v1972
        %v1974 = vand.u32 %v1973, 4294901760
        %1975 = vmatmul.mubr.f32.gmra.mxu0 %v1974
        %v1976 = vpop.f32.mrf.mxu0
        %v1977 = vadd.f32 %v1869, %v1976
        %v1978 = vpop.f32.mrf.mxu0
        %1979 = vdwg.mxu0
        %1980 = vmatprep.subr.mxu0 0.0
        %v1981 = vand.u32 %v269, 4294901760
        %v1982 = vsub.f32 %v269, %v1981
        %v1983 = vand.u32 %v1982, 4294901760
        %1984 = vmatpush1.msra.mxu0 %v1983
        %1985 = vmatprep.subr.mxu0 0.0
        %v1986 = vand.u32 %v268, 4294901760
        %v1987 = vsub.f32 %v268, %v1986
        %v1988 = vand.u32 %v1987, 4294901760
        %1989 = vmatpush1.msra.mxu0 %v1988
        %1990 = vmatprep.subr.mxu0 0.0
        %v1991 = vand.u32 %v267, 4294901760
        %v1992 = vsub.f32 %v267, %v1991
        %v1993 = vand.u32 %v1992, 4294901760
        %1994 = vmatpush1.msra.mxu0 %v1993
        %1995 = vmatprep.subr.mxu0 0.0
        %v1996 = vand.u32 %v266, 4294901760
        %v1997 = vsub.f32 %v266, %v1996
        %v1998 = vand.u32 %v1997, 4294901760
        %1999 = vmatpush1.msra.mxu0 %v1998
        %2000 = vmatprep.subr.mxu0 0.0
        %v2001 = vand.u32 %v265, 4294901760
        %v2002 = vsub.f32 %v265, %v2001
        %v2003 = vand.u32 %v2002, 4294901760
        %2004 = vmatpush1.msra.mxu0 %v2003
        %2005 = vmatprep.subr.mxu0 0.0
        %v2006 = vand.u32 %v264, 4294901760
        %v2007 = vsub.f32 %v264, %v2006
        %v2008 = vand.u32 %v2007, 4294901760
        %2009 = vmatpush1.msra.mxu0 %v2008
        %2010 = vmatprep.subr.mxu0 0.0
        %v2011 = vand.u32 %v263, 4294901760
        %v2012 = vsub.f32 %v263, %v2011
        %v2013 = vand.u32 %v2012, 4294901760
        %2014 = vmatpush1.msra.mxu0 %v2013
        %2015 = vmatprep.subr.mxu0 0.0
        %v2016 = vand.u32 %v262, 4294901760
        %v2017 = vsub.f32 %v262, %v2016
        %v2018 = vand.u32 %v2017, 4294901760
        %2019 = vmatpush1.msra.mxu0 %v2018
        %2020 = vmatprep.subr.mxu0 0.0
        %v2021 = vand.u32 %v261, 4294901760
        %v2022 = vsub.f32 %v261, %v2021
        %v2023 = vand.u32 %v2022, 4294901760
        %2024 = vmatpush1.msra.mxu0 %v2023
        %2025 = vmatprep.subr.mxu0 0.0
        %v2026 = vand.u32 %v260, 4294901760
        %v2027 = vsub.f32 %v260, %v2026
        %v2028 = vand.u32 %v2027, 4294901760
        %2029 = vmatpush1.msra.mxu0 %v2028
        %2030 = vmatprep.subr.mxu0 0.0
        %v2031 = vand.u32 %v259, 4294901760
        %v2032 = vsub.f32 %v259, %v2031
        %v2033 = vand.u32 %v2032, 4294901760
        %2034 = vmatpush1.msra.mxu0 %v2033
        %2035 = vmatprep.subr.mxu0 0.0
        %v2036 = vand.u32 %v258, 4294901760
        %v2037 = vsub.f32 %v258, %v2036
        %v2038 = vand.u32 %v2037, 4294901760
        %2039 = vmatpush1.msra.mxu0 %v2038
        %2040 = vmatprep.subr.mxu0 0.0
        %v2041 = vand.u32 %v257, 4294901760
        %v2042 = vsub.f32 %v257, %v2041
        %v2043 = vand.u32 %v2042, 4294901760
        %2044 = vmatpush1.msra.mxu0 %v2043
        %2045 = vmatprep.subr.mxu0 0.0
        %v2046 = vand.u32 %v256, 4294901760
        %v2047 = vsub.f32 %v256, %v2046
        %v2048 = vand.u32 %v2047, 4294901760
        %2049 = vmatpush1.msra.mxu0 %v2048
        %2050 = vmatprep.subr.mxu0 0.0
        %v2051 = vand.u32 %v255, 4294901760
        %v2052 = vsub.f32 %v255, %v2051
        %v2053 = vand.u32 %v2052, 4294901760
        %2054 = vmatpush1.msra.mxu0 %v2053
        %2055 = vmatprep.subr.mxu0 0.0
        %v2056 = vand.u32 %v254, 4294901760
        %v2057 = vsub.f32 %v254, %v2056
        %v2058 = vand.u32 %v2057, 4294901760
        %2059 = vmatpush1.msra.mxu0 %v2058
        %2060 = vmatprep.subr.mxu0 0.0
        %v2061 = vand.u32 %v285, 4294901760
        %v2062 = vsub.f32 %v285, %v2061
        %v2063 = vand.u32 %v2062, 4294901760
        %2064 = vmatpush2.msra.mxu0 %v2063
        %2065 = vmatprep.subr.mxu0 0.0
        %v2066 = vand.u32 %v284, 4294901760
        %v2067 = vsub.f32 %v284, %v2066
        %v2068 = vand.u32 %v2067, 4294901760
        %2069 = vmatpush2.msra.mxu0 %v2068
        %2070 = vmatprep.subr.mxu0 0.0
        %v2071 = vand.u32 %v283, 4294901760
        %v2072 = vsub.f32 %v283, %v2071
        %v2073 = vand.u32 %v2072, 4294901760
        %2074 = vmatpush2.msra.mxu0 %v2073
        %2075 = vmatprep.subr.mxu0 0.0
        %v2076 = vand.u32 %v282, 4294901760
        %v2077 = vsub.f32 %v282, %v2076
        %v2078 = vand.u32 %v2077, 4294901760
        %2079 = vmatpush2.msra.mxu0 %v2078
        %2080 = vmatprep.subr.mxu0 0.0
        %v2081 = vand.u32 %v281, 4294901760
        %v2082 = vsub.f32 %v281, %v2081
        %v2083 = vand.u32 %v2082, 4294901760
        %2084 = vmatpush2.msra.mxu0 %v2083
        %2085 = vmatprep.subr.mxu0 0.0
        %v2086 = vand.u32 %v280, 4294901760
        %v2087 = vsub.f32 %v280, %v2086
        %v2088 = vand.u32 %v2087, 4294901760
        %2089 = vmatpush2.msra.mxu0 %v2088
        %2090 = vmatprep.subr.mxu0 0.0
        %v2091 = vand.u32 %v279, 4294901760
        %v2092 = vsub.f32 %v279, %v2091
        %v2093 = vand.u32 %v2092, 4294901760
        %2094 = vmatpush2.msra.mxu0 %v2093
        %2095 = vmatprep.subr.mxu0 0.0
        %v2096 = vand.u32 %v278, 4294901760
        %v2097 = vsub.f32 %v278, %v2096
        %v2098 = vand.u32 %v2097, 4294901760
        %2099 = vmatpush2.msra.mxu0 %v2098
        %2100 = vmatprep.subr.mxu0 0.0
        %v2101 = vand.u32 %v277, 4294901760
        %v2102 = vsub.f32 %v277, %v2101
        %v2103 = vand.u32 %v2102, 4294901760
        %2104 = vmatpush2.msra.mxu0 %v2103
        %2105 = vmatprep.subr.mxu0 0.0
        %v2106 = vand.u32 %v276, 4294901760
        %v2107 = vsub.f32 %v276, %v2106
        %v2108 = vand.u32 %v2107, 4294901760
        %2109 = vmatpush2.msra.mxu0 %v2108
        %2110 = vmatprep.subr.mxu0 0.0
        %v2111 = vand.u32 %v275, 4294901760
        %v2112 = vsub.f32 %v275, %v2111
        %v2113 = vand.u32 %v2112, 4294901760
        %2114 = vmatpush2.msra.mxu0 %v2113
        %2115 = vmatprep.subr.mxu0 0.0
        %v2116 = vand.u32 %v274, 4294901760
        %v2117 = vsub.f32 %v274, %v2116
        %v2118 = vand.u32 %v2117, 4294901760
        %2119 = vmatpush2.msra.mxu0 %v2118
        %2120 = vmatprep.subr.mxu0 0.0
        %v2121 = vand.u32 %v273, 4294901760
        %v2122 = vsub.f32 %v273, %v2121
        %v2123 = vand.u32 %v2122, 4294901760
        %2124 = vmatpush2.msra.mxu0 %v2123
        %2125 = vmatprep.subr.mxu0 0.0
        %v2126 = vand.u32 %v272, 4294901760
        %v2127 = vsub.f32 %v272, %v2126
        %v2128 = vand.u32 %v2127, 4294901760
        %2129 = vmatpush2.msra.mxu0 %v2128
        %2130 = vmatprep.subr.mxu0 0.0
        %v2131 = vand.u32 %v271, 4294901760
        %v2132 = vsub.f32 %v271, %v2131
        %v2133 = vand.u32 %v2132, 4294901760
        %2134 = vmatpush2.msra.mxu0 %v2133
        %2135 = vmatprep.subr.mxu0 0.0
        %v2136 = vand.u32 %v270, 4294901760
        %v2137 = vsub.f32 %v270, %v2136
        %v2138 = vand.u32 %v2137, 4294901760
        %2139 = vmatpush2.msra.mxu0 %v2138
        %v2140 = vand.u32 %v206, 4294901760
        %2141 = vmatprep.mubr.f32.mxu0 %v2140
        %v2142 = vand.u32 %v205, 4294901760
        %2143 = vmatmul.mubr.f32.gmra.mxu0 %v2142
        %v2144 = vpop.f32.mrf.mxu0
        %v2145 = vadd.f32 %v1977, %v2144
        %v2146 = vpop.f32.mrf.mxu0
        %2147 = vdwg.mxu0
        %2148 = vmatprep.subr.mxu0 0.0
        %v2149 = vand.u32 %v269, 4294901760
        %2150 = vmatpush1.msra.mxu0 %v2149
        %2151 = vmatprep.subr.mxu0 0.0
        %v2152 = vand.u32 %v268, 4294901760
        %2153 = vmatpush1.msra.mxu0 %v2152
        %2154 = vmatprep.subr.mxu0 0.0
        %v2155 = vand.u32 %v267, 4294901760
        %2156 = vmatpush1.msra.mxu0 %v2155
        %2157 = vmatprep.subr.mxu0 0.0
        %v2158 = vand.u32 %v266, 4294901760
        %2159 = vmatpush1.msra.mxu0 %v2158
        %2160 = vmatprep.subr.mxu0 0.0
        %v2161 = vand.u32 %v265, 4294901760
        %2162 = vmatpush1.msra.mxu0 %v2161
        %2163 = vmatprep.subr.mxu0 0.0
        %v2164 = vand.u32 %v264, 4294901760
        %2165 = vmatpush1.msra.mxu0 %v2164
        %2166 = vmatprep.subr.mxu0 0.0
        %v2167 = vand.u32 %v263, 4294901760
        %2168 = vmatpush1.msra.mxu0 %v2167
        %2169 = vmatprep.subr.mxu0 0.0
        %v2170 = vand.u32 %v262, 4294901760
        %2171 = vmatpush1.msra.mxu0 %v2170
        %2172 = vmatprep.subr.mxu0 0.0
        %v2173 = vand.u32 %v261, 4294901760
        %2174 = vmatpush1.msra.mxu0 %v2173
        %2175 = vmatprep.subr.mxu0 0.0
        %v2176 = vand.u32 %v260, 4294901760
        %2177 = vmatpush1.msra.mxu0 %v2176
        %2178 = vmatprep.subr.mxu0 0.0
        %v2179 = vand.u32 %v259, 4294901760
        %2180 = vmatpush1.msra.mxu0 %v2179
        %2181 = vmatprep.subr.mxu0 0.0
        %v2182 = vand.u32 %v258, 4294901760
        %2183 = vmatpush1.msra.mxu0 %v2182
        %2184 = vmatprep.subr.mxu0 0.0
        %v2185 = vand.u32 %v257, 4294901760
        %2186 = vmatpush1.msra.mxu0 %v2185
        %2187 = vmatprep.subr.mxu0 0.0
        %v2188 = vand.u32 %v256, 4294901760
        %2189 = vmatpush1.msra.mxu0 %v2188
        %2190 = vmatprep.subr.mxu0 0.0
        %v2191 = vand.u32 %v255, 4294901760
        %2192 = vmatpush1.msra.mxu0 %v2191
        %2193 = vmatprep.subr.mxu0 0.0
        %v2194 = vand.u32 %v254, 4294901760
        %2195 = vmatpush1.msra.mxu0 %v2194
        %2196 = vmatprep.subr.mxu0 0.0
        %v2197 = vand.u32 %v285, 4294901760
        %2198 = vmatpush2.msra.mxu0 %v2197
        %2199 = vmatprep.subr.mxu0 0.0
        %v2200 = vand.u32 %v284, 4294901760
        %2201 = vmatpush2.msra.mxu0 %v2200
        %2202 = vmatprep.subr.mxu0 0.0
        %v2203 = vand.u32 %v283, 4294901760
        %2204 = vmatpush2.msra.mxu0 %v2203
        %2205 = vmatprep.subr.mxu0 0.0
        %v2206 = vand.u32 %v282, 4294901760
        %2207 = vmatpush2.msra.mxu0 %v2206
        %2208 = vmatprep.subr.mxu0 0.0
        %v2209 = vand.u32 %v281, 4294901760
        %2210 = vmatpush2.msra.mxu0 %v2209
        %2211 = vmatprep.subr.mxu0 0.0
        %v2212 = vand.u32 %v280, 4294901760
        %2213 = vmatpush2.msra.mxu0 %v2212
        %2214 = vmatprep.subr.mxu0 0.0
        %v2215 = vand.u32 %v279, 4294901760
        %2216 = vmatpush2.msra.mxu0 %v2215
        %2217 = vmatprep.subr.mxu0 0.0
        %v2218 = vand.u32 %v278, 4294901760
        %2219 = vmatpush2.msra.mxu0 %v2218
        %2220 = vmatprep.subr.mxu0 0.0
        %v2221 = vand.u32 %v277, 4294901760
        %2222 = vmatpush2.msra.mxu0 %v2221
        %2223 = vmatprep.subr.mxu0 0.0
        %v2224 = vand.u32 %v276, 4294901760
        %2225 = vmatpush2.msra.mxu0 %v2224
        %2226 = vmatprep.subr.mxu0 0.0
        %v2227 = vand.u32 %v275, 4294901760
        %2228 = vmatpush2.msra.mxu0 %v2227
        %2229 = vmatprep.subr.mxu0 0.0
        %v2230 = vand.u32 %v274, 4294901760
        %2231 = vmatpush2.msra.mxu0 %v2230
        %2232 = vmatprep.subr.mxu0 0.0
        %v2233 = vand.u32 %v273, 4294901760
        %2234 = vmatpush2.msra.mxu0 %v2233
        %2235 = vmatprep.subr.mxu0 0.0
        %v2236 = vand.u32 %v272, 4294901760
        %2237 = vmatpush2.msra.mxu0 %v2236
        %2238 = vmatprep.subr.mxu0 0.0
        %v2239 = vand.u32 %v271, 4294901760
        %2240 = vmatpush2.msra.mxu0 %v2239
        %2241 = vmatprep.subr.mxu0 0.0
        %v2242 = vand.u32 %v270, 4294901760
        %2243 = vmatpush2.msra.mxu0 %v2242
        %v2244 = vand.u32 %v206, 4294901760
        %2245 = vmatprep.mubr.f32.mxu0 %v2244
        %v2246 = vand.u32 %v205, 4294901760
        %2247 = vmatmul.mubr.f32.gmra.mxu0 %v2246
        %v2248 = vpop.f32.mrf.mxu0
        %v2249 = vadd.f32 %v2145, %v2248
        %v2250 = vpop.f32.mrf.mxu0
        %2251 = vdwg.mxu0
        %2252 = vmatprep.subr.mxu0 0.0
        %v2253 = vand.u32 %v301, 4294901760
        %2254 = vmatpush1.msra.mxu0 %v2253
        %2255 = vmatprep.subr.mxu0 0.0
        %v2256 = vand.u32 %v300, 4294901760
        %2257 = vmatpush1.msra.mxu0 %v2256
        %2258 = vmatprep.subr.mxu0 0.0
        %v2259 = vand.u32 %v299, 4294901760
        %2260 = vmatpush1.msra.mxu0 %v2259
        %2261 = vmatprep.subr.mxu0 0.0
        %v2262 = vand.u32 %v298, 4294901760
        %2263 = vmatpush1.msra.mxu0 %v2262
        %2264 = vmatprep.subr.mxu0 0.0
        %v2265 = vand.u32 %v297, 4294901760
        %2266 = vmatpush1.msra.mxu0 %v2265
        %2267 = vmatprep.subr.mxu0 0.0
        %v2268 = vand.u32 %v296, 4294901760
        %2269 = vmatpush1.msra.mxu0 %v2268
        %2270 = vmatprep.subr.mxu0 0.0
        %v2271 = vand.u32 %v295, 4294901760
        %2272 = vmatpush1.msra.mxu0 %v2271
        %2273 = vmatprep.subr.mxu0 0.0
        %v2274 = vand.u32 %v294, 4294901760
        %2275 = vmatpush1.msra.mxu0 %v2274
        %2276 = vmatprep.subr.mxu0 0.0
        %v2277 = vand.u32 %v293, 4294901760
        %2278 = vmatpush1.msra.mxu0 %v2277
        %2279 = vmatprep.subr.mxu0 0.0
        %v2280 = vand.u32 %v292, 4294901760
        %2281 = vmatpush1.msra.mxu0 %v2280
        %2282 = vmatprep.subr.mxu0 0.0
        %v2283 = vand.u32 %v291, 4294901760
        %2284 = vmatpush1.msra.mxu0 %v2283
        %2285 = vmatprep.subr.mxu0 0.0
        %v2286 = vand.u32 %v290, 4294901760
        %2287 = vmatpush1.msra.mxu0 %v2286
        %2288 = vmatprep.subr.mxu0 0.0
        %v2289 = vand.u32 %v289, 4294901760
        %2290 = vmatpush1.msra.mxu0 %v2289
        %2291 = vmatprep.subr.mxu0 0.0
        %v2292 = vand.u32 %v288, 4294901760
        %2293 = vmatpush1.msra.mxu0 %v2292
        %2294 = vmatprep.subr.mxu0 0.0
        %v2295 = vand.u32 %v287, 4294901760
        %2296 = vmatpush1.msra.mxu0 %v2295
        %2297 = vmatprep.subr.mxu0 0.0
        %v2298 = vand.u32 %v286, 4294901760
        %2299 = vmatpush1.msra.mxu0 %v2298
        %2300 = vmatprep.subr.mxu0 0.0
        %v2301 = vand.u32 %v317, 4294901760
        %2302 = vmatpush2.msra.mxu0 %v2301
        %2303 = vmatprep.subr.mxu0 0.0
        %v2304 = vand.u32 %v316, 4294901760
        %2305 = vmatpush2.msra.mxu0 %v2304
        %2306 = vmatprep.subr.mxu0 0.0
        %v2307 = vand.u32 %v315, 4294901760
        %2308 = vmatpush2.msra.mxu0 %v2307
        %2309 = vmatprep.subr.mxu0 0.0
        %v2310 = vand.u32 %v314, 4294901760
        %2311 = vmatpush2.msra.mxu0 %v2310
        %2312 = vmatprep.subr.mxu0 0.0
        %v2313 = vand.u32 %v313, 4294901760
        %2314 = vmatpush2.msra.mxu0 %v2313
        %2315 = vmatprep.subr.mxu0 0.0
        %v2316 = vand.u32 %v312, 4294901760
        %2317 = vmatpush2.msra.mxu0 %v2316
        %2318 = vmatprep.subr.mxu0 0.0
        %v2319 = vand.u32 %v311, 4294901760
        %2320 = vmatpush2.msra.mxu0 %v2319
        %2321 = vmatprep.subr.mxu0 0.0
        %v2322 = vand.u32 %v310, 4294901760
        %2323 = vmatpush2.msra.mxu0 %v2322
        %2324 = vmatprep.subr.mxu0 0.0
        %v2325 = vand.u32 %v309, 4294901760
        %2326 = vmatpush2.msra.mxu0 %v2325
        %2327 = vmatprep.subr.mxu0 0.0
        %v2328 = vand.u32 %v308, 4294901760
        %2329 = vmatpush2.msra.mxu0 %v2328
        %2330 = vmatprep.subr.mxu0 0.0
        %v2331 = vand.u32 %v307, 4294901760
        %2332 = vmatpush2.msra.mxu0 %v2331
        %2333 = vmatprep.subr.mxu0 0.0
        %v2334 = vand.u32 %v306, 4294901760
        %2335 = vmatpush2.msra.mxu0 %v2334
        %2336 = vmatprep.subr.mxu0 0.0
        %v2337 = vand.u32 %v305, 4294901760
        %2338 = vmatpush2.msra.mxu0 %v2337
        %2339 = vmatprep.subr.mxu0 0.0
        %v2340 = vand.u32 %v304, 4294901760
        %2341 = vmatpush2.msra.mxu0 %v2340
        %2342 = vmatprep.subr.mxu0 0.0
        %v2343 = vand.u32 %v303, 4294901760
        %2344 = vmatpush2.msra.mxu0 %v2343
        %2345 = vmatprep.subr.mxu0 0.0
        %v2346 = vand.u32 %v302, 4294901760
        %2347 = vmatpush2.msra.mxu0 %v2346
        %v2348 = vand.u32 %v208, 4294901760
        %v2349 = vsub.f32 %v208, %v2348
        %v2350 = vand.u32 %v2349, 4294901760
        %v2351 = vsub.f32 %v2349, %v2350
        %v2352 = vand.u32 %v2351, 4294901760
        %2353 = vmatprep.mubr.f32.mxu0 %v2352
        %v2354 = vand.u32 %v207, 4294901760
        %v2355 = vsub.f32 %v207, %v2354
        %v2356 = vand.u32 %v2355, 4294901760
        %v2357 = vsub.f32 %v2355, %v2356
        %v2358 = vand.u32 %v2357, 4294901760
        %2359 = vmatmul.mubr.f32.gmra.mxu0 %v2358
        %v2360 = vpop.f32.mrf.mxu0
        %v2361 = vadd.f32 %v2249, %v2360
        %v2362 = vpop.f32.mrf.mxu0
        %2363 = vdwg.mxu0
        %2364 = vmatprep.subr.mxu0 0.0
        %v2365 = vand.u32 %v301, 4294901760
        %v2366 = vsub.f32 %v301, %v2365
        %v2367 = vand.u32 %v2366, 4294901760
        %v2368 = vsub.f32 %v2366, %v2367
        %v2369 = vand.u32 %v2368, 4294901760
        %2370 = vmatpush1.msra.mxu0 %v2369
        %2371 = vmatprep.subr.mxu0 0.0
        %v2372 = vand.u32 %v300, 4294901760
        %v2373 = vsub.f32 %v300, %v2372
        %v2374 = vand.u32 %v2373, 4294901760
        %v2375 = vsub.f32 %v2373, %v2374
        %v2376 = vand.u32 %v2375, 4294901760
        %2377 = vmatpush1.msra.mxu0 %v2376
        %2378 = vmatprep.subr.mxu0 0.0
        %v2379 = vand.u32 %v299, 4294901760
        %v2380 = vsub.f32 %v299, %v2379
        %v2381 = vand.u32 %v2380, 4294901760
        %v2382 = vsub.f32 %v2380, %v2381
        %v2383 = vand.u32 %v2382, 4294901760
        %2384 = vmatpush1.msra.mxu0 %v2383
        %2385 = vmatprep.subr.mxu0 0.0
        %v2386 = vand.u32 %v298, 4294901760
        %v2387 = vsub.f32 %v298, %v2386
        %v2388 = vand.u32 %v2387, 4294901760
        %v2389 = vsub.f32 %v2387, %v2388
        %v2390 = vand.u32 %v2389, 4294901760
        %2391 = vmatpush1.msra.mxu0 %v2390
        %2392 = vmatprep.subr.mxu0 0.0
        %v2393 = vand.u32 %v297, 4294901760
        %v2394 = vsub.f32 %v297, %v2393
        %v2395 = vand.u32 %v2394, 4294901760
        %v2396 = vsub.f32 %v2394, %v2395
        %v2397 = vand.u32 %v2396, 4294901760
        %2398 = vmatpush1.msra.mxu0 %v2397
        %2399 = vmatprep.subr.mxu0 0.0
        %v2400 = vand.u32 %v296, 4294901760
        %v2401 = vsub.f32 %v296, %v2400
        %v2402 = vand.u32 %v2401, 4294901760
        %v2403 = vsub.f32 %v2401, %v2402
        %v2404 = vand.u32 %v2403, 4294901760
        %2405 = vmatpush1.msra.mxu0 %v2404
        %2406 = vmatprep.subr.mxu0 0.0
        %v2407 = vand.u32 %v295, 4294901760
        %v2408 = vsub.f32 %v295, %v2407
        %v2409 = vand.u32 %v2408, 4294901760
        %v2410 = vsub.f32 %v2408, %v2409
        %v2411 = vand.u32 %v2410, 4294901760
        %2412 = vmatpush1.msra.mxu0 %v2411
        %2413 = vmatprep.subr.mxu0 0.0
        %v2414 = vand.u32 %v294, 4294901760
        %v2415 = vsub.f32 %v294, %v2414
        %v2416 = vand.u32 %v2415, 4294901760
        %v2417 = vsub.f32 %v2415, %v2416
        %v2418 = vand.u32 %v2417, 4294901760
        %2419 = vmatpush1.msra.mxu0 %v2418
        %2420 = vmatprep.subr.mxu0 0.0
        %v2421 = vand.u32 %v293, 4294901760
        %v2422 = vsub.f32 %v293, %v2421
        %v2423 = vand.u32 %v2422, 4294901760
        %v2424 = vsub.f32 %v2422, %v2423
        %v2425 = vand.u32 %v2424, 4294901760
        %2426 = vmatpush1.msra.mxu0 %v2425
        %2427 = vmatprep.subr.mxu0 0.0
        %v2428 = vand.u32 %v292, 4294901760
        %v2429 = vsub.f32 %v292, %v2428
        %v2430 = vand.u32 %v2429, 4294901760
        %v2431 = vsub.f32 %v2429, %v2430
        %v2432 = vand.u32 %v2431, 4294901760
        %2433 = vmatpush1.msra.mxu0 %v2432
        %2434 = vmatprep.subr.mxu0 0.0
        %v2435 = vand.u32 %v291, 4294901760
        %v2436 = vsub.f32 %v291, %v2435
        %v2437 = vand.u32 %v2436, 4294901760
        %v2438 = vsub.f32 %v2436, %v2437
        %v2439 = vand.u32 %v2438, 4294901760
        %2440 = vmatpush1.msra.mxu0 %v2439
        %2441 = vmatprep.subr.mxu0 0.0
        %v2442 = vand.u32 %v290, 4294901760
        %v2443 = vsub.f32 %v290, %v2442
        %v2444 = vand.u32 %v2443, 4294901760
        %v2445 = vsub.f32 %v2443, %v2444
        %v2446 = vand.u32 %v2445, 4294901760
        %2447 = vmatpush1.msra.mxu0 %v2446
        %2448 = vmatprep.subr.mxu0 0.0
        %v2449 = vand.u32 %v289, 4294901760
        %v2450 = vsub.f32 %v289, %v2449
        %v2451 = vand.u32 %v2450, 4294901760
        %v2452 = vsub.f32 %v2450, %v2451
        %v2453 = vand.u32 %v2452, 4294901760
        %2454 = vmatpush1.msra.mxu0 %v2453
        %2455 = vmatprep.subr.mxu0 0.0
        %v2456 = vand.u32 %v288, 4294901760
        %v2457 = vsub.f32 %v288, %v2456
        %v2458 = vand.u32 %v2457, 4294901760
        %v2459 = vsub.f32 %v2457, %v2458
        %v2460 = vand.u32 %v2459, 4294901760
        %2461 = vmatpush1.msra.mxu0 %v2460
        %2462 = vmatprep.subr.mxu0 0.0
        %v2463 = vand.u32 %v287, 4294901760
        %v2464 = vsub.f32 %v287, %v2463
        %v2465 = vand.u32 %v2464, 4294901760
        %v2466 = vsub.f32 %v2464, %v2465
        %v2467 = vand.u32 %v2466, 4294901760
        %2468 = vmatpush1.msra.mxu0 %v2467
        %2469 = vmatprep.subr.mxu0 0.0
        %v2470 = vand.u32 %v286, 4294901760
        %v2471 = vsub.f32 %v286, %v2470
        %v2472 = vand.u32 %v2471, 4294901760
        %v2473 = vsub.f32 %v2471, %v2472
        %v2474 = vand.u32 %v2473, 4294901760
        %2475 = vmatpush1.msra.mxu0 %v2474
        %2476 = vmatprep.subr.mxu0 0.0
        %v2477 = vand.u32 %v317, 4294901760
        %v2478 = vsub.f32 %v317, %v2477
        %v2479 = vand.u32 %v2478, 4294901760
        %v2480 = vsub.f32 %v2478, %v2479
        %v2481 = vand.u32 %v2480, 4294901760
        %2482 = vmatpush2.msra.mxu0 %v2481
        %2483 = vmatprep.subr.mxu0 0.0
        %v2484 = vand.u32 %v316, 4294901760
        %v2485 = vsub.f32 %v316, %v2484
        %v2486 = vand.u32 %v2485, 4294901760
        %v2487 = vsub.f32 %v2485, %v2486
        %v2488 = vand.u32 %v2487, 4294901760
        %2489 = vmatpush2.msra.mxu0 %v2488
        %2490 = vmatprep.subr.mxu0 0.0
        %v2491 = vand.u32 %v315, 4294901760
        %v2492 = vsub.f32 %v315, %v2491
        %v2493 = vand.u32 %v2492, 4294901760
        %v2494 = vsub.f32 %v2492, %v2493
        %v2495 = vand.u32 %v2494, 4294901760
        %2496 = vmatpush2.msra.mxu0 %v2495
        %2497 = vmatprep.subr.mxu0 0.0
        %v2498 = vand.u32 %v314, 4294901760
        %v2499 = vsub.f32 %v314, %v2498
        %v2500 = vand.u32 %v2499, 4294901760
        %v2501 = vsub.f32 %v2499, %v2500
        %v2502 = vand.u32 %v2501, 4294901760
        %2503 = vmatpush2.msra.mxu0 %v2502
        %2504 = vmatprep.subr.mxu0 0.0
        %v2505 = vand.u32 %v313, 4294901760
        %v2506 = vsub.f32 %v313, %v2505
        %v2507 = vand.u32 %v2506, 4294901760
        %v2508 = vsub.f32 %v2506, %v2507
        %v2509 = vand.u32 %v2508, 4294901760
        %2510 = vmatpush2.msra.mxu0 %v2509
        %2511 = vmatprep.subr.mxu0 0.0
        %v2512 = vand.u32 %v312, 4294901760
        %v2513 = vsub.f32 %v312, %v2512
        %v2514 = vand.u32 %v2513, 4294901760
        %v2515 = vsub.f32 %v2513, %v2514
        %v2516 = vand.u32 %v2515, 4294901760
        %2517 = vmatpush2.msra.mxu0 %v2516
        %2518 = vmatprep.subr.mxu0 0.0
        %v2519 = vand.u32 %v311, 4294901760
        %v2520 = vsub.f32 %v311, %v2519
        %v2521 = vand.u32 %v2520, 4294901760
        %v2522 = vsub.f32 %v2520, %v2521
        %v2523 = vand.u32 %v2522, 4294901760
        %2524 = vmatpush2.msra.mxu0 %v2523
        %2525 = vmatprep.subr.mxu0 0.0
        %v2526 = vand.u32 %v310, 4294901760
        %v2527 = vsub.f32 %v310, %v2526
        %v2528 = vand.u32 %v2527, 4294901760
        %v2529 = vsub.f32 %v2527, %v2528
        %v2530 = vand.u32 %v2529, 4294901760
        %2531 = vmatpush2.msra.mxu0 %v2530
        %2532 = vmatprep.subr.mxu0 0.0
        %v2533 = vand.u32 %v309, 4294901760
        %v2534 = vsub.f32 %v309, %v2533
        %v2535 = vand.u32 %v2534, 4294901760
        %v2536 = vsub.f32 %v2534, %v2535
        %v2537 = vand.u32 %v2536, 4294901760
        %2538 = vmatpush2.msra.mxu0 %v2537
        %2539 = vmatprep.subr.mxu0 0.0
        %v2540 = vand.u32 %v308, 4294901760
        %v2541 = vsub.f32 %v308, %v2540
        %v2542 = vand.u32 %v2541, 4294901760
        %v2543 = vsub.f32 %v2541, %v2542
        %v2544 = vand.u32 %v2543, 4294901760
        %2545 = vmatpush2.msra.mxu0 %v2544
        %2546 = vmatprep.subr.mxu0 0.0
        %v2547 = vand.u32 %v307, 4294901760
        %v2548 = vsub.f32 %v307, %v2547
        %v2549 = vand.u32 %v2548, 4294901760
        %v2550 = vsub.f32 %v2548, %v2549
        %v2551 = vand.u32 %v2550, 4294901760
        %2552 = vmatpush2.msra.mxu0 %v2551
        %2553 = vmatprep.subr.mxu0 0.0
        %v2554 = vand.u32 %v306, 4294901760
        %v2555 = vsub.f32 %v306, %v2554
        %v2556 = vand.u32 %v2555, 4294901760
        %v2557 = vsub.f32 %v2555, %v2556
        %v2558 = vand.u32 %v2557, 4294901760
        %2559 = vmatpush2.msra.mxu0 %v2558
        %2560 = vmatprep.subr.mxu0 0.0
        %v2561 = vand.u32 %v305, 4294901760
        %v2562 = vsub.f32 %v305, %v2561
        %v2563 = vand.u32 %v2562, 4294901760
        %v2564 = vsub.f32 %v2562, %v2563
        %v2565 = vand.u32 %v2564, 4294901760
        %2566 = vmatpush2.msra.mxu0 %v2565
        %2567 = vmatprep.subr.mxu0 0.0
        %v2568 = vand.u32 %v304, 4294901760
        %v2569 = vsub.f32 %v304, %v2568
        %v2570 = vand.u32 %v2569, 4294901760
        %v2571 = vsub.f32 %v2569, %v2570
        %v2572 = vand.u32 %v2571, 4294901760
        %2573 = vmatpush2.msra.mxu0 %v2572
        %2574 = vmatprep.subr.mxu0 0.0
        %v2575 = vand.u32 %v303, 4294901760
        %v2576 = vsub.f32 %v303, %v2575
        %v2577 = vand.u32 %v2576, 4294901760
        %v2578 = vsub.f32 %v2576, %v2577
        %v2579 = vand.u32 %v2578, 4294901760
        %2580 = vmatpush2.msra.mxu0 %v2579
        %2581 = vmatprep.subr.mxu0 0.0
        %v2582 = vand.u32 %v302, 4294901760
        %v2583 = vsub.f32 %v302, %v2582
        %v2584 = vand.u32 %v2583, 4294901760
        %v2585 = vsub.f32 %v2583, %v2584
        %v2586 = vand.u32 %v2585, 4294901760
        %2587 = vmatpush2.msra.mxu0 %v2586
        %v2588 = vand.u32 %v208, 4294901760
        %2589 = vmatprep.mubr.f32.mxu0 %v2588
        %v2590 = vand.u32 %v207, 4294901760
        %2591 = vmatmul.mubr.f32.gmra.mxu0 %v2590
        %v2592 = vpop.f32.mrf.mxu0
        %v2593 = vadd.f32 %v2361, %v2592
        %v2594 = vpop.f32.mrf.mxu0
        %2595 = vdwg.mxu0
        %2596 = vmatprep.subr.mxu0 0.0
        %v2597 = vand.u32 %v301, 4294901760
        %v2598 = vsub.f32 %v301, %v2597
        %2599 = vmatpush1.msra.mxu0 %v2598
        %2600 = vmatprep.subr.mxu0 0.0
        %v2601 = vand.u32 %v300, 4294901760
        %v2602 = vsub.f32 %v300, %v2601
        %2603 = vmatpush1.msra.mxu0 %v2602
        %2604 = vmatprep.subr.mxu0 0.0
        %v2605 = vand.u32 %v299, 4294901760
        %v2606 = vsub.f32 %v299, %v2605
        %2607 = vmatpush1.msra.mxu0 %v2606
        %2608 = vmatprep.subr.mxu0 0.0
        %v2609 = vand.u32 %v298, 4294901760
        %v2610 = vsub.f32 %v298, %v2609
        %2611 = vmatpush1.msra.mxu0 %v2610
        %2612 = vmatprep.subr.mxu0 0.0
        %v2613 = vand.u32 %v297, 4294901760
        %v2614 = vsub.f32 %v297, %v2613
        %2615 = vmatpush1.msra.mxu0 %v2614
        %2616 = vmatprep.subr.mxu0 0.0
        %v2617 = vand.u32 %v296, 4294901760
        %v2618 = vsub.f32 %v296, %v2617
        %2619 = vmatpush1.msra.mxu0 %v2618
        %2620 = vmatprep.subr.mxu0 0.0
        %v2621 = vand.u32 %v295, 4294901760
        %v2622 = vsub.f32 %v295, %v2621
        %2623 = vmatpush1.msra.mxu0 %v2622
        %2624 = vmatprep.subr.mxu0 0.0
        %v2625 = vand.u32 %v294, 4294901760
        %v2626 = vsub.f32 %v294, %v2625
        %2627 = vmatpush1.msra.mxu0 %v2626
        %2628 = vmatprep.subr.mxu0 0.0
        %v2629 = vand.u32 %v293, 4294901760
        %v2630 = vsub.f32 %v293, %v2629
        %2631 = vmatpush1.msra.mxu0 %v2630
        %2632 = vmatprep.subr.mxu0 0.0
        %v2633 = vand.u32 %v292, 4294901760
        %v2634 = vsub.f32 %v292, %v2633
        %2635 = vmatpush1.msra.mxu0 %v2634
        %2636 = vmatprep.subr.mxu0 0.0
        %v2637 = vand.u32 %v291, 4294901760
        %v2638 = vsub.f32 %v291, %v2637
        %2639 = vmatpush1.msra.mxu0 %v2638
        %2640 = vmatprep.subr.mxu0 0.0
        %v2641 = vand.u32 %v290, 4294901760
        %v2642 = vsub.f32 %v290, %v2641
        %2643 = vmatpush1.msra.mxu0 %v2642
        %2644 = vmatprep.subr.mxu0 0.0
        %v2645 = vand.u32 %v289, 4294901760
        %v2646 = vsub.f32 %v289, %v2645
        %2647 = vmatpush1.msra.mxu0 %v2646
        %2648 = vmatprep.subr.mxu0 0.0
        %v2649 = vand.u32 %v288, 4294901760
        %v2650 = vsub.f32 %v288, %v2649
        %2651 = vmatpush1.msra.mxu0 %v2650
        %2652 = vmatprep.subr.mxu0 0.0
        %v2653 = vand.u32 %v287, 4294901760
        %v2654 = vsub.f32 %v287, %v2653
        %2655 = vmatpush1.msra.mxu0 %v2654
        %2656 = vmatprep.subr.mxu0 0.0
        %v2657 = vand.u32 %v286, 4294901760
        %v2658 = vsub.f32 %v286, %v2657
        %2659 = vmatpush1.msra.mxu0 %v2658
        %2660 = vmatprep.subr.mxu0 0.0
        %v2661 = vand.u32 %v317, 4294901760
        %v2662 = vsub.f32 %v317, %v2661
        %2663 = vmatpush2.msra.mxu0 %v2662
        %2664 = vmatprep.subr.mxu0 0.0
        %v2665 = vand.u32 %v316, 4294901760
        %v2666 = vsub.f32 %v316, %v2665
        %2667 = vmatpush2.msra.mxu0 %v2666
        %2668 = vmatprep.subr.mxu0 0.0
        %v2669 = vand.u32 %v315, 4294901760
        %v2670 = vsub.f32 %v315, %v2669
        %2671 = vmatpush2.msra.mxu0 %v2670
        %2672 = vmatprep.subr.mxu0 0.0
        %v2673 = vand.u32 %v314, 4294901760
        %v2674 = vsub.f32 %v314, %v2673
        %2675 = vmatpush2.msra.mxu0 %v2674
        %2676 = vmatprep.subr.mxu0 0.0
        %v2677 = vand.u32 %v313, 4294901760
        %v2678 = vsub.f32 %v313, %v2677
        %2679 = vmatpush2.msra.mxu0 %v2678
        %2680 = vmatprep.subr.mxu0 0.0
        %v2681 = vand.u32 %v312, 4294901760
        %v2682 = vsub.f32 %v312, %v2681
        %2683 = vmatpush2.msra.mxu0 %v2682
        %2684 = vmatprep.subr.mxu0 0.0
        %v2685 = vand.u32 %v311, 4294901760
        %v2686 = vsub.f32 %v311, %v2685
        %2687 = vmatpush2.msra.mxu0 %v2686
        %2688 = vmatprep.subr.mxu0 0.0
        %v2689 = vand.u32 %v310, 4294901760
        %v2690 = vsub.f32 %v310, %v2689
        %2691 = vmatpush2.msra.mxu0 %v2690
        %2692 = vmatprep.subr.mxu0 0.0
        %v2693 = vand.u32 %v309, 4294901760
        %v2694 = vsub.f32 %v309, %v2693
        %2695 = vmatpush2.msra.mxu0 %v2694
        %2696 = vmatprep.subr.mxu0 0.0
        %v2697 = vand.u32 %v308, 4294901760
        %v2698 = vsub.f32 %v308, %v2697
        %2699 = vmatpush2.msra.mxu0 %v2698
        %2700 = vmatprep.subr.mxu0 0.0
        %v2701 = vand.u32 %v307, 4294901760
        %v2702 = vsub.f32 %v307, %v2701
        %2703 = vmatpush2.msra.mxu0 %v2702
        %2704 = vmatprep.subr.mxu0 0.0
        %v2705 = vand.u32 %v306, 4294901760
        %v2706 = vsub.f32 %v306, %v2705
        %2707 = vmatpush2.msra.mxu0 %v2706
        %2708 = vmatprep.subr.mxu0 0.0
        %v2709 = vand.u32 %v305, 4294901760
        %v2710 = vsub.f32 %v305, %v2709
        %2711 = vmatpush2.msra.mxu0 %v2710
        %2712 = vmatprep.subr.mxu0 0.0
        %v2713 = vand.u32 %v304, 4294901760
        %v2714 = vsub.f32 %v304, %v2713
        %2715 = vmatpush2.msra.mxu0 %v2714
        %2716 = vmatprep.subr.mxu0 0.0
        %v2717 = vand.u32 %v303, 4294901760
        %v2718 = vsub.f32 %v303, %v2717
        %2719 = vmatpush2.msra.mxu0 %v2718
        %2720 = vmatprep.subr.mxu0 0.0
        %v2721 = vand.u32 %v302, 4294901760
        %v2722 = vsub.f32 %v302, %v2721
        %2723 = vmatpush2.msra.mxu0 %v2722
        %v2724 = vand.u32 %v208, 4294901760
        %v2725 = vsub.f32 %v208, %v2724
        %2726 = vmatprep.mubr.f32.mxu0 %v2725
        %v2727 = vand.u32 %v207, 4294901760
        %v2728 = vsub.f32 %v207, %v2727
        %2729 = vmatmul.mubr.f32.gmra.mxu0 %v2728
        %v2730 = vpop.f32.mrf.mxu0
        %v2731 = vadd.f32 %v2593, %v2730
        %v2732 = vpop.f32.mrf.mxu0
        %2733 = vdwg.mxu0
        %2734 = vmatprep.subr.mxu0 0.0
        %v2735 = vand.u32 %v301, 4294901760
        %2736 = vmatpush1.msra.mxu0 %v2735
        %2737 = vmatprep.subr.mxu0 0.0
        %v2738 = vand.u32 %v300, 4294901760
        %2739 = vmatpush1.msra.mxu0 %v2738
        %2740 = vmatprep.subr.mxu0 0.0
        %v2741 = vand.u32 %v299, 4294901760
        %2742 = vmatpush1.msra.mxu0 %v2741
        %2743 = vmatprep.subr.mxu0 0.0
        %v2744 = vand.u32 %v298, 4294901760
        %2745 = vmatpush1.msra.mxu0 %v2744
        %2746 = vmatprep.subr.mxu0 0.0
        %v2747 = vand.u32 %v297, 4294901760
        %2748 = vmatpush1.msra.mxu0 %v2747
        %2749 = vmatprep.subr.mxu0 0.0
        %v2750 = vand.u32 %v296, 4294901760
        %2751 = vmatpush1.msra.mxu0 %v2750
        %2752 = vmatprep.subr.mxu0 0.0
        %v2753 = vand.u32 %v295, 4294901760
        %2754 = vmatpush1.msra.mxu0 %v2753
        %2755 = vmatprep.subr.mxu0 0.0
        %v2756 = vand.u32 %v294, 4294901760
        %2757 = vmatpush1.msra.mxu0 %v2756
        %2758 = vmatprep.subr.mxu0 0.0
        %v2759 = vand.u32 %v293, 4294901760
        %2760 = vmatpush1.msra.mxu0 %v2759
        %2761 = vmatprep.subr.mxu0 0.0
        %v2762 = vand.u32 %v292, 4294901760
        %2763 = vmatpush1.msra.mxu0 %v2762
        %2764 = vmatprep.subr.mxu0 0.0
        %v2765 = vand.u32 %v291, 4294901760
        %2766 = vmatpush1.msra.mxu0 %v2765
        %2767 = vmatprep.subr.mxu0 0.0
        %v2768 = vand.u32 %v290, 4294901760
        %2769 = vmatpush1.msra.mxu0 %v2768
        %2770 = vmatprep.subr.mxu0 0.0
        %v2771 = vand.u32 %v289, 4294901760
        %2772 = vmatpush1.msra.mxu0 %v2771
        %2773 = vmatprep.subr.mxu0 0.0
        %v2774 = vand.u32 %v288, 4294901760
        %2775 = vmatpush1.msra.mxu0 %v2774
        %2776 = vmatprep.subr.mxu0 0.0
        %v2777 = vand.u32 %v287, 4294901760
        %2778 = vmatpush1.msra.mxu0 %v2777
        %2779 = vmatprep.subr.mxu0 0.0
        %v2780 = vand.u32 %v286, 4294901760
        %2781 = vmatpush1.msra.mxu0 %v2780
        %2782 = vmatprep.subr.mxu0 0.0
        %v2783 = vand.u32 %v317, 4294901760
        %2784 = vmatpush2.msra.mxu0 %v2783
        %2785 = vmatprep.subr.mxu0 0.0
        %v2786 = vand.u32 %v316, 4294901760
        %2787 = vmatpush2.msra.mxu0 %v2786
        %2788 = vmatprep.subr.mxu0 0.0
        %v2789 = vand.u32 %v315, 4294901760
        %2790 = vmatpush2.msra.mxu0 %v2789
        %2791 = vmatprep.subr.mxu0 0.0
        %v2792 = vand.u32 %v314, 4294901760
        %2793 = vmatpush2.msra.mxu0 %v2792
        %2794 = vmatprep.subr.mxu0 0.0
        %v2795 = vand.u32 %v313, 4294901760
        %2796 = vmatpush2.msra.mxu0 %v2795
        %2797 = vmatprep.subr.mxu0 0.0
        %v2798 = vand.u32 %v312, 4294901760
        %2799 = vmatpush2.msra.mxu0 %v2798
        %2800 = vmatprep.subr.mxu0 0.0
        %v2801 = vand.u32 %v311, 4294901760
        %2802 = vmatpush2.msra.mxu0 %v2801
        %2803 = vmatprep.subr.mxu0 0.0
        %v2804 = vand.u32 %v310, 4294901760
        %2805 = vmatpush2.msra.mxu0 %v2804
        %2806 = vmatprep.subr.mxu0 0.0
        %v2807 = vand.u32 %v309, 4294901760
        %2808 = vmatpush2.msra.mxu0 %v2807
        %2809 = vmatprep.subr.mxu0 0.0
        %v2810 = vand.u32 %v308, 4294901760
        %2811 = vmatpush2.msra.mxu0 %v2810
        %2812 = vmatprep.subr.mxu0 0.0
        %v2813 = vand.u32 %v307, 4294901760
        %2814 = vmatpush2.msra.mxu0 %v2813
        %2815 = vmatprep.subr.mxu0 0.0
        %v2816 = vand.u32 %v306, 4294901760
        %2817 = vmatpush2.msra.mxu0 %v2816
        %2818 = vmatprep.subr.mxu0 0.0
        %v2819 = vand.u32 %v305, 4294901760
        %2820 = vmatpush2.msra.mxu0 %v2819
        %2821 = vmatprep.subr.mxu0 0.0
        %v2822 = vand.u32 %v304, 4294901760
        %2823 = vmatpush2.msra.mxu0 %v2822
        %2824 = vmatprep.subr.mxu0 0.0
        %v2825 = vand.u32 %v303, 4294901760
        %2826 = vmatpush2.msra.mxu0 %v2825
        %2827 = vmatprep.subr.mxu0 0.0
        %v2828 = vand.u32 %v302, 4294901760
        %2829 = vmatpush2.msra.mxu0 %v2828
        %v2830 = vand.u32 %v208, 4294901760
        %v2831 = vsub.f32 %v208, %v2830
        %v2832 = vand.u32 %v2831, 4294901760
        %2833 = vmatprep.mubr.f32.mxu0 %v2832
        %v2834 = vand.u32 %v207, 4294901760
        %v2835 = vsub.f32 %v207, %v2834
        %v2836 = vand.u32 %v2835, 4294901760
        %2837 = vmatmul.mubr.f32.gmra.mxu0 %v2836
        %v2838 = vpop.f32.mrf.mxu0
        %v2839 = vadd.f32 %v2731, %v2838
        %v2840 = vpop.f32.mrf.mxu0
        %2841 = vdwg.mxu0
        %2842 = vmatprep.subr.mxu0 0.0
        %v2843 = vand.u32 %v301, 4294901760
        %v2844 = vsub.f32 %v301, %v2843
        %v2845 = vand.u32 %v2844, 4294901760
        %2846 = vmatpush1.msra.mxu0 %v2845
        %2847 = vmatprep.subr.mxu0 0.0
        %v2848 = vand.u32 %v300, 4294901760
        %v2849 = vsub.f32 %v300, %v2848
        %v2850 = vand.u32 %v2849, 4294901760
        %2851 = vmatpush1.msra.mxu0 %v2850
        %2852 = vmatprep.subr.mxu0 0.0
        %v2853 = vand.u32 %v299, 4294901760
        %v2854 = vsub.f32 %v299, %v2853
        %v2855 = vand.u32 %v2854, 4294901760
        %2856 = vmatpush1.msra.mxu0 %v2855
        %2857 = vmatprep.subr.mxu0 0.0
        %v2858 = vand.u32 %v298, 4294901760
        %v2859 = vsub.f32 %v298, %v2858
        %v2860 = vand.u32 %v2859, 4294901760
        %2861 = vmatpush1.msra.mxu0 %v2860
        %2862 = vmatprep.subr.mxu0 0.0
        %v2863 = vand.u32 %v297, 4294901760
        %v2864 = vsub.f32 %v297, %v2863
        %v2865 = vand.u32 %v2864, 4294901760
        %2866 = vmatpush1.msra.mxu0 %v2865
        %2867 = vmatprep.subr.mxu0 0.0
        %v2868 = vand.u32 %v296, 4294901760
        %v2869 = vsub.f32 %v296, %v2868
        %v2870 = vand.u32 %v2869, 4294901760
        %2871 = vmatpush1.msra.mxu0 %v2870
        %2872 = vmatprep.subr.mxu0 0.0
        %v2873 = vand.u32 %v295, 4294901760
        %v2874 = vsub.f32 %v295, %v2873
        %v2875 = vand.u32 %v2874, 4294901760
        %2876 = vmatpush1.msra.mxu0 %v2875
        %2877 = vmatprep.subr.mxu0 0.0
        %v2878 = vand.u32 %v294, 4294901760
        %v2879 = vsub.f32 %v294, %v2878
        %v2880 = vand.u32 %v2879, 4294901760
        %2881 = vmatpush1.msra.mxu0 %v2880
        %2882 = vmatprep.subr.mxu0 0.0
        %v2883 = vand.u32 %v293, 4294901760
        %v2884 = vsub.f32 %v293, %v2883
        %v2885 = vand.u32 %v2884, 4294901760
        %2886 = vmatpush1.msra.mxu0 %v2885
        %2887 = vmatprep.subr.mxu0 0.0
        %v2888 = vand.u32 %v292, 4294901760
        %v2889 = vsub.f32 %v292, %v2888
        %v2890 = vand.u32 %v2889, 4294901760
        %2891 = vmatpush1.msra.mxu0 %v2890
        %2892 = vmatprep.subr.mxu0 0.0
        %v2893 = vand.u32 %v291, 4294901760
        %v2894 = vsub.f32 %v291, %v2893
        %v2895 = vand.u32 %v2894, 4294901760
        %2896 = vmatpush1.msra.mxu0 %v2895
        %2897 = vmatprep.subr.mxu0 0.0
        %v2898 = vand.u32 %v290, 4294901760
        %v2899 = vsub.f32 %v290, %v2898
        %v2900 = vand.u32 %v2899, 4294901760
        %2901 = vmatpush1.msra.mxu0 %v2900
        %2902 = vmatprep.subr.mxu0 0.0
        %v2903 = vand.u32 %v289, 4294901760
        %v2904 = vsub.f32 %v289, %v2903
        %v2905 = vand.u32 %v2904, 4294901760
        %2906 = vmatpush1.msra.mxu0 %v2905
        %2907 = vmatprep.subr.mxu0 0.0
        %v2908 = vand.u32 %v288, 4294901760
        %v2909 = vsub.f32 %v288, %v2908
        %v2910 = vand.u32 %v2909, 4294901760
        %2911 = vmatpush1.msra.mxu0 %v2910
        %2912 = vmatprep.subr.mxu0 0.0
        %v2913 = vand.u32 %v287, 4294901760
        %v2914 = vsub.f32 %v287, %v2913
        %v2915 = vand.u32 %v2914, 4294901760
        %2916 = vmatpush1.msra.mxu0 %v2915
        %2917 = vmatprep.subr.mxu0 0.0
        %v2918 = vand.u32 %v286, 4294901760
        %v2919 = vsub.f32 %v286, %v2918
        %v2920 = vand.u32 %v2919, 4294901760
        %2921 = vmatpush1.msra.mxu0 %v2920
        %2922 = vmatprep.subr.mxu0 0.0
        %v2923 = vand.u32 %v317, 4294901760
        %v2924 = vsub.f32 %v317, %v2923
        %v2925 = vand.u32 %v2924, 4294901760
        %2926 = vmatpush2.msra.mxu0 %v2925
        %2927 = vmatprep.subr.mxu0 0.0
        %v2928 = vand.u32 %v316, 4294901760
        %v2929 = vsub.f32 %v316, %v2928
        %v2930 = vand.u32 %v2929, 4294901760
        %2931 = vmatpush2.msra.mxu0 %v2930
        %2932 = vmatprep.subr.mxu0 0.0
        %v2933 = vand.u32 %v315, 4294901760
        %v2934 = vsub.f32 %v315, %v2933
        %v2935 = vand.u32 %v2934, 4294901760
        %2936 = vmatpush2.msra.mxu0 %v2935
        %2937 = vmatprep.subr.mxu0 0.0
        %v2938 = vand.u32 %v314, 4294901760
        %v2939 = vsub.f32 %v314, %v2938
        %v2940 = vand.u32 %v2939, 4294901760
        %2941 = vmatpush2.msra.mxu0 %v2940
        %2942 = vmatprep.subr.mxu0 0.0
        %v2943 = vand.u32 %v313, 4294901760
        %v2944 = vsub.f32 %v313, %v2943
        %v2945 = vand.u32 %v2944, 4294901760
        %2946 = vmatpush2.msra.mxu0 %v2945
        %2947 = vmatprep.subr.mxu0 0.0
        %v2948 = vand.u32 %v312, 4294901760
        %v2949 = vsub.f32 %v312, %v2948
        %v2950 = vand.u32 %v2949, 4294901760
        %2951 = vmatpush2.msra.mxu0 %v2950
        %2952 = vmatprep.subr.mxu0 0.0
        %v2953 = vand.u32 %v311, 4294901760
        %v2954 = vsub.f32 %v311, %v2953
        %v2955 = vand.u32 %v2954, 4294901760
        %2956 = vmatpush2.msra.mxu0 %v2955
        %2957 = vmatprep.subr.mxu0 0.0
        %v2958 = vand.u32 %v310, 4294901760
        %v2959 = vsub.f32 %v310, %v2958
        %v2960 = vand.u32 %v2959, 4294901760
        %2961 = vmatpush2.msra.mxu0 %v2960
        %2962 = vmatprep.subr.mxu0 0.0
        %v2963 = vand.u32 %v309, 4294901760
        %v2964 = vsub.f32 %v309, %v2963
        %v2965 = vand.u32 %v2964, 4294901760
        %2966 = vmatpush2.msra.mxu0 %v2965
        %2967 = vmatprep.subr.mxu0 0.0
        %v2968 = vand.u32 %v308, 4294901760
        %v2969 = vsub.f32 %v308, %v2968
        %v2970 = vand.u32 %v2969, 4294901760
        %2971 = vmatpush2.msra.mxu0 %v2970
        %2972 = vmatprep.subr.mxu0 0.0
        %v2973 = vand.u32 %v307, 4294901760
        %v2974 = vsub.f32 %v307, %v2973
        %v2975 = vand.u32 %v2974, 4294901760
        %2976 = vmatpush2.msra.mxu0 %v2975
        %2977 = vmatprep.subr.mxu0 0.0
        %v2978 = vand.u32 %v306, 4294901760
        %v2979 = vsub.f32 %v306, %v2978
        %v2980 = vand.u32 %v2979, 4294901760
        %2981 = vmatpush2.msra.mxu0 %v2980
        %2982 = vmatprep.subr.mxu0 0.0
        %v2983 = vand.u32 %v305, 4294901760
        %v2984 = vsub.f32 %v305, %v2983
        %v2985 = vand.u32 %v2984, 4294901760
        %2986 = vmatpush2.msra.mxu0 %v2985
        %2987 = vmatprep.subr.mxu0 0.0
        %v2988 = vand.u32 %v304, 4294901760
        %v2989 = vsub.f32 %v304, %v2988
        %v2990 = vand.u32 %v2989, 4294901760
        %2991 = vmatpush2.msra.mxu0 %v2990
        %2992 = vmatprep.subr.mxu0 0.0
        %v2993 = vand.u32 %v303, 4294901760
        %v2994 = vsub.f32 %v303, %v2993
        %v2995 = vand.u32 %v2994, 4294901760
        %2996 = vmatpush2.msra.mxu0 %v2995
        %2997 = vmatprep.subr.mxu0 0.0
        %v2998 = vand.u32 %v302, 4294901760
        %v2999 = vsub.f32 %v302, %v2998
        %v3000 = vand.u32 %v2999, 4294901760
        %3001 = vmatpush2.msra.mxu0 %v3000
        %v3002 = vand.u32 %v208, 4294901760
        %3003 = vmatprep.mubr.f32.mxu0 %v3002
        %v3004 = vand.u32 %v207, 4294901760
        %3005 = vmatmul.mubr.f32.gmra.mxu0 %v3004
        %v3006 = vpop.f32.mrf.mxu0
        %v3007 = vadd.f32 %v2839, %v3006
        %v3008 = vpop.f32.mrf.mxu0
        %3009 = vdwg.mxu0
        %3010 = vmatprep.subr.mxu0 0.0
        %v3011 = vand.u32 %v301, 4294901760
        %3012 = vmatpush1.msra.mxu0 %v3011
        %3013 = vmatprep.subr.mxu0 0.0
        %v3014 = vand.u32 %v300, 4294901760
        %3015 = vmatpush1.msra.mxu0 %v3014
        %3016 = vmatprep.subr.mxu0 0.0
        %v3017 = vand.u32 %v299, 4294901760
        %3018 = vmatpush1.msra.mxu0 %v3017
        %3019 = vmatprep.subr.mxu0 0.0
        %v3020 = vand.u32 %v298, 4294901760
        %3021 = vmatpush1.msra.mxu0 %v3020
        %3022 = vmatprep.subr.mxu0 0.0
        %v3023 = vand.u32 %v297, 4294901760
        %3024 = vmatpush1.msra.mxu0 %v3023
        %3025 = vmatprep.subr.mxu0 0.0
        %v3026 = vand.u32 %v296, 4294901760
        %3027 = vmatpush1.msra.mxu0 %v3026
        %3028 = vmatprep.subr.mxu0 0.0
        %v3029 = vand.u32 %v295, 4294901760
        %3030 = vmatpush1.msra.mxu0 %v3029
        %3031 = vmatprep.subr.mxu0 0.0
        %v3032 = vand.u32 %v294, 4294901760
        %3033 = vmatpush1.msra.mxu0 %v3032
        %3034 = vmatprep.subr.mxu0 0.0
        %v3035 = vand.u32 %v293, 4294901760
        %3036 = vmatpush1.msra.mxu0 %v3035
        %3037 = vmatprep.subr.mxu0 0.0
        %v3038 = vand.u32 %v292, 4294901760
        %3039 = vmatpush1.msra.mxu0 %v3038
        %3040 = vmatprep.subr.mxu0 0.0
        %v3041 = vand.u32 %v291, 4294901760
        %3042 = vmatpush1.msra.mxu0 %v3041
        %3043 = vmatprep.subr.mxu0 0.0
        %v3044 = vand.u32 %v290, 4294901760
        %3045 = vmatpush1.msra.mxu0 %v3044
        %3046 = vmatprep.subr.mxu0 0.0
        %v3047 = vand.u32 %v289, 4294901760
        %3048 = vmatpush1.msra.mxu0 %v3047
        %3049 = vmatprep.subr.mxu0 0.0
        %v3050 = vand.u32 %v288, 4294901760
        %3051 = vmatpush1.msra.mxu0 %v3050
        %3052 = vmatprep.subr.mxu0 0.0
        %v3053 = vand.u32 %v287, 4294901760
        %3054 = vmatpush1.msra.mxu0 %v3053
        %3055 = vmatprep.subr.mxu0 0.0
        %v3056 = vand.u32 %v286, 4294901760
        %3057 = vmatpush1.msra.mxu0 %v3056
        %3058 = vmatprep.subr.mxu0 0.0
        %v3059 = vand.u32 %v317, 4294901760
        %3060 = vmatpush2.msra.mxu0 %v3059
        %3061 = vmatprep.subr.mxu0 0.0
        %v3062 = vand.u32 %v316, 4294901760
        %3063 = vmatpush2.msra.mxu0 %v3062
        %3064 = vmatprep.subr.mxu0 0.0
        %v3065 = vand.u32 %v315, 4294901760
        %3066 = vmatpush2.msra.mxu0 %v3065
        %3067 = vmatprep.subr.mxu0 0.0
        %v3068 = vand.u32 %v314, 4294901760
        %3069 = vmatpush2.msra.mxu0 %v3068
        %3070 = vmatprep.subr.mxu0 0.0
        %v3071 = vand.u32 %v313, 4294901760
        %3072 = vmatpush2.msra.mxu0 %v3071
        %3073 = vmatprep.subr.mxu0 0.0
        %v3074 = vand.u32 %v312, 4294901760
        %3075 = vmatpush2.msra.mxu0 %v3074
        %3076 = vmatprep.subr.mxu0 0.0
        %v3077 = vand.u32 %v311, 4294901760
        %3078 = vmatpush2.msra.mxu0 %v3077
        %3079 = vmatprep.subr.mxu0 0.0
        %v3080 = vand.u32 %v310, 4294901760
        %3081 = vmatpush2.msra.mxu0 %v3080
        %3082 = vmatprep.subr.mxu0 0.0
        %v3083 = vand.u32 %v309, 4294901760
        %3084 = vmatpush2.msra.mxu0 %v3083
        %3085 = vmatprep.subr.mxu0 0.0
        %v3086 = vand.u32 %v308, 4294901760
        %3087 = vmatpush2.msra.mxu0 %v3086
        %3088 = vmatprep.subr.mxu0 0.0
        %v3089 = vand.u32 %v307, 4294901760
        %3090 = vmatpush2.msra.mxu0 %v3089
        %3091 = vmatprep.subr.mxu0 0.0
        %v3092 = vand.u32 %v306, 4294901760
        %3093 = vmatpush2.msra.mxu0 %v3092
        %3094 = vmatprep.subr.mxu0 0.0
        %v3095 = vand.u32 %v305, 4294901760
        %3096 = vmatpush2.msra.mxu0 %v3095
        %3097 = vmatprep.subr.mxu0 0.0
        %v3098 = vand.u32 %v304, 4294901760
        %3099 = vmatpush2.msra.mxu0 %v3098
        %3100 = vmatprep.subr.mxu0 0.0
        %v3101 = vand.u32 %v303, 4294901760
        %3102 = vmatpush2.msra.mxu0 %v3101
        %3103 = vmatprep.subr.mxu0 0.0
        %v3104 = vand.u32 %v302, 4294901760
        %3105 = vmatpush2.msra.mxu0 %v3104
        %v3106 = vand.u32 %v208, 4294901760
        %3107 = vmatprep.mubr.f32.mxu0 %v3106
        %v3108 = vand.u32 %v207, 4294901760
        %3109 = vmatmul.mubr.f32.gmra.mxu0 %v3108
        %v3110 = vpop.f32.mrf.mxu0
        %v3111 = vadd.f32 %v3007, %v3110
        %v3112 = vpop.f32.mrf.mxu0
        %3113 = vdwg.mxu0
        %3114 = vmatprep.subr.mxu0 0.0
        %v3115 = vand.u32 %v333, 4294901760
        %3116 = vmatpush1.msra.mxu0 %v3115
        %3117 = vmatprep.subr.mxu0 0.0
        %v3118 = vand.u32 %v332, 4294901760
        %3119 = vmatpush1.msra.mxu0 %v3118
        %3120 = vmatprep.subr.mxu0 0.0
        %v3121 = vand.u32 %v331, 4294901760
        %3122 = vmatpush1.msra.mxu0 %v3121
        %3123 = vmatprep.subr.mxu0 0.0
        %v3124 = vand.u32 %v330, 4294901760
        %3125 = vmatpush1.msra.mxu0 %v3124
        %3126 = vmatprep.subr.mxu0 0.0
        %v3127 = vand.u32 %v329, 4294901760
        %3128 = vmatpush1.msra.mxu0 %v3127
        %3129 = vmatprep.subr.mxu0 0.0
        %v3130 = vand.u32 %v328, 4294901760
        %3131 = vmatpush1.msra.mxu0 %v3130
        %3132 = vmatprep.subr.mxu0 0.0
        %v3133 = vand.u32 %v327, 4294901760
        %3134 = vmatpush1.msra.mxu0 %v3133
        %3135 = vmatprep.subr.mxu0 0.0
        %v3136 = vand.u32 %v326, 4294901760
        %3137 = vmatpush1.msra.mxu0 %v3136
        %3138 = vmatprep.subr.mxu0 0.0
        %v3139 = vand.u32 %v325, 4294901760
        %3140 = vmatpush1.msra.mxu0 %v3139
        %3141 = vmatprep.subr.mxu0 0.0
        %v3142 = vand.u32 %v324, 4294901760
        %3143 = vmatpush1.msra.mxu0 %v3142
        %3144 = vmatprep.subr.mxu0 0.0
        %v3145 = vand.u32 %v323, 4294901760
        %3146 = vmatpush1.msra.mxu0 %v3145
        %3147 = vmatprep.subr.mxu0 0.0
        %v3148 = vand.u32 %v322, 4294901760
        %3149 = vmatpush1.msra.mxu0 %v3148
        %3150 = vmatprep.subr.mxu0 0.0
        %v3151 = vand.u32 %v321, 4294901760
        %3152 = vmatpush1.msra.mxu0 %v3151
        %3153 = vmatprep.subr.mxu0 0.0
        %v3154 = vand.u32 %v320, 4294901760
        %3155 = vmatpush1.msra.mxu0 %v3154
        %3156 = vmatprep.subr.mxu0 0.0
        %v3157 = vand.u32 %v319, 4294901760
        %3158 = vmatpush1.msra.mxu0 %v3157
        %3159 = vmatprep.subr.mxu0 0.0
        %v3160 = vand.u32 %v318, 4294901760
        %3161 = vmatpush1.msra.mxu0 %v3160
        %3162 = vmatprep.subr.mxu0 0.0
        %v3163 = vand.u32 %v349, 4294901760
        %3164 = vmatpush2.msra.mxu0 %v3163
        %3165 = vmatprep.subr.mxu0 0.0
        %v3166 = vand.u32 %v348, 4294901760
        %3167 = vmatpush2.msra.mxu0 %v3166
        %3168 = vmatprep.subr.mxu0 0.0
        %v3169 = vand.u32 %v347, 4294901760
        %3170 = vmatpush2.msra.mxu0 %v3169
        %3171 = vmatprep.subr.mxu0 0.0
        %v3172 = vand.u32 %v346, 4294901760
        %3173 = vmatpush2.msra.mxu0 %v3172
        %3174 = vmatprep.subr.mxu0 0.0
        %v3175 = vand.u32 %v345, 4294901760
        %3176 = vmatpush2.msra.mxu0 %v3175
        %3177 = vmatprep.subr.mxu0 0.0
        %v3178 = vand.u32 %v344, 4294901760
        %3179 = vmatpush2.msra.mxu0 %v3178
        %3180 = vmatprep.subr.mxu0 0.0
        %v3181 = vand.u32 %v343, 4294901760
        %3182 = vmatpush2.msra.mxu0 %v3181
        %3183 = vmatprep.subr.mxu0 0.0
        %v3184 = vand.u32 %v342, 4294901760
        %3185 = vmatpush2.msra.mxu0 %v3184
        %3186 = vmatprep.subr.mxu0 0.0
        %v3187 = vand.u32 %v341, 4294901760
        %3188 = vmatpush2.msra.mxu0 %v3187
        %3189 = vmatprep.subr.mxu0 0.0
        %v3190 = vand.u32 %v340, 4294901760
        %3191 = vmatpush2.msra.mxu0 %v3190
        %3192 = vmatprep.subr.mxu0 0.0
        %v3193 = vand.u32 %v339, 4294901760
        %3194 = vmatpush2.msra.mxu0 %v3193
        %3195 = vmatprep.subr.mxu0 0.0
        %v3196 = vand.u32 %v338, 4294901760
        %3197 = vmatpush2.msra.mxu0 %v3196
        %3198 = vmatprep.subr.mxu0 0.0
        %v3199 = vand.u32 %v337, 4294901760
        %3200 = vmatpush2.msra.mxu0 %v3199
        %3201 = vmatprep.subr.mxu0 0.0
        %v3202 = vand.u32 %v336, 4294901760
        %3203 = vmatpush2.msra.mxu0 %v3202
        %3204 = vmatprep.subr.mxu0 0.0
        %v3205 = vand.u32 %v335, 4294901760
        %3206 = vmatpush2.msra.mxu0 %v3205
        %3207 = vmatprep.subr.mxu0 0.0
        %v3208 = vand.u32 %v334, 4294901760
        %3209 = vmatpush2.msra.mxu0 %v3208
        %v3210 = vand.u32 %v210, 4294901760
        %v3211 = vsub.f32 %v210, %v3210
        %v3212 = vand.u32 %v3211, 4294901760
        %v3213 = vsub.f32 %v3211, %v3212
        %v3214 = vand.u32 %v3213, 4294901760
        %3215 = vmatprep.mubr.f32.mxu0 %v3214
        %v3216 = vand.u32 %v209, 4294901760
        %v3217 = vsub.f32 %v209, %v3216
        %v3218 = vand.u32 %v3217, 4294901760
        %v3219 = vsub.f32 %v3217, %v3218
        %v3220 = vand.u32 %v3219, 4294901760
        %3221 = vmatmul.mubr.f32.gmra.mxu0 %v3220
        %v3222 = vpop.f32.mrf.mxu0
        %v3223 = vadd.f32 %v3111, %v3222
        %v3224 = vpop.f32.mrf.mxu0
        %3225 = vdwg.mxu0
        %3226 = vmatprep.subr.mxu0 0.0
        %v3227 = vand.u32 %v333, 4294901760
        %v3228 = vsub.f32 %v333, %v3227
        %v3229 = vand.u32 %v3228, 4294901760
        %v3230 = vsub.f32 %v3228, %v3229
        %v3231 = vand.u32 %v3230, 4294901760
        %3232 = vmatpush1.msra.mxu0 %v3231
        %3233 = vmatprep.subr.mxu0 0.0
        %v3234 = vand.u32 %v332, 4294901760
        %v3235 = vsub.f32 %v332, %v3234
        %v3236 = vand.u32 %v3235, 4294901760
        %v3237 = vsub.f32 %v3235, %v3236
        %v3238 = vand.u32 %v3237, 4294901760
        %3239 = vmatpush1.msra.mxu0 %v3238
        %3240 = vmatprep.subr.mxu0 0.0
        %v3241 = vand.u32 %v331, 4294901760
        %v3242 = vsub.f32 %v331, %v3241
        %v3243 = vand.u32 %v3242, 4294901760
        %v3244 = vsub.f32 %v3242, %v3243
        %v3245 = vand.u32 %v3244, 4294901760
        %3246 = vmatpush1.msra.mxu0 %v3245
        %3247 = vmatprep.subr.mxu0 0.0
        %v3248 = vand.u32 %v330, 4294901760
        %v3249 = vsub.f32 %v330, %v3248
        %v3250 = vand.u32 %v3249, 4294901760
        %v3251 = vsub.f32 %v3249, %v3250
        %v3252 = vand.u32 %v3251, 4294901760
        %3253 = vmatpush1.msra.mxu0 %v3252
        %3254 = vmatprep.subr.mxu0 0.0
        %v3255 = vand.u32 %v329, 4294901760
        %v3256 = vsub.f32 %v329, %v3255
        %v3257 = vand.u32 %v3256, 4294901760
        %v3258 = vsub.f32 %v3256, %v3257
        %v3259 = vand.u32 %v3258, 4294901760
        %3260 = vmatpush1.msra.mxu0 %v3259
        %3261 = vmatprep.subr.mxu0 0.0
        %v3262 = vand.u32 %v328, 4294901760
        %v3263 = vsub.f32 %v328, %v3262
        %v3264 = vand.u32 %v3263, 4294901760
        %v3265 = vsub.f32 %v3263, %v3264
        %v3266 = vand.u32 %v3265, 4294901760
        %3267 = vmatpush1.msra.mxu0 %v3266
        %3268 = vmatprep.subr.mxu0 0.0
        %v3269 = vand.u32 %v327, 4294901760
        %v3270 = vsub.f32 %v327, %v3269
        %v3271 = vand.u32 %v3270, 4294901760
        %v3272 = vsub.f32 %v3270, %v3271
        %v3273 = vand.u32 %v3272, 4294901760
        %3274 = vmatpush1.msra.mxu0 %v3273
        %3275 = vmatprep.subr.mxu0 0.0
        %v3276 = vand.u32 %v326, 4294901760
        %v3277 = vsub.f32 %v326, %v3276
        %v3278 = vand.u32 %v3277, 4294901760
        %v3279 = vsub.f32 %v3277, %v3278
        %v3280 = vand.u32 %v3279, 4294901760
        %3281 = vmatpush1.msra.mxu0 %v3280
        %3282 = vmatprep.subr.mxu0 0.0
        %v3283 = vand.u32 %v325, 4294901760
        %v3284 = vsub.f32 %v325, %v3283
        %v3285 = vand.u32 %v3284, 4294901760
        %v3286 = vsub.f32 %v3284, %v3285
        %v3287 = vand.u32 %v3286, 4294901760
        %3288 = vmatpush1.msra.mxu0 %v3287
        %3289 = vmatprep.subr.mxu0 0.0
        %v3290 = vand.u32 %v324, 4294901760
        %v3291 = vsub.f32 %v324, %v3290
        %v3292 = vand.u32 %v3291, 4294901760
        %v3293 = vsub.f32 %v3291, %v3292
        %v3294 = vand.u32 %v3293, 4294901760
        %3295 = vmatpush1.msra.mxu0 %v3294
        %3296 = vmatprep.subr.mxu0 0.0
        %v3297 = vand.u32 %v323, 4294901760
        %v3298 = vsub.f32 %v323, %v3297
        %v3299 = vand.u32 %v3298, 4294901760
        %v3300 = vsub.f32 %v3298, %v3299
        %v3301 = vand.u32 %v3300, 4294901760
        %3302 = vmatpush1.msra.mxu0 %v3301
        %3303 = vmatprep.subr.mxu0 0.0
        %v3304 = vand.u32 %v322, 4294901760
        %v3305 = vsub.f32 %v322, %v3304
        %v3306 = vand.u32 %v3305, 4294901760
        %v3307 = vsub.f32 %v3305, %v3306
        %v3308 = vand.u32 %v3307, 4294901760
        %3309 = vmatpush1.msra.mxu0 %v3308
        %3310 = vmatprep.subr.mxu0 0.0
        %v3311 = vand.u32 %v321, 4294901760
        %v3312 = vsub.f32 %v321, %v3311
        %v3313 = vand.u32 %v3312, 4294901760
        %v3314 = vsub.f32 %v3312, %v3313
        %v3315 = vand.u32 %v3314, 4294901760
        %3316 = vmatpush1.msra.mxu0 %v3315
        %3317 = vmatprep.subr.mxu0 0.0
        %v3318 = vand.u32 %v320, 4294901760
        %v3319 = vsub.f32 %v320, %v3318
        %v3320 = vand.u32 %v3319, 4294901760
        %v3321 = vsub.f32 %v3319, %v3320
        %v3322 = vand.u32 %v3321, 4294901760
        %3323 = vmatpush1.msra.mxu0 %v3322
        %3324 = vmatprep.subr.mxu0 0.0
        %v3325 = vand.u32 %v319, 4294901760
        %v3326 = vsub.f32 %v319, %v3325
        %v3327 = vand.u32 %v3326, 4294901760
        %v3328 = vsub.f32 %v3326, %v3327
        %v3329 = vand.u32 %v3328, 4294901760
        %3330 = vmatpush1.msra.mxu0 %v3329
        %3331 = vmatprep.subr.mxu0 0.0
        %v3332 = vand.u32 %v318, 4294901760
        %v3333 = vsub.f32 %v318, %v3332
        %v3334 = vand.u32 %v3333, 4294901760
        %v3335 = vsub.f32 %v3333, %v3334
        %v3336 = vand.u32 %v3335, 4294901760
        %3337 = vmatpush1.msra.mxu0 %v3336
        %3338 = vmatprep.subr.mxu0 0.0
        %v3339 = vand.u32 %v349, 4294901760
        %v3340 = vsub.f32 %v349, %v3339
        %v3341 = vand.u32 %v3340, 4294901760
        %v3342 = vsub.f32 %v3340, %v3341
        %v3343 = vand.u32 %v3342, 4294901760
        %3344 = vmatpush2.msra.mxu0 %v3343
        %3345 = vmatprep.subr.mxu0 0.0
        %v3346 = vand.u32 %v348, 4294901760
        %v3347 = vsub.f32 %v348, %v3346
        %v3348 = vand.u32 %v3347, 4294901760
        %v3349 = vsub.f32 %v3347, %v3348
        %v3350 = vand.u32 %v3349, 4294901760
        %3351 = vmatpush2.msra.mxu0 %v3350
        %3352 = vmatprep.subr.mxu0 0.0
        %v3353 = vand.u32 %v347, 4294901760
        %v3354 = vsub.f32 %v347, %v3353
        %v3355 = vand.u32 %v3354, 4294901760
        %v3356 = vsub.f32 %v3354, %v3355
        %v3357 = vand.u32 %v3356, 4294901760
        %3358 = vmatpush2.msra.mxu0 %v3357
        %3359 = vmatprep.subr.mxu0 0.0
        %v3360 = vand.u32 %v346, 4294901760
        %v3361 = vsub.f32 %v346, %v3360
        %v3362 = vand.u32 %v3361, 4294901760
        %v3363 = vsub.f32 %v3361, %v3362
        %v3364 = vand.u32 %v3363, 4294901760
        %3365 = vmatpush2.msra.mxu0 %v3364
        %3366 = vmatprep.subr.mxu0 0.0
        %v3367 = vand.u32 %v345, 4294901760
        %v3368 = vsub.f32 %v345, %v3367
        %v3369 = vand.u32 %v3368, 4294901760
        %v3370 = vsub.f32 %v3368, %v3369
        %v3371 = vand.u32 %v3370, 4294901760
        %3372 = vmatpush2.msra.mxu0 %v3371
        %3373 = vmatprep.subr.mxu0 0.0
        %v3374 = vand.u32 %v344, 4294901760
        %v3375 = vsub.f32 %v344, %v3374
        %v3376 = vand.u32 %v3375, 4294901760
        %v3377 = vsub.f32 %v3375, %v3376
        %v3378 = vand.u32 %v3377, 4294901760
        %3379 = vmatpush2.msra.mxu0 %v3378
        %3380 = vmatprep.subr.mxu0 0.0
        %v3381 = vand.u32 %v343, 4294901760
        %v3382 = vsub.f32 %v343, %v3381
        %v3383 = vand.u32 %v3382, 4294901760
        %v3384 = vsub.f32 %v3382, %v3383
        %v3385 = vand.u32 %v3384, 4294901760
        %3386 = vmatpush2.msra.mxu0 %v3385
        %3387 = vmatprep.subr.mxu0 0.0
        %v3388 = vand.u32 %v342, 4294901760
        %v3389 = vsub.f32 %v342, %v3388
        %v3390 = vand.u32 %v3389, 4294901760
        %v3391 = vsub.f32 %v3389, %v3390
        %v3392 = vand.u32 %v3391, 4294901760
        %3393 = vmatpush2.msra.mxu0 %v3392
        %3394 = vmatprep.subr.mxu0 0.0
        %v3395 = vand.u32 %v341, 4294901760
        %v3396 = vsub.f32 %v341, %v3395
        %v3397 = vand.u32 %v3396, 4294901760
        %v3398 = vsub.f32 %v3396, %v3397
        %v3399 = vand.u32 %v3398, 4294901760
        %3400 = vmatpush2.msra.mxu0 %v3399
        %3401 = vmatprep.subr.mxu0 0.0
        %v3402 = vand.u32 %v340, 4294901760
        %v3403 = vsub.f32 %v340, %v3402
        %v3404 = vand.u32 %v3403, 4294901760
        %v3405 = vsub.f32 %v3403, %v3404
        %v3406 = vand.u32 %v3405, 4294901760
        %3407 = vmatpush2.msra.mxu0 %v3406
        %3408 = vmatprep.subr.mxu0 0.0
        %v3409 = vand.u32 %v339, 4294901760
        %v3410 = vsub.f32 %v339, %v3409
        %v3411 = vand.u32 %v3410, 4294901760
        %v3412 = vsub.f32 %v3410, %v3411
        %v3413 = vand.u32 %v3412, 4294901760
        %3414 = vmatpush2.msra.mxu0 %v3413
        %3415 = vmatprep.subr.mxu0 0.0
        %v3416 = vand.u32 %v338, 4294901760
        %v3417 = vsub.f32 %v338, %v3416
        %v3418 = vand.u32 %v3417, 4294901760
        %v3419 = vsub.f32 %v3417, %v3418
        %v3420 = vand.u32 %v3419, 4294901760
        %3421 = vmatpush2.msra.mxu0 %v3420
        %3422 = vmatprep.subr.mxu0 0.0
        %v3423 = vand.u32 %v337, 4294901760
        %v3424 = vsub.f32 %v337, %v3423
        %v3425 = vand.u32 %v3424, 4294901760
        %v3426 = vsub.f32 %v3424, %v3425
        %v3427 = vand.u32 %v3426, 4294901760
        %3428 = vmatpush2.msra.mxu0 %v3427
        %3429 = vmatprep.subr.mxu0 0.0
        %v3430 = vand.u32 %v336, 4294901760
        %v3431 = vsub.f32 %v336, %v3430
        %v3432 = vand.u32 %v3431, 4294901760
        %v3433 = vsub.f32 %v3431, %v3432
        %v3434 = vand.u32 %v3433, 4294901760
        %3435 = vmatpush2.msra.mxu0 %v3434
        %3436 = vmatprep.subr.mxu0 0.0
        %v3437 = vand.u32 %v335, 4294901760
        %v3438 = vsub.f32 %v335, %v3437
        %v3439 = vand.u32 %v3438, 4294901760
        %v3440 = vsub.f32 %v3438, %v3439
        %v3441 = vand.u32 %v3440, 4294901760
        %3442 = vmatpush2.msra.mxu0 %v3441
        %3443 = vmatprep.subr.mxu0 0.0
        %v3444 = vand.u32 %v334, 4294901760
        %v3445 = vsub.f32 %v334, %v3444
        %v3446 = vand.u32 %v3445, 4294901760
        %v3447 = vsub.f32 %v3445, %v3446
        %v3448 = vand.u32 %v3447, 4294901760
        %3449 = vmatpush2.msra.mxu0 %v3448
        %v3450 = vand.u32 %v210, 4294901760
        %3451 = vmatprep.mubr.f32.mxu0 %v3450
        %v3452 = vand.u32 %v209, 4294901760
        %3453 = vmatmul.mubr.f32.gmra.mxu0 %v3452
        %v3454 = vpop.f32.mrf.mxu0
        %v3455 = vadd.f32 %v3223, %v3454
        %v3456 = vpop.f32.mrf.mxu0
        %3457 = vdwg.mxu0
        %3458 = vmatprep.subr.mxu0 0.0
        %v3459 = vand.u32 %v333, 4294901760
        %v3460 = vsub.f32 %v333, %v3459
        %3461 = vmatpush1.msra.mxu0 %v3460
        %3462 = vmatprep.subr.mxu0 0.0
        %v3463 = vand.u32 %v332, 4294901760
        %v3464 = vsub.f32 %v332, %v3463
        %3465 = vmatpush1.msra.mxu0 %v3464
        %3466 = vmatprep.subr.mxu0 0.0
        %v3467 = vand.u32 %v331, 4294901760
        %v3468 = vsub.f32 %v331, %v3467
        %3469 = vmatpush1.msra.mxu0 %v3468
        %3470 = vmatprep.subr.mxu0 0.0
        %v3471 = vand.u32 %v330, 4294901760
        %v3472 = vsub.f32 %v330, %v3471
        %3473 = vmatpush1.msra.mxu0 %v3472
        %3474 = vmatprep.subr.mxu0 0.0
        %v3475 = vand.u32 %v329, 4294901760
        %v3476 = vsub.f32 %v329, %v3475
        %3477 = vmatpush1.msra.mxu0 %v3476
        %3478 = vmatprep.subr.mxu0 0.0
        %v3479 = vand.u32 %v328, 4294901760
        %v3480 = vsub.f32 %v328, %v3479
        %3481 = vmatpush1.msra.mxu0 %v3480
        %3482 = vmatprep.subr.mxu0 0.0
        %v3483 = vand.u32 %v327, 4294901760
        %v3484 = vsub.f32 %v327, %v3483
        %3485 = vmatpush1.msra.mxu0 %v3484
        %3486 = vmatprep.subr.mxu0 0.0
        %v3487 = vand.u32 %v326, 4294901760
        %v3488 = vsub.f32 %v326, %v3487
        %3489 = vmatpush1.msra.mxu0 %v3488
        %3490 = vmatprep.subr.mxu0 0.0
        %v3491 = vand.u32 %v325, 4294901760
        %v3492 = vsub.f32 %v325, %v3491
        %3493 = vmatpush1.msra.mxu0 %v3492
        %3494 = vmatprep.subr.mxu0 0.0
        %v3495 = vand.u32 %v324, 4294901760
        %v3496 = vsub.f32 %v324, %v3495
        %3497 = vmatpush1.msra.mxu0 %v3496
        %3498 = vmatprep.subr.mxu0 0.0
        %v3499 = vand.u32 %v323, 4294901760
        %v3500 = vsub.f32 %v323, %v3499
        %3501 = vmatpush1.msra.mxu0 %v3500
        %3502 = vmatprep.subr.mxu0 0.0
        %v3503 = vand.u32 %v322, 4294901760
        %v3504 = vsub.f32 %v322, %v3503
        %3505 = vmatpush1.msra.mxu0 %v3504
        %3506 = vmatprep.subr.mxu0 0.0
        %v3507 = vand.u32 %v321, 4294901760
        %v3508 = vsub.f32 %v321, %v3507
        %3509 = vmatpush1.msra.mxu0 %v3508
        %3510 = vmatprep.subr.mxu0 0.0
        %v3511 = vand.u32 %v320, 4294901760
        %v3512 = vsub.f32 %v320, %v3511
        %3513 = vmatpush1.msra.mxu0 %v3512
        %3514 = vmatprep.subr.mxu0 0.0
        %v3515 = vand.u32 %v319, 4294901760
        %v3516 = vsub.f32 %v319, %v3515
        %3517 = vmatpush1.msra.mxu0 %v3516
        %3518 = vmatprep.subr.mxu0 0.0
        %v3519 = vand.u32 %v318, 4294901760
        %v3520 = vsub.f32 %v318, %v3519
        %3521 = vmatpush1.msra.mxu0 %v3520
        %3522 = vmatprep.subr.mxu0 0.0
        %v3523 = vand.u32 %v349, 4294901760
        %v3524 = vsub.f32 %v349, %v3523
        %3525 = vmatpush2.msra.mxu0 %v3524
        %3526 = vmatprep.subr.mxu0 0.0
        %v3527 = vand.u32 %v348, 4294901760
        %v3528 = vsub.f32 %v348, %v3527
        %3529 = vmatpush2.msra.mxu0 %v3528
        %3530 = vmatprep.subr.mxu0 0.0
        %v3531 = vand.u32 %v347, 4294901760
        %v3532 = vsub.f32 %v347, %v3531
        %3533 = vmatpush2.msra.mxu0 %v3532
        %3534 = vmatprep.subr.mxu0 0.0
        %v3535 = vand.u32 %v346, 4294901760
        %v3536 = vsub.f32 %v346, %v3535
        %3537 = vmatpush2.msra.mxu0 %v3536
        %3538 = vmatprep.subr.mxu0 0.0
        %v3539 = vand.u32 %v345, 4294901760
        %v3540 = vsub.f32 %v345, %v3539
        %3541 = vmatpush2.msra.mxu0 %v3540
        %3542 = vmatprep.subr.mxu0 0.0
        %v3543 = vand.u32 %v344, 4294901760
        %v3544 = vsub.f32 %v344, %v3543
        %3545 = vmatpush2.msra.mxu0 %v3544
        %3546 = vmatprep.subr.mxu0 0.0
        %v3547 = vand.u32 %v343, 4294901760
        %v3548 = vsub.f32 %v343, %v3547
        %3549 = vmatpush2.msra.mxu0 %v3548
        %3550 = vmatprep.subr.mxu0 0.0
        %v3551 = vand.u32 %v342, 4294901760
        %v3552 = vsub.f32 %v342, %v3551
        %3553 = vmatpush2.msra.mxu0 %v3552
        %3554 = vmatprep.subr.mxu0 0.0
        %v3555 = vand.u32 %v341, 4294901760
        %v3556 = vsub.f32 %v341, %v3555
        %3557 = vmatpush2.msra.mxu0 %v3556
        %3558 = vmatprep.subr.mxu0 0.0
        %v3559 = vand.u32 %v340, 4294901760
        %v3560 = vsub.f32 %v340, %v3559
        %3561 = vmatpush2.msra.mxu0 %v3560
        %3562 = vmatprep.subr.mxu0 0.0
        %v3563 = vand.u32 %v339, 4294901760
        %v3564 = vsub.f32 %v339, %v3563
        %3565 = vmatpush2.msra.mxu0 %v3564
        %3566 = vmatprep.subr.mxu0 0.0
        %v3567 = vand.u32 %v338, 4294901760
        %v3568 = vsub.f32 %v338, %v3567
        %3569 = vmatpush2.msra.mxu0 %v3568
        %3570 = vmatprep.subr.mxu0 0.0
        %v3571 = vand.u32 %v337, 4294901760
        %v3572 = vsub.f32 %v337, %v3571
        %3573 = vmatpush2.msra.mxu0 %v3572
        %3574 = vmatprep.subr.mxu0 0.0
        %v3575 = vand.u32 %v336, 4294901760
        %v3576 = vsub.f32 %v336, %v3575
        %3577 = vmatpush2.msra.mxu0 %v3576
        %3578 = vmatprep.subr.mxu0 0.0
        %v3579 = vand.u32 %v335, 4294901760
        %v3580 = vsub.f32 %v335, %v3579
        %3581 = vmatpush2.msra.mxu0 %v3580
        %3582 = vmatprep.subr.mxu0 0.0
        %v3583 = vand.u32 %v334, 4294901760
        %v3584 = vsub.f32 %v334, %v3583
        %3585 = vmatpush2.msra.mxu0 %v3584
        %v3586 = vand.u32 %v210, 4294901760
        %v3587 = vsub.f32 %v210, %v3586
        %3588 = vmatprep.mubr.f32.mxu0 %v3587
        %v3589 = vand.u32 %v209, 4294901760
        %v3590 = vsub.f32 %v209, %v3589
        %3591 = vmatmul.mubr.f32.gmra.mxu0 %v3590
        %v3592 = vpop.f32.mrf.mxu0
        %v3593 = vadd.f32 %v3455, %v3592
        %v3594 = vpop.f32.mrf.mxu0
        %3595 = vdwg.mxu0
        %3596 = vmatprep.subr.mxu0 0.0
        %v3597 = vand.u32 %v333, 4294901760
        %3598 = vmatpush1.msra.mxu0 %v3597
        %3599 = vmatprep.subr.mxu0 0.0
        %v3600 = vand.u32 %v332, 4294901760
        %3601 = vmatpush1.msra.mxu0 %v3600
        %3602 = vmatprep.subr.mxu0 0.0
        %v3603 = vand.u32 %v331, 4294901760
        %3604 = vmatpush1.msra.mxu0 %v3603
        %3605 = vmatprep.subr.mxu0 0.0
        %v3606 = vand.u32 %v330, 4294901760
        %3607 = vmatpush1.msra.mxu0 %v3606
        %3608 = vmatprep.subr.mxu0 0.0
        %v3609 = vand.u32 %v329, 4294901760
        %3610 = vmatpush1.msra.mxu0 %v3609
        %3611 = vmatprep.subr.mxu0 0.0
        %v3612 = vand.u32 %v328, 4294901760
        %3613 = vmatpush1.msra.mxu0 %v3612
        %3614 = vmatprep.subr.mxu0 0.0
        %v3615 = vand.u32 %v327, 4294901760
        %3616 = vmatpush1.msra.mxu0 %v3615
        %3617 = vmatprep.subr.mxu0 0.0
        %v3618 = vand.u32 %v326, 4294901760
        %3619 = vmatpush1.msra.mxu0 %v3618
        %3620 = vmatprep.subr.mxu0 0.0
        %v3621 = vand.u32 %v325, 4294901760
        %3622 = vmatpush1.msra.mxu0 %v3621
        %3623 = vmatprep.subr.mxu0 0.0
        %v3624 = vand.u32 %v324, 4294901760
        %3625 = vmatpush1.msra.mxu0 %v3624
        %3626 = vmatprep.subr.mxu0 0.0
        %v3627 = vand.u32 %v323, 4294901760
        %3628 = vmatpush1.msra.mxu0 %v3627
        %3629 = vmatprep.subr.mxu0 0.0
        %v3630 = vand.u32 %v322, 4294901760
        %3631 = vmatpush1.msra.mxu0 %v3630
        %3632 = vmatprep.subr.mxu0 0.0
        %v3633 = vand.u32 %v321, 4294901760
        %3634 = vmatpush1.msra.mxu0 %v3633
        %3635 = vmatprep.subr.mxu0 0.0
        %v3636 = vand.u32 %v320, 4294901760
        %3637 = vmatpush1.msra.mxu0 %v3636
        %3638 = vmatprep.subr.mxu0 0.0
        %v3639 = vand.u32 %v319, 4294901760
        %3640 = vmatpush1.msra.mxu0 %v3639
        %3641 = vmatprep.subr.mxu0 0.0
        %v3642 = vand.u32 %v318, 4294901760
        %3643 = vmatpush1.msra.mxu0 %v3642
        %3644 = vmatprep.subr.mxu0 0.0
        %v3645 = vand.u32 %v349, 4294901760
        %3646 = vmatpush2.msra.mxu0 %v3645
        %3647 = vmatprep.subr.mxu0 0.0
        %v3648 = vand.u32 %v348, 4294901760
        %3649 = vmatpush2.msra.mxu0 %v3648
        %3650 = vmatprep.subr.mxu0 0.0
        %v3651 = vand.u32 %v347, 4294901760
        %3652 = vmatpush2.msra.mxu0 %v3651
        %3653 = vmatprep.subr.mxu0 0.0
        %v3654 = vand.u32 %v346, 4294901760
        %3655 = vmatpush2.msra.mxu0 %v3654
        %3656 = vmatprep.subr.mxu0 0.0
        %v3657 = vand.u32 %v345, 4294901760
        %3658 = vmatpush2.msra.mxu0 %v3657
        %3659 = vmatprep.subr.mxu0 0.0
        %v3660 = vand.u32 %v344, 4294901760
        %3661 = vmatpush2.msra.mxu0 %v3660
        %3662 = vmatprep.subr.mxu0 0.0
        %v3663 = vand.u32 %v343, 4294901760
        %3664 = vmatpush2.msra.mxu0 %v3663
        %3665 = vmatprep.subr.mxu0 0.0
        %v3666 = vand.u32 %v342, 4294901760
        %3667 = vmatpush2.msra.mxu0 %v3666
        %3668 = vmatprep.subr.mxu0 0.0
        %v3669 = vand.u32 %v341, 4294901760
        %3670 = vmatpush2.msra.mxu0 %v3669
        %3671 = vmatprep.subr.mxu0 0.0
        %v3672 = vand.u32 %v340, 4294901760
        %3673 = vmatpush2.msra.mxu0 %v3672
        %3674 = vmatprep.subr.mxu0 0.0
        %v3675 = vand.u32 %v339, 4294901760
        %3676 = vmatpush2.msra.mxu0 %v3675
        %3677 = vmatprep.subr.mxu0 0.0
        %v3678 = vand.u32 %v338, 4294901760
        %3679 = vmatpush2.msra.mxu0 %v3678
        %3680 = vmatprep.subr.mxu0 0.0
        %v3681 = vand.u32 %v337, 4294901760
        %3682 = vmatpush2.msra.mxu0 %v3681
        %3683 = vmatprep.subr.mxu0 0.0
        %v3684 = vand.u32 %v336, 4294901760
        %3685 = vmatpush2.msra.mxu0 %v3684
        %3686 = vmatprep.subr.mxu0 0.0
        %v3687 = vand.u32 %v335, 4294901760
        %3688 = vmatpush2.msra.mxu0 %v3687
        %3689 = vmatprep.subr.mxu0 0.0
        %v3690 = vand.u32 %v334, 4294901760
        %3691 = vmatpush2.msra.mxu0 %v3690
        %v3692 = vand.u32 %v210, 4294901760
        %v3693 = vsub.f32 %v210, %v3692
        %v3694 = vand.u32 %v3693, 4294901760
        %3695 = vmatprep.mubr.f32.mxu0 %v3694
        %v3696 = vand.u32 %v209, 4294901760
        %v3697 = vsub.f32 %v209, %v3696
        %v3698 = vand.u32 %v3697, 4294901760
        %3699 = vmatmul.mubr.f32.gmra.mxu0 %v3698
        %v3700 = vpop.f32.mrf.mxu0
        %v3701 = vadd.f32 %v3593, %v3700
        %v3702 = vpop.f32.mrf.mxu0
        %3703 = vdwg.mxu0
        %3704 = vmatprep.subr.mxu0 0.0
        %v3705 = vand.u32 %v333, 4294901760
        %v3706 = vsub.f32 %v333, %v3705
        %v3707 = vand.u32 %v3706, 4294901760
        %3708 = vmatpush1.msra.mxu0 %v3707
        %3709 = vmatprep.subr.mxu0 0.0
        %v3710 = vand.u32 %v332, 4294901760
        %v3711 = vsub.f32 %v332, %v3710
        %v3712 = vand.u32 %v3711, 4294901760
        %3713 = vmatpush1.msra.mxu0 %v3712
        %3714 = vmatprep.subr.mxu0 0.0
        %v3715 = vand.u32 %v331, 4294901760
        %v3716 = vsub.f32 %v331, %v3715
        %v3717 = vand.u32 %v3716, 4294901760
        %3718 = vmatpush1.msra.mxu0 %v3717
        %3719 = vmatprep.subr.mxu0 0.0
        %v3720 = vand.u32 %v330, 4294901760
        %v3721 = vsub.f32 %v330, %v3720
        %v3722 = vand.u32 %v3721, 4294901760
        %3723 = vmatpush1.msra.mxu0 %v3722
        %3724 = vmatprep.subr.mxu0 0.0
        %v3725 = vand.u32 %v329, 4294901760
        %v3726 = vsub.f32 %v329, %v3725
        %v3727 = vand.u32 %v3726, 4294901760
        %3728 = vmatpush1.msra.mxu0 %v3727
        %3729 = vmatprep.subr.mxu0 0.0
        %v3730 = vand.u32 %v328, 4294901760
        %v3731 = vsub.f32 %v328, %v3730
        %v3732 = vand.u32 %v3731, 4294901760
        %3733 = vmatpush1.msra.mxu0 %v3732
        %3734 = vmatprep.subr.mxu0 0.0
        %v3735 = vand.u32 %v327, 4294901760
        %v3736 = vsub.f32 %v327, %v3735
        %v3737 = vand.u32 %v3736, 4294901760
        %3738 = vmatpush1.msra.mxu0 %v3737
        %3739 = vmatprep.subr.mxu0 0.0
        %v3740 = vand.u32 %v326, 4294901760
        %v3741 = vsub.f32 %v326, %v3740
        %v3742 = vand.u32 %v3741, 4294901760
        %3743 = vmatpush1.msra.mxu0 %v3742
        %3744 = vmatprep.subr.mxu0 0.0
        %v3745 = vand.u32 %v325, 4294901760
        %v3746 = vsub.f32 %v325, %v3745
        %v3747 = vand.u32 %v3746, 4294901760
        %3748 = vmatpush1.msra.mxu0 %v3747
        %3749 = vmatprep.subr.mxu0 0.0
        %v3750 = vand.u32 %v324, 4294901760
        %v3751 = vsub.f32 %v324, %v3750
        %v3752 = vand.u32 %v3751, 4294901760
        %3753 = vmatpush1.msra.mxu0 %v3752
        %3754 = vmatprep.subr.mxu0 0.0
        %v3755 = vand.u32 %v323, 4294901760
        %v3756 = vsub.f32 %v323, %v3755
        %v3757 = vand.u32 %v3756, 4294901760
        %3758 = vmatpush1.msra.mxu0 %v3757
        %3759 = vmatprep.subr.mxu0 0.0
        %v3760 = vand.u32 %v322, 4294901760
        %v3761 = vsub.f32 %v322, %v3760
        %v3762 = vand.u32 %v3761, 4294901760
        %3763 = vmatpush1.msra.mxu0 %v3762
        %3764 = vmatprep.subr.mxu0 0.0
        %v3765 = vand.u32 %v321, 4294901760
        %v3766 = vsub.f32 %v321, %v3765
        %v3767 = vand.u32 %v3766, 4294901760
        %3768 = vmatpush1.msra.mxu0 %v3767
        %3769 = vmatprep.subr.mxu0 0.0
        %v3770 = vand.u32 %v320, 4294901760
        %v3771 = vsub.f32 %v320, %v3770
        %v3772 = vand.u32 %v3771, 4294901760
        %3773 = vmatpush1.msra.mxu0 %v3772
        %3774 = vmatprep.subr.mxu0 0.0
        %v3775 = vand.u32 %v319, 4294901760
        %v3776 = vsub.f32 %v319, %v3775
        %v3777 = vand.u32 %v3776, 4294901760
        %3778 = vmatpush1.msra.mxu0 %v3777
        %3779 = vmatprep.subr.mxu0 0.0
        %v3780 = vand.u32 %v318, 4294901760
        %v3781 = vsub.f32 %v318, %v3780
        %v3782 = vand.u32 %v3781, 4294901760
        %3783 = vmatpush1.msra.mxu0 %v3782
        %3784 = vmatprep.subr.mxu0 0.0
        %v3785 = vand.u32 %v349, 4294901760
        %v3786 = vsub.f32 %v349, %v3785
        %v3787 = vand.u32 %v3786, 4294901760
        %3788 = vmatpush2.msra.mxu0 %v3787
        %3789 = vmatprep.subr.mxu0 0.0
        %v3790 = vand.u32 %v348, 4294901760
        %v3791 = vsub.f32 %v348, %v3790
        %v3792 = vand.u32 %v3791, 4294901760
        %3793 = vmatpush2.msra.mxu0 %v3792
        %3794 = vmatprep.subr.mxu0 0.0
        %v3795 = vand.u32 %v347, 4294901760
        %v3796 = vsub.f32 %v347, %v3795
        %v3797 = vand.u32 %v3796, 4294901760
        %3798 = vmatpush2.msra.mxu0 %v3797
        %3799 = vmatprep.subr.mxu0 0.0
        %v3800 = vand.u32 %v346, 4294901760
        %v3801 = vsub.f32 %v346, %v3800
        %v3802 = vand.u32 %v3801, 4294901760
        %3803 = vmatpush2.msra.mxu0 %v3802
        %3804 = vmatprep.subr.mxu0 0.0
        %v3805 = vand.u32 %v345, 4294901760
        %v3806 = vsub.f32 %v345, %v3805
        %v3807 = vand.u32 %v3806, 4294901760
        %3808 = vmatpush2.msra.mxu0 %v3807
        %3809 = vmatprep.subr.mxu0 0.0
        %v3810 = vand.u32 %v344, 4294901760
        %v3811 = vsub.f32 %v344, %v3810
        %v3812 = vand.u32 %v3811, 4294901760
        %3813 = vmatpush2.msra.mxu0 %v3812
        %3814 = vmatprep.subr.mxu0 0.0
        %v3815 = vand.u32 %v343, 4294901760
        %v3816 = vsub.f32 %v343, %v3815
        %v3817 = vand.u32 %v3816, 4294901760
        %3818 = vmatpush2.msra.mxu0 %v3817
        %3819 = vmatprep.subr.mxu0 0.0
        %v3820 = vand.u32 %v342, 4294901760
        %v3821 = vsub.f32 %v342, %v3820
        %v3822 = vand.u32 %v3821, 4294901760
        %3823 = vmatpush2.msra.mxu0 %v3822
        %3824 = vmatprep.subr.mxu0 0.0
        %v3825 = vand.u32 %v341, 4294901760
        %v3826 = vsub.f32 %v341, %v3825
        %v3827 = vand.u32 %v3826, 4294901760
        %3828 = vmatpush2.msra.mxu0 %v3827
        %3829 = vmatprep.subr.mxu0 0.0
        %v3830 = vand.u32 %v340, 4294901760
        %v3831 = vsub.f32 %v340, %v3830
        %v3832 = vand.u32 %v3831, 4294901760
        %3833 = vmatpush2.msra.mxu0 %v3832
        %3834 = vmatprep.subr.mxu0 0.0
        %v3835 = vand.u32 %v339, 4294901760
        %v3836 = vsub.f32 %v339, %v3835
        %v3837 = vand.u32 %v3836, 4294901760
        %3838 = vmatpush2.msra.mxu0 %v3837
        %3839 = vmatprep.subr.mxu0 0.0
        %v3840 = vand.u32 %v338, 4294901760
        %v3841 = vsub.f32 %v338, %v3840
        %v3842 = vand.u32 %v3841, 4294901760
        %3843 = vmatpush2.msra.mxu0 %v3842
        %3844 = vmatprep.subr.mxu0 0.0
        %v3845 = vand.u32 %v337, 4294901760
        %v3846 = vsub.f32 %v337, %v3845
        %v3847 = vand.u32 %v3846, 4294901760
        %3848 = vmatpush2.msra.mxu0 %v3847
        %3849 = vmatprep.subr.mxu0 0.0
        %v3850 = vand.u32 %v336, 4294901760
        %v3851 = vsub.f32 %v336, %v3850
        %v3852 = vand.u32 %v3851, 4294901760
        %3853 = vmatpush2.msra.mxu0 %v3852
        %3854 = vmatprep.subr.mxu0 0.0
        %v3855 = vand.u32 %v335, 4294901760
        %v3856 = vsub.f32 %v335, %v3855
        %v3857 = vand.u32 %v3856, 4294901760
        %3858 = vmatpush2.msra.mxu0 %v3857
        %3859 = vmatprep.subr.mxu0 0.0
        %v3860 = vand.u32 %v334, 4294901760
        %v3861 = vsub.f32 %v334, %v3860
        %v3862 = vand.u32 %v3861, 4294901760
        %3863 = vmatpush2.msra.mxu0 %v3862
        %v3864 = vand.u32 %v210, 4294901760
        %3865 = vmatprep.mubr.f32.mxu0 %v3864
        %v3866 = vand.u32 %v209, 4294901760
        %3867 = vmatmul.mubr.f32.gmra.mxu0 %v3866
        %v3868 = vpop.f32.mrf.mxu0
        %v3869 = vadd.f32 %v3701, %v3868
        %v3870 = vpop.f32.mrf.mxu0
        %3871 = vdwg.mxu0
        %3872 = vmatprep.subr.mxu0 0.0
        %v3873 = vand.u32 %v333, 4294901760
        %3874 = vmatpush1.msra.mxu0 %v3873
        %3875 = vmatprep.subr.mxu0 0.0
        %v3876 = vand.u32 %v332, 4294901760
        %3877 = vmatpush1.msra.mxu0 %v3876
        %3878 = vmatprep.subr.mxu0 0.0
        %v3879 = vand.u32 %v331, 4294901760
        %3880 = vmatpush1.msra.mxu0 %v3879
        %3881 = vmatprep.subr.mxu0 0.0
        %v3882 = vand.u32 %v330, 4294901760
        %3883 = vmatpush1.msra.mxu0 %v3882
        %3884 = vmatprep.subr.mxu0 0.0
        %v3885 = vand.u32 %v329, 4294901760
        %3886 = vmatpush1.msra.mxu0 %v3885
        %3887 = vmatprep.subr.mxu0 0.0
        %v3888 = vand.u32 %v328, 4294901760
        %3889 = vmatpush1.msra.mxu0 %v3888
        %3890 = vmatprep.subr.mxu0 0.0
        %v3891 = vand.u32 %v327, 4294901760
        %3892 = vmatpush1.msra.mxu0 %v3891
        %3893 = vmatprep.subr.mxu0 0.0
        %v3894 = vand.u32 %v326, 4294901760
        %3895 = vmatpush1.msra.mxu0 %v3894
        %3896 = vmatprep.subr.mxu0 0.0
        %v3897 = vand.u32 %v325, 4294901760
        %3898 = vmatpush1.msra.mxu0 %v3897
        %3899 = vmatprep.subr.mxu0 0.0
        %v3900 = vand.u32 %v324, 4294901760
        %3901 = vmatpush1.msra.mxu0 %v3900
        %3902 = vmatprep.subr.mxu0 0.0
        %v3903 = vand.u32 %v323, 4294901760
        %3904 = vmatpush1.msra.mxu0 %v3903
        %3905 = vmatprep.subr.mxu0 0.0
        %v3906 = vand.u32 %v322, 4294901760
        %3907 = vmatpush1.msra.mxu0 %v3906
        %3908 = vmatprep.subr.mxu0 0.0
        %v3909 = vand.u32 %v321, 4294901760
        %3910 = vmatpush1.msra.mxu0 %v3909
        %3911 = vmatprep.subr.mxu0 0.0
        %v3912 = vand.u32 %v320, 4294901760
        %3913 = vmatpush1.msra.mxu0 %v3912
        %3914 = vmatprep.subr.mxu0 0.0
        %v3915 = vand.u32 %v319, 4294901760
        %3916 = vmatpush1.msra.mxu0 %v3915
        %3917 = vmatprep.subr.mxu0 0.0
        %v3918 = vand.u32 %v318, 4294901760
        %3919 = vmatpush1.msra.mxu0 %v3918
        %3920 = vmatprep.subr.mxu0 0.0
        %v3921 = vand.u32 %v349, 4294901760
        %3922 = vmatpush2.msra.mxu0 %v3921
        %3923 = vmatprep.subr.mxu0 0.0
        %v3924 = vand.u32 %v348, 4294901760
        %3925 = vmatpush2.msra.mxu0 %v3924
        %3926 = vmatprep.subr.mxu0 0.0
        %v3927 = vand.u32 %v347, 4294901760
        %3928 = vmatpush2.msra.mxu0 %v3927
        %3929 = vmatprep.subr.mxu0 0.0
        %v3930 = vand.u32 %v346, 4294901760
        %3931 = vmatpush2.msra.mxu0 %v3930
        %3932 = vmatprep.subr.mxu0 0.0
        %v3933 = vand.u32 %v345, 4294901760
        %3934 = vmatpush2.msra.mxu0 %v3933
        %3935 = vmatprep.subr.mxu0 0.0
        %v3936 = vand.u32 %v344, 4294901760
        %3937 = vmatpush2.msra.mxu0 %v3936
        %3938 = vmatprep.subr.mxu0 0.0
        %v3939 = vand.u32 %v343, 4294901760
        %3940 = vmatpush2.msra.mxu0 %v3939
        %3941 = vmatprep.subr.mxu0 0.0
        %v3942 = vand.u32 %v342, 4294901760
        %3943 = vmatpush2.msra.mxu0 %v3942
        %3944 = vmatprep.subr.mxu0 0.0
        %v3945 = vand.u32 %v341, 4294901760
        %3946 = vmatpush2.msra.mxu0 %v3945
        %3947 = vmatprep.subr.mxu0 0.0
        %v3948 = vand.u32 %v340, 4294901760
        %3949 = vmatpush2.msra.mxu0 %v3948
        %3950 = vmatprep.subr.mxu0 0.0
        %v3951 = vand.u32 %v339, 4294901760
        %3952 = vmatpush2.msra.mxu0 %v3951
        %3953 = vmatprep.subr.mxu0 0.0
        %v3954 = vand.u32 %v338, 4294901760
        %3955 = vmatpush2.msra.mxu0 %v3954
        %3956 = vmatprep.subr.mxu0 0.0
        %v3957 = vand.u32 %v337, 4294901760
        %3958 = vmatpush2.msra.mxu0 %v3957
        %3959 = vmatprep.subr.mxu0 0.0
        %v3960 = vand.u32 %v336, 4294901760
        %3961 = vmatpush2.msra.mxu0 %v3960
        %3962 = vmatprep.subr.mxu0 0.0
        %v3963 = vand.u32 %v335, 4294901760
        %3964 = vmatpush2.msra.mxu0 %v3963
        %3965 = vmatprep.subr.mxu0 0.0
        %v3966 = vand.u32 %v334, 4294901760
        %3967 = vmatpush2.msra.mxu0 %v3966
        %v3968 = vand.u32 %v210, 4294901760
        %3969 = vmatprep.mubr.f32.mxu0 %v3968
        %v3970 = vand.u32 %v209, 4294901760
        %3971 = vmatmul.mubr.f32.gmra.mxu0 %v3970
        %v3972 = vpop.f32.mrf.mxu0
        %v3973 = vadd.f32 %v3869, %v3972
        %v3974 = vpop.f32.mrf.mxu0
        %3975 = vdwg.mxu0
        %3976 = vmatprep.subr.mxu0 0.0
        %v3977 = vand.u32 %v365, 4294901760
        %3978 = vmatpush1.msra.mxu0 %v3977
        %3979 = vmatprep.subr.mxu0 0.0
        %v3980 = vand.u32 %v364, 4294901760
        %3981 = vmatpush1.msra.mxu0 %v3980
        %3982 = vmatprep.subr.mxu0 0.0
        %v3983 = vand.u32 %v363, 4294901760
        %3984 = vmatpush1.msra.mxu0 %v3983
        %3985 = vmatprep.subr.mxu0 0.0
        %v3986 = vand.u32 %v362, 4294901760
        %3987 = vmatpush1.msra.mxu0 %v3986
        %3988 = vmatprep.subr.mxu0 0.0
        %v3989 = vand.u32 %v361, 4294901760
        %3990 = vmatpush1.msra.mxu0 %v3989
        %3991 = vmatprep.subr.mxu0 0.0
        %v3992 = vand.u32 %v360, 4294901760
        %3993 = vmatpush1.msra.mxu0 %v3992
        %3994 = vmatprep.subr.mxu0 0.0
        %v3995 = vand.u32 %v359, 4294901760
        %3996 = vmatpush1.msra.mxu0 %v3995
        %3997 = vmatprep.subr.mxu0 0.0
        %v3998 = vand.u32 %v358, 4294901760
        %3999 = vmatpush1.msra.mxu0 %v3998
        %4000 = vmatprep.subr.mxu0 0.0
        %v4001 = vand.u32 %v357, 4294901760
        %4002 = vmatpush1.msra.mxu0 %v4001
        %4003 = vmatprep.subr.mxu0 0.0
        %v4004 = vand.u32 %v356, 4294901760
        %4005 = vmatpush1.msra.mxu0 %v4004
        %4006 = vmatprep.subr.mxu0 0.0
        %v4007 = vand.u32 %v355, 4294901760
        %4008 = vmatpush1.msra.mxu0 %v4007
        %4009 = vmatprep.subr.mxu0 0.0
        %v4010 = vand.u32 %v354, 4294901760
        %4011 = vmatpush1.msra.mxu0 %v4010
        %4012 = vmatprep.subr.mxu0 0.0
        %v4013 = vand.u32 %v353, 4294901760
        %4014 = vmatpush1.msra.mxu0 %v4013
        %4015 = vmatprep.subr.mxu0 0.0
        %v4016 = vand.u32 %v352, 4294901760
        %4017 = vmatpush1.msra.mxu0 %v4016
        %4018 = vmatprep.subr.mxu0 0.0
        %v4019 = vand.u32 %v351, 4294901760
        %4020 = vmatpush1.msra.mxu0 %v4019
        %4021 = vmatprep.subr.mxu0 0.0
        %v4022 = vand.u32 %v350, 4294901760
        %4023 = vmatpush1.msra.mxu0 %v4022
        %4024 = vmatprep.subr.mxu0 0.0
        %v4025 = vand.u32 %v381, 4294901760
        %4026 = vmatpush2.msra.mxu0 %v4025
        %4027 = vmatprep.subr.mxu0 0.0
        %v4028 = vand.u32 %v380, 4294901760
        %4029 = vmatpush2.msra.mxu0 %v4028
        %4030 = vmatprep.subr.mxu0 0.0
        %v4031 = vand.u32 %v379, 4294901760
        %4032 = vmatpush2.msra.mxu0 %v4031
        %4033 = vmatprep.subr.mxu0 0.0
        %v4034 = vand.u32 %v378, 4294901760
        %4035 = vmatpush2.msra.mxu0 %v4034
        %4036 = vmatprep.subr.mxu0 0.0
        %v4037 = vand.u32 %v377, 4294901760
        %4038 = vmatpush2.msra.mxu0 %v4037
        %4039 = vmatprep.subr.mxu0 0.0
        %v4040 = vand.u32 %v376, 4294901760
        %4041 = vmatpush2.msra.mxu0 %v4040
        %4042 = vmatprep.subr.mxu0 0.0
        %v4043 = vand.u32 %v375, 4294901760
        %4044 = vmatpush2.msra.mxu0 %v4043
        %4045 = vmatprep.subr.mxu0 0.0
        %v4046 = vand.u32 %v374, 4294901760
        %4047 = vmatpush2.msra.mxu0 %v4046
        %4048 = vmatprep.subr.mxu0 0.0
        %v4049 = vand.u32 %v373, 4294901760
        %4050 = vmatpush2.msra.mxu0 %v4049
        %4051 = vmatprep.subr.mxu0 0.0
        %v4052 = vand.u32 %v372, 4294901760
        %4053 = vmatpush2.msra.mxu0 %v4052
        %4054 = vmatprep.subr.mxu0 0.0
        %v4055 = vand.u32 %v371, 4294901760
        %4056 = vmatpush2.msra.mxu0 %v4055
        %4057 = vmatprep.subr.mxu0 0.0
        %v4058 = vand.u32 %v370, 4294901760
        %4059 = vmatpush2.msra.mxu0 %v4058
        %4060 = vmatprep.subr.mxu0 0.0
        %v4061 = vand.u32 %v369, 4294901760
        %4062 = vmatpush2.msra.mxu0 %v4061
        %4063 = vmatprep.subr.mxu0 0.0
        %v4064 = vand.u32 %v368, 4294901760
        %4065 = vmatpush2.msra.mxu0 %v4064
        %4066 = vmatprep.subr.mxu0 0.0
        %v4067 = vand.u32 %v367, 4294901760
        %4068 = vmatpush2.msra.mxu0 %v4067
        %4069 = vmatprep.subr.mxu0 0.0
        %v4070 = vand.u32 %v366, 4294901760
        %4071 = vmatpush2.msra.mxu0 %v4070
        %v4072 = vand.u32 %v212, 4294901760
        %v4073 = vsub.f32 %v212, %v4072
        %v4074 = vand.u32 %v4073, 4294901760
        %v4075 = vsub.f32 %v4073, %v4074
        %v4076 = vand.u32 %v4075, 4294901760
        %4077 = vmatprep.mubr.f32.mxu0 %v4076
        %v4078 = vand.u32 %v211, 4294901760
        %v4079 = vsub.f32 %v211, %v4078
        %v4080 = vand.u32 %v4079, 4294901760
        %v4081 = vsub.f32 %v4079, %v4080
        %v4082 = vand.u32 %v4081, 4294901760
        %4083 = vmatmul.mubr.f32.gmra.mxu0 %v4082
        %v4084 = vpop.f32.mrf.mxu0
        %v4085 = vadd.f32 %v3973, %v4084
        %v4086 = vpop.f32.mrf.mxu0
        %4087 = vdwg.mxu0
        %4088 = vmatprep.subr.mxu0 0.0
        %v4089 = vand.u32 %v365, 4294901760
        %v4090 = vsub.f32 %v365, %v4089
        %v4091 = vand.u32 %v4090, 4294901760
        %v4092 = vsub.f32 %v4090, %v4091
        %v4093 = vand.u32 %v4092, 4294901760
        %4094 = vmatpush1.msra.mxu0 %v4093
        %4095 = vmatprep.subr.mxu0 0.0
        %v4096 = vand.u32 %v364, 4294901760
        %v4097 = vsub.f32 %v364, %v4096
        %v4098 = vand.u32 %v4097, 4294901760
        %v4099 = vsub.f32 %v4097, %v4098
        %v4100 = vand.u32 %v4099, 4294901760
        %4101 = vmatpush1.msra.mxu0 %v4100
        %4102 = vmatprep.subr.mxu0 0.0
        %v4103 = vand.u32 %v363, 4294901760
        %v4104 = vsub.f32 %v363, %v4103
        %v4105 = vand.u32 %v4104, 4294901760
        %v4106 = vsub.f32 %v4104, %v4105
        %v4107 = vand.u32 %v4106, 4294901760
        %4108 = vmatpush1.msra.mxu0 %v4107
        %4109 = vmatprep.subr.mxu0 0.0
        %v4110 = vand.u32 %v362, 4294901760
        %v4111 = vsub.f32 %v362, %v4110
        %v4112 = vand.u32 %v4111, 4294901760
        %v4113 = vsub.f32 %v4111, %v4112
        %v4114 = vand.u32 %v4113, 4294901760
        %4115 = vmatpush1.msra.mxu0 %v4114
        %4116 = vmatprep.subr.mxu0 0.0
        %v4117 = vand.u32 %v361, 4294901760
        %v4118 = vsub.f32 %v361, %v4117
        %v4119 = vand.u32 %v4118, 4294901760
        %v4120 = vsub.f32 %v4118, %v4119
        %v4121 = vand.u32 %v4120, 4294901760
        %4122 = vmatpush1.msra.mxu0 %v4121
        %4123 = vmatprep.subr.mxu0 0.0
        %v4124 = vand.u32 %v360, 4294901760
        %v4125 = vsub.f32 %v360, %v4124
        %v4126 = vand.u32 %v4125, 4294901760
        %v4127 = vsub.f32 %v4125, %v4126
        %v4128 = vand.u32 %v4127, 4294901760
        %4129 = vmatpush1.msra.mxu0 %v4128
        %4130 = vmatprep.subr.mxu0 0.0
        %v4131 = vand.u32 %v359, 4294901760
        %v4132 = vsub.f32 %v359, %v4131
        %v4133 = vand.u32 %v4132, 4294901760
        %v4134 = vsub.f32 %v4132, %v4133
        %v4135 = vand.u32 %v4134, 4294901760
        %4136 = vmatpush1.msra.mxu0 %v4135
        %4137 = vmatprep.subr.mxu0 0.0
        %v4138 = vand.u32 %v358, 4294901760
        %v4139 = vsub.f32 %v358, %v4138
        %v4140 = vand.u32 %v4139, 4294901760
        %v4141 = vsub.f32 %v4139, %v4140
        %v4142 = vand.u32 %v4141, 4294901760
        %4143 = vmatpush1.msra.mxu0 %v4142
        %4144 = vmatprep.subr.mxu0 0.0
        %v4145 = vand.u32 %v357, 4294901760
        %v4146 = vsub.f32 %v357, %v4145
        %v4147 = vand.u32 %v4146, 4294901760
        %v4148 = vsub.f32 %v4146, %v4147
        %v4149 = vand.u32 %v4148, 4294901760
        %4150 = vmatpush1.msra.mxu0 %v4149
        %4151 = vmatprep.subr.mxu0 0.0
        %v4152 = vand.u32 %v356, 4294901760
        %v4153 = vsub.f32 %v356, %v4152
        %v4154 = vand.u32 %v4153, 4294901760
        %v4155 = vsub.f32 %v4153, %v4154
        %v4156 = vand.u32 %v4155, 4294901760
        %4157 = vmatpush1.msra.mxu0 %v4156
        %4158 = vmatprep.subr.mxu0 0.0
        %v4159 = vand.u32 %v355, 4294901760
        %v4160 = vsub.f32 %v355, %v4159
        %v4161 = vand.u32 %v4160, 4294901760
        %v4162 = vsub.f32 %v4160, %v4161
        %v4163 = vand.u32 %v4162, 4294901760
        %4164 = vmatpush1.msra.mxu0 %v4163
        %4165 = vmatprep.subr.mxu0 0.0
        %v4166 = vand.u32 %v354, 4294901760
        %v4167 = vsub.f32 %v354, %v4166
        %v4168 = vand.u32 %v4167, 4294901760
        %v4169 = vsub.f32 %v4167, %v4168
        %v4170 = vand.u32 %v4169, 4294901760
        %4171 = vmatpush1.msra.mxu0 %v4170
        %4172 = vmatprep.subr.mxu0 0.0
        %v4173 = vand.u32 %v353, 4294901760
        %v4174 = vsub.f32 %v353, %v4173
        %v4175 = vand.u32 %v4174, 4294901760
        %v4176 = vsub.f32 %v4174, %v4175
        %v4177 = vand.u32 %v4176, 4294901760
        %4178 = vmatpush1.msra.mxu0 %v4177
        %4179 = vmatprep.subr.mxu0 0.0
        %v4180 = vand.u32 %v352, 4294901760
        %v4181 = vsub.f32 %v352, %v4180
        %v4182 = vand.u32 %v4181, 4294901760
        %v4183 = vsub.f32 %v4181, %v4182
        %v4184 = vand.u32 %v4183, 4294901760
        %4185 = vmatpush1.msra.mxu0 %v4184
        %4186 = vmatprep.subr.mxu0 0.0
        %v4187 = vand.u32 %v351, 4294901760
        %v4188 = vsub.f32 %v351, %v4187
        %v4189 = vand.u32 %v4188, 4294901760
        %v4190 = vsub.f32 %v4188, %v4189
        %v4191 = vand.u32 %v4190, 4294901760
        %4192 = vmatpush1.msra.mxu0 %v4191
        %4193 = vmatprep.subr.mxu0 0.0
        %v4194 = vand.u32 %v350, 4294901760
        %v4195 = vsub.f32 %v350, %v4194
        %v4196 = vand.u32 %v4195, 4294901760
        %v4197 = vsub.f32 %v4195, %v4196
        %v4198 = vand.u32 %v4197, 4294901760
        %4199 = vmatpush1.msra.mxu0 %v4198
        %4200 = vmatprep.subr.mxu0 0.0
        %v4201 = vand.u32 %v381, 4294901760
        %v4202 = vsub.f32 %v381, %v4201
        %v4203 = vand.u32 %v4202, 4294901760
        %v4204 = vsub.f32 %v4202, %v4203
        %v4205 = vand.u32 %v4204, 4294901760
        %4206 = vmatpush2.msra.mxu0 %v4205
        %4207 = vmatprep.subr.mxu0 0.0
        %v4208 = vand.u32 %v380, 4294901760
        %v4209 = vsub.f32 %v380, %v4208
        %v4210 = vand.u32 %v4209, 4294901760
        %v4211 = vsub.f32 %v4209, %v4210
        %v4212 = vand.u32 %v4211, 4294901760
        %4213 = vmatpush2.msra.mxu0 %v4212
        %4214 = vmatprep.subr.mxu0 0.0
        %v4215 = vand.u32 %v379, 4294901760
        %v4216 = vsub.f32 %v379, %v4215
        %v4217 = vand.u32 %v4216, 4294901760
        %v4218 = vsub.f32 %v4216, %v4217
        %v4219 = vand.u32 %v4218, 4294901760
        %4220 = vmatpush2.msra.mxu0 %v4219
        %4221 = vmatprep.subr.mxu0 0.0
        %v4222 = vand.u32 %v378, 4294901760
        %v4223 = vsub.f32 %v378, %v4222
        %v4224 = vand.u32 %v4223, 4294901760
        %v4225 = vsub.f32 %v4223, %v4224
        %v4226 = vand.u32 %v4225, 4294901760
        %4227 = vmatpush2.msra.mxu0 %v4226
        %4228 = vmatprep.subr.mxu0 0.0
        %v4229 = vand.u32 %v377, 4294901760
        %v4230 = vsub.f32 %v377, %v4229
        %v4231 = vand.u32 %v4230, 4294901760
        %v4232 = vsub.f32 %v4230, %v4231
        %v4233 = vand.u32 %v4232, 4294901760
        %4234 = vmatpush2.msra.mxu0 %v4233
        %4235 = vmatprep.subr.mxu0 0.0
        %v4236 = vand.u32 %v376, 4294901760
        %v4237 = vsub.f32 %v376, %v4236
        %v4238 = vand.u32 %v4237, 4294901760
        %v4239 = vsub.f32 %v4237, %v4238
        %v4240 = vand.u32 %v4239, 4294901760
        %4241 = vmatpush2.msra.mxu0 %v4240
        %4242 = vmatprep.subr.mxu0 0.0
        %v4243 = vand.u32 %v375, 4294901760
        %v4244 = vsub.f32 %v375, %v4243
        %v4245 = vand.u32 %v4244, 4294901760
        %v4246 = vsub.f32 %v4244, %v4245
        %v4247 = vand.u32 %v4246, 4294901760
        %4248 = vmatpush2.msra.mxu0 %v4247
        %4249 = vmatprep.subr.mxu0 0.0
        %v4250 = vand.u32 %v374, 4294901760
        %v4251 = vsub.f32 %v374, %v4250
        %v4252 = vand.u32 %v4251, 4294901760
        %v4253 = vsub.f32 %v4251, %v4252
        %v4254 = vand.u32 %v4253, 4294901760
        %4255 = vmatpush2.msra.mxu0 %v4254
        %4256 = vmatprep.subr.mxu0 0.0
        %v4257 = vand.u32 %v373, 4294901760
        %v4258 = vsub.f32 %v373, %v4257
        %v4259 = vand.u32 %v4258, 4294901760
        %v4260 = vsub.f32 %v4258, %v4259
        %v4261 = vand.u32 %v4260, 4294901760
        %4262 = vmatpush2.msra.mxu0 %v4261
        %4263 = vmatprep.subr.mxu0 0.0
        %v4264 = vand.u32 %v372, 4294901760
        %v4265 = vsub.f32 %v372, %v4264
        %v4266 = vand.u32 %v4265, 4294901760
        %v4267 = vsub.f32 %v4265, %v4266
        %v4268 = vand.u32 %v4267, 4294901760
        %4269 = vmatpush2.msra.mxu0 %v4268
        %4270 = vmatprep.subr.mxu0 0.0
        %v4271 = vand.u32 %v371, 4294901760
        %v4272 = vsub.f32 %v371, %v4271
        %v4273 = vand.u32 %v4272, 4294901760
        %v4274 = vsub.f32 %v4272, %v4273
        %v4275 = vand.u32 %v4274, 4294901760
        %4276 = vmatpush2.msra.mxu0 %v4275
        %4277 = vmatprep.subr.mxu0 0.0
        %v4278 = vand.u32 %v370, 4294901760
        %v4279 = vsub.f32 %v370, %v4278
        %v4280 = vand.u32 %v4279, 4294901760
        %v4281 = vsub.f32 %v4279, %v4280
        %v4282 = vand.u32 %v4281, 4294901760
        %4283 = vmatpush2.msra.mxu0 %v4282
        %4284 = vmatprep.subr.mxu0 0.0
        %v4285 = vand.u32 %v369, 4294901760
        %v4286 = vsub.f32 %v369, %v4285
        %v4287 = vand.u32 %v4286, 4294901760
        %v4288 = vsub.f32 %v4286, %v4287
        %v4289 = vand.u32 %v4288, 4294901760
        %4290 = vmatpush2.msra.mxu0 %v4289
        %4291 = vmatprep.subr.mxu0 0.0
        %v4292 = vand.u32 %v368, 4294901760
        %v4293 = vsub.f32 %v368, %v4292
        %v4294 = vand.u32 %v4293, 4294901760
        %v4295 = vsub.f32 %v4293, %v4294
        %v4296 = vand.u32 %v4295, 4294901760
        %4297 = vmatpush2.msra.mxu0 %v4296
        %4298 = vmatprep.subr.mxu0 0.0
        %v4299 = vand.u32 %v367, 4294901760
        %v4300 = vsub.f32 %v367, %v4299
        %v4301 = vand.u32 %v4300, 4294901760
        %v4302 = vsub.f32 %v4300, %v4301
        %v4303 = vand.u32 %v4302, 4294901760
        %4304 = vmatpush2.msra.mxu0 %v4303
        %4305 = vmatprep.subr.mxu0 0.0
        %v4306 = vand.u32 %v366, 4294901760
        %v4307 = vsub.f32 %v366, %v4306
        %v4308 = vand.u32 %v4307, 4294901760
        %v4309 = vsub.f32 %v4307, %v4308
        %v4310 = vand.u32 %v4309, 4294901760
        %4311 = vmatpush2.msra.mxu0 %v4310
        %v4312 = vand.u32 %v212, 4294901760
        %4313 = vmatprep.mubr.f32.mxu0 %v4312
        %v4314 = vand.u32 %v211, 4294901760
        %4315 = vmatmul.mubr.f32.gmra.mxu0 %v4314
        %v4316 = vpop.f32.mrf.mxu0
        %v4317 = vadd.f32 %v4085, %v4316
        %v4318 = vpop.f32.mrf.mxu0
        %4319 = vdwg.mxu0
        %4320 = vmatprep.subr.mxu0 0.0
        %v4321 = vand.u32 %v365, 4294901760
        %v4322 = vsub.f32 %v365, %v4321
        %4323 = vmatpush1.msra.mxu0 %v4322
        %4324 = vmatprep.subr.mxu0 0.0
        %v4325 = vand.u32 %v364, 4294901760
        %v4326 = vsub.f32 %v364, %v4325
        %4327 = vmatpush1.msra.mxu0 %v4326
        %4328 = vmatprep.subr.mxu0 0.0
        %v4329 = vand.u32 %v363, 4294901760
        %v4330 = vsub.f32 %v363, %v4329
        %4331 = vmatpush1.msra.mxu0 %v4330
        %4332 = vmatprep.subr.mxu0 0.0
        %v4333 = vand.u32 %v362, 4294901760
        %v4334 = vsub.f32 %v362, %v4333
        %4335 = vmatpush1.msra.mxu0 %v4334
        %4336 = vmatprep.subr.mxu0 0.0
        %v4337 = vand.u32 %v361, 4294901760
        %v4338 = vsub.f32 %v361, %v4337
        %4339 = vmatpush1.msra.mxu0 %v4338
        %4340 = vmatprep.subr.mxu0 0.0
        %v4341 = vand.u32 %v360, 4294901760
        %v4342 = vsub.f32 %v360, %v4341
        %4343 = vmatpush1.msra.mxu0 %v4342
        %4344 = vmatprep.subr.mxu0 0.0
        %v4345 = vand.u32 %v359, 4294901760
        %v4346 = vsub.f32 %v359, %v4345
        %4347 = vmatpush1.msra.mxu0 %v4346
        %4348 = vmatprep.subr.mxu0 0.0
        %v4349 = vand.u32 %v358, 4294901760
        %v4350 = vsub.f32 %v358, %v4349
        %4351 = vmatpush1.msra.mxu0 %v4350
        %4352 = vmatprep.subr.mxu0 0.0
        %v4353 = vand.u32 %v357, 4294901760
        %v4354 = vsub.f32 %v357, %v4353
        %4355 = vmatpush1.msra.mxu0 %v4354
        %4356 = vmatprep.subr.mxu0 0.0
        %v4357 = vand.u32 %v356, 4294901760
        %v4358 = vsub.f32 %v356, %v4357
        %4359 = vmatpush1.msra.mxu0 %v4358
        %4360 = vmatprep.subr.mxu0 0.0
        %v4361 = vand.u32 %v355, 4294901760
        %v4362 = vsub.f32 %v355, %v4361
        %4363 = vmatpush1.msra.mxu0 %v4362
        %4364 = vmatprep.subr.mxu0 0.0
        %v4365 = vand.u32 %v354, 4294901760
        %v4366 = vsub.f32 %v354, %v4365
        %4367 = vmatpush1.msra.mxu0 %v4366
        %4368 = vmatprep.subr.mxu0 0.0
        %v4369 = vand.u32 %v353, 4294901760
        %v4370 = vsub.f32 %v353, %v4369
        %4371 = vmatpush1.msra.mxu0 %v4370
        %4372 = vmatprep.subr.mxu0 0.0
        %v4373 = vand.u32 %v352, 4294901760
        %v4374 = vsub.f32 %v352, %v4373
        %4375 = vmatpush1.msra.mxu0 %v4374
        %4376 = vmatprep.subr.mxu0 0.0
        %v4377 = vand.u32 %v351, 4294901760
        %v4378 = vsub.f32 %v351, %v4377
        %4379 = vmatpush1.msra.mxu0 %v4378
        %4380 = vmatprep.subr.mxu0 0.0
        %v4381 = vand.u32 %v350, 4294901760
        %v4382 = vsub.f32 %v350, %v4381
        %4383 = vmatpush1.msra.mxu0 %v4382
        %4384 = vmatprep.subr.mxu0 0.0
        %v4385 = vand.u32 %v381, 4294901760
        %v4386 = vsub.f32 %v381, %v4385
        %4387 = vmatpush2.msra.mxu0 %v4386
        %4388 = vmatprep.subr.mxu0 0.0
        %v4389 = vand.u32 %v380, 4294901760
        %v4390 = vsub.f32 %v380, %v4389
        %4391 = vmatpush2.msra.mxu0 %v4390
        %4392 = vmatprep.subr.mxu0 0.0
        %v4393 = vand.u32 %v379, 4294901760
        %v4394 = vsub.f32 %v379, %v4393
        %4395 = vmatpush2.msra.mxu0 %v4394
        %4396 = vmatprep.subr.mxu0 0.0
        %v4397 = vand.u32 %v378, 4294901760
        %v4398 = vsub.f32 %v378, %v4397
        %4399 = vmatpush2.msra.mxu0 %v4398
        %4400 = vmatprep.subr.mxu0 0.0
        %v4401 = vand.u32 %v377, 4294901760
        %v4402 = vsub.f32 %v377, %v4401
        %4403 = vmatpush2.msra.mxu0 %v4402
        %4404 = vmatprep.subr.mxu0 0.0
        %v4405 = vand.u32 %v376, 4294901760
        %v4406 = vsub.f32 %v376, %v4405
        %4407 = vmatpush2.msra.mxu0 %v4406
        %4408 = vmatprep.subr.mxu0 0.0
        %v4409 = vand.u32 %v375, 4294901760
        %v4410 = vsub.f32 %v375, %v4409
        %4411 = vmatpush2.msra.mxu0 %v4410
        %4412 = vmatprep.subr.mxu0 0.0
        %v4413 = vand.u32 %v374, 4294901760
        %v4414 = vsub.f32 %v374, %v4413
        %4415 = vmatpush2.msra.mxu0 %v4414
        %4416 = vmatprep.subr.mxu0 0.0
        %v4417 = vand.u32 %v373, 4294901760
        %v4418 = vsub.f32 %v373, %v4417
        %4419 = vmatpush2.msra.mxu0 %v4418
        %4420 = vmatprep.subr.mxu0 0.0
        %v4421 = vand.u32 %v372, 4294901760
        %v4422 = vsub.f32 %v372, %v4421
        %4423 = vmatpush2.msra.mxu0 %v4422
        %4424 = vmatprep.subr.mxu0 0.0
        %v4425 = vand.u32 %v371, 4294901760
        %v4426 = vsub.f32 %v371, %v4425
        %4427 = vmatpush2.msra.mxu0 %v4426
        %4428 = vmatprep.subr.mxu0 0.0
        %v4429 = vand.u32 %v370, 4294901760
        %v4430 = vsub.f32 %v370, %v4429
        %4431 = vmatpush2.msra.mxu0 %v4430
        %4432 = vmatprep.subr.mxu0 0.0
        %v4433 = vand.u32 %v369, 4294901760
        %v4434 = vsub.f32 %v369, %v4433
        %4435 = vmatpush2.msra.mxu0 %v4434
        %4436 = vmatprep.subr.mxu0 0.0
        %v4437 = vand.u32 %v368, 4294901760
        %v4438 = vsub.f32 %v368, %v4437
        %4439 = vmatpush2.msra.mxu0 %v4438
        %4440 = vmatprep.subr.mxu0 0.0
        %v4441 = vand.u32 %v367, 4294901760
        %v4442 = vsub.f32 %v367, %v4441
        %4443 = vmatpush2.msra.mxu0 %v4442
        %4444 = vmatprep.subr.mxu0 0.0
        %v4445 = vand.u32 %v366, 4294901760
        %v4446 = vsub.f32 %v366, %v4445
        %4447 = vmatpush2.msra.mxu0 %v4446
        %v4448 = vand.u32 %v212, 4294901760
        %v4449 = vsub.f32 %v212, %v4448
        %4450 = vmatprep.mubr.f32.mxu0 %v4449
        %v4451 = vand.u32 %v211, 4294901760
        %v4452 = vsub.f32 %v211, %v4451
        %4453 = vmatmul.mubr.f32.gmra.mxu0 %v4452
        %v4454 = vpop.f32.mrf.mxu0
        %v4455 = vadd.f32 %v4317, %v4454
        %v4456 = vpop.f32.mrf.mxu0
        %4457 = vdwg.mxu0
        %4458 = vmatprep.subr.mxu0 0.0
        %v4459 = vand.u32 %v365, 4294901760
        %4460 = vmatpush1.msra.mxu0 %v4459
        %4461 = vmatprep.subr.mxu0 0.0
        %v4462 = vand.u32 %v364, 4294901760
        %4463 = vmatpush1.msra.mxu0 %v4462
        %4464 = vmatprep.subr.mxu0 0.0
        %v4465 = vand.u32 %v363, 4294901760
        %4466 = vmatpush1.msra.mxu0 %v4465
        %4467 = vmatprep.subr.mxu0 0.0
        %v4468 = vand.u32 %v362, 4294901760
        %4469 = vmatpush1.msra.mxu0 %v4468
        %4470 = vmatprep.subr.mxu0 0.0
        %v4471 = vand.u32 %v361, 4294901760
        %4472 = vmatpush1.msra.mxu0 %v4471
        %4473 = vmatprep.subr.mxu0 0.0
        %v4474 = vand.u32 %v360, 4294901760
        %4475 = vmatpush1.msra.mxu0 %v4474
        %4476 = vmatprep.subr.mxu0 0.0
        %v4477 = vand.u32 %v359, 4294901760
        %4478 = vmatpush1.msra.mxu0 %v4477
        %4479 = vmatprep.subr.mxu0 0.0
        %v4480 = vand.u32 %v358, 4294901760
        %4481 = vmatpush1.msra.mxu0 %v4480
        %4482 = vmatprep.subr.mxu0 0.0
        %v4483 = vand.u32 %v357, 4294901760
        %4484 = vmatpush1.msra.mxu0 %v4483
        %4485 = vmatprep.subr.mxu0 0.0
        %v4486 = vand.u32 %v356, 4294901760
        %4487 = vmatpush1.msra.mxu0 %v4486
        %4488 = vmatprep.subr.mxu0 0.0
        %v4489 = vand.u32 %v355, 4294901760
        %4490 = vmatpush1.msra.mxu0 %v4489
        %4491 = vmatprep.subr.mxu0 0.0
        %v4492 = vand.u32 %v354, 4294901760
        %4493 = vmatpush1.msra.mxu0 %v4492
        %4494 = vmatprep.subr.mxu0 0.0
        %v4495 = vand.u32 %v353, 4294901760
        %4496 = vmatpush1.msra.mxu0 %v4495
        %4497 = vmatprep.subr.mxu0 0.0
        %v4498 = vand.u32 %v352, 4294901760
        %4499 = vmatpush1.msra.mxu0 %v4498
        %4500 = vmatprep.subr.mxu0 0.0
        %v4501 = vand.u32 %v351, 4294901760
        %4502 = vmatpush1.msra.mxu0 %v4501
        %4503 = vmatprep.subr.mxu0 0.0
        %v4504 = vand.u32 %v350, 4294901760
        %4505 = vmatpush1.msra.mxu0 %v4504
        %4506 = vmatprep.subr.mxu0 0.0
        %v4507 = vand.u32 %v381, 4294901760
        %4508 = vmatpush2.msra.mxu0 %v4507
        %4509 = vmatprep.subr.mxu0 0.0
        %v4510 = vand.u32 %v380, 4294901760
        %4511 = vmatpush2.msra.mxu0 %v4510
        %4512 = vmatprep.subr.mxu0 0.0
        %v4513 = vand.u32 %v379, 4294901760
        %4514 = vmatpush2.msra.mxu0 %v4513
        %4515 = vmatprep.subr.mxu0 0.0
        %v4516 = vand.u32 %v378, 4294901760
        %4517 = vmatpush2.msra.mxu0 %v4516
        %4518 = vmatprep.subr.mxu0 0.0
        %v4519 = vand.u32 %v377, 4294901760
        %4520 = vmatpush2.msra.mxu0 %v4519
        %4521 = vmatprep.subr.mxu0 0.0
        %v4522 = vand.u32 %v376, 4294901760
        %4523 = vmatpush2.msra.mxu0 %v4522
        %4524 = vmatprep.subr.mxu0 0.0
        %v4525 = vand.u32 %v375, 4294901760
        %4526 = vmatpush2.msra.mxu0 %v4525
        %4527 = vmatprep.subr.mxu0 0.0
        %v4528 = vand.u32 %v374, 4294901760
        %4529 = vmatpush2.msra.mxu0 %v4528
        %4530 = vmatprep.subr.mxu0 0.0
        %v4531 = vand.u32 %v373, 4294901760
        %4532 = vmatpush2.msra.mxu0 %v4531
        %4533 = vmatprep.subr.mxu0 0.0
        %v4534 = vand.u32 %v372, 4294901760
        %4535 = vmatpush2.msra.mxu0 %v4534
        %4536 = vmatprep.subr.mxu0 0.0
        %v4537 = vand.u32 %v371, 4294901760
        %4538 = vmatpush2.msra.mxu0 %v4537
        %4539 = vmatprep.subr.mxu0 0.0
        %v4540 = vand.u32 %v370, 4294901760
        %4541 = vmatpush2.msra.mxu0 %v4540
        %4542 = vmatprep.subr.mxu0 0.0
        %v4543 = vand.u32 %v369, 4294901760
        %4544 = vmatpush2.msra.mxu0 %v4543
        %4545 = vmatprep.subr.mxu0 0.0
        %v4546 = vand.u32 %v368, 4294901760
        %4547 = vmatpush2.msra.mxu0 %v4546
        %4548 = vmatprep.subr.mxu0 0.0
        %v4549 = vand.u32 %v367, 4294901760
        %4550 = vmatpush2.msra.mxu0 %v4549
        %4551 = vmatprep.subr.mxu0 0.0
        %v4552 = vand.u32 %v366, 4294901760
        %4553 = vmatpush2.msra.mxu0 %v4552
        %v4554 = vand.u32 %v212, 4294901760
        %v4555 = vsub.f32 %v212, %v4554
        %v4556 = vand.u32 %v4555, 4294901760
        %4557 = vmatprep.mubr.f32.mxu0 %v4556
        %v4558 = vand.u32 %v211, 4294901760
        %v4559 = vsub.f32 %v211, %v4558
        %v4560 = vand.u32 %v4559, 4294901760
        %4561 = vmatmul.mubr.f32.gmra.mxu0 %v4560
        %v4562 = vpop.f32.mrf.mxu0
        %v4563 = vadd.f32 %v4455, %v4562
        %v4564 = vpop.f32.mrf.mxu0
        %4565 = vdwg.mxu0
        %4566 = vmatprep.subr.mxu0 0.0
        %v4567 = vand.u32 %v365, 4294901760
        %v4568 = vsub.f32 %v365, %v4567
        %v4569 = vand.u32 %v4568, 4294901760
        %4570 = vmatpush1.msra.mxu0 %v4569
        %4571 = vmatprep.subr.mxu0 0.0
        %v4572 = vand.u32 %v364, 4294901760
        %v4573 = vsub.f32 %v364, %v4572
        %v4574 = vand.u32 %v4573, 4294901760
        %4575 = vmatpush1.msra.mxu0 %v4574
        %4576 = vmatprep.subr.mxu0 0.0
        %v4577 = vand.u32 %v363, 4294901760
        %v4578 = vsub.f32 %v363, %v4577
        %v4579 = vand.u32 %v4578, 4294901760
        %4580 = vmatpush1.msra.mxu0 %v4579
        %4581 = vmatprep.subr.mxu0 0.0
        %v4582 = vand.u32 %v362, 4294901760
        %v4583 = vsub.f32 %v362, %v4582
        %v4584 = vand.u32 %v4583, 4294901760
        %4585 = vmatpush1.msra.mxu0 %v4584
        %4586 = vmatprep.subr.mxu0 0.0
        %v4587 = vand.u32 %v361, 4294901760
        %v4588 = vsub.f32 %v361, %v4587
        %v4589 = vand.u32 %v4588, 4294901760
        %4590 = vmatpush1.msra.mxu0 %v4589
        %4591 = vmatprep.subr.mxu0 0.0
        %v4592 = vand.u32 %v360, 4294901760
        %v4593 = vsub.f32 %v360, %v4592
        %v4594 = vand.u32 %v4593, 4294901760
        %4595 = vmatpush1.msra.mxu0 %v4594
        %4596 = vmatprep.subr.mxu0 0.0
        %v4597 = vand.u32 %v359, 4294901760
        %v4598 = vsub.f32 %v359, %v4597
        %v4599 = vand.u32 %v4598, 4294901760
        %4600 = vmatpush1.msra.mxu0 %v4599
        %4601 = vmatprep.subr.mxu0 0.0
        %v4602 = vand.u32 %v358, 4294901760
        %v4603 = vsub.f32 %v358, %v4602
        %v4604 = vand.u32 %v4603, 4294901760
        %4605 = vmatpush1.msra.mxu0 %v4604
        %4606 = vmatprep.subr.mxu0 0.0
        %v4607 = vand.u32 %v357, 4294901760
        %v4608 = vsub.f32 %v357, %v4607
        %v4609 = vand.u32 %v4608, 4294901760
        %4610 = vmatpush1.msra.mxu0 %v4609
        %4611 = vmatprep.subr.mxu0 0.0
        %v4612 = vand.u32 %v356, 4294901760
        %v4613 = vsub.f32 %v356, %v4612
        %v4614 = vand.u32 %v4613, 4294901760
        %4615 = vmatpush1.msra.mxu0 %v4614
        %4616 = vmatprep.subr.mxu0 0.0
        %v4617 = vand.u32 %v355, 4294901760
        %v4618 = vsub.f32 %v355, %v4617
        %v4619 = vand.u32 %v4618, 4294901760
        %4620 = vmatpush1.msra.mxu0 %v4619
        %4621 = vmatprep.subr.mxu0 0.0
        %v4622 = vand.u32 %v354, 4294901760
        %v4623 = vsub.f32 %v354, %v4622
        %v4624 = vand.u32 %v4623, 4294901760
        %4625 = vmatpush1.msra.mxu0 %v4624
        %4626 = vmatprep.subr.mxu0 0.0
        %v4627 = vand.u32 %v353, 4294901760
        %v4628 = vsub.f32 %v353, %v4627
        %v4629 = vand.u32 %v4628, 4294901760
        %4630 = vmatpush1.msra.mxu0 %v4629
        %4631 = vmatprep.subr.mxu0 0.0
        %v4632 = vand.u32 %v352, 4294901760
        %v4633 = vsub.f32 %v352, %v4632
        %v4634 = vand.u32 %v4633, 4294901760
        %4635 = vmatpush1.msra.mxu0 %v4634
        %4636 = vmatprep.subr.mxu0 0.0
        %v4637 = vand.u32 %v351, 4294901760
        %v4638 = vsub.f32 %v351, %v4637
        %v4639 = vand.u32 %v4638, 4294901760
        %4640 = vmatpush1.msra.mxu0 %v4639
        %4641 = vmatprep.subr.mxu0 0.0
        %v4642 = vand.u32 %v350, 4294901760
        %v4643 = vsub.f32 %v350, %v4642
        %v4644 = vand.u32 %v4643, 4294901760
        %4645 = vmatpush1.msra.mxu0 %v4644
        %4646 = vmatprep.subr.mxu0 0.0
        %v4647 = vand.u32 %v381, 4294901760
        %v4648 = vsub.f32 %v381, %v4647
        %v4649 = vand.u32 %v4648, 4294901760
        %4650 = vmatpush2.msra.mxu0 %v4649
        %4651 = vmatprep.subr.mxu0 0.0
        %v4652 = vand.u32 %v380, 4294901760
        %v4653 = vsub.f32 %v380, %v4652
        %v4654 = vand.u32 %v4653, 4294901760
        %4655 = vmatpush2.msra.mxu0 %v4654
        %4656 = vmatprep.subr.mxu0 0.0
        %v4657 = vand.u32 %v379, 4294901760
        %v4658 = vsub.f32 %v379, %v4657
        %v4659 = vand.u32 %v4658, 4294901760
        %4660 = vmatpush2.msra.mxu0 %v4659
        %4661 = vmatprep.subr.mxu0 0.0
        %v4662 = vand.u32 %v378, 4294901760
        %v4663 = vsub.f32 %v378, %v4662
        %v4664 = vand.u32 %v4663, 4294901760
        %4665 = vmatpush2.msra.mxu0 %v4664
        %4666 = vmatprep.subr.mxu0 0.0
        %v4667 = vand.u32 %v377, 4294901760
        %v4668 = vsub.f32 %v377, %v4667
        %v4669 = vand.u32 %v4668, 4294901760
        %4670 = vmatpush2.msra.mxu0 %v4669
        %4671 = vmatprep.subr.mxu0 0.0
        %v4672 = vand.u32 %v376, 4294901760
        %v4673 = vsub.f32 %v376, %v4672
        %v4674 = vand.u32 %v4673, 4294901760
        %4675 = vmatpush2.msra.mxu0 %v4674
        %4676 = vmatprep.subr.mxu0 0.0
        %v4677 = vand.u32 %v375, 4294901760
        %v4678 = vsub.f32 %v375, %v4677
        %v4679 = vand.u32 %v4678, 4294901760
        %4680 = vmatpush2.msra.mxu0 %v4679
        %4681 = vmatprep.subr.mxu0 0.0
        %v4682 = vand.u32 %v374, 4294901760
        %v4683 = vsub.f32 %v374, %v4682
        %v4684 = vand.u32 %v4683, 4294901760
        %4685 = vmatpush2.msra.mxu0 %v4684
        %4686 = vmatprep.subr.mxu0 0.0
        %v4687 = vand.u32 %v373, 4294901760
        %v4688 = vsub.f32 %v373, %v4687
        %v4689 = vand.u32 %v4688, 4294901760
        %4690 = vmatpush2.msra.mxu0 %v4689
        %4691 = vmatprep.subr.mxu0 0.0
        %v4692 = vand.u32 %v372, 4294901760
        %v4693 = vsub.f32 %v372, %v4692
        %v4694 = vand.u32 %v4693, 4294901760
        %4695 = vmatpush2.msra.mxu0 %v4694
        %4696 = vmatprep.subr.mxu0 0.0
        %v4697 = vand.u32 %v371, 4294901760
        %v4698 = vsub.f32 %v371, %v4697
        %v4699 = vand.u32 %v4698, 4294901760
        %4700 = vmatpush2.msra.mxu0 %v4699
        %4701 = vmatprep.subr.mxu0 0.0
        %v4702 = vand.u32 %v370, 4294901760
        %v4703 = vsub.f32 %v370, %v4702
        %v4704 = vand.u32 %v4703, 4294901760
        %4705 = vmatpush2.msra.mxu0 %v4704
        %4706 = vmatprep.subr.mxu0 0.0
        %v4707 = vand.u32 %v369, 4294901760
        %v4708 = vsub.f32 %v369, %v4707
        %v4709 = vand.u32 %v4708, 4294901760
        %4710 = vmatpush2.msra.mxu0 %v4709
        %4711 = vmatprep.subr.mxu0 0.0
        %v4712 = vand.u32 %v368, 4294901760
        %v4713 = vsub.f32 %v368, %v4712
        %v4714 = vand.u32 %v4713, 4294901760
        %4715 = vmatpush2.msra.mxu0 %v4714
        %4716 = vmatprep.subr.mxu0 0.0
        %v4717 = vand.u32 %v367, 4294901760
        %v4718 = vsub.f32 %v367, %v4717
        %v4719 = vand.u32 %v4718, 4294901760
        %4720 = vmatpush2.msra.mxu0 %v4719
        %4721 = vmatprep.subr.mxu0 0.0
        %v4722 = vand.u32 %v366, 4294901760
        %v4723 = vsub.f32 %v366, %v4722
        %v4724 = vand.u32 %v4723, 4294901760
        %4725 = vmatpush2.msra.mxu0 %v4724
        %v4726 = vand.u32 %v212, 4294901760
        %4727 = vmatprep.mubr.f32.mxu0 %v4726
        %v4728 = vand.u32 %v211, 4294901760
        %4729 = vmatmul.mubr.f32.gmra.mxu0 %v4728
        %v4730 = vpop.f32.mrf.mxu0
        %v4731 = vadd.f32 %v4563, %v4730
        %v4732 = vpop.f32.mrf.mxu0
        %4733 = vdwg.mxu0
        %4734 = vmatprep.subr.mxu0 0.0
        %v4735 = vand.u32 %v365, 4294901760
        %4736 = vmatpush1.msra.mxu0 %v4735
        %4737 = vmatprep.subr.mxu0 0.0
        %v4738 = vand.u32 %v364, 4294901760
        %4739 = vmatpush1.msra.mxu0 %v4738
        %4740 = vmatprep.subr.mxu0 0.0
        %v4741 = vand.u32 %v363, 4294901760
        %4742 = vmatpush1.msra.mxu0 %v4741
        %4743 = vmatprep.subr.mxu0 0.0
        %v4744 = vand.u32 %v362, 4294901760
        %4745 = vmatpush1.msra.mxu0 %v4744
        %4746 = vmatprep.subr.mxu0 0.0
        %v4747 = vand.u32 %v361, 4294901760
        %4748 = vmatpush1.msra.mxu0 %v4747
        %4749 = vmatprep.subr.mxu0 0.0
        %v4750 = vand.u32 %v360, 4294901760
        %4751 = vmatpush1.msra.mxu0 %v4750
        %4752 = vmatprep.subr.mxu0 0.0
        %v4753 = vand.u32 %v359, 4294901760
        %4754 = vmatpush1.msra.mxu0 %v4753
        %4755 = vmatprep.subr.mxu0 0.0
        %v4756 = vand.u32 %v358, 4294901760
        %4757 = vmatpush1.msra.mxu0 %v4756
        %4758 = vmatprep.subr.mxu0 0.0
        %v4759 = vand.u32 %v357, 4294901760
        %4760 = vmatpush1.msra.mxu0 %v4759
        %4761 = vmatprep.subr.mxu0 0.0
        %v4762 = vand.u32 %v356, 4294901760
        %4763 = vmatpush1.msra.mxu0 %v4762
        %4764 = vmatprep.subr.mxu0 0.0
        %v4765 = vand.u32 %v355, 4294901760
        %4766 = vmatpush1.msra.mxu0 %v4765
        %4767 = vmatprep.subr.mxu0 0.0
        %v4768 = vand.u32 %v354, 4294901760
        %4769 = vmatpush1.msra.mxu0 %v4768
        %4770 = vmatprep.subr.mxu0 0.0
        %v4771 = vand.u32 %v353, 4294901760
        %4772 = vmatpush1.msra.mxu0 %v4771
        %4773 = vmatprep.subr.mxu0 0.0
        %v4774 = vand.u32 %v352, 4294901760
        %4775 = vmatpush1.msra.mxu0 %v4774
        %4776 = vmatprep.subr.mxu0 0.0
        %v4777 = vand.u32 %v351, 4294901760
        %4778 = vmatpush1.msra.mxu0 %v4777
        %4779 = vmatprep.subr.mxu0 0.0
        %v4780 = vand.u32 %v350, 4294901760
        %4781 = vmatpush1.msra.mxu0 %v4780
        %4782 = vmatprep.subr.mxu0 0.0
        %v4783 = vand.u32 %v381, 4294901760
        %4784 = vmatpush2.msra.mxu0 %v4783
        %4785 = vmatprep.subr.mxu0 0.0
        %v4786 = vand.u32 %v380, 4294901760
        %4787 = vmatpush2.msra.mxu0 %v4786
        %4788 = vmatprep.subr.mxu0 0.0
        %v4789 = vand.u32 %v379, 4294901760
        %4790 = vmatpush2.msra.mxu0 %v4789
        %4791 = vmatprep.subr.mxu0 0.0
        %v4792 = vand.u32 %v378, 4294901760
        %4793 = vmatpush2.msra.mxu0 %v4792
        %4794 = vmatprep.subr.mxu0 0.0
        %v4795 = vand.u32 %v377, 4294901760
        %4796 = vmatpush2.msra.mxu0 %v4795
        %4797 = vmatprep.subr.mxu0 0.0
        %v4798 = vand.u32 %v376, 4294901760
        %4799 = vmatpush2.msra.mxu0 %v4798
        %4800 = vmatprep.subr.mxu0 0.0
        %v4801 = vand.u32 %v375, 4294901760
        %4802 = vmatpush2.msra.mxu0 %v4801
        %4803 = vmatprep.subr.mxu0 0.0
        %v4804 = vand.u32 %v374, 4294901760
        %4805 = vmatpush2.msra.mxu0 %v4804
        %4806 = vmatprep.subr.mxu0 0.0
        %v4807 = vand.u32 %v373, 4294901760
        %4808 = vmatpush2.msra.mxu0 %v4807
        %4809 = vmatprep.subr.mxu0 0.0
        %v4810 = vand.u32 %v372, 4294901760
        %4811 = vmatpush2.msra.mxu0 %v4810
        %4812 = vmatprep.subr.mxu0 0.0
        %v4813 = vand.u32 %v371, 4294901760
        %4814 = vmatpush2.msra.mxu0 %v4813
        %4815 = vmatprep.subr.mxu0 0.0
        %v4816 = vand.u32 %v370, 4294901760
        %4817 = vmatpush2.msra.mxu0 %v4816
        %4818 = vmatprep.subr.mxu0 0.0
        %v4819 = vand.u32 %v369, 4294901760
        %4820 = vmatpush2.msra.mxu0 %v4819
        %4821 = vmatprep.subr.mxu0 0.0
        %v4822 = vand.u32 %v368, 4294901760
        %4823 = vmatpush2.msra.mxu0 %v4822
        %4824 = vmatprep.subr.mxu0 0.0
        %v4825 = vand.u32 %v367, 4294901760
        %4826 = vmatpush2.msra.mxu0 %v4825
        %4827 = vmatprep.subr.mxu0 0.0
        %v4828 = vand.u32 %v366, 4294901760
        %4829 = vmatpush2.msra.mxu0 %v4828
        %v4830 = vand.u32 %v212, 4294901760
        %4831 = vmatprep.mubr.f32.mxu0 %v4830
        %v4832 = vand.u32 %v211, 4294901760
        %4833 = vmatmul.mubr.f32.gmra.mxu0 %v4832
        %v4834 = vpop.f32.mrf.mxu0
        %v4835 = vadd.f32 %v4731, %v4834
        %v4836 = vpop.f32.mrf.mxu0
        %4837 = vdwg.mxu0
        %4838 = vmatprep.subr.mxu0 0.0
        %v4839 = vand.u32 %v397, 4294901760
        %4840 = vmatpush1.msra.mxu0 %v4839
        %4841 = vmatprep.subr.mxu0 0.0
        %v4842 = vand.u32 %v396, 4294901760
        %4843 = vmatpush1.msra.mxu0 %v4842
        %4844 = vmatprep.subr.mxu0 0.0
        %v4845 = vand.u32 %v395, 4294901760
        %4846 = vmatpush1.msra.mxu0 %v4845
        %4847 = vmatprep.subr.mxu0 0.0
        %v4848 = vand.u32 %v394, 4294901760
        %4849 = vmatpush1.msra.mxu0 %v4848
        %4850 = vmatprep.subr.mxu0 0.0
        %v4851 = vand.u32 %v393, 4294901760
        %4852 = vmatpush1.msra.mxu0 %v4851
        %4853 = vmatprep.subr.mxu0 0.0
        %v4854 = vand.u32 %v392, 4294901760
        %4855 = vmatpush1.msra.mxu0 %v4854
        %4856 = vmatprep.subr.mxu0 0.0
        %v4857 = vand.u32 %v391, 4294901760
        %4858 = vmatpush1.msra.mxu0 %v4857
        %4859 = vmatprep.subr.mxu0 0.0
        %v4860 = vand.u32 %v390, 4294901760
        %4861 = vmatpush1.msra.mxu0 %v4860
        %4862 = vmatprep.subr.mxu0 0.0
        %v4863 = vand.u32 %v389, 4294901760
        %4864 = vmatpush1.msra.mxu0 %v4863
        %4865 = vmatprep.subr.mxu0 0.0
        %v4866 = vand.u32 %v388, 4294901760
        %4867 = vmatpush1.msra.mxu0 %v4866
        %4868 = vmatprep.subr.mxu0 0.0
        %v4869 = vand.u32 %v387, 4294901760
        %4870 = vmatpush1.msra.mxu0 %v4869
        %4871 = vmatprep.subr.mxu0 0.0
        %v4872 = vand.u32 %v386, 4294901760
        %4873 = vmatpush1.msra.mxu0 %v4872
        %4874 = vmatprep.subr.mxu0 0.0
        %v4875 = vand.u32 %v385, 4294901760
        %4876 = vmatpush1.msra.mxu0 %v4875
        %4877 = vmatprep.subr.mxu0 0.0
        %v4878 = vand.u32 %v384, 4294901760
        %4879 = vmatpush1.msra.mxu0 %v4878
        %4880 = vmatprep.subr.mxu0 0.0
        %v4881 = vand.u32 %v383, 4294901760
        %4882 = vmatpush1.msra.mxu0 %v4881
        %4883 = vmatprep.subr.mxu0 0.0
        %v4884 = vand.u32 %v382, 4294901760
        %4885 = vmatpush1.msra.mxu0 %v4884
        %4886 = vmatprep.subr.mxu0 0.0
        %v4887 = vand.u32 %v413, 4294901760
        %4888 = vmatpush2.msra.mxu0 %v4887
        %4889 = vmatprep.subr.mxu0 0.0
        %v4890 = vand.u32 %v412, 4294901760
        %4891 = vmatpush2.msra.mxu0 %v4890
        %4892 = vmatprep.subr.mxu0 0.0
        %v4893 = vand.u32 %v411, 4294901760
        %4894 = vmatpush2.msra.mxu0 %v4893
        %4895 = vmatprep.subr.mxu0 0.0
        %v4896 = vand.u32 %v410, 4294901760
        %4897 = vmatpush2.msra.mxu0 %v4896
        %4898 = vmatprep.subr.mxu0 0.0
        %v4899 = vand.u32 %v409, 4294901760
        %4900 = vmatpush2.msra.mxu0 %v4899
        %4901 = vmatprep.subr.mxu0 0.0
        %v4902 = vand.u32 %v408, 4294901760
        %4903 = vmatpush2.msra.mxu0 %v4902
        %4904 = vmatprep.subr.mxu0 0.0
        %v4905 = vand.u32 %v407, 4294901760
        %4906 = vmatpush2.msra.mxu0 %v4905
        %4907 = vmatprep.subr.mxu0 0.0
        %v4908 = vand.u32 %v406, 4294901760
        %4909 = vmatpush2.msra.mxu0 %v4908
        %4910 = vmatprep.subr.mxu0 0.0
        %v4911 = vand.u32 %v405, 4294901760
        %4912 = vmatpush2.msra.mxu0 %v4911
        %4913 = vmatprep.subr.mxu0 0.0
        %v4914 = vand.u32 %v404, 4294901760
        %4915 = vmatpush2.msra.mxu0 %v4914
        %4916 = vmatprep.subr.mxu0 0.0
        %v4917 = vand.u32 %v403, 4294901760
        %4918 = vmatpush2.msra.mxu0 %v4917
        %4919 = vmatprep.subr.mxu0 0.0
        %v4920 = vand.u32 %v402, 4294901760
        %4921 = vmatpush2.msra.mxu0 %v4920
        %4922 = vmatprep.subr.mxu0 0.0
        %v4923 = vand.u32 %v401, 4294901760
        %4924 = vmatpush2.msra.mxu0 %v4923
        %4925 = vmatprep.subr.mxu0 0.0
        %v4926 = vand.u32 %v400, 4294901760
        %4927 = vmatpush2.msra.mxu0 %v4926
        %4928 = vmatprep.subr.mxu0 0.0
        %v4929 = vand.u32 %v399, 4294901760
        %4930 = vmatpush2.msra.mxu0 %v4929
        %4931 = vmatprep.subr.mxu0 0.0
        %v4932 = vand.u32 %v398, 4294901760
        %4933 = vmatpush2.msra.mxu0 %v4932
        %v4934 = vand.u32 %v214, 4294901760
        %v4935 = vsub.f32 %v214, %v4934
        %v4936 = vand.u32 %v4935, 4294901760
        %v4937 = vsub.f32 %v4935, %v4936
        %v4938 = vand.u32 %v4937, 4294901760
        %4939 = vmatprep.mubr.f32.mxu0 %v4938
        %v4940 = vand.u32 %v213, 4294901760
        %v4941 = vsub.f32 %v213, %v4940
        %v4942 = vand.u32 %v4941, 4294901760
        %v4943 = vsub.f32 %v4941, %v4942
        %v4944 = vand.u32 %v4943, 4294901760
        %4945 = vmatmul.mubr.f32.gmra.mxu0 %v4944
        %v4946 = vpop.f32.mrf.mxu0
        %v4947 = vadd.f32 %v4835, %v4946
        %v4948 = vpop.f32.mrf.mxu0
        %4949 = vdwg.mxu0
        %4950 = vmatprep.subr.mxu0 0.0
        %v4951 = vand.u32 %v397, 4294901760
        %v4952 = vsub.f32 %v397, %v4951
        %v4953 = vand.u32 %v4952, 4294901760
        %v4954 = vsub.f32 %v4952, %v4953
        %v4955 = vand.u32 %v4954, 4294901760
        %4956 = vmatpush1.msra.mxu0 %v4955
        %4957 = vmatprep.subr.mxu0 0.0
        %v4958 = vand.u32 %v396, 4294901760
        %v4959 = vsub.f32 %v396, %v4958
        %v4960 = vand.u32 %v4959, 4294901760
        %v4961 = vsub.f32 %v4959, %v4960
        %v4962 = vand.u32 %v4961, 4294901760
        %4963 = vmatpush1.msra.mxu0 %v4962
        %4964 = vmatprep.subr.mxu0 0.0
        %v4965 = vand.u32 %v395, 4294901760
        %v4966 = vsub.f32 %v395, %v4965
        %v4967 = vand.u32 %v4966, 4294901760
        %v4968 = vsub.f32 %v4966, %v4967
        %v4969 = vand.u32 %v4968, 4294901760
        %4970 = vmatpush1.msra.mxu0 %v4969
        %4971 = vmatprep.subr.mxu0 0.0
        %v4972 = vand.u32 %v394, 4294901760
        %v4973 = vsub.f32 %v394, %v4972
        %v4974 = vand.u32 %v4973, 4294901760
        %v4975 = vsub.f32 %v4973, %v4974
        %v4976 = vand.u32 %v4975, 4294901760
        %4977 = vmatpush1.msra.mxu0 %v4976
        %4978 = vmatprep.subr.mxu0 0.0
        %v4979 = vand.u32 %v393, 4294901760
        %v4980 = vsub.f32 %v393, %v4979
        %v4981 = vand.u32 %v4980, 4294901760
        %v4982 = vsub.f32 %v4980, %v4981
        %v4983 = vand.u32 %v4982, 4294901760
        %4984 = vmatpush1.msra.mxu0 %v4983
        %4985 = vmatprep.subr.mxu0 0.0
        %v4986 = vand.u32 %v392, 4294901760
        %v4987 = vsub.f32 %v392, %v4986
        %v4988 = vand.u32 %v4987, 4294901760
        %v4989 = vsub.f32 %v4987, %v4988
        %v4990 = vand.u32 %v4989, 4294901760
        %4991 = vmatpush1.msra.mxu0 %v4990
        %4992 = vmatprep.subr.mxu0 0.0
        %v4993 = vand.u32 %v391, 4294901760
        %v4994 = vsub.f32 %v391, %v4993
        %v4995 = vand.u32 %v4994, 4294901760
        %v4996 = vsub.f32 %v4994, %v4995
        %v4997 = vand.u32 %v4996, 4294901760
        %4998 = vmatpush1.msra.mxu0 %v4997
        %4999 = vmatprep.subr.mxu0 0.0
        %v5000 = vand.u32 %v390, 4294901760
        %v5001 = vsub.f32 %v390, %v5000
        %v5002 = vand.u32 %v5001, 4294901760
        %v5003 = vsub.f32 %v5001, %v5002
        %v5004 = vand.u32 %v5003, 4294901760
        %5005 = vmatpush1.msra.mxu0 %v5004
        %5006 = vmatprep.subr.mxu0 0.0
        %v5007 = vand.u32 %v389, 4294901760
        %v5008 = vsub.f32 %v389, %v5007
        %v5009 = vand.u32 %v5008, 4294901760
        %v5010 = vsub.f32 %v5008, %v5009
        %v5011 = vand.u32 %v5010, 4294901760
        %5012 = vmatpush1.msra.mxu0 %v5011
        %5013 = vmatprep.subr.mxu0 0.0
        %v5014 = vand.u32 %v388, 4294901760
        %v5015 = vsub.f32 %v388, %v5014
        %v5016 = vand.u32 %v5015, 4294901760
        %v5017 = vsub.f32 %v5015, %v5016
        %v5018 = vand.u32 %v5017, 4294901760
        %5019 = vmatpush1.msra.mxu0 %v5018
        %5020 = vmatprep.subr.mxu0 0.0
        %v5021 = vand.u32 %v387, 4294901760
        %v5022 = vsub.f32 %v387, %v5021
        %v5023 = vand.u32 %v5022, 4294901760
        %v5024 = vsub.f32 %v5022, %v5023
        %v5025 = vand.u32 %v5024, 4294901760
        %5026 = vmatpush1.msra.mxu0 %v5025
        %5027 = vmatprep.subr.mxu0 0.0
        %v5028 = vand.u32 %v386, 4294901760
        %v5029 = vsub.f32 %v386, %v5028
        %v5030 = vand.u32 %v5029, 4294901760
        %v5031 = vsub.f32 %v5029, %v5030
        %v5032 = vand.u32 %v5031, 4294901760
        %5033 = vmatpush1.msra.mxu0 %v5032
        %5034 = vmatprep.subr.mxu0 0.0
        %v5035 = vand.u32 %v385, 4294901760
        %v5036 = vsub.f32 %v385, %v5035
        %v5037 = vand.u32 %v5036, 4294901760
        %v5038 = vsub.f32 %v5036, %v5037
        %v5039 = vand.u32 %v5038, 4294901760
        %5040 = vmatpush1.msra.mxu0 %v5039
        %5041 = vmatprep.subr.mxu0 0.0
        %v5042 = vand.u32 %v384, 4294901760
        %v5043 = vsub.f32 %v384, %v5042
        %v5044 = vand.u32 %v5043, 4294901760
        %v5045 = vsub.f32 %v5043, %v5044
        %v5046 = vand.u32 %v5045, 4294901760
        %5047 = vmatpush1.msra.mxu0 %v5046
        %5048 = vmatprep.subr.mxu0 0.0
        %v5049 = vand.u32 %v383, 4294901760
        %v5050 = vsub.f32 %v383, %v5049
        %v5051 = vand.u32 %v5050, 4294901760
        %v5052 = vsub.f32 %v5050, %v5051
        %v5053 = vand.u32 %v5052, 4294901760
        %5054 = vmatpush1.msra.mxu0 %v5053
        %5055 = vmatprep.subr.mxu0 0.0
        %v5056 = vand.u32 %v382, 4294901760
        %v5057 = vsub.f32 %v382, %v5056
        %v5058 = vand.u32 %v5057, 4294901760
        %v5059 = vsub.f32 %v5057, %v5058
        %v5060 = vand.u32 %v5059, 4294901760
        %5061 = vmatpush1.msra.mxu0 %v5060
        %5062 = vmatprep.subr.mxu0 0.0
        %v5063 = vand.u32 %v413, 4294901760
        %v5064 = vsub.f32 %v413, %v5063
        %v5065 = vand.u32 %v5064, 4294901760
        %v5066 = vsub.f32 %v5064, %v5065
        %v5067 = vand.u32 %v5066, 4294901760
        %5068 = vmatpush2.msra.mxu0 %v5067
        %5069 = vmatprep.subr.mxu0 0.0
        %v5070 = vand.u32 %v412, 4294901760
        %v5071 = vsub.f32 %v412, %v5070
        %v5072 = vand.u32 %v5071, 4294901760
        %v5073 = vsub.f32 %v5071, %v5072
        %v5074 = vand.u32 %v5073, 4294901760
        %5075 = vmatpush2.msra.mxu0 %v5074
        %5076 = vmatprep.subr.mxu0 0.0
        %v5077 = vand.u32 %v411, 4294901760
        %v5078 = vsub.f32 %v411, %v5077
        %v5079 = vand.u32 %v5078, 4294901760
        %v5080 = vsub.f32 %v5078, %v5079
        %v5081 = vand.u32 %v5080, 4294901760
        %5082 = vmatpush2.msra.mxu0 %v5081
        %5083 = vmatprep.subr.mxu0 0.0
        %v5084 = vand.u32 %v410, 4294901760
        %v5085 = vsub.f32 %v410, %v5084
        %v5086 = vand.u32 %v5085, 4294901760
        %v5087 = vsub.f32 %v5085, %v5086
        %v5088 = vand.u32 %v5087, 4294901760
        %5089 = vmatpush2.msra.mxu0 %v5088
        %5090 = vmatprep.subr.mxu0 0.0
        %v5091 = vand.u32 %v409, 4294901760
        %v5092 = vsub.f32 %v409, %v5091
        %v5093 = vand.u32 %v5092, 4294901760
        %v5094 = vsub.f32 %v5092, %v5093
        %v5095 = vand.u32 %v5094, 4294901760
        %5096 = vmatpush2.msra.mxu0 %v5095
        %5097 = vmatprep.subr.mxu0 0.0
        %v5098 = vand.u32 %v408, 4294901760
        %v5099 = vsub.f32 %v408, %v5098
        %v5100 = vand.u32 %v5099, 4294901760
        %v5101 = vsub.f32 %v5099, %v5100
        %v5102 = vand.u32 %v5101, 4294901760
        %5103 = vmatpush2.msra.mxu0 %v5102
        %5104 = vmatprep.subr.mxu0 0.0
        %v5105 = vand.u32 %v407, 4294901760
        %v5106 = vsub.f32 %v407, %v5105
        %v5107 = vand.u32 %v5106, 4294901760
        %v5108 = vsub.f32 %v5106, %v5107
        %v5109 = vand.u32 %v5108, 4294901760
        %5110 = vmatpush2.msra.mxu0 %v5109
        %5111 = vmatprep.subr.mxu0 0.0
        %v5112 = vand.u32 %v406, 4294901760
        %v5113 = vsub.f32 %v406, %v5112
        %v5114 = vand.u32 %v5113, 4294901760
        %v5115 = vsub.f32 %v5113, %v5114
        %v5116 = vand.u32 %v5115, 4294901760
        %5117 = vmatpush2.msra.mxu0 %v5116
        %5118 = vmatprep.subr.mxu0 0.0
        %v5119 = vand.u32 %v405, 4294901760
        %v5120 = vsub.f32 %v405, %v5119
        %v5121 = vand.u32 %v5120, 4294901760
        %v5122 = vsub.f32 %v5120, %v5121
        %v5123 = vand.u32 %v5122, 4294901760
        %5124 = vmatpush2.msra.mxu0 %v5123
        %5125 = vmatprep.subr.mxu0 0.0
        %v5126 = vand.u32 %v404, 4294901760
        %v5127 = vsub.f32 %v404, %v5126
        %v5128 = vand.u32 %v5127, 4294901760
        %v5129 = vsub.f32 %v5127, %v5128
        %v5130 = vand.u32 %v5129, 4294901760
        %5131 = vmatpush2.msra.mxu0 %v5130
        %5132 = vmatprep.subr.mxu0 0.0
        %v5133 = vand.u32 %v403, 4294901760
        %v5134 = vsub.f32 %v403, %v5133
        %v5135 = vand.u32 %v5134, 4294901760
        %v5136 = vsub.f32 %v5134, %v5135
        %v5137 = vand.u32 %v5136, 4294901760
        %5138 = vmatpush2.msra.mxu0 %v5137
        %5139 = vmatprep.subr.mxu0 0.0
        %v5140 = vand.u32 %v402, 4294901760
        %v5141 = vsub.f32 %v402, %v5140
        %v5142 = vand.u32 %v5141, 4294901760
        %v5143 = vsub.f32 %v5141, %v5142
        %v5144 = vand.u32 %v5143, 4294901760
        %5145 = vmatpush2.msra.mxu0 %v5144
        %5146 = vmatprep.subr.mxu0 0.0
        %v5147 = vand.u32 %v401, 4294901760
        %v5148 = vsub.f32 %v401, %v5147
        %v5149 = vand.u32 %v5148, 4294901760
        %v5150 = vsub.f32 %v5148, %v5149
        %v5151 = vand.u32 %v5150, 4294901760
        %5152 = vmatpush2.msra.mxu0 %v5151
        %5153 = vmatprep.subr.mxu0 0.0
        %v5154 = vand.u32 %v400, 4294901760
        %v5155 = vsub.f32 %v400, %v5154
        %v5156 = vand.u32 %v5155, 4294901760
        %v5157 = vsub.f32 %v5155, %v5156
        %v5158 = vand.u32 %v5157, 4294901760
        %5159 = vmatpush2.msra.mxu0 %v5158
        %5160 = vmatprep.subr.mxu0 0.0
        %v5161 = vand.u32 %v399, 4294901760
        %v5162 = vsub.f32 %v399, %v5161
        %v5163 = vand.u32 %v5162, 4294901760
        %v5164 = vsub.f32 %v5162, %v5163
        %v5165 = vand.u32 %v5164, 4294901760
        %5166 = vmatpush2.msra.mxu0 %v5165
        %5167 = vmatprep.subr.mxu0 0.0
        %v5168 = vand.u32 %v398, 4294901760
        %v5169 = vsub.f32 %v398, %v5168
        %v5170 = vand.u32 %v5169, 4294901760
        %v5171 = vsub.f32 %v5169, %v5170
        %v5172 = vand.u32 %v5171, 4294901760
        %5173 = vmatpush2.msra.mxu0 %v5172
        %v5174 = vand.u32 %v214, 4294901760
        %5175 = vmatprep.mubr.f32.mxu0 %v5174
        %v5176 = vand.u32 %v213, 4294901760
        %5177 = vmatmul.mubr.f32.gmra.mxu0 %v5176
        %v5178 = vpop.f32.mrf.mxu0
        %v5179 = vadd.f32 %v4947, %v5178
        %v5180 = vpop.f32.mrf.mxu0
        %5181 = vdwg.mxu0
        %5182 = vmatprep.subr.mxu0 0.0
        %v5183 = vand.u32 %v397, 4294901760
        %v5184 = vsub.f32 %v397, %v5183
        %5185 = vmatpush1.msra.mxu0 %v5184
        %5186 = vmatprep.subr.mxu0 0.0
        %v5187 = vand.u32 %v396, 4294901760
        %v5188 = vsub.f32 %v396, %v5187
        %5189 = vmatpush1.msra.mxu0 %v5188
        %5190 = vmatprep.subr.mxu0 0.0
        %v5191 = vand.u32 %v395, 4294901760
        %v5192 = vsub.f32 %v395, %v5191
        %5193 = vmatpush1.msra.mxu0 %v5192
        %5194 = vmatprep.subr.mxu0 0.0
        %v5195 = vand.u32 %v394, 4294901760
        %v5196 = vsub.f32 %v394, %v5195
        %5197 = vmatpush1.msra.mxu0 %v5196
        %5198 = vmatprep.subr.mxu0 0.0
        %v5199 = vand.u32 %v393, 4294901760
        %v5200 = vsub.f32 %v393, %v5199
        %5201 = vmatpush1.msra.mxu0 %v5200
        %5202 = vmatprep.subr.mxu0 0.0
        %v5203 = vand.u32 %v392, 4294901760
        %v5204 = vsub.f32 %v392, %v5203
        %5205 = vmatpush1.msra.mxu0 %v5204
        %5206 = vmatprep.subr.mxu0 0.0
        %v5207 = vand.u32 %v391, 4294901760
        %v5208 = vsub.f32 %v391, %v5207
        %5209 = vmatpush1.msra.mxu0 %v5208
        %5210 = vmatprep.subr.mxu0 0.0
        %v5211 = vand.u32 %v390, 4294901760
        %v5212 = vsub.f32 %v390, %v5211
        %5213 = vmatpush1.msra.mxu0 %v5212
        %5214 = vmatprep.subr.mxu0 0.0
        %v5215 = vand.u32 %v389, 4294901760
        %v5216 = vsub.f32 %v389, %v5215
        %5217 = vmatpush1.msra.mxu0 %v5216
        %5218 = vmatprep.subr.mxu0 0.0
        %v5219 = vand.u32 %v388, 4294901760
        %v5220 = vsub.f32 %v388, %v5219
        %5221 = vmatpush1.msra.mxu0 %v5220
        %5222 = vmatprep.subr.mxu0 0.0
        %v5223 = vand.u32 %v387, 4294901760
        %v5224 = vsub.f32 %v387, %v5223
        %5225 = vmatpush1.msra.mxu0 %v5224
        %5226 = vmatprep.subr.mxu0 0.0
        %v5227 = vand.u32 %v386, 4294901760
        %v5228 = vsub.f32 %v386, %v5227
        %5229 = vmatpush1.msra.mxu0 %v5228
        %5230 = vmatprep.subr.mxu0 0.0
        %v5231 = vand.u32 %v385, 4294901760
        %v5232 = vsub.f32 %v385, %v5231
        %5233 = vmatpush1.msra.mxu0 %v5232
        %5234 = vmatprep.subr.mxu0 0.0
        %v5235 = vand.u32 %v384, 4294901760
        %v5236 = vsub.f32 %v384, %v5235
        %5237 = vmatpush1.msra.mxu0 %v5236
        %5238 = vmatprep.subr.mxu0 0.0
        %v5239 = vand.u32 %v383, 4294901760
        %v5240 = vsub.f32 %v383, %v5239
        %5241 = vmatpush1.msra.mxu0 %v5240
        %5242 = vmatprep.subr.mxu0 0.0
        %v5243 = vand.u32 %v382, 4294901760
        %v5244 = vsub.f32 %v382, %v5243
        %5245 = vmatpush1.msra.mxu0 %v5244
        %5246 = vmatprep.subr.mxu0 0.0
        %v5247 = vand.u32 %v413, 4294901760
        %v5248 = vsub.f32 %v413, %v5247
        %5249 = vmatpush2.msra.mxu0 %v5248
        %5250 = vmatprep.subr.mxu0 0.0
        %v5251 = vand.u32 %v412, 4294901760
        %v5252 = vsub.f32 %v412, %v5251
        %5253 = vmatpush2.msra.mxu0 %v5252
        %5254 = vmatprep.subr.mxu0 0.0
        %v5255 = vand.u32 %v411, 4294901760
        %v5256 = vsub.f32 %v411, %v5255
        %5257 = vmatpush2.msra.mxu0 %v5256
        %5258 = vmatprep.subr.mxu0 0.0
        %v5259 = vand.u32 %v410, 4294901760
        %v5260 = vsub.f32 %v410, %v5259
        %5261 = vmatpush2.msra.mxu0 %v5260
        %5262 = vmatprep.subr.mxu0 0.0
        %v5263 = vand.u32 %v409, 4294901760
        %v5264 = vsub.f32 %v409, %v5263
        %5265 = vmatpush2.msra.mxu0 %v5264
        %5266 = vmatprep.subr.mxu0 0.0
        %v5267 = vand.u32 %v408, 4294901760
        %v5268 = vsub.f32 %v408, %v5267
        %5269 = vmatpush2.msra.mxu0 %v5268
        %5270 = vmatprep.subr.mxu0 0.0
        %v5271 = vand.u32 %v407, 4294901760
        %v5272 = vsub.f32 %v407, %v5271
        %5273 = vmatpush2.msra.mxu0 %v5272
        %5274 = vmatprep.subr.mxu0 0.0
        %v5275 = vand.u32 %v406, 4294901760
        %v5276 = vsub.f32 %v406, %v5275
        %5277 = vmatpush2.msra.mxu0 %v5276
        %5278 = vmatprep.subr.mxu0 0.0
        %v5279 = vand.u32 %v405, 4294901760
        %v5280 = vsub.f32 %v405, %v5279
        %5281 = vmatpush2.msra.mxu0 %v5280
        %5282 = vmatprep.subr.mxu0 0.0
        %v5283 = vand.u32 %v404, 4294901760
        %v5284 = vsub.f32 %v404, %v5283
        %5285 = vmatpush2.msra.mxu0 %v5284
        %5286 = vmatprep.subr.mxu0 0.0
        %v5287 = vand.u32 %v403, 4294901760
        %v5288 = vsub.f32 %v403, %v5287
        %5289 = vmatpush2.msra.mxu0 %v5288
        %5290 = vmatprep.subr.mxu0 0.0
        %v5291 = vand.u32 %v402, 4294901760
        %v5292 = vsub.f32 %v402, %v5291
        %5293 = vmatpush2.msra.mxu0 %v5292
        %5294 = vmatprep.subr.mxu0 0.0
        %v5295 = vand.u32 %v401, 4294901760
        %v5296 = vsub.f32 %v401, %v5295
        %5297 = vmatpush2.msra.mxu0 %v5296
        %5298 = vmatprep.subr.mxu0 0.0
        %v5299 = vand.u32 %v400, 4294901760
        %v5300 = vsub.f32 %v400, %v5299
        %5301 = vmatpush2.msra.mxu0 %v5300
        %5302 = vmatprep.subr.mxu0 0.0
        %v5303 = vand.u32 %v399, 4294901760
        %v5304 = vsub.f32 %v399, %v5303
        %5305 = vmatpush2.msra.mxu0 %v5304
        %5306 = vmatprep.subr.mxu0 0.0
        %v5307 = vand.u32 %v398, 4294901760
        %v5308 = vsub.f32 %v398, %v5307
        %5309 = vmatpush2.msra.mxu0 %v5308
        %v5310 = vand.u32 %v214, 4294901760
        %v5311 = vsub.f32 %v214, %v5310
        %5312 = vmatprep.mubr.f32.mxu0 %v5311
        %v5313 = vand.u32 %v213, 4294901760
        %v5314 = vsub.f32 %v213, %v5313
        %5315 = vmatmul.mubr.f32.gmra.mxu0 %v5314
        %v5316 = vpop.f32.mrf.mxu0
        %v5317 = vadd.f32 %v5179, %v5316
        %v5318 = vpop.f32.mrf.mxu0
        %5319 = vdwg.mxu0
        %5320 = vmatprep.subr.mxu0 0.0
        %v5321 = vand.u32 %v397, 4294901760
        %5322 = vmatpush1.msra.mxu0 %v5321
        %5323 = vmatprep.subr.mxu0 0.0
        %v5324 = vand.u32 %v396, 4294901760
        %5325 = vmatpush1.msra.mxu0 %v5324
        %5326 = vmatprep.subr.mxu0 0.0
        %v5327 = vand.u32 %v395, 4294901760
        %5328 = vmatpush1.msra.mxu0 %v5327
        %5329 = vmatprep.subr.mxu0 0.0
        %v5330 = vand.u32 %v394, 4294901760
        %5331 = vmatpush1.msra.mxu0 %v5330
        %5332 = vmatprep.subr.mxu0 0.0
        %v5333 = vand.u32 %v393, 4294901760
        %5334 = vmatpush1.msra.mxu0 %v5333
        %5335 = vmatprep.subr.mxu0 0.0
        %v5336 = vand.u32 %v392, 4294901760
        %5337 = vmatpush1.msra.mxu0 %v5336
        %5338 = vmatprep.subr.mxu0 0.0
        %v5339 = vand.u32 %v391, 4294901760
        %5340 = vmatpush1.msra.mxu0 %v5339
        %5341 = vmatprep.subr.mxu0 0.0
        %v5342 = vand.u32 %v390, 4294901760
        %5343 = vmatpush1.msra.mxu0 %v5342
        %5344 = vmatprep.subr.mxu0 0.0
        %v5345 = vand.u32 %v389, 4294901760
        %5346 = vmatpush1.msra.mxu0 %v5345
        %5347 = vmatprep.subr.mxu0 0.0
        %v5348 = vand.u32 %v388, 4294901760
        %5349 = vmatpush1.msra.mxu0 %v5348
        %5350 = vmatprep.subr.mxu0 0.0
        %v5351 = vand.u32 %v387, 4294901760
        %5352 = vmatpush1.msra.mxu0 %v5351
        %5353 = vmatprep.subr.mxu0 0.0
        %v5354 = vand.u32 %v386, 4294901760
        %5355 = vmatpush1.msra.mxu0 %v5354
        %5356 = vmatprep.subr.mxu0 0.0
        %v5357 = vand.u32 %v385, 4294901760
        %5358 = vmatpush1.msra.mxu0 %v5357
        %5359 = vmatprep.subr.mxu0 0.0
        %v5360 = vand.u32 %v384, 4294901760
        %5361 = vmatpush1.msra.mxu0 %v5360
        %5362 = vmatprep.subr.mxu0 0.0
        %v5363 = vand.u32 %v383, 4294901760
        %5364 = vmatpush1.msra.mxu0 %v5363
        %5365 = vmatprep.subr.mxu0 0.0
        %v5366 = vand.u32 %v382, 4294901760
        %5367 = vmatpush1.msra.mxu0 %v5366
        %5368 = vmatprep.subr.mxu0 0.0
        %v5369 = vand.u32 %v413, 4294901760
        %5370 = vmatpush2.msra.mxu0 %v5369
        %5371 = vmatprep.subr.mxu0 0.0
        %v5372 = vand.u32 %v412, 4294901760
        %5373 = vmatpush2.msra.mxu0 %v5372
        %5374 = vmatprep.subr.mxu0 0.0
        %v5375 = vand.u32 %v411, 4294901760
        %5376 = vmatpush2.msra.mxu0 %v5375
        %5377 = vmatprep.subr.mxu0 0.0
        %v5378 = vand.u32 %v410, 4294901760
        %5379 = vmatpush2.msra.mxu0 %v5378
        %5380 = vmatprep.subr.mxu0 0.0
        %v5381 = vand.u32 %v409, 4294901760
        %5382 = vmatpush2.msra.mxu0 %v5381
        %5383 = vmatprep.subr.mxu0 0.0
        %v5384 = vand.u32 %v408, 4294901760
        %5385 = vmatpush2.msra.mxu0 %v5384
        %5386 = vmatprep.subr.mxu0 0.0
        %v5387 = vand.u32 %v407, 4294901760
        %5388 = vmatpush2.msra.mxu0 %v5387
        %5389 = vmatprep.subr.mxu0 0.0
        %v5390 = vand.u32 %v406, 4294901760
        %5391 = vmatpush2.msra.mxu0 %v5390
        %5392 = vmatprep.subr.mxu0 0.0
        %v5393 = vand.u32 %v405, 4294901760
        %5394 = vmatpush2.msra.mxu0 %v5393
        %5395 = vmatprep.subr.mxu0 0.0
        %v5396 = vand.u32 %v404, 4294901760
        %5397 = vmatpush2.msra.mxu0 %v5396
        %5398 = vmatprep.subr.mxu0 0.0
        %v5399 = vand.u32 %v403, 4294901760
        %5400 = vmatpush2.msra.mxu0 %v5399
        %5401 = vmatprep.subr.mxu0 0.0
        %v5402 = vand.u32 %v402, 4294901760
        %5403 = vmatpush2.msra.mxu0 %v5402
        %5404 = vmatprep.subr.mxu0 0.0
        %v5405 = vand.u32 %v401, 4294901760
        %5406 = vmatpush2.msra.mxu0 %v5405
        %5407 = vmatprep.subr.mxu0 0.0
        %v5408 = vand.u32 %v400, 4294901760
        %5409 = vmatpush2.msra.mxu0 %v5408
        %5410 = vmatprep.subr.mxu0 0.0
        %v5411 = vand.u32 %v399, 4294901760
        %5412 = vmatpush2.msra.mxu0 %v5411
        %5413 = vmatprep.subr.mxu0 0.0
        %v5414 = vand.u32 %v398, 4294901760
        %5415 = vmatpush2.msra.mxu0 %v5414
        %v5416 = vand.u32 %v214, 4294901760
        %v5417 = vsub.f32 %v214, %v5416
        %v5418 = vand.u32 %v5417, 4294901760
        %5419 = vmatprep.mubr.f32.mxu0 %v5418
        %v5420 = vand.u32 %v213, 4294901760
        %v5421 = vsub.f32 %v213, %v5420
        %v5422 = vand.u32 %v5421, 4294901760
        %5423 = vmatmul.mubr.f32.gmra.mxu0 %v5422
        %v5424 = vpop.f32.mrf.mxu0
        %v5425 = vadd.f32 %v5317, %v5424
        %v5426 = vpop.f32.mrf.mxu0
        %5427 = vdwg.mxu0
        %5428 = vmatprep.subr.mxu0 0.0
        %v5429 = vand.u32 %v397, 4294901760
        %v5430 = vsub.f32 %v397, %v5429
        %v5431 = vand.u32 %v5430, 4294901760
        %5432 = vmatpush1.msra.mxu0 %v5431
        %5433 = vmatprep.subr.mxu0 0.0
        %v5434 = vand.u32 %v396, 4294901760
        %v5435 = vsub.f32 %v396, %v5434
        %v5436 = vand.u32 %v5435, 4294901760
        %5437 = vmatpush1.msra.mxu0 %v5436
        %5438 = vmatprep.subr.mxu0 0.0
        %v5439 = vand.u32 %v395, 4294901760
        %v5440 = vsub.f32 %v395, %v5439
        %v5441 = vand.u32 %v5440, 4294901760
        %5442 = vmatpush1.msra.mxu0 %v5441
        %5443 = vmatprep.subr.mxu0 0.0
        %v5444 = vand.u32 %v394, 4294901760
        %v5445 = vsub.f32 %v394, %v5444
        %v5446 = vand.u32 %v5445, 4294901760
        %5447 = vmatpush1.msra.mxu0 %v5446
        %5448 = vmatprep.subr.mxu0 0.0
        %v5449 = vand.u32 %v393, 4294901760
        %v5450 = vsub.f32 %v393, %v5449
        %v5451 = vand.u32 %v5450, 4294901760
        %5452 = vmatpush1.msra.mxu0 %v5451
        %5453 = vmatprep.subr.mxu0 0.0
        %v5454 = vand.u32 %v392, 4294901760
        %v5455 = vsub.f32 %v392, %v5454
        %v5456 = vand.u32 %v5455, 4294901760
        %5457 = vmatpush1.msra.mxu0 %v5456
        %5458 = vmatprep.subr.mxu0 0.0
        %v5459 = vand.u32 %v391, 4294901760
        %v5460 = vsub.f32 %v391, %v5459
        %v5461 = vand.u32 %v5460, 4294901760
        %5462 = vmatpush1.msra.mxu0 %v5461
        %5463 = vmatprep.subr.mxu0 0.0
        %v5464 = vand.u32 %v390, 4294901760
        %v5465 = vsub.f32 %v390, %v5464
        %v5466 = vand.u32 %v5465, 4294901760
        %5467 = vmatpush1.msra.mxu0 %v5466
        %5468 = vmatprep.subr.mxu0 0.0
        %v5469 = vand.u32 %v389, 4294901760
        %v5470 = vsub.f32 %v389, %v5469
        %v5471 = vand.u32 %v5470, 4294901760
        %5472 = vmatpush1.msra.mxu0 %v5471
        %5473 = vmatprep.subr.mxu0 0.0
        %v5474 = vand.u32 %v388, 4294901760
        %v5475 = vsub.f32 %v388, %v5474
        %v5476 = vand.u32 %v5475, 4294901760
        %5477 = vmatpush1.msra.mxu0 %v5476
        %5478 = vmatprep.subr.mxu0 0.0
        %v5479 = vand.u32 %v387, 4294901760
        %v5480 = vsub.f32 %v387, %v5479
        %v5481 = vand.u32 %v5480, 4294901760
        %5482 = vmatpush1.msra.mxu0 %v5481
        %5483 = vmatprep.subr.mxu0 0.0
        %v5484 = vand.u32 %v386, 4294901760
        %v5485 = vsub.f32 %v386, %v5484
        %v5486 = vand.u32 %v5485, 4294901760
        %5487 = vmatpush1.msra.mxu0 %v5486
        %5488 = vmatprep.subr.mxu0 0.0
        %v5489 = vand.u32 %v385, 4294901760
        %v5490 = vsub.f32 %v385, %v5489
        %v5491 = vand.u32 %v5490, 4294901760
        %5492 = vmatpush1.msra.mxu0 %v5491
        %5493 = vmatprep.subr.mxu0 0.0
        %v5494 = vand.u32 %v384, 4294901760
        %v5495 = vsub.f32 %v384, %v5494
        %v5496 = vand.u32 %v5495, 4294901760
        %5497 = vmatpush1.msra.mxu0 %v5496
        %5498 = vmatprep.subr.mxu0 0.0
        %v5499 = vand.u32 %v383, 4294901760
        %v5500 = vsub.f32 %v383, %v5499
        %v5501 = vand.u32 %v5500, 4294901760
        %5502 = vmatpush1.msra.mxu0 %v5501
        %5503 = vmatprep.subr.mxu0 0.0
        %v5504 = vand.u32 %v382, 4294901760
        %v5505 = vsub.f32 %v382, %v5504
        %v5506 = vand.u32 %v5505, 4294901760
        %5507 = vmatpush1.msra.mxu0 %v5506
        %5508 = vmatprep.subr.mxu0 0.0
        %v5509 = vand.u32 %v413, 4294901760
        %v5510 = vsub.f32 %v413, %v5509
        %v5511 = vand.u32 %v5510, 4294901760
        %5512 = vmatpush2.msra.mxu0 %v5511
        %5513 = vmatprep.subr.mxu0 0.0
        %v5514 = vand.u32 %v412, 4294901760
        %v5515 = vsub.f32 %v412, %v5514
        %v5516 = vand.u32 %v5515, 4294901760
        %5517 = vmatpush2.msra.mxu0 %v5516
        %5518 = vmatprep.subr.mxu0 0.0
        %v5519 = vand.u32 %v411, 4294901760
        %v5520 = vsub.f32 %v411, %v5519
        %v5521 = vand.u32 %v5520, 4294901760
        %5522 = vmatpush2.msra.mxu0 %v5521
        %5523 = vmatprep.subr.mxu0 0.0
        %v5524 = vand.u32 %v410, 4294901760
        %v5525 = vsub.f32 %v410, %v5524
        %v5526 = vand.u32 %v5525, 4294901760
        %5527 = vmatpush2.msra.mxu0 %v5526
        %5528 = vmatprep.subr.mxu0 0.0
        %v5529 = vand.u32 %v409, 4294901760
        %v5530 = vsub.f32 %v409, %v5529
        %v5531 = vand.u32 %v5530, 4294901760
        %5532 = vmatpush2.msra.mxu0 %v5531
        %5533 = vmatprep.subr.mxu0 0.0
        %v5534 = vand.u32 %v408, 4294901760
        %v5535 = vsub.f32 %v408, %v5534
        %v5536 = vand.u32 %v5535, 4294901760
        %5537 = vmatpush2.msra.mxu0 %v5536
        %5538 = vmatprep.subr.mxu0 0.0
        %v5539 = vand.u32 %v407, 4294901760
        %v5540 = vsub.f32 %v407, %v5539
        %v5541 = vand.u32 %v5540, 4294901760
        %5542 = vmatpush2.msra.mxu0 %v5541
        %5543 = vmatprep.subr.mxu0 0.0
        %v5544 = vand.u32 %v406, 4294901760
        %v5545 = vsub.f32 %v406, %v5544
        %v5546 = vand.u32 %v5545, 4294901760
        %5547 = vmatpush2.msra.mxu0 %v5546
        %5548 = vmatprep.subr.mxu0 0.0
        %v5549 = vand.u32 %v405, 4294901760
        %v5550 = vsub.f32 %v405, %v5549
        %v5551 = vand.u32 %v5550, 4294901760
        %5552 = vmatpush2.msra.mxu0 %v5551
        %5553 = vmatprep.subr.mxu0 0.0
        %v5554 = vand.u32 %v404, 4294901760
        %v5555 = vsub.f32 %v404, %v5554
        %v5556 = vand.u32 %v5555, 4294901760
        %5557 = vmatpush2.msra.mxu0 %v5556
        %5558 = vmatprep.subr.mxu0 0.0
        %v5559 = vand.u32 %v403, 4294901760
        %v5560 = vsub.f32 %v403, %v5559
        %v5561 = vand.u32 %v5560, 4294901760
        %5562 = vmatpush2.msra.mxu0 %v5561
        %5563 = vmatprep.subr.mxu0 0.0
        %v5564 = vand.u32 %v402, 4294901760
        %v5565 = vsub.f32 %v402, %v5564
        %v5566 = vand.u32 %v5565, 4294901760
        %5567 = vmatpush2.msra.mxu0 %v5566
        %5568 = vmatprep.subr.mxu0 0.0
        %v5569 = vand.u32 %v401, 4294901760
        %v5570 = vsub.f32 %v401, %v5569
        %v5571 = vand.u32 %v5570, 4294901760
        %5572 = vmatpush2.msra.mxu0 %v5571
        %5573 = vmatprep.subr.mxu0 0.0
        %v5574 = vand.u32 %v400, 4294901760
        %v5575 = vsub.f32 %v400, %v5574
        %v5576 = vand.u32 %v5575, 4294901760
        %5577 = vmatpush2.msra.mxu0 %v5576
        %5578 = vmatprep.subr.mxu0 0.0
        %v5579 = vand.u32 %v399, 4294901760
        %v5580 = vsub.f32 %v399, %v5579
        %v5581 = vand.u32 %v5580, 4294901760
        %5582 = vmatpush2.msra.mxu0 %v5581
        %5583 = vmatprep.subr.mxu0 0.0
        %v5584 = vand.u32 %v398, 4294901760
        %v5585 = vsub.f32 %v398, %v5584
        %v5586 = vand.u32 %v5585, 4294901760
        %5587 = vmatpush2.msra.mxu0 %v5586
        %v5588 = vand.u32 %v214, 4294901760
        %5589 = vmatprep.mubr.f32.mxu0 %v5588
        %v5590 = vand.u32 %v213, 4294901760
        %5591 = vmatmul.mubr.f32.gmra.mxu0 %v5590
        %v5592 = vpop.f32.mrf.mxu0
        %v5593 = vadd.f32 %v5425, %v5592
        %v5594 = vpop.f32.mrf.mxu0
        %5595 = vdwg.mxu0
        %5596 = vmatprep.subr.mxu0 0.0
        %v5597 = vand.u32 %v397, 4294901760
        %5598 = vmatpush1.msra.mxu0 %v5597
        %5599 = vmatprep.subr.mxu0 0.0
        %v5600 = vand.u32 %v396, 4294901760
        %5601 = vmatpush1.msra.mxu0 %v5600
        %5602 = vmatprep.subr.mxu0 0.0
        %v5603 = vand.u32 %v395, 4294901760
        %5604 = vmatpush1.msra.mxu0 %v5603
        %5605 = vmatprep.subr.mxu0 0.0
        %v5606 = vand.u32 %v394, 4294901760
        %5607 = vmatpush1.msra.mxu0 %v5606
        %5608 = vmatprep.subr.mxu0 0.0
        %v5609 = vand.u32 %v393, 4294901760
        %5610 = vmatpush1.msra.mxu0 %v5609
        %5611 = vmatprep.subr.mxu0 0.0
        %v5612 = vand.u32 %v392, 4294901760
        %5613 = vmatpush1.msra.mxu0 %v5612
        %5614 = vmatprep.subr.mxu0 0.0
        %v5615 = vand.u32 %v391, 4294901760
        %5616 = vmatpush1.msra.mxu0 %v5615
        %5617 = vmatprep.subr.mxu0 0.0
        %v5618 = vand.u32 %v390, 4294901760
        %5619 = vmatpush1.msra.mxu0 %v5618
        %5620 = vmatprep.subr.mxu0 0.0
        %v5621 = vand.u32 %v389, 4294901760
        %5622 = vmatpush1.msra.mxu0 %v5621
        %5623 = vmatprep.subr.mxu0 0.0
        %v5624 = vand.u32 %v388, 4294901760
        %5625 = vmatpush1.msra.mxu0 %v5624
        %5626 = vmatprep.subr.mxu0 0.0
        %v5627 = vand.u32 %v387, 4294901760
        %5628 = vmatpush1.msra.mxu0 %v5627
        %5629 = vmatprep.subr.mxu0 0.0
        %v5630 = vand.u32 %v386, 4294901760
        %5631 = vmatpush1.msra.mxu0 %v5630
        %5632 = vmatprep.subr.mxu0 0.0
        %v5633 = vand.u32 %v385, 4294901760
        %5634 = vmatpush1.msra.mxu0 %v5633
        %5635 = vmatprep.subr.mxu0 0.0
        %v5636 = vand.u32 %v384, 4294901760
        %5637 = vmatpush1.msra.mxu0 %v5636
        %5638 = vmatprep.subr.mxu0 0.0
        %v5639 = vand.u32 %v383, 4294901760
        %5640 = vmatpush1.msra.mxu0 %v5639
        %5641 = vmatprep.subr.mxu0 0.0
        %v5642 = vand.u32 %v382, 4294901760
        %5643 = vmatpush1.msra.mxu0 %v5642
        %5644 = vmatprep.subr.mxu0 0.0
        %v5645 = vand.u32 %v413, 4294901760
        %5646 = vmatpush2.msra.mxu0 %v5645
        %5647 = vmatprep.subr.mxu0 0.0
        %v5648 = vand.u32 %v412, 4294901760
        %5649 = vmatpush2.msra.mxu0 %v5648
        %5650 = vmatprep.subr.mxu0 0.0
        %v5651 = vand.u32 %v411, 4294901760
        %5652 = vmatpush2.msra.mxu0 %v5651
        %5653 = vmatprep.subr.mxu0 0.0
        %v5654 = vand.u32 %v410, 4294901760
        %5655 = vmatpush2.msra.mxu0 %v5654
        %5656 = vmatprep.subr.mxu0 0.0
        %v5657 = vand.u32 %v409, 4294901760
        %5658 = vmatpush2.msra.mxu0 %v5657
        %5659 = vmatprep.subr.mxu0 0.0
        %v5660 = vand.u32 %v408, 4294901760
        %5661 = vmatpush2.msra.mxu0 %v5660
        %5662 = vmatprep.subr.mxu0 0.0
        %v5663 = vand.u32 %v407, 4294901760
        %5664 = vmatpush2.msra.mxu0 %v5663
        %5665 = vmatprep.subr.mxu0 0.0
        %v5666 = vand.u32 %v406, 4294901760
        %5667 = vmatpush2.msra.mxu0 %v5666
        %5668 = vmatprep.subr.mxu0 0.0
        %v5669 = vand.u32 %v405, 4294901760
        %5670 = vmatpush2.msra.mxu0 %v5669
        %5671 = vmatprep.subr.mxu0 0.0
        %v5672 = vand.u32 %v404, 4294901760
        %5673 = vmatpush2.msra.mxu0 %v5672
        %5674 = vmatprep.subr.mxu0 0.0
        %v5675 = vand.u32 %v403, 4294901760
        %5676 = vmatpush2.msra.mxu0 %v5675
        %5677 = vmatprep.subr.mxu0 0.0
        %v5678 = vand.u32 %v402, 4294901760
        %5679 = vmatpush2.msra.mxu0 %v5678
        %5680 = vmatprep.subr.mxu0 0.0
        %v5681 = vand.u32 %v401, 4294901760
        %5682 = vmatpush2.msra.mxu0 %v5681
        %5683 = vmatprep.subr.mxu0 0.0
        %v5684 = vand.u32 %v400, 4294901760
        %5685 = vmatpush2.msra.mxu0 %v5684
        %5686 = vmatprep.subr.mxu0 0.0
        %v5687 = vand.u32 %v399, 4294901760
        %5688 = vmatpush2.msra.mxu0 %v5687
        %5689 = vmatprep.subr.mxu0 0.0
        %v5690 = vand.u32 %v398, 4294901760
        %5691 = vmatpush2.msra.mxu0 %v5690
        %v5692 = vand.u32 %v214, 4294901760
        %5693 = vmatprep.mubr.f32.mxu0 %v5692
        %v5694 = vand.u32 %v213, 4294901760
        %5695 = vmatmul.mubr.f32.gmra.mxu0 %v5694
        %v5696 = vpop.f32.mrf.mxu0
        %v5697 = vadd.f32 %v5593, %v5696
        %v5698 = vpop.f32.mrf.mxu0
        %5699 = vdwg.mxu0
        %5700 = vmatprep.subr.mxu0 0.0
        %v5701 = vand.u32 %v429, 4294901760
        %5702 = vmatpush1.msra.mxu0 %v5701
        %5703 = vmatprep.subr.mxu0 0.0
        %v5704 = vand.u32 %v428, 4294901760
        %5705 = vmatpush1.msra.mxu0 %v5704
        %5706 = vmatprep.subr.mxu0 0.0
        %v5707 = vand.u32 %v427, 4294901760
        %5708 = vmatpush1.msra.mxu0 %v5707
        %5709 = vmatprep.subr.mxu0 0.0
        %v5710 = vand.u32 %v426, 4294901760
        %5711 = vmatpush1.msra.mxu0 %v5710
        %5712 = vmatprep.subr.mxu0 0.0
        %v5713 = vand.u32 %v425, 4294901760
        %5714 = vmatpush1.msra.mxu0 %v5713
        %5715 = vmatprep.subr.mxu0 0.0
        %v5716 = vand.u32 %v424, 4294901760
        %5717 = vmatpush1.msra.mxu0 %v5716
        %5718 = vmatprep.subr.mxu0 0.0
        %v5719 = vand.u32 %v423, 4294901760
        %5720 = vmatpush1.msra.mxu0 %v5719
        %5721 = vmatprep.subr.mxu0 0.0
        %v5722 = vand.u32 %v422, 4294901760
        %5723 = vmatpush1.msra.mxu0 %v5722
        %5724 = vmatprep.subr.mxu0 0.0
        %v5725 = vand.u32 %v421, 4294901760
        %5726 = vmatpush1.msra.mxu0 %v5725
        %5727 = vmatprep.subr.mxu0 0.0
        %v5728 = vand.u32 %v420, 4294901760
        %5729 = vmatpush1.msra.mxu0 %v5728
        %5730 = vmatprep.subr.mxu0 0.0
        %v5731 = vand.u32 %v419, 4294901760
        %5732 = vmatpush1.msra.mxu0 %v5731
        %5733 = vmatprep.subr.mxu0 0.0
        %v5734 = vand.u32 %v418, 4294901760
        %5735 = vmatpush1.msra.mxu0 %v5734
        %5736 = vmatprep.subr.mxu0 0.0
        %v5737 = vand.u32 %v417, 4294901760
        %5738 = vmatpush1.msra.mxu0 %v5737
        %5739 = vmatprep.subr.mxu0 0.0
        %v5740 = vand.u32 %v416, 4294901760
        %5741 = vmatpush1.msra.mxu0 %v5740
        %5742 = vmatprep.subr.mxu0 0.0
        %v5743 = vand.u32 %v415, 4294901760
        %5744 = vmatpush1.msra.mxu0 %v5743
        %5745 = vmatprep.subr.mxu0 0.0
        %v5746 = vand.u32 %v414, 4294901760
        %5747 = vmatpush1.msra.mxu0 %v5746
        %5748 = vmatprep.subr.mxu0 0.0
        %v5749 = vand.u32 %v445, 4294901760
        %5750 = vmatpush2.msra.mxu0 %v5749
        %5751 = vmatprep.subr.mxu0 0.0
        %v5752 = vand.u32 %v444, 4294901760
        %5753 = vmatpush2.msra.mxu0 %v5752
        %5754 = vmatprep.subr.mxu0 0.0
        %v5755 = vand.u32 %v443, 4294901760
        %5756 = vmatpush2.msra.mxu0 %v5755
        %5757 = vmatprep.subr.mxu0 0.0
        %v5758 = vand.u32 %v442, 4294901760
        %5759 = vmatpush2.msra.mxu0 %v5758
        %5760 = vmatprep.subr.mxu0 0.0
        %v5761 = vand.u32 %v441, 4294901760
        %5762 = vmatpush2.msra.mxu0 %v5761
        %5763 = vmatprep.subr.mxu0 0.0
        %v5764 = vand.u32 %v440, 4294901760
        %5765 = vmatpush2.msra.mxu0 %v5764
        %5766 = vmatprep.subr.mxu0 0.0
        %v5767 = vand.u32 %v439, 4294901760
        %5768 = vmatpush2.msra.mxu0 %v5767
        %5769 = vmatprep.subr.mxu0 0.0
        %v5770 = vand.u32 %v438, 4294901760
        %5771 = vmatpush2.msra.mxu0 %v5770
        %5772 = vmatprep.subr.mxu0 0.0
        %v5773 = vand.u32 %v437, 4294901760
        %5774 = vmatpush2.msra.mxu0 %v5773
        %5775 = vmatprep.subr.mxu0 0.0
        %v5776 = vand.u32 %v436, 4294901760
        %5777 = vmatpush2.msra.mxu0 %v5776
        %5778 = vmatprep.subr.mxu0 0.0
        %v5779 = vand.u32 %v435, 4294901760
        %5780 = vmatpush2.msra.mxu0 %v5779
        %5781 = vmatprep.subr.mxu0 0.0
        %v5782 = vand.u32 %v434, 4294901760
        %5783 = vmatpush2.msra.mxu0 %v5782
        %5784 = vmatprep.subr.mxu0 0.0
        %v5785 = vand.u32 %v433, 4294901760
        %5786 = vmatpush2.msra.mxu0 %v5785
        %5787 = vmatprep.subr.mxu0 0.0
        %v5788 = vand.u32 %v432, 4294901760
        %5789 = vmatpush2.msra.mxu0 %v5788
        %5790 = vmatprep.subr.mxu0 0.0
        %v5791 = vand.u32 %v431, 4294901760
        %5792 = vmatpush2.msra.mxu0 %v5791
        %5793 = vmatprep.subr.mxu0 0.0
        %v5794 = vand.u32 %v430, 4294901760
        %5795 = vmatpush2.msra.mxu0 %v5794
        %v5796 = vand.u32 %v216, 4294901760
        %v5797 = vsub.f32 %v216, %v5796
        %v5798 = vand.u32 %v5797, 4294901760
        %v5799 = vsub.f32 %v5797, %v5798
        %v5800 = vand.u32 %v5799, 4294901760
        %5801 = vmatprep.mubr.f32.mxu0 %v5800
        %v5802 = vand.u32 %v215, 4294901760
        %v5803 = vsub.f32 %v215, %v5802
        %v5804 = vand.u32 %v5803, 4294901760
        %v5805 = vsub.f32 %v5803, %v5804
        %v5806 = vand.u32 %v5805, 4294901760
        %5807 = vmatmul.mubr.f32.gmra.mxu0 %v5806
        %v5808 = vpop.f32.mrf.mxu0
        %v5809 = vadd.f32 %v5697, %v5808
        %v5810 = vpop.f32.mrf.mxu0
        %5811 = vdwg.mxu0
        %5812 = vmatprep.subr.mxu0 0.0
        %v5813 = vand.u32 %v429, 4294901760
        %v5814 = vsub.f32 %v429, %v5813
        %v5815 = vand.u32 %v5814, 4294901760
        %v5816 = vsub.f32 %v5814, %v5815
        %v5817 = vand.u32 %v5816, 4294901760
        %5818 = vmatpush1.msra.mxu0 %v5817
        %5819 = vmatprep.subr.mxu0 0.0
        %v5820 = vand.u32 %v428, 4294901760
        %v5821 = vsub.f32 %v428, %v5820
        %v5822 = vand.u32 %v5821, 4294901760
        %v5823 = vsub.f32 %v5821, %v5822
        %v5824 = vand.u32 %v5823, 4294901760
        %5825 = vmatpush1.msra.mxu0 %v5824
        %5826 = vmatprep.subr.mxu0 0.0
        %v5827 = vand.u32 %v427, 4294901760
        %v5828 = vsub.f32 %v427, %v5827
        %v5829 = vand.u32 %v5828, 4294901760
        %v5830 = vsub.f32 %v5828, %v5829
        %v5831 = vand.u32 %v5830, 4294901760
        %5832 = vmatpush1.msra.mxu0 %v5831
        %5833 = vmatprep.subr.mxu0 0.0
        %v5834 = vand.u32 %v426, 4294901760
        %v5835 = vsub.f32 %v426, %v5834
        %v5836 = vand.u32 %v5835, 4294901760
        %v5837 = vsub.f32 %v5835, %v5836
        %v5838 = vand.u32 %v5837, 4294901760
        %5839 = vmatpush1.msra.mxu0 %v5838
        %5840 = vmatprep.subr.mxu0 0.0
        %v5841 = vand.u32 %v425, 4294901760
        %v5842 = vsub.f32 %v425, %v5841
        %v5843 = vand.u32 %v5842, 4294901760
        %v5844 = vsub.f32 %v5842, %v5843
        %v5845 = vand.u32 %v5844, 4294901760
        %5846 = vmatpush1.msra.mxu0 %v5845
        %5847 = vmatprep.subr.mxu0 0.0
        %v5848 = vand.u32 %v424, 4294901760
        %v5849 = vsub.f32 %v424, %v5848
        %v5850 = vand.u32 %v5849, 4294901760
        %v5851 = vsub.f32 %v5849, %v5850
        %v5852 = vand.u32 %v5851, 4294901760
        %5853 = vmatpush1.msra.mxu0 %v5852
        %5854 = vmatprep.subr.mxu0 0.0
        %v5855 = vand.u32 %v423, 4294901760
        %v5856 = vsub.f32 %v423, %v5855
        %v5857 = vand.u32 %v5856, 4294901760
        %v5858 = vsub.f32 %v5856, %v5857
        %v5859 = vand.u32 %v5858, 4294901760
        %5860 = vmatpush1.msra.mxu0 %v5859
        %5861 = vmatprep.subr.mxu0 0.0
        %v5862 = vand.u32 %v422, 4294901760
        %v5863 = vsub.f32 %v422, %v5862
        %v5864 = vand.u32 %v5863, 4294901760
        %v5865 = vsub.f32 %v5863, %v5864
        %v5866 = vand.u32 %v5865, 4294901760
        %5867 = vmatpush1.msra.mxu0 %v5866
        %5868 = vmatprep.subr.mxu0 0.0
        %v5869 = vand.u32 %v421, 4294901760
        %v5870 = vsub.f32 %v421, %v5869
        %v5871 = vand.u32 %v5870, 4294901760
        %v5872 = vsub.f32 %v5870, %v5871
        %v5873 = vand.u32 %v5872, 4294901760
        %5874 = vmatpush1.msra.mxu0 %v5873
        %5875 = vmatprep.subr.mxu0 0.0
        %v5876 = vand.u32 %v420, 4294901760
        %v5877 = vsub.f32 %v420, %v5876
        %v5878 = vand.u32 %v5877, 4294901760
        %v5879 = vsub.f32 %v5877, %v5878
        %v5880 = vand.u32 %v5879, 4294901760
        %5881 = vmatpush1.msra.mxu0 %v5880
        %5882 = vmatprep.subr.mxu0 0.0
        %v5883 = vand.u32 %v419, 4294901760
        %v5884 = vsub.f32 %v419, %v5883
        %v5885 = vand.u32 %v5884, 4294901760
        %v5886 = vsub.f32 %v5884, %v5885
        %v5887 = vand.u32 %v5886, 4294901760
        %5888 = vmatpush1.msra.mxu0 %v5887
        %5889 = vmatprep.subr.mxu0 0.0
        %v5890 = vand.u32 %v418, 4294901760
        %v5891 = vsub.f32 %v418, %v5890
        %v5892 = vand.u32 %v5891, 4294901760
        %v5893 = vsub.f32 %v5891, %v5892
        %v5894 = vand.u32 %v5893, 4294901760
        %5895 = vmatpush1.msra.mxu0 %v5894
        %5896 = vmatprep.subr.mxu0 0.0
        %v5897 = vand.u32 %v417, 4294901760
        %v5898 = vsub.f32 %v417, %v5897
        %v5899 = vand.u32 %v5898, 4294901760
        %v5900 = vsub.f32 %v5898, %v5899
        %v5901 = vand.u32 %v5900, 4294901760
        %5902 = vmatpush1.msra.mxu0 %v5901
        %5903 = vmatprep.subr.mxu0 0.0
        %v5904 = vand.u32 %v416, 4294901760
        %v5905 = vsub.f32 %v416, %v5904
        %v5906 = vand.u32 %v5905, 4294901760
        %v5907 = vsub.f32 %v5905, %v5906
        %v5908 = vand.u32 %v5907, 4294901760
        %5909 = vmatpush1.msra.mxu0 %v5908
        %5910 = vmatprep.subr.mxu0 0.0
        %v5911 = vand.u32 %v415, 4294901760
        %v5912 = vsub.f32 %v415, %v5911
        %v5913 = vand.u32 %v5912, 4294901760
        %v5914 = vsub.f32 %v5912, %v5913
        %v5915 = vand.u32 %v5914, 4294901760
        %5916 = vmatpush1.msra.mxu0 %v5915
        %5917 = vmatprep.subr.mxu0 0.0
        %v5918 = vand.u32 %v414, 4294901760
        %v5919 = vsub.f32 %v414, %v5918
        %v5920 = vand.u32 %v5919, 4294901760
        %v5921 = vsub.f32 %v5919, %v5920
        %v5922 = vand.u32 %v5921, 4294901760
        %5923 = vmatpush1.msra.mxu0 %v5922
        %5924 = vmatprep.subr.mxu0 0.0
        %v5925 = vand.u32 %v445, 4294901760
        %v5926 = vsub.f32 %v445, %v5925
        %v5927 = vand.u32 %v5926, 4294901760
        %v5928 = vsub.f32 %v5926, %v5927
        %v5929 = vand.u32 %v5928, 4294901760
        %5930 = vmatpush2.msra.mxu0 %v5929
        %5931 = vmatprep.subr.mxu0 0.0
        %v5932 = vand.u32 %v444, 4294901760
        %v5933 = vsub.f32 %v444, %v5932
        %v5934 = vand.u32 %v5933, 4294901760
        %v5935 = vsub.f32 %v5933, %v5934
        %v5936 = vand.u32 %v5935, 4294901760
        %5937 = vmatpush2.msra.mxu0 %v5936
        %5938 = vmatprep.subr.mxu0 0.0
        %v5939 = vand.u32 %v443, 4294901760
        %v5940 = vsub.f32 %v443, %v5939
        %v5941 = vand.u32 %v5940, 4294901760
        %v5942 = vsub.f32 %v5940, %v5941
        %v5943 = vand.u32 %v5942, 4294901760
        %5944 = vmatpush2.msra.mxu0 %v5943
        %5945 = vmatprep.subr.mxu0 0.0
        %v5946 = vand.u32 %v442, 4294901760
        %v5947 = vsub.f32 %v442, %v5946
        %v5948 = vand.u32 %v5947, 4294901760
        %v5949 = vsub.f32 %v5947, %v5948
        %v5950 = vand.u32 %v5949, 4294901760
        %5951 = vmatpush2.msra.mxu0 %v5950
        %5952 = vmatprep.subr.mxu0 0.0
        %v5953 = vand.u32 %v441, 4294901760
        %v5954 = vsub.f32 %v441, %v5953
        %v5955 = vand.u32 %v5954, 4294901760
        %v5956 = vsub.f32 %v5954, %v5955
        %v5957 = vand.u32 %v5956, 4294901760
        %5958 = vmatpush2.msra.mxu0 %v5957
        %5959 = vmatprep.subr.mxu0 0.0
        %v5960 = vand.u32 %v440, 4294901760
        %v5961 = vsub.f32 %v440, %v5960
        %v5962 = vand.u32 %v5961, 4294901760
        %v5963 = vsub.f32 %v5961, %v5962
        %v5964 = vand.u32 %v5963, 4294901760
        %5965 = vmatpush2.msra.mxu0 %v5964
        %5966 = vmatprep.subr.mxu0 0.0
        %v5967 = vand.u32 %v439, 4294901760
        %v5968 = vsub.f32 %v439, %v5967
        %v5969 = vand.u32 %v5968, 4294901760
        %v5970 = vsub.f32 %v5968, %v5969
        %v5971 = vand.u32 %v5970, 4294901760
        %5972 = vmatpush2.msra.mxu0 %v5971
        %5973 = vmatprep.subr.mxu0 0.0
        %v5974 = vand.u32 %v438, 4294901760
        %v5975 = vsub.f32 %v438, %v5974
        %v5976 = vand.u32 %v5975, 4294901760
        %v5977 = vsub.f32 %v5975, %v5976
        %v5978 = vand.u32 %v5977, 4294901760
        %5979 = vmatpush2.msra.mxu0 %v5978
        %5980 = vmatprep.subr.mxu0 0.0
        %v5981 = vand.u32 %v437, 4294901760
        %v5982 = vsub.f32 %v437, %v5981
        %v5983 = vand.u32 %v5982, 4294901760
        %v5984 = vsub.f32 %v5982, %v5983
        %v5985 = vand.u32 %v5984, 4294901760
        %5986 = vmatpush2.msra.mxu0 %v5985
        %5987 = vmatprep.subr.mxu0 0.0
        %v5988 = vand.u32 %v436, 4294901760
        %v5989 = vsub.f32 %v436, %v5988
        %v5990 = vand.u32 %v5989, 4294901760
        %v5991 = vsub.f32 %v5989, %v5990
        %v5992 = vand.u32 %v5991, 4294901760
        %5993 = vmatpush2.msra.mxu0 %v5992
        %5994 = vmatprep.subr.mxu0 0.0
        %v5995 = vand.u32 %v435, 4294901760
        %v5996 = vsub.f32 %v435, %v5995
        %v5997 = vand.u32 %v5996, 4294901760
        %v5998 = vsub.f32 %v5996, %v5997
        %v5999 = vand.u32 %v5998, 4294901760
        %6000 = vmatpush2.msra.mxu0 %v5999
        %6001 = vmatprep.subr.mxu0 0.0
        %v6002 = vand.u32 %v434, 4294901760
        %v6003 = vsub.f32 %v434, %v6002
        %v6004 = vand.u32 %v6003, 4294901760
        %v6005 = vsub.f32 %v6003, %v6004
        %v6006 = vand.u32 %v6005, 4294901760
        %6007 = vmatpush2.msra.mxu0 %v6006
        %6008 = vmatprep.subr.mxu0 0.0
        %v6009 = vand.u32 %v433, 4294901760
        %v6010 = vsub.f32 %v433, %v6009
        %v6011 = vand.u32 %v6010, 4294901760
        %v6012 = vsub.f32 %v6010, %v6011
        %v6013 = vand.u32 %v6012, 4294901760
        %6014 = vmatpush2.msra.mxu0 %v6013
        %6015 = vmatprep.subr.mxu0 0.0
        %v6016 = vand.u32 %v432, 4294901760
        %v6017 = vsub.f32 %v432, %v6016
        %v6018 = vand.u32 %v6017, 4294901760
        %v6019 = vsub.f32 %v6017, %v6018
        %v6020 = vand.u32 %v6019, 4294901760
        %6021 = vmatpush2.msra.mxu0 %v6020
        %6022 = vmatprep.subr.mxu0 0.0
        %v6023 = vand.u32 %v431, 4294901760
        %v6024 = vsub.f32 %v431, %v6023
        %v6025 = vand.u32 %v6024, 4294901760
        %v6026 = vsub.f32 %v6024, %v6025
        %v6027 = vand.u32 %v6026, 4294901760
        %6028 = vmatpush2.msra.mxu0 %v6027
        %6029 = vmatprep.subr.mxu0 0.0
        %v6030 = vand.u32 %v430, 4294901760
        %v6031 = vsub.f32 %v430, %v6030
        %v6032 = vand.u32 %v6031, 4294901760
        %v6033 = vsub.f32 %v6031, %v6032
        %v6034 = vand.u32 %v6033, 4294901760
        %6035 = vmatpush2.msra.mxu0 %v6034
        %v6036 = vand.u32 %v216, 4294901760
        %6037 = vmatprep.mubr.f32.mxu0 %v6036
        %v6038 = vand.u32 %v215, 4294901760
        %6039 = vmatmul.mubr.f32.gmra.mxu0 %v6038
        %v6040 = vpop.f32.mrf.mxu0
        %v6041 = vadd.f32 %v5809, %v6040
        %v6042 = vpop.f32.mrf.mxu0
        %6043 = vdwg.mxu0
        %6044 = vmatprep.subr.mxu0 0.0
        %v6045 = vand.u32 %v429, 4294901760
        %v6046 = vsub.f32 %v429, %v6045
        %6047 = vmatpush1.msra.mxu0 %v6046
        %6048 = vmatprep.subr.mxu0 0.0
        %v6049 = vand.u32 %v428, 4294901760
        %v6050 = vsub.f32 %v428, %v6049
        %6051 = vmatpush1.msra.mxu0 %v6050
        %6052 = vmatprep.subr.mxu0 0.0
        %v6053 = vand.u32 %v427, 4294901760
        %v6054 = vsub.f32 %v427, %v6053
        %6055 = vmatpush1.msra.mxu0 %v6054
        %6056 = vmatprep.subr.mxu0 0.0
        %v6057 = vand.u32 %v426, 4294901760
        %v6058 = vsub.f32 %v426, %v6057
        %6059 = vmatpush1.msra.mxu0 %v6058
        %6060 = vmatprep.subr.mxu0 0.0
        %v6061 = vand.u32 %v425, 4294901760
        %v6062 = vsub.f32 %v425, %v6061
        %6063 = vmatpush1.msra.mxu0 %v6062
        %6064 = vmatprep.subr.mxu0 0.0
        %v6065 = vand.u32 %v424, 4294901760
        %v6066 = vsub.f32 %v424, %v6065
        %6067 = vmatpush1.msra.mxu0 %v6066
        %6068 = vmatprep.subr.mxu0 0.0
        %v6069 = vand.u32 %v423, 4294901760
        %v6070 = vsub.f32 %v423, %v6069
        %6071 = vmatpush1.msra.mxu0 %v6070
        %6072 = vmatprep.subr.mxu0 0.0
        %v6073 = vand.u32 %v422, 4294901760
        %v6074 = vsub.f32 %v422, %v6073
        %6075 = vmatpush1.msra.mxu0 %v6074
        %6076 = vmatprep.subr.mxu0 0.0
        %v6077 = vand.u32 %v421, 4294901760
        %v6078 = vsub.f32 %v421, %v6077
        %6079 = vmatpush1.msra.mxu0 %v6078
        %6080 = vmatprep.subr.mxu0 0.0
        %v6081 = vand.u32 %v420, 4294901760
        %v6082 = vsub.f32 %v420, %v6081
        %6083 = vmatpush1.msra.mxu0 %v6082
        %6084 = vmatprep.subr.mxu0 0.0
        %v6085 = vand.u32 %v419, 4294901760
        %v6086 = vsub.f32 %v419, %v6085
        %6087 = vmatpush1.msra.mxu0 %v6086
        %6088 = vmatprep.subr.mxu0 0.0
        %v6089 = vand.u32 %v418, 4294901760
        %v6090 = vsub.f32 %v418, %v6089
        %6091 = vmatpush1.msra.mxu0 %v6090
        %6092 = vmatprep.subr.mxu0 0.0
        %v6093 = vand.u32 %v417, 4294901760
        %v6094 = vsub.f32 %v417, %v6093
        %6095 = vmatpush1.msra.mxu0 %v6094
        %6096 = vmatprep.subr.mxu0 0.0
        %v6097 = vand.u32 %v416, 4294901760
        %v6098 = vsub.f32 %v416, %v6097
        %6099 = vmatpush1.msra.mxu0 %v6098
        %6100 = vmatprep.subr.mxu0 0.0
        %v6101 = vand.u32 %v415, 4294901760
        %v6102 = vsub.f32 %v415, %v6101
        %6103 = vmatpush1.msra.mxu0 %v6102
        %6104 = vmatprep.subr.mxu0 0.0
        %v6105 = vand.u32 %v414, 4294901760
        %v6106 = vsub.f32 %v414, %v6105
        %6107 = vmatpush1.msra.mxu0 %v6106
        %6108 = vmatprep.subr.mxu0 0.0
        %v6109 = vand.u32 %v445, 4294901760
        %v6110 = vsub.f32 %v445, %v6109
        %6111 = vmatpush2.msra.mxu0 %v6110
        %6112 = vmatprep.subr.mxu0 0.0
        %v6113 = vand.u32 %v444, 4294901760
        %v6114 = vsub.f32 %v444, %v6113
        %6115 = vmatpush2.msra.mxu0 %v6114
        %6116 = vmatprep.subr.mxu0 0.0
        %v6117 = vand.u32 %v443, 4294901760
        %v6118 = vsub.f32 %v443, %v6117
        %6119 = vmatpush2.msra.mxu0 %v6118
        %6120 = vmatprep.subr.mxu0 0.0
        %v6121 = vand.u32 %v442, 4294901760
        %v6122 = vsub.f32 %v442, %v6121
        %6123 = vmatpush2.msra.mxu0 %v6122
        %6124 = vmatprep.subr.mxu0 0.0
        %v6125 = vand.u32 %v441, 4294901760
        %v6126 = vsub.f32 %v441, %v6125
        %6127 = vmatpush2.msra.mxu0 %v6126
        %6128 = vmatprep.subr.mxu0 0.0
        %v6129 = vand.u32 %v440, 4294901760
        %v6130 = vsub.f32 %v440, %v6129
        %6131 = vmatpush2.msra.mxu0 %v6130
        %6132 = vmatprep.subr.mxu0 0.0
        %v6133 = vand.u32 %v439, 4294901760
        %v6134 = vsub.f32 %v439, %v6133
        %6135 = vmatpush2.msra.mxu0 %v6134
        %6136 = vmatprep.subr.mxu0 0.0
        %v6137 = vand.u32 %v438, 4294901760
        %v6138 = vsub.f32 %v438, %v6137
        %6139 = vmatpush2.msra.mxu0 %v6138
        %6140 = vmatprep.subr.mxu0 0.0
        %v6141 = vand.u32 %v437, 4294901760
        %v6142 = vsub.f32 %v437, %v6141
        %6143 = vmatpush2.msra.mxu0 %v6142
        %6144 = vmatprep.subr.mxu0 0.0
        %v6145 = vand.u32 %v436, 4294901760
        %v6146 = vsub.f32 %v436, %v6145
        %6147 = vmatpush2.msra.mxu0 %v6146
        %6148 = vmatprep.subr.mxu0 0.0
        %v6149 = vand.u32 %v435, 4294901760
        %v6150 = vsub.f32 %v435, %v6149
        %6151 = vmatpush2.msra.mxu0 %v6150
        %6152 = vmatprep.subr.mxu0 0.0
        %v6153 = vand.u32 %v434, 4294901760
        %v6154 = vsub.f32 %v434, %v6153
        %6155 = vmatpush2.msra.mxu0 %v6154
        %6156 = vmatprep.subr.mxu0 0.0
        %v6157 = vand.u32 %v433, 4294901760
        %v6158 = vsub.f32 %v433, %v6157
        %6159 = vmatpush2.msra.mxu0 %v6158
        %6160 = vmatprep.subr.mxu0 0.0
        %v6161 = vand.u32 %v432, 4294901760
        %v6162 = vsub.f32 %v432, %v6161
        %6163 = vmatpush2.msra.mxu0 %v6162
        %6164 = vmatprep.subr.mxu0 0.0
        %v6165 = vand.u32 %v431, 4294901760
        %v6166 = vsub.f32 %v431, %v6165
        %6167 = vmatpush2.msra.mxu0 %v6166
        %6168 = vmatprep.subr.mxu0 0.0
        %v6169 = vand.u32 %v430, 4294901760
        %v6170 = vsub.f32 %v430, %v6169
        %6171 = vmatpush2.msra.mxu0 %v6170
        %v6172 = vand.u32 %v216, 4294901760
        %v6173 = vsub.f32 %v216, %v6172
        %6174 = vmatprep.mubr.f32.mxu0 %v6173
        %v6175 = vand.u32 %v215, 4294901760
        %v6176 = vsub.f32 %v215, %v6175
        %6177 = vmatmul.mubr.f32.gmra.mxu0 %v6176
        %v6178 = vpop.f32.mrf.mxu0
        %v6179 = vadd.f32 %v6041, %v6178
        %v6180 = vpop.f32.mrf.mxu0
        %6181 = vdwg.mxu0
        %6182 = vmatprep.subr.mxu0 0.0
        %v6183 = vand.u32 %v429, 4294901760
        %6184 = vmatpush1.msra.mxu0 %v6183
        %6185 = vmatprep.subr.mxu0 0.0
        %v6186 = vand.u32 %v428, 4294901760
        %6187 = vmatpush1.msra.mxu0 %v6186
        %6188 = vmatprep.subr.mxu0 0.0
        %v6189 = vand.u32 %v427, 4294901760
        %6190 = vmatpush1.msra.mxu0 %v6189
        %6191 = vmatprep.subr.mxu0 0.0
        %v6192 = vand.u32 %v426, 4294901760
        %6193 = vmatpush1.msra.mxu0 %v6192
        %6194 = vmatprep.subr.mxu0 0.0
        %v6195 = vand.u32 %v425, 4294901760
        %6196 = vmatpush1.msra.mxu0 %v6195
        %6197 = vmatprep.subr.mxu0 0.0
        %v6198 = vand.u32 %v424, 4294901760
        %6199 = vmatpush1.msra.mxu0 %v6198
        %6200 = vmatprep.subr.mxu0 0.0
        %v6201 = vand.u32 %v423, 4294901760
        %6202 = vmatpush1.msra.mxu0 %v6201
        %6203 = vmatprep.subr.mxu0 0.0
        %v6204 = vand.u32 %v422, 4294901760
        %6205 = vmatpush1.msra.mxu0 %v6204
        %6206 = vmatprep.subr.mxu0 0.0
        %v6207 = vand.u32 %v421, 4294901760
        %6208 = vmatpush1.msra.mxu0 %v6207
        %6209 = vmatprep.subr.mxu0 0.0
        %v6210 = vand.u32 %v420, 4294901760
        %6211 = vmatpush1.msra.mxu0 %v6210
        %6212 = vmatprep.subr.mxu0 0.0
        %v6213 = vand.u32 %v419, 4294901760
        %6214 = vmatpush1.msra.mxu0 %v6213
        %6215 = vmatprep.subr.mxu0 0.0
        %v6216 = vand.u32 %v418, 4294901760
        %6217 = vmatpush1.msra.mxu0 %v6216
        %6218 = vmatprep.subr.mxu0 0.0
        %v6219 = vand.u32 %v417, 4294901760
        %6220 = vmatpush1.msra.mxu0 %v6219
        %6221 = vmatprep.subr.mxu0 0.0
        %v6222 = vand.u32 %v416, 4294901760
        %6223 = vmatpush1.msra.mxu0 %v6222
        %6224 = vmatprep.subr.mxu0 0.0
        %v6225 = vand.u32 %v415, 4294901760
        %6226 = vmatpush1.msra.mxu0 %v6225
        %6227 = vmatprep.subr.mxu0 0.0
        %v6228 = vand.u32 %v414, 4294901760
        %6229 = vmatpush1.msra.mxu0 %v6228
        %6230 = vmatprep.subr.mxu0 0.0
        %v6231 = vand.u32 %v445, 4294901760
        %6232 = vmatpush2.msra.mxu0 %v6231
        %6233 = vmatprep.subr.mxu0 0.0
        %v6234 = vand.u32 %v444, 4294901760
        %6235 = vmatpush2.msra.mxu0 %v6234
        %6236 = vmatprep.subr.mxu0 0.0
        %v6237 = vand.u32 %v443, 4294901760
        %6238 = vmatpush2.msra.mxu0 %v6237
        %6239 = vmatprep.subr.mxu0 0.0
        %v6240 = vand.u32 %v442, 4294901760
        %6241 = vmatpush2.msra.mxu0 %v6240
        %6242 = vmatprep.subr.mxu0 0.0
        %v6243 = vand.u32 %v441, 4294901760
        %6244 = vmatpush2.msra.mxu0 %v6243
        %6245 = vmatprep.subr.mxu0 0.0
        %v6246 = vand.u32 %v440, 4294901760
        %6247 = vmatpush2.msra.mxu0 %v6246
        %6248 = vmatprep.subr.mxu0 0.0
        %v6249 = vand.u32 %v439, 4294901760
        %6250 = vmatpush2.msra.mxu0 %v6249
        %6251 = vmatprep.subr.mxu0 0.0
        %v6252 = vand.u32 %v438, 4294901760
        %6253 = vmatpush2.msra.mxu0 %v6252
        %6254 = vmatprep.subr.mxu0 0.0
        %v6255 = vand.u32 %v437, 4294901760
        %6256 = vmatpush2.msra.mxu0 %v6255
        %6257 = vmatprep.subr.mxu0 0.0
        %v6258 = vand.u32 %v436, 4294901760
        %6259 = vmatpush2.msra.mxu0 %v6258
        %6260 = vmatprep.subr.mxu0 0.0
        %v6261 = vand.u32 %v435, 4294901760
        %6262 = vmatpush2.msra.mxu0 %v6261
        %6263 = vmatprep.subr.mxu0 0.0
        %v6264 = vand.u32 %v434, 4294901760
        %6265 = vmatpush2.msra.mxu0 %v6264
        %6266 = vmatprep.subr.mxu0 0.0
        %v6267 = vand.u32 %v433, 4294901760
        %6268 = vmatpush2.msra.mxu0 %v6267
        %6269 = vmatprep.subr.mxu0 0.0
        %v6270 = vand.u32 %v432, 4294901760
        %6271 = vmatpush2.msra.mxu0 %v6270
        %6272 = vmatprep.subr.mxu0 0.0
        %v6273 = vand.u32 %v431, 4294901760
        %6274 = vmatpush2.msra.mxu0 %v6273
        %6275 = vmatprep.subr.mxu0 0.0
        %v6276 = vand.u32 %v430, 4294901760
        %6277 = vmatpush2.msra.mxu0 %v6276
        %v6278 = vand.u32 %v216, 4294901760
        %v6279 = vsub.f32 %v216, %v6278
        %v6280 = vand.u32 %v6279, 4294901760
        %6281 = vmatprep.mubr.f32.mxu0 %v6280
        %v6282 = vand.u32 %v215, 4294901760
        %v6283 = vsub.f32 %v215, %v6282
        %v6284 = vand.u32 %v6283, 4294901760
        %6285 = vmatmul.mubr.f32.gmra.mxu0 %v6284
        %v6286 = vpop.f32.mrf.mxu0
        %v6287 = vadd.f32 %v6179, %v6286
        %v6288 = vpop.f32.mrf.mxu0
        %6289 = vdwg.mxu0
        %6290 = vmatprep.subr.mxu0 0.0
        %v6291 = vand.u32 %v429, 4294901760
        %v6292 = vsub.f32 %v429, %v6291
        %v6293 = vand.u32 %v6292, 4294901760
        %6294 = vmatpush1.msra.mxu0 %v6293
        %6295 = vmatprep.subr.mxu0 0.0
        %v6296 = vand.u32 %v428, 4294901760
        %v6297 = vsub.f32 %v428, %v6296
        %v6298 = vand.u32 %v6297, 4294901760
        %6299 = vmatpush1.msra.mxu0 %v6298
        %6300 = vmatprep.subr.mxu0 0.0
        %v6301 = vand.u32 %v427, 4294901760
        %v6302 = vsub.f32 %v427, %v6301
        %v6303 = vand.u32 %v6302, 4294901760
        %6304 = vmatpush1.msra.mxu0 %v6303
        %6305 = vmatprep.subr.mxu0 0.0
        %v6306 = vand.u32 %v426, 4294901760
        %v6307 = vsub.f32 %v426, %v6306
        %v6308 = vand.u32 %v6307, 4294901760
        %6309 = vmatpush1.msra.mxu0 %v6308
        %6310 = vmatprep.subr.mxu0 0.0
        %v6311 = vand.u32 %v425, 4294901760
        %v6312 = vsub.f32 %v425, %v6311
        %v6313 = vand.u32 %v6312, 4294901760
        %6314 = vmatpush1.msra.mxu0 %v6313
        %6315 = vmatprep.subr.mxu0 0.0
        %v6316 = vand.u32 %v424, 4294901760
        %v6317 = vsub.f32 %v424, %v6316
        %v6318 = vand.u32 %v6317, 4294901760
        %6319 = vmatpush1.msra.mxu0 %v6318
        %6320 = vmatprep.subr.mxu0 0.0
        %v6321 = vand.u32 %v423, 4294901760
        %v6322 = vsub.f32 %v423, %v6321
        %v6323 = vand.u32 %v6322, 4294901760
        %6324 = vmatpush1.msra.mxu0 %v6323
        %6325 = vmatprep.subr.mxu0 0.0
        %v6326 = vand.u32 %v422, 4294901760
        %v6327 = vsub.f32 %v422, %v6326
        %v6328 = vand.u32 %v6327, 4294901760
        %6329 = vmatpush1.msra.mxu0 %v6328
        %6330 = vmatprep.subr.mxu0 0.0
        %v6331 = vand.u32 %v421, 4294901760
        %v6332 = vsub.f32 %v421, %v6331
        %v6333 = vand.u32 %v6332, 4294901760
        %6334 = vmatpush1.msra.mxu0 %v6333
        %6335 = vmatprep.subr.mxu0 0.0
        %v6336 = vand.u32 %v420, 4294901760
        %v6337 = vsub.f32 %v420, %v6336
        %v6338 = vand.u32 %v6337, 4294901760
        %6339 = vmatpush1.msra.mxu0 %v6338
        %6340 = vmatprep.subr.mxu0 0.0
        %v6341 = vand.u32 %v419, 4294901760
        %v6342 = vsub.f32 %v419, %v6341
        %v6343 = vand.u32 %v6342, 4294901760
        %6344 = vmatpush1.msra.mxu0 %v6343
        %6345 = vmatprep.subr.mxu0 0.0
        %v6346 = vand.u32 %v418, 4294901760
        %v6347 = vsub.f32 %v418, %v6346
        %v6348 = vand.u32 %v6347, 4294901760
        %6349 = vmatpush1.msra.mxu0 %v6348
        %6350 = vmatprep.subr.mxu0 0.0
        %v6351 = vand.u32 %v417, 4294901760
        %v6352 = vsub.f32 %v417, %v6351
        %v6353 = vand.u32 %v6352, 4294901760
        %6354 = vmatpush1.msra.mxu0 %v6353
        %6355 = vmatprep.subr.mxu0 0.0
        %v6356 = vand.u32 %v416, 4294901760
        %v6357 = vsub.f32 %v416, %v6356
        %v6358 = vand.u32 %v6357, 4294901760
        %6359 = vmatpush1.msra.mxu0 %v6358
        %6360 = vmatprep.subr.mxu0 0.0
        %v6361 = vand.u32 %v415, 4294901760
        %v6362 = vsub.f32 %v415, %v6361
        %v6363 = vand.u32 %v6362, 4294901760
        %6364 = vmatpush1.msra.mxu0 %v6363
        %6365 = vmatprep.subr.mxu0 0.0
        %v6366 = vand.u32 %v414, 4294901760
        %v6367 = vsub.f32 %v414, %v6366
        %v6368 = vand.u32 %v6367, 4294901760
        %6369 = vmatpush1.msra.mxu0 %v6368
        %6370 = vmatprep.subr.mxu0 0.0
        %v6371 = vand.u32 %v445, 4294901760
        %v6372 = vsub.f32 %v445, %v6371
        %v6373 = vand.u32 %v6372, 4294901760
        %6374 = vmatpush2.msra.mxu0 %v6373
        %6375 = vmatprep.subr.mxu0 0.0
        %v6376 = vand.u32 %v444, 4294901760
        %v6377 = vsub.f32 %v444, %v6376
        %v6378 = vand.u32 %v6377, 4294901760
        %6379 = vmatpush2.msra.mxu0 %v6378
        %6380 = vmatprep.subr.mxu0 0.0
        %v6381 = vand.u32 %v443, 4294901760
        %v6382 = vsub.f32 %v443, %v6381
        %v6383 = vand.u32 %v6382, 4294901760
        %6384 = vmatpush2.msra.mxu0 %v6383
        %6385 = vmatprep.subr.mxu0 0.0
        %v6386 = vand.u32 %v442, 4294901760
        %v6387 = vsub.f32 %v442, %v6386
        %v6388 = vand.u32 %v6387, 4294901760
        %6389 = vmatpush2.msra.mxu0 %v6388
        %6390 = vmatprep.subr.mxu0 0.0
        %v6391 = vand.u32 %v441, 4294901760
        %v6392 = vsub.f32 %v441, %v6391
        %v6393 = vand.u32 %v6392, 4294901760
        %6394 = vmatpush2.msra.mxu0 %v6393
        %6395 = vmatprep.subr.mxu0 0.0
        %v6396 = vand.u32 %v440, 4294901760
        %v6397 = vsub.f32 %v440, %v6396
        %v6398 = vand.u32 %v6397, 4294901760
        %6399 = vmatpush2.msra.mxu0 %v6398
        %6400 = vmatprep.subr.mxu0 0.0
        %v6401 = vand.u32 %v439, 4294901760
        %v6402 = vsub.f32 %v439, %v6401
        %v6403 = vand.u32 %v6402, 4294901760
        %6404 = vmatpush2.msra.mxu0 %v6403
        %6405 = vmatprep.subr.mxu0 0.0
        %v6406 = vand.u32 %v438, 4294901760
        %v6407 = vsub.f32 %v438, %v6406
        %v6408 = vand.u32 %v6407, 4294901760
        %6409 = vmatpush2.msra.mxu0 %v6408
        %6410 = vmatprep.subr.mxu0 0.0
        %v6411 = vand.u32 %v437, 4294901760
        %v6412 = vsub.f32 %v437, %v6411
        %v6413 = vand.u32 %v6412, 4294901760
        %6414 = vmatpush2.msra.mxu0 %v6413
        %6415 = vmatprep.subr.mxu0 0.0
        %v6416 = vand.u32 %v436, 4294901760
        %v6417 = vsub.f32 %v436, %v6416
        %v6418 = vand.u32 %v6417, 4294901760
        %6419 = vmatpush2.msra.mxu0 %v6418
        %6420 = vmatprep.subr.mxu0 0.0
        %v6421 = vand.u32 %v435, 4294901760
        %v6422 = vsub.f32 %v435, %v6421
        %v6423 = vand.u32 %v6422, 4294901760
        %6424 = vmatpush2.msra.mxu0 %v6423
        %6425 = vmatprep.subr.mxu0 0.0
        %v6426 = vand.u32 %v434, 4294901760
        %v6427 = vsub.f32 %v434, %v6426
        %v6428 = vand.u32 %v6427, 4294901760
        %6429 = vmatpush2.msra.mxu0 %v6428
        %6430 = vmatprep.subr.mxu0 0.0
        %v6431 = vand.u32 %v433, 4294901760
        %v6432 = vsub.f32 %v433, %v6431
        %v6433 = vand.u32 %v6432, 4294901760
        %6434 = vmatpush2.msra.mxu0 %v6433
        %6435 = vmatprep.subr.mxu0 0.0
        %v6436 = vand.u32 %v432, 4294901760
        %v6437 = vsub.f32 %v432, %v6436
        %v6438 = vand.u32 %v6437, 4294901760
        %6439 = vmatpush2.msra.mxu0 %v6438
        %6440 = vmatprep.subr.mxu0 0.0
        %v6441 = vand.u32 %v431, 4294901760
        %v6442 = vsub.f32 %v431, %v6441
        %v6443 = vand.u32 %v6442, 4294901760
        %6444 = vmatpush2.msra.mxu0 %v6443
        %6445 = vmatprep.subr.mxu0 0.0
        %v6446 = vand.u32 %v430, 4294901760
        %v6447 = vsub.f32 %v430, %v6446
        %v6448 = vand.u32 %v6447, 4294901760
        %6449 = vmatpush2.msra.mxu0 %v6448
        %v6450 = vand.u32 %v216, 4294901760
        %6451 = vmatprep.mubr.f32.mxu0 %v6450
        %v6452 = vand.u32 %v215, 4294901760
        %6453 = vmatmul.mubr.f32.gmra.mxu0 %v6452
        %v6454 = vpop.f32.mrf.mxu0
        %v6455 = vadd.f32 %v6287, %v6454
        %v6456 = vpop.f32.mrf.mxu0
        %6457 = vdwg.mxu0
        %6458 = vmatprep.subr.mxu0 0.0
        %v6459 = vand.u32 %v429, 4294901760
        %6460 = vmatpush1.msra.mxu0 %v6459
        %6461 = vmatprep.subr.mxu0 0.0
        %v6462 = vand.u32 %v428, 4294901760
        %6463 = vmatpush1.msra.mxu0 %v6462
        %6464 = vmatprep.subr.mxu0 0.0
        %v6465 = vand.u32 %v427, 4294901760
        %6466 = vmatpush1.msra.mxu0 %v6465
        %6467 = vmatprep.subr.mxu0 0.0
        %v6468 = vand.u32 %v426, 4294901760
        %6469 = vmatpush1.msra.mxu0 %v6468
        %6470 = vmatprep.subr.mxu0 0.0
        %v6471 = vand.u32 %v425, 4294901760
        %6472 = vmatpush1.msra.mxu0 %v6471
        %6473 = vmatprep.subr.mxu0 0.0
        %v6474 = vand.u32 %v424, 4294901760
        %6475 = vmatpush1.msra.mxu0 %v6474
        %6476 = vmatprep.subr.mxu0 0.0
        %v6477 = vand.u32 %v423, 4294901760
        %6478 = vmatpush1.msra.mxu0 %v6477
        %6479 = vmatprep.subr.mxu0 0.0
        %v6480 = vand.u32 %v422, 4294901760
        %6481 = vmatpush1.msra.mxu0 %v6480
        %6482 = vmatprep.subr.mxu0 0.0
        %v6483 = vand.u32 %v421, 4294901760
        %6484 = vmatpush1.msra.mxu0 %v6483
        %6485 = vmatprep.subr.mxu0 0.0
        %v6486 = vand.u32 %v420, 4294901760
        %6487 = vmatpush1.msra.mxu0 %v6486
        %6488 = vmatprep.subr.mxu0 0.0
        %v6489 = vand.u32 %v419, 4294901760
        %6490 = vmatpush1.msra.mxu0 %v6489
        %6491 = vmatprep.subr.mxu0 0.0
        %v6492 = vand.u32 %v418, 4294901760
        %6493 = vmatpush1.msra.mxu0 %v6492
        %6494 = vmatprep.subr.mxu0 0.0
        %v6495 = vand.u32 %v417, 4294901760
        %6496 = vmatpush1.msra.mxu0 %v6495
        %6497 = vmatprep.subr.mxu0 0.0
        %v6498 = vand.u32 %v416, 4294901760
        %6499 = vmatpush1.msra.mxu0 %v6498
        %6500 = vmatprep.subr.mxu0 0.0
        %v6501 = vand.u32 %v415, 4294901760
        %6502 = vmatpush1.msra.mxu0 %v6501
        %6503 = vmatprep.subr.mxu0 0.0
        %v6504 = vand.u32 %v414, 4294901760
        %6505 = vmatpush1.msra.mxu0 %v6504
        %6506 = vmatprep.subr.mxu0 0.0
        %v6507 = vand.u32 %v445, 4294901760
        %6508 = vmatpush2.msra.mxu0 %v6507
        %6509 = vmatprep.subr.mxu0 0.0
        %v6510 = vand.u32 %v444, 4294901760
        %6511 = vmatpush2.msra.mxu0 %v6510
        %6512 = vmatprep.subr.mxu0 0.0
        %v6513 = vand.u32 %v443, 4294901760
        %6514 = vmatpush2.msra.mxu0 %v6513
        %6515 = vmatprep.subr.mxu0 0.0
        %v6516 = vand.u32 %v442, 4294901760
        %6517 = vmatpush2.msra.mxu0 %v6516
        %6518 = vmatprep.subr.mxu0 0.0
        %v6519 = vand.u32 %v441, 4294901760
        %6520 = vmatpush2.msra.mxu0 %v6519
        %6521 = vmatprep.subr.mxu0 0.0
        %v6522 = vand.u32 %v440, 4294901760
        %6523 = vmatpush2.msra.mxu0 %v6522
        %6524 = vmatprep.subr.mxu0 0.0
        %v6525 = vand.u32 %v439, 4294901760
        %6526 = vmatpush2.msra.mxu0 %v6525
        %6527 = vmatprep.subr.mxu0 0.0
        %v6528 = vand.u32 %v438, 4294901760
        %6529 = vmatpush2.msra.mxu0 %v6528
        %6530 = vmatprep.subr.mxu0 0.0
        %v6531 = vand.u32 %v437, 4294901760
        %6532 = vmatpush2.msra.mxu0 %v6531
        %6533 = vmatprep.subr.mxu0 0.0
        %v6534 = vand.u32 %v436, 4294901760
        %6535 = vmatpush2.msra.mxu0 %v6534
        %6536 = vmatprep.subr.mxu0 0.0
        %v6537 = vand.u32 %v435, 4294901760
        %6538 = vmatpush2.msra.mxu0 %v6537
        %6539 = vmatprep.subr.mxu0 0.0
        %v6540 = vand.u32 %v434, 4294901760
        %6541 = vmatpush2.msra.mxu0 %v6540
        %6542 = vmatprep.subr.mxu0 0.0
        %v6543 = vand.u32 %v433, 4294901760
        %6544 = vmatpush2.msra.mxu0 %v6543
        %6545 = vmatprep.subr.mxu0 0.0
        %v6546 = vand.u32 %v432, 4294901760
        %6547 = vmatpush2.msra.mxu0 %v6546
        %6548 = vmatprep.subr.mxu0 0.0
        %v6549 = vand.u32 %v431, 4294901760
        %6550 = vmatpush2.msra.mxu0 %v6549
        %6551 = vmatprep.subr.mxu0 0.0
        %v6552 = vand.u32 %v430, 4294901760
        %6553 = vmatpush2.msra.mxu0 %v6552
        %v6554 = vand.u32 %v216, 4294901760
        %6555 = vmatprep.mubr.f32.mxu0 %v6554
        %v6556 = vand.u32 %v215, 4294901760
        %6557 = vmatmul.mubr.f32.gmra.mxu0 %v6556
        %v6558 = vpop.f32.mrf.mxu0
        %v6559 = vadd.f32 %v6455, %v6558
        %v6560 = vpop.f32.mrf.mxu0
        %6561 = vdwg.mxu0
        %6562 = vmatprep.subr.mxu0 0.0
        %v6563 = vand.u32 %v461, 4294901760
        %6564 = vmatpush1.msra.mxu0 %v6563
        %6565 = vmatprep.subr.mxu0 0.0
        %v6566 = vand.u32 %v460, 4294901760
        %6567 = vmatpush1.msra.mxu0 %v6566
        %6568 = vmatprep.subr.mxu0 0.0
        %v6569 = vand.u32 %v459, 4294901760
        %6570 = vmatpush1.msra.mxu0 %v6569
        %6571 = vmatprep.subr.mxu0 0.0
        %v6572 = vand.u32 %v458, 4294901760
        %6573 = vmatpush1.msra.mxu0 %v6572
        %6574 = vmatprep.subr.mxu0 0.0
        %v6575 = vand.u32 %v457, 4294901760
        %6576 = vmatpush1.msra.mxu0 %v6575
        %6577 = vmatprep.subr.mxu0 0.0
        %v6578 = vand.u32 %v456, 4294901760
        %6579 = vmatpush1.msra.mxu0 %v6578
        %6580 = vmatprep.subr.mxu0 0.0
        %v6581 = vand.u32 %v455, 4294901760
        %6582 = vmatpush1.msra.mxu0 %v6581
        %6583 = vmatprep.subr.mxu0 0.0
        %v6584 = vand.u32 %v454, 4294901760
        %6585 = vmatpush1.msra.mxu0 %v6584
        %6586 = vmatprep.subr.mxu0 0.0
        %v6587 = vand.u32 %v453, 4294901760
        %6588 = vmatpush1.msra.mxu0 %v6587
        %6589 = vmatprep.subr.mxu0 0.0
        %v6590 = vand.u32 %v452, 4294901760
        %6591 = vmatpush1.msra.mxu0 %v6590
        %6592 = vmatprep.subr.mxu0 0.0
        %v6593 = vand.u32 %v451, 4294901760
        %6594 = vmatpush1.msra.mxu0 %v6593
        %6595 = vmatprep.subr.mxu0 0.0
        %v6596 = vand.u32 %v450, 4294901760
        %6597 = vmatpush1.msra.mxu0 %v6596
        %6598 = vmatprep.subr.mxu0 0.0
        %v6599 = vand.u32 %v449, 4294901760
        %6600 = vmatpush1.msra.mxu0 %v6599
        %6601 = vmatprep.subr.mxu0 0.0
        %v6602 = vand.u32 %v448, 4294901760
        %6603 = vmatpush1.msra.mxu0 %v6602
        %6604 = vmatprep.subr.mxu0 0.0
        %v6605 = vand.u32 %v447, 4294901760
        %6606 = vmatpush1.msra.mxu0 %v6605
        %6607 = vmatprep.subr.mxu0 0.0
        %v6608 = vand.u32 %v446, 4294901760
        %6609 = vmatpush1.msra.mxu0 %v6608
        %6610 = vmatprep.subr.mxu0 0.0
        %v6611 = vand.u32 %v477, 4294901760
        %6612 = vmatpush2.msra.mxu0 %v6611
        %6613 = vmatprep.subr.mxu0 0.0
        %v6614 = vand.u32 %v476, 4294901760
        %6615 = vmatpush2.msra.mxu0 %v6614
        %6616 = vmatprep.subr.mxu0 0.0
        %v6617 = vand.u32 %v475, 4294901760
        %6618 = vmatpush2.msra.mxu0 %v6617
        %6619 = vmatprep.subr.mxu0 0.0
        %v6620 = vand.u32 %v474, 4294901760
        %6621 = vmatpush2.msra.mxu0 %v6620
        %6622 = vmatprep.subr.mxu0 0.0
        %v6623 = vand.u32 %v473, 4294901760
        %6624 = vmatpush2.msra.mxu0 %v6623
        %6625 = vmatprep.subr.mxu0 0.0
        %v6626 = vand.u32 %v472, 4294901760
        %6627 = vmatpush2.msra.mxu0 %v6626
        %6628 = vmatprep.subr.mxu0 0.0
        %v6629 = vand.u32 %v471, 4294901760
        %6630 = vmatpush2.msra.mxu0 %v6629
        %6631 = vmatprep.subr.mxu0 0.0
        %v6632 = vand.u32 %v470, 4294901760
        %6633 = vmatpush2.msra.mxu0 %v6632
        %6634 = vmatprep.subr.mxu0 0.0
        %v6635 = vand.u32 %v469, 4294901760
        %6636 = vmatpush2.msra.mxu0 %v6635
        %6637 = vmatprep.subr.mxu0 0.0
        %v6638 = vand.u32 %v468, 4294901760
        %6639 = vmatpush2.msra.mxu0 %v6638
        %6640 = vmatprep.subr.mxu0 0.0
        %v6641 = vand.u32 %v467, 4294901760
        %6642 = vmatpush2.msra.mxu0 %v6641
        %6643 = vmatprep.subr.mxu0 0.0
        %v6644 = vand.u32 %v466, 4294901760
        %6645 = vmatpush2.msra.mxu0 %v6644
        %6646 = vmatprep.subr.mxu0 0.0
        %v6647 = vand.u32 %v465, 4294901760
        %6648 = vmatpush2.msra.mxu0 %v6647
        %6649 = vmatprep.subr.mxu0 0.0
        %v6650 = vand.u32 %v464, 4294901760
        %6651 = vmatpush2.msra.mxu0 %v6650
        %6652 = vmatprep.subr.mxu0 0.0
        %v6653 = vand.u32 %v463, 4294901760
        %6654 = vmatpush2.msra.mxu0 %v6653
        %6655 = vmatprep.subr.mxu0 0.0
        %v6656 = vand.u32 %v462, 4294901760
        %6657 = vmatpush2.msra.mxu0 %v6656
        %v6658 = vand.u32 %v218, 4294901760
        %v6659 = vsub.f32 %v218, %v6658
        %v6660 = vand.u32 %v6659, 4294901760
        %v6661 = vsub.f32 %v6659, %v6660
        %v6662 = vand.u32 %v6661, 4294901760
        %6663 = vmatprep.mubr.f32.mxu0 %v6662
        %v6664 = vand.u32 %v217, 4294901760
        %v6665 = vsub.f32 %v217, %v6664
        %v6666 = vand.u32 %v6665, 4294901760
        %v6667 = vsub.f32 %v6665, %v6666
        %v6668 = vand.u32 %v6667, 4294901760
        %6669 = vmatmul.mubr.f32.gmra.mxu0 %v6668
        %v6670 = vpop.f32.mrf.mxu0
        %v6671 = vadd.f32 %v6559, %v6670
        %v6672 = vpop.f32.mrf.mxu0
        %6673 = vdwg.mxu0
        %6674 = vmatprep.subr.mxu0 0.0
        %v6675 = vand.u32 %v461, 4294901760
        %v6676 = vsub.f32 %v461, %v6675
        %v6677 = vand.u32 %v6676, 4294901760
        %v6678 = vsub.f32 %v6676, %v6677
        %v6679 = vand.u32 %v6678, 4294901760
        %6680 = vmatpush1.msra.mxu0 %v6679
        %6681 = vmatprep.subr.mxu0 0.0
        %v6682 = vand.u32 %v460, 4294901760
        %v6683 = vsub.f32 %v460, %v6682
        %v6684 = vand.u32 %v6683, 4294901760
        %v6685 = vsub.f32 %v6683, %v6684
        %v6686 = vand.u32 %v6685, 4294901760
        %6687 = vmatpush1.msra.mxu0 %v6686
        %6688 = vmatprep.subr.mxu0 0.0
        %v6689 = vand.u32 %v459, 4294901760
        %v6690 = vsub.f32 %v459, %v6689
        %v6691 = vand.u32 %v6690, 4294901760
        %v6692 = vsub.f32 %v6690, %v6691
        %v6693 = vand.u32 %v6692, 4294901760
        %6694 = vmatpush1.msra.mxu0 %v6693
        %6695 = vmatprep.subr.mxu0 0.0
        %v6696 = vand.u32 %v458, 4294901760
        %v6697 = vsub.f32 %v458, %v6696
        %v6698 = vand.u32 %v6697, 4294901760
        %v6699 = vsub.f32 %v6697, %v6698
        %v6700 = vand.u32 %v6699, 4294901760
        %6701 = vmatpush1.msra.mxu0 %v6700
        %6702 = vmatprep.subr.mxu0 0.0
        %v6703 = vand.u32 %v457, 4294901760
        %v6704 = vsub.f32 %v457, %v6703
        %v6705 = vand.u32 %v6704, 4294901760
        %v6706 = vsub.f32 %v6704, %v6705
        %v6707 = vand.u32 %v6706, 4294901760
        %6708 = vmatpush1.msra.mxu0 %v6707
        %6709 = vmatprep.subr.mxu0 0.0
        %v6710 = vand.u32 %v456, 4294901760
        %v6711 = vsub.f32 %v456, %v6710
        %v6712 = vand.u32 %v6711, 4294901760
        %v6713 = vsub.f32 %v6711, %v6712
        %v6714 = vand.u32 %v6713, 4294901760
        %6715 = vmatpush1.msra.mxu0 %v6714
        %6716 = vmatprep.subr.mxu0 0.0
        %v6717 = vand.u32 %v455, 4294901760
        %v6718 = vsub.f32 %v455, %v6717
        %v6719 = vand.u32 %v6718, 4294901760
        %v6720 = vsub.f32 %v6718, %v6719
        %v6721 = vand.u32 %v6720, 4294901760
        %6722 = vmatpush1.msra.mxu0 %v6721
        %6723 = vmatprep.subr.mxu0 0.0
        %v6724 = vand.u32 %v454, 4294901760
        %v6725 = vsub.f32 %v454, %v6724
        %v6726 = vand.u32 %v6725, 4294901760
        %v6727 = vsub.f32 %v6725, %v6726
        %v6728 = vand.u32 %v6727, 4294901760
        %6729 = vmatpush1.msra.mxu0 %v6728
        %6730 = vmatprep.subr.mxu0 0.0
        %v6731 = vand.u32 %v453, 4294901760
        %v6732 = vsub.f32 %v453, %v6731
        %v6733 = vand.u32 %v6732, 4294901760
        %v6734 = vsub.f32 %v6732, %v6733
        %v6735 = vand.u32 %v6734, 4294901760
        %6736 = vmatpush1.msra.mxu0 %v6735
        %6737 = vmatprep.subr.mxu0 0.0
        %v6738 = vand.u32 %v452, 4294901760
        %v6739 = vsub.f32 %v452, %v6738
        %v6740 = vand.u32 %v6739, 4294901760
        %v6741 = vsub.f32 %v6739, %v6740
        %v6742 = vand.u32 %v6741, 4294901760
        %6743 = vmatpush1.msra.mxu0 %v6742
        %6744 = vmatprep.subr.mxu0 0.0
        %v6745 = vand.u32 %v451, 4294901760
        %v6746 = vsub.f32 %v451, %v6745
        %v6747 = vand.u32 %v6746, 4294901760
        %v6748 = vsub.f32 %v6746, %v6747
        %v6749 = vand.u32 %v6748, 4294901760
        %6750 = vmatpush1.msra.mxu0 %v6749
        %6751 = vmatprep.subr.mxu0 0.0
        %v6752 = vand.u32 %v450, 4294901760
        %v6753 = vsub.f32 %v450, %v6752
        %v6754 = vand.u32 %v6753, 4294901760
        %v6755 = vsub.f32 %v6753, %v6754
        %v6756 = vand.u32 %v6755, 4294901760
        %6757 = vmatpush1.msra.mxu0 %v6756
        %6758 = vmatprep.subr.mxu0 0.0
        %v6759 = vand.u32 %v449, 4294901760
        %v6760 = vsub.f32 %v449, %v6759
        %v6761 = vand.u32 %v6760, 4294901760
        %v6762 = vsub.f32 %v6760, %v6761
        %v6763 = vand.u32 %v6762, 4294901760
        %6764 = vmatpush1.msra.mxu0 %v6763
        %6765 = vmatprep.subr.mxu0 0.0
        %v6766 = vand.u32 %v448, 4294901760
        %v6767 = vsub.f32 %v448, %v6766
        %v6768 = vand.u32 %v6767, 4294901760
        %v6769 = vsub.f32 %v6767, %v6768
        %v6770 = vand.u32 %v6769, 4294901760
        %6771 = vmatpush1.msra.mxu0 %v6770
        %6772 = vmatprep.subr.mxu0 0.0
        %v6773 = vand.u32 %v447, 4294901760
        %v6774 = vsub.f32 %v447, %v6773
        %v6775 = vand.u32 %v6774, 4294901760
        %v6776 = vsub.f32 %v6774, %v6775
        %v6777 = vand.u32 %v6776, 4294901760
        %6778 = vmatpush1.msra.mxu0 %v6777
        %6779 = vmatprep.subr.mxu0 0.0
        %v6780 = vand.u32 %v446, 4294901760
        %v6781 = vsub.f32 %v446, %v6780
        %v6782 = vand.u32 %v6781, 4294901760
        %v6783 = vsub.f32 %v6781, %v6782
        %v6784 = vand.u32 %v6783, 4294901760
        %6785 = vmatpush1.msra.mxu0 %v6784
        %6786 = vmatprep.subr.mxu0 0.0
        %v6787 = vand.u32 %v477, 4294901760
        %v6788 = vsub.f32 %v477, %v6787
        %v6789 = vand.u32 %v6788, 4294901760
        %v6790 = vsub.f32 %v6788, %v6789
        %v6791 = vand.u32 %v6790, 4294901760
        %6792 = vmatpush2.msra.mxu0 %v6791
        %6793 = vmatprep.subr.mxu0 0.0
        %v6794 = vand.u32 %v476, 4294901760
        %v6795 = vsub.f32 %v476, %v6794
        %v6796 = vand.u32 %v6795, 4294901760
        %v6797 = vsub.f32 %v6795, %v6796
        %v6798 = vand.u32 %v6797, 4294901760
        %6799 = vmatpush2.msra.mxu0 %v6798
        %6800 = vmatprep.subr.mxu0 0.0
        %v6801 = vand.u32 %v475, 4294901760
        %v6802 = vsub.f32 %v475, %v6801
        %v6803 = vand.u32 %v6802, 4294901760
        %v6804 = vsub.f32 %v6802, %v6803
        %v6805 = vand.u32 %v6804, 4294901760
        %6806 = vmatpush2.msra.mxu0 %v6805
        %6807 = vmatprep.subr.mxu0 0.0
        %v6808 = vand.u32 %v474, 4294901760
        %v6809 = vsub.f32 %v474, %v6808
        %v6810 = vand.u32 %v6809, 4294901760
        %v6811 = vsub.f32 %v6809, %v6810
        %v6812 = vand.u32 %v6811, 4294901760
        %6813 = vmatpush2.msra.mxu0 %v6812
        %6814 = vmatprep.subr.mxu0 0.0
        %v6815 = vand.u32 %v473, 4294901760
        %v6816 = vsub.f32 %v473, %v6815
        %v6817 = vand.u32 %v6816, 4294901760
        %v6818 = vsub.f32 %v6816, %v6817
        %v6819 = vand.u32 %v6818, 4294901760
        %6820 = vmatpush2.msra.mxu0 %v6819
        %6821 = vmatprep.subr.mxu0 0.0
        %v6822 = vand.u32 %v472, 4294901760
        %v6823 = vsub.f32 %v472, %v6822
        %v6824 = vand.u32 %v6823, 4294901760
        %v6825 = vsub.f32 %v6823, %v6824
        %v6826 = vand.u32 %v6825, 4294901760
        %6827 = vmatpush2.msra.mxu0 %v6826
        %6828 = vmatprep.subr.mxu0 0.0
        %v6829 = vand.u32 %v471, 4294901760
        %v6830 = vsub.f32 %v471, %v6829
        %v6831 = vand.u32 %v6830, 4294901760
        %v6832 = vsub.f32 %v6830, %v6831
        %v6833 = vand.u32 %v6832, 4294901760
        %6834 = vmatpush2.msra.mxu0 %v6833
        %6835 = vmatprep.subr.mxu0 0.0
        %v6836 = vand.u32 %v470, 4294901760
        %v6837 = vsub.f32 %v470, %v6836
        %v6838 = vand.u32 %v6837, 4294901760
        %v6839 = vsub.f32 %v6837, %v6838
        %v6840 = vand.u32 %v6839, 4294901760
        %6841 = vmatpush2.msra.mxu0 %v6840
        %6842 = vmatprep.subr.mxu0 0.0
        %v6843 = vand.u32 %v469, 4294901760
        %v6844 = vsub.f32 %v469, %v6843
        %v6845 = vand.u32 %v6844, 4294901760
        %v6846 = vsub.f32 %v6844, %v6845
        %v6847 = vand.u32 %v6846, 4294901760
        %6848 = vmatpush2.msra.mxu0 %v6847
        %6849 = vmatprep.subr.mxu0 0.0
        %v6850 = vand.u32 %v468, 4294901760
        %v6851 = vsub.f32 %v468, %v6850
        %v6852 = vand.u32 %v6851, 4294901760
        %v6853 = vsub.f32 %v6851, %v6852
        %v6854 = vand.u32 %v6853, 4294901760
        %6855 = vmatpush2.msra.mxu0 %v6854
        %6856 = vmatprep.subr.mxu0 0.0
        %v6857 = vand.u32 %v467, 4294901760
        %v6858 = vsub.f32 %v467, %v6857
        %v6859 = vand.u32 %v6858, 4294901760
        %v6860 = vsub.f32 %v6858, %v6859
        %v6861 = vand.u32 %v6860, 4294901760
        %6862 = vmatpush2.msra.mxu0 %v6861
        %6863 = vmatprep.subr.mxu0 0.0
        %v6864 = vand.u32 %v466, 4294901760
        %v6865 = vsub.f32 %v466, %v6864
        %v6866 = vand.u32 %v6865, 4294901760
        %v6867 = vsub.f32 %v6865, %v6866
        %v6868 = vand.u32 %v6867, 4294901760
        %6869 = vmatpush2.msra.mxu0 %v6868
        %6870 = vmatprep.subr.mxu0 0.0
        %v6871 = vand.u32 %v465, 4294901760
        %v6872 = vsub.f32 %v465, %v6871
        %v6873 = vand.u32 %v6872, 4294901760
        %v6874 = vsub.f32 %v6872, %v6873
        %v6875 = vand.u32 %v6874, 4294901760
        %6876 = vmatpush2.msra.mxu0 %v6875
        %6877 = vmatprep.subr.mxu0 0.0
        %v6878 = vand.u32 %v464, 4294901760
        %v6879 = vsub.f32 %v464, %v6878
        %v6880 = vand.u32 %v6879, 4294901760
        %v6881 = vsub.f32 %v6879, %v6880
        %v6882 = vand.u32 %v6881, 4294901760
        %6883 = vmatpush2.msra.mxu0 %v6882
        %6884 = vmatprep.subr.mxu0 0.0
        %v6885 = vand.u32 %v463, 4294901760
        %v6886 = vsub.f32 %v463, %v6885
        %v6887 = vand.u32 %v6886, 4294901760
        %v6888 = vsub.f32 %v6886, %v6887
        %v6889 = vand.u32 %v6888, 4294901760
        %6890 = vmatpush2.msra.mxu0 %v6889
        %6891 = vmatprep.subr.mxu0 0.0
        %v6892 = vand.u32 %v462, 4294901760
        %v6893 = vsub.f32 %v462, %v6892
        %v6894 = vand.u32 %v6893, 4294901760
        %v6895 = vsub.f32 %v6893, %v6894
        %v6896 = vand.u32 %v6895, 4294901760
        %6897 = vmatpush2.msra.mxu0 %v6896
        %v6898 = vand.u32 %v218, 4294901760
        %6899 = vmatprep.mubr.f32.mxu0 %v6898
        %v6900 = vand.u32 %v217, 4294901760
        %6901 = vmatmul.mubr.f32.gmra.mxu0 %v6900
        %v6902 = vpop.f32.mrf.mxu0
        %v6903 = vadd.f32 %v6671, %v6902
        %v6904 = vpop.f32.mrf.mxu0
        %6905 = vdwg.mxu0
        %6906 = vmatprep.subr.mxu0 0.0
        %v6907 = vand.u32 %v461, 4294901760
        %v6908 = vsub.f32 %v461, %v6907
        %6909 = vmatpush1.msra.mxu0 %v6908
        %6910 = vmatprep.subr.mxu0 0.0
        %v6911 = vand.u32 %v460, 4294901760
        %v6912 = vsub.f32 %v460, %v6911
        %6913 = vmatpush1.msra.mxu0 %v6912
        %6914 = vmatprep.subr.mxu0 0.0
        %v6915 = vand.u32 %v459, 4294901760
        %v6916 = vsub.f32 %v459, %v6915
        %6917 = vmatpush1.msra.mxu0 %v6916
        %6918 = vmatprep.subr.mxu0 0.0
        %v6919 = vand.u32 %v458, 4294901760
        %v6920 = vsub.f32 %v458, %v6919
        %6921 = vmatpush1.msra.mxu0 %v6920
        %6922 = vmatprep.subr.mxu0 0.0
        %v6923 = vand.u32 %v457, 4294901760
        %v6924 = vsub.f32 %v457, %v6923
        %6925 = vmatpush1.msra.mxu0 %v6924
        %6926 = vmatprep.subr.mxu0 0.0
        %v6927 = vand.u32 %v456, 4294901760
        %v6928 = vsub.f32 %v456, %v6927
        %6929 = vmatpush1.msra.mxu0 %v6928
        %6930 = vmatprep.subr.mxu0 0.0
        %v6931 = vand.u32 %v455, 4294901760
        %v6932 = vsub.f32 %v455, %v6931
        %6933 = vmatpush1.msra.mxu0 %v6932
        %6934 = vmatprep.subr.mxu0 0.0
        %v6935 = vand.u32 %v454, 4294901760
        %v6936 = vsub.f32 %v454, %v6935
        %6937 = vmatpush1.msra.mxu0 %v6936
        %6938 = vmatprep.subr.mxu0 0.0
        %v6939 = vand.u32 %v453, 4294901760
        %v6940 = vsub.f32 %v453, %v6939
        %6941 = vmatpush1.msra.mxu0 %v6940
        %6942 = vmatprep.subr.mxu0 0.0
        %v6943 = vand.u32 %v452, 4294901760
        %v6944 = vsub.f32 %v452, %v6943
        %6945 = vmatpush1.msra.mxu0 %v6944
        %6946 = vmatprep.subr.mxu0 0.0
        %v6947 = vand.u32 %v451, 4294901760
        %v6948 = vsub.f32 %v451, %v6947
        %6949 = vmatpush1.msra.mxu0 %v6948
        %6950 = vmatprep.subr.mxu0 0.0
        %v6951 = vand.u32 %v450, 4294901760
        %v6952 = vsub.f32 %v450, %v6951
        %6953 = vmatpush1.msra.mxu0 %v6952
        %6954 = vmatprep.subr.mxu0 0.0
        %v6955 = vand.u32 %v449, 4294901760
        %v6956 = vsub.f32 %v449, %v6955
        %6957 = vmatpush1.msra.mxu0 %v6956
        %6958 = vmatprep.subr.mxu0 0.0
        %v6959 = vand.u32 %v448, 4294901760
        %v6960 = vsub.f32 %v448, %v6959
        %6961 = vmatpush1.msra.mxu0 %v6960
        %6962 = vmatprep.subr.mxu0 0.0
        %v6963 = vand.u32 %v447, 4294901760
        %v6964 = vsub.f32 %v447, %v6963
        %6965 = vmatpush1.msra.mxu0 %v6964
        %6966 = vmatprep.subr.mxu0 0.0
        %v6967 = vand.u32 %v446, 4294901760
        %v6968 = vsub.f32 %v446, %v6967
        %6969 = vmatpush1.msra.mxu0 %v6968
        %6970 = vmatprep.subr.mxu0 0.0
        %v6971 = vand.u32 %v477, 4294901760
        %v6972 = vsub.f32 %v477, %v6971
        %6973 = vmatpush2.msra.mxu0 %v6972
        %6974 = vmatprep.subr.mxu0 0.0
        %v6975 = vand.u32 %v476, 4294901760
        %v6976 = vsub.f32 %v476, %v6975
        %6977 = vmatpush2.msra.mxu0 %v6976
        %6978 = vmatprep.subr.mxu0 0.0
        %v6979 = vand.u32 %v475, 4294901760
        %v6980 = vsub.f32 %v475, %v6979
        %6981 = vmatpush2.msra.mxu0 %v6980
        %6982 = vmatprep.subr.mxu0 0.0
        %v6983 = vand.u32 %v474, 4294901760
        %v6984 = vsub.f32 %v474, %v6983
        %6985 = vmatpush2.msra.mxu0 %v6984
        %6986 = vmatprep.subr.mxu0 0.0
        %v6987 = vand.u32 %v473, 4294901760
        %v6988 = vsub.f32 %v473, %v6987
        %6989 = vmatpush2.msra.mxu0 %v6988
        %6990 = vmatprep.subr.mxu0 0.0
        %v6991 = vand.u32 %v472, 4294901760
        %v6992 = vsub.f32 %v472, %v6991
        %6993 = vmatpush2.msra.mxu0 %v6992
        %6994 = vmatprep.subr.mxu0 0.0
        %v6995 = vand.u32 %v471, 4294901760
        %v6996 = vsub.f32 %v471, %v6995
        %6997 = vmatpush2.msra.mxu0 %v6996
        %6998 = vmatprep.subr.mxu0 0.0
        %v6999 = vand.u32 %v470, 4294901760
        %v7000 = vsub.f32 %v470, %v6999
        %7001 = vmatpush2.msra.mxu0 %v7000
        %7002 = vmatprep.subr.mxu0 0.0
        %v7003 = vand.u32 %v469, 4294901760
        %v7004 = vsub.f32 %v469, %v7003
        %7005 = vmatpush2.msra.mxu0 %v7004
        %7006 = vmatprep.subr.mxu0 0.0
        %v7007 = vand.u32 %v468, 4294901760
        %v7008 = vsub.f32 %v468, %v7007
        %7009 = vmatpush2.msra.mxu0 %v7008
        %7010 = vmatprep.subr.mxu0 0.0
        %v7011 = vand.u32 %v467, 4294901760
        %v7012 = vsub.f32 %v467, %v7011
        %7013 = vmatpush2.msra.mxu0 %v7012
        %7014 = vmatprep.subr.mxu0 0.0
        %v7015 = vand.u32 %v466, 4294901760
        %v7016 = vsub.f32 %v466, %v7015
        %7017 = vmatpush2.msra.mxu0 %v7016
        %7018 = vmatprep.subr.mxu0 0.0
        %v7019 = vand.u32 %v465, 4294901760
        %v7020 = vsub.f32 %v465, %v7019
        %7021 = vmatpush2.msra.mxu0 %v7020
        %7022 = vmatprep.subr.mxu0 0.0
        %v7023 = vand.u32 %v464, 4294901760
        %v7024 = vsub.f32 %v464, %v7023
        %7025 = vmatpush2.msra.mxu0 %v7024
        %7026 = vmatprep.subr.mxu0 0.0
        %v7027 = vand.u32 %v463, 4294901760
        %v7028 = vsub.f32 %v463, %v7027
        %7029 = vmatpush2.msra.mxu0 %v7028
        %7030 = vmatprep.subr.mxu0 0.0
        %v7031 = vand.u32 %v462, 4294901760
        %v7032 = vsub.f32 %v462, %v7031
        %7033 = vmatpush2.msra.mxu0 %v7032
        %v7034 = vand.u32 %v218, 4294901760
        %v7035 = vsub.f32 %v218, %v7034
        %7036 = vmatprep.mubr.f32.mxu0 %v7035
        %v7037 = vand.u32 %v217, 4294901760
        %v7038 = vsub.f32 %v217, %v7037
        %7039 = vmatmul.mubr.f32.gmra.mxu0 %v7038
        %v7040 = vpop.f32.mrf.mxu0
        %v7041 = vadd.f32 %v6903, %v7040
        %v7042 = vpop.f32.mrf.mxu0
        %7043 = vdwg.mxu0
        %7044 = vmatprep.subr.mxu0 0.0
        %v7045 = vand.u32 %v461, 4294901760
        %7046 = vmatpush1.msra.mxu0 %v7045
        %7047 = vmatprep.subr.mxu0 0.0
        %v7048 = vand.u32 %v460, 4294901760
        %7049 = vmatpush1.msra.mxu0 %v7048
        %7050 = vmatprep.subr.mxu0 0.0
        %v7051 = vand.u32 %v459, 4294901760
        %7052 = vmatpush1.msra.mxu0 %v7051
        %7053 = vmatprep.subr.mxu0 0.0
        %v7054 = vand.u32 %v458, 4294901760
        %7055 = vmatpush1.msra.mxu0 %v7054
        %7056 = vmatprep.subr.mxu0 0.0
        %v7057 = vand.u32 %v457, 4294901760
        %7058 = vmatpush1.msra.mxu0 %v7057
        %7059 = vmatprep.subr.mxu0 0.0
        %v7060 = vand.u32 %v456, 4294901760
        %7061 = vmatpush1.msra.mxu0 %v7060
        %7062 = vmatprep.subr.mxu0 0.0
        %v7063 = vand.u32 %v455, 4294901760
        %7064 = vmatpush1.msra.mxu0 %v7063
        %7065 = vmatprep.subr.mxu0 0.0
        %v7066 = vand.u32 %v454, 4294901760
        %7067 = vmatpush1.msra.mxu0 %v7066
        %7068 = vmatprep.subr.mxu0 0.0
        %v7069 = vand.u32 %v453, 4294901760
        %7070 = vmatpush1.msra.mxu0 %v7069
        %7071 = vmatprep.subr.mxu0 0.0
        %v7072 = vand.u32 %v452, 4294901760
        %7073 = vmatpush1.msra.mxu0 %v7072
        %7074 = vmatprep.subr.mxu0 0.0
        %v7075 = vand.u32 %v451, 4294901760
        %7076 = vmatpush1.msra.mxu0 %v7075
        %7077 = vmatprep.subr.mxu0 0.0
        %v7078 = vand.u32 %v450, 4294901760
        %7079 = vmatpush1.msra.mxu0 %v7078
        %7080 = vmatprep.subr.mxu0 0.0
        %v7081 = vand.u32 %v449, 4294901760
        %7082 = vmatpush1.msra.mxu0 %v7081
        %7083 = vmatprep.subr.mxu0 0.0
        %v7084 = vand.u32 %v448, 4294901760
        %7085 = vmatpush1.msra.mxu0 %v7084
        %7086 = vmatprep.subr.mxu0 0.0
        %v7087 = vand.u32 %v447, 4294901760
        %7088 = vmatpush1.msra.mxu0 %v7087
        %7089 = vmatprep.subr.mxu0 0.0
        %v7090 = vand.u32 %v446, 4294901760
        %7091 = vmatpush1.msra.mxu0 %v7090
        %7092 = vmatprep.subr.mxu0 0.0
        %v7093 = vand.u32 %v477, 4294901760
        %7094 = vmatpush2.msra.mxu0 %v7093
        %7095 = vmatprep.subr.mxu0 0.0
        %v7096 = vand.u32 %v476, 4294901760
        %7097 = vmatpush2.msra.mxu0 %v7096
        %7098 = vmatprep.subr.mxu0 0.0
        %v7099 = vand.u32 %v475, 4294901760
        %7100 = vmatpush2.msra.mxu0 %v7099
        %7101 = vmatprep.subr.mxu0 0.0
        %v7102 = vand.u32 %v474, 4294901760
        %7103 = vmatpush2.msra.mxu0 %v7102
        %7104 = vmatprep.subr.mxu0 0.0
        %v7105 = vand.u32 %v473, 4294901760
        %7106 = vmatpush2.msra.mxu0 %v7105
        %7107 = vmatprep.subr.mxu0 0.0
        %v7108 = vand.u32 %v472, 4294901760
        %7109 = vmatpush2.msra.mxu0 %v7108
        %7110 = vmatprep.subr.mxu0 0.0
        %v7111 = vand.u32 %v471, 4294901760
        %7112 = vmatpush2.msra.mxu0 %v7111
        %7113 = vmatprep.subr.mxu0 0.0
        %v7114 = vand.u32 %v470, 4294901760
        %7115 = vmatpush2.msra.mxu0 %v7114
        %7116 = vmatprep.subr.mxu0 0.0
        %v7117 = vand.u32 %v469, 4294901760
        %7118 = vmatpush2.msra.mxu0 %v7117
        %7119 = vmatprep.subr.mxu0 0.0
        %v7120 = vand.u32 %v468, 4294901760
        %7121 = vmatpush2.msra.mxu0 %v7120
        %7122 = vmatprep.subr.mxu0 0.0
        %v7123 = vand.u32 %v467, 4294901760
        %7124 = vmatpush2.msra.mxu0 %v7123
        %7125 = vmatprep.subr.mxu0 0.0
        %v7126 = vand.u32 %v466, 4294901760
        %7127 = vmatpush2.msra.mxu0 %v7126
        %7128 = vmatprep.subr.mxu0 0.0
        %v7129 = vand.u32 %v465, 4294901760
        %7130 = vmatpush2.msra.mxu0 %v7129
        %7131 = vmatprep.subr.mxu0 0.0
        %v7132 = vand.u32 %v464, 4294901760
        %7133 = vmatpush2.msra.mxu0 %v7132
        %7134 = vmatprep.subr.mxu0 0.0
        %v7135 = vand.u32 %v463, 4294901760
        %7136 = vmatpush2.msra.mxu0 %v7135
        %7137 = vmatprep.subr.mxu0 0.0
        %v7138 = vand.u32 %v462, 4294901760
        %7139 = vmatpush2.msra.mxu0 %v7138
        %v7140 = vand.u32 %v218, 4294901760
        %v7141 = vsub.f32 %v218, %v7140
        %v7142 = vand.u32 %v7141, 4294901760
        %7143 = vmatprep.mubr.f32.mxu0 %v7142
        %v7144 = vand.u32 %v217, 4294901760
        %v7145 = vsub.f32 %v217, %v7144
        %v7146 = vand.u32 %v7145, 4294901760
        %7147 = vmatmul.mubr.f32.gmra.mxu0 %v7146
        %v7148 = vpop.f32.mrf.mxu0
        %v7149 = vadd.f32 %v7041, %v7148
        %v7150 = vpop.f32.mrf.mxu0
        %7151 = vdwg.mxu0
        %7152 = vmatprep.subr.mxu0 0.0
        %v7153 = vand.u32 %v461, 4294901760
        %v7154 = vsub.f32 %v461, %v7153
        %v7155 = vand.u32 %v7154, 4294901760
        %7156 = vmatpush1.msra.mxu0 %v7155
        %7157 = vmatprep.subr.mxu0 0.0
        %v7158 = vand.u32 %v460, 4294901760
        %v7159 = vsub.f32 %v460, %v7158
        %v7160 = vand.u32 %v7159, 4294901760
        %7161 = vmatpush1.msra.mxu0 %v7160
        %7162 = vmatprep.subr.mxu0 0.0
        %v7163 = vand.u32 %v459, 4294901760
        %v7164 = vsub.f32 %v459, %v7163
        %v7165 = vand.u32 %v7164, 4294901760
        %7166 = vmatpush1.msra.mxu0 %v7165
        %7167 = vmatprep.subr.mxu0 0.0
        %v7168 = vand.u32 %v458, 4294901760
        %v7169 = vsub.f32 %v458, %v7168
        %v7170 = vand.u32 %v7169, 4294901760
        %7171 = vmatpush1.msra.mxu0 %v7170
        %7172 = vmatprep.subr.mxu0 0.0
        %v7173 = vand.u32 %v457, 4294901760
        %v7174 = vsub.f32 %v457, %v7173
        %v7175 = vand.u32 %v7174, 4294901760
        %7176 = vmatpush1.msra.mxu0 %v7175
        %7177 = vmatprep.subr.mxu0 0.0
        %v7178 = vand.u32 %v456, 4294901760
        %v7179 = vsub.f32 %v456, %v7178
        %v7180 = vand.u32 %v7179, 4294901760
        %7181 = vmatpush1.msra.mxu0 %v7180
        %7182 = vmatprep.subr.mxu0 0.0
        %v7183 = vand.u32 %v455, 4294901760
        %v7184 = vsub.f32 %v455, %v7183
        %v7185 = vand.u32 %v7184, 4294901760
        %7186 = vmatpush1.msra.mxu0 %v7185
        %7187 = vmatprep.subr.mxu0 0.0
        %v7188 = vand.u32 %v454, 4294901760
        %v7189 = vsub.f32 %v454, %v7188
        %v7190 = vand.u32 %v7189, 4294901760
        %7191 = vmatpush1.msra.mxu0 %v7190
        %7192 = vmatprep.subr.mxu0 0.0
        %v7193 = vand.u32 %v453, 4294901760
        %v7194 = vsub.f32 %v453, %v7193
        %v7195 = vand.u32 %v7194, 4294901760
        %7196 = vmatpush1.msra.mxu0 %v7195
        %7197 = vmatprep.subr.mxu0 0.0
        %v7198 = vand.u32 %v452, 4294901760
        %v7199 = vsub.f32 %v452, %v7198
        %v7200 = vand.u32 %v7199, 4294901760
        %7201 = vmatpush1.msra.mxu0 %v7200
        %7202 = vmatprep.subr.mxu0 0.0
        %v7203 = vand.u32 %v451, 4294901760
        %v7204 = vsub.f32 %v451, %v7203
        %v7205 = vand.u32 %v7204, 4294901760
        %7206 = vmatpush1.msra.mxu0 %v7205
        %7207 = vmatprep.subr.mxu0 0.0
        %v7208 = vand.u32 %v450, 4294901760
        %v7209 = vsub.f32 %v450, %v7208
        %v7210 = vand.u32 %v7209, 4294901760
        %7211 = vmatpush1.msra.mxu0 %v7210
        %7212 = vmatprep.subr.mxu0 0.0
        %v7213 = vand.u32 %v449, 4294901760
        %v7214 = vsub.f32 %v449, %v7213
        %v7215 = vand.u32 %v7214, 4294901760
        %7216 = vmatpush1.msra.mxu0 %v7215
        %7217 = vmatprep.subr.mxu0 0.0
        %v7218 = vand.u32 %v448, 4294901760
        %v7219 = vsub.f32 %v448, %v7218
        %v7220 = vand.u32 %v7219, 4294901760
        %7221 = vmatpush1.msra.mxu0 %v7220
        %7222 = vmatprep.subr.mxu0 0.0
        %v7223 = vand.u32 %v447, 4294901760
        %v7224 = vsub.f32 %v447, %v7223
        %v7225 = vand.u32 %v7224, 4294901760
        %7226 = vmatpush1.msra.mxu0 %v7225
        %7227 = vmatprep.subr.mxu0 0.0
        %v7228 = vand.u32 %v446, 4294901760
        %v7229 = vsub.f32 %v446, %v7228
        %v7230 = vand.u32 %v7229, 4294901760
        %7231 = vmatpush1.msra.mxu0 %v7230
        %7232 = vmatprep.subr.mxu0 0.0
        %v7233 = vand.u32 %v477, 4294901760
        %v7234 = vsub.f32 %v477, %v7233
        %v7235 = vand.u32 %v7234, 4294901760
        %7236 = vmatpush2.msra.mxu0 %v7235
        %7237 = vmatprep.subr.mxu0 0.0
        %v7238 = vand.u32 %v476, 4294901760
        %v7239 = vsub.f32 %v476, %v7238
        %v7240 = vand.u32 %v7239, 4294901760
        %7241 = vmatpush2.msra.mxu0 %v7240
        %7242 = vmatprep.subr.mxu0 0.0
        %v7243 = vand.u32 %v475, 4294901760
        %v7244 = vsub.f32 %v475, %v7243
        %v7245 = vand.u32 %v7244, 4294901760
        %7246 = vmatpush2.msra.mxu0 %v7245
        %7247 = vmatprep.subr.mxu0 0.0
        %v7248 = vand.u32 %v474, 4294901760
        %v7249 = vsub.f32 %v474, %v7248
        %v7250 = vand.u32 %v7249, 4294901760
        %7251 = vmatpush2.msra.mxu0 %v7250
        %7252 = vmatprep.subr.mxu0 0.0
        %v7253 = vand.u32 %v473, 4294901760
        %v7254 = vsub.f32 %v473, %v7253
        %v7255 = vand.u32 %v7254, 4294901760
        %7256 = vmatpush2.msra.mxu0 %v7255
        %7257 = vmatprep.subr.mxu0 0.0
        %v7258 = vand.u32 %v472, 4294901760
        %v7259 = vsub.f32 %v472, %v7258
        %v7260 = vand.u32 %v7259, 4294901760
        %7261 = vmatpush2.msra.mxu0 %v7260
        %7262 = vmatprep.subr.mxu0 0.0
        %v7263 = vand.u32 %v471, 4294901760
        %v7264 = vsub.f32 %v471, %v7263
        %v7265 = vand.u32 %v7264, 4294901760
        %7266 = vmatpush2.msra.mxu0 %v7265
        %7267 = vmatprep.subr.mxu0 0.0
        %v7268 = vand.u32 %v470, 4294901760
        %v7269 = vsub.f32 %v470, %v7268
        %v7270 = vand.u32 %v7269, 4294901760
        %7271 = vmatpush2.msra.mxu0 %v7270
        %7272 = vmatprep.subr.mxu0 0.0
        %v7273 = vand.u32 %v469, 4294901760
        %v7274 = vsub.f32 %v469, %v7273
        %v7275 = vand.u32 %v7274, 4294901760
        %7276 = vmatpush2.msra.mxu0 %v7275
        %7277 = vmatprep.subr.mxu0 0.0
        %v7278 = vand.u32 %v468, 4294901760
        %v7279 = vsub.f32 %v468, %v7278
        %v7280 = vand.u32 %v7279, 4294901760
        %7281 = vmatpush2.msra.mxu0 %v7280
        %7282 = vmatprep.subr.mxu0 0.0
        %v7283 = vand.u32 %v467, 4294901760
        %v7284 = vsub.f32 %v467, %v7283
        %v7285 = vand.u32 %v7284, 4294901760
        %7286 = vmatpush2.msra.mxu0 %v7285
        %7287 = vmatprep.subr.mxu0 0.0
        %v7288 = vand.u32 %v466, 4294901760
        %v7289 = vsub.f32 %v466, %v7288
        %v7290 = vand.u32 %v7289, 4294901760
        %7291 = vmatpush2.msra.mxu0 %v7290
        %7292 = vmatprep.subr.mxu0 0.0
        %v7293 = vand.u32 %v465, 4294901760
        %v7294 = vsub.f32 %v465, %v7293
        %v7295 = vand.u32 %v7294, 4294901760
        %7296 = vmatpush2.msra.mxu0 %v7295
        %7297 = vmatprep.subr.mxu0 0.0
        %v7298 = vand.u32 %v464, 4294901760
        %v7299 = vsub.f32 %v464, %v7298
        %v7300 = vand.u32 %v7299, 4294901760
        %7301 = vmatpush2.msra.mxu0 %v7300
        %7302 = vmatprep.subr.mxu0 0.0
        %v7303 = vand.u32 %v463, 4294901760
        %v7304 = vsub.f32 %v463, %v7303
        %v7305 = vand.u32 %v7304, 4294901760
        %7306 = vmatpush2.msra.mxu0 %v7305
        %7307 = vmatprep.subr.mxu0 0.0
        %v7308 = vand.u32 %v462, 4294901760
        %v7309 = vsub.f32 %v462, %v7308
        %v7310 = vand.u32 %v7309, 4294901760
        %7311 = vmatpush2.msra.mxu0 %v7310
        %v7312 = vand.u32 %v218, 4294901760
        %7313 = vmatprep.mubr.f32.mxu0 %v7312
        %v7314 = vand.u32 %v217, 4294901760
        %7315 = vmatmul.mubr.f32.gmra.mxu0 %v7314
        %v7316 = vpop.f32.mrf.mxu0
        %v7317 = vadd.f32 %v7149, %v7316
        %v7318 = vpop.f32.mrf.mxu0
        %7319 = vdwg.mxu0
        %7320 = vmatprep.subr.mxu0 0.0
        %v7321 = vand.u32 %v461, 4294901760
        %7322 = vmatpush1.msra.mxu0 %v7321
        %7323 = vmatprep.subr.mxu0 0.0
        %v7324 = vand.u32 %v460, 4294901760
        %7325 = vmatpush1.msra.mxu0 %v7324
        %7326 = vmatprep.subr.mxu0 0.0
        %v7327 = vand.u32 %v459, 4294901760
        %7328 = vmatpush1.msra.mxu0 %v7327
        %7329 = vmatprep.subr.mxu0 0.0
        %v7330 = vand.u32 %v458, 4294901760
        %7331 = vmatpush1.msra.mxu0 %v7330
        %7332 = vmatprep.subr.mxu0 0.0
        %v7333 = vand.u32 %v457, 4294901760
        %7334 = vmatpush1.msra.mxu0 %v7333
        %7335 = vmatprep.subr.mxu0 0.0
        %v7336 = vand.u32 %v456, 4294901760
        %7337 = vmatpush1.msra.mxu0 %v7336
        %7338 = vmatprep.subr.mxu0 0.0
        %v7339 = vand.u32 %v455, 4294901760
        %7340 = vmatpush1.msra.mxu0 %v7339
        %7341 = vmatprep.subr.mxu0 0.0
        %v7342 = vand.u32 %v454, 4294901760
        %7343 = vmatpush1.msra.mxu0 %v7342
        %7344 = vmatprep.subr.mxu0 0.0
        %v7345 = vand.u32 %v453, 4294901760
        %7346 = vmatpush1.msra.mxu0 %v7345
        %7347 = vmatprep.subr.mxu0 0.0
        %v7348 = vand.u32 %v452, 4294901760
        %7349 = vmatpush1.msra.mxu0 %v7348
        %7350 = vmatprep.subr.mxu0 0.0
        %v7351 = vand.u32 %v451, 4294901760
        %7352 = vmatpush1.msra.mxu0 %v7351
        %7353 = vmatprep.subr.mxu0 0.0
        %v7354 = vand.u32 %v450, 4294901760
        %7355 = vmatpush1.msra.mxu0 %v7354
        %7356 = vmatprep.subr.mxu0 0.0
        %v7357 = vand.u32 %v449, 4294901760
        %7358 = vmatpush1.msra.mxu0 %v7357
        %7359 = vmatprep.subr.mxu0 0.0
        %v7360 = vand.u32 %v448, 4294901760
        %7361 = vmatpush1.msra.mxu0 %v7360
        %7362 = vmatprep.subr.mxu0 0.0
        %v7363 = vand.u32 %v447, 4294901760
        %7364 = vmatpush1.msra.mxu0 %v7363
        %7365 = vmatprep.subr.mxu0 0.0
        %v7366 = vand.u32 %v446, 4294901760
        %7367 = vmatpush1.msra.mxu0 %v7366
        %7368 = vmatprep.subr.mxu0 0.0
        %v7369 = vand.u32 %v477, 4294901760
        %7370 = vmatpush2.msra.mxu0 %v7369
        %7371 = vmatprep.subr.mxu0 0.0
        %v7372 = vand.u32 %v476, 4294901760
        %7373 = vmatpush2.msra.mxu0 %v7372
        %7374 = vmatprep.subr.mxu0 0.0
        %v7375 = vand.u32 %v475, 4294901760
        %7376 = vmatpush2.msra.mxu0 %v7375
        %7377 = vmatprep.subr.mxu0 0.0
        %v7378 = vand.u32 %v474, 4294901760
        %7379 = vmatpush2.msra.mxu0 %v7378
        %7380 = vmatprep.subr.mxu0 0.0
        %v7381 = vand.u32 %v473, 4294901760
        %7382 = vmatpush2.msra.mxu0 %v7381
        %7383 = vmatprep.subr.mxu0 0.0
        %v7384 = vand.u32 %v472, 4294901760
        %7385 = vmatpush2.msra.mxu0 %v7384
        %7386 = vmatprep.subr.mxu0 0.0
        %v7387 = vand.u32 %v471, 4294901760
        %7388 = vmatpush2.msra.mxu0 %v7387
        %7389 = vmatprep.subr.mxu0 0.0
        %v7390 = vand.u32 %v470, 4294901760
        %7391 = vmatpush2.msra.mxu0 %v7390
        %7392 = vmatprep.subr.mxu0 0.0
        %v7393 = vand.u32 %v469, 4294901760
        %7394 = vmatpush2.msra.mxu0 %v7393
        %7395 = vmatprep.subr.mxu0 0.0
        %v7396 = vand.u32 %v468, 4294901760
        %7397 = vmatpush2.msra.mxu0 %v7396
        %7398 = vmatprep.subr.mxu0 0.0
        %v7399 = vand.u32 %v467, 4294901760
        %7400 = vmatpush2.msra.mxu0 %v7399
        %7401 = vmatprep.subr.mxu0 0.0
        %v7402 = vand.u32 %v466, 4294901760
        %7403 = vmatpush2.msra.mxu0 %v7402
        %7404 = vmatprep.subr.mxu0 0.0
        %v7405 = vand.u32 %v465, 4294901760
        %7406 = vmatpush2.msra.mxu0 %v7405
        %7407 = vmatprep.subr.mxu0 0.0
        %v7408 = vand.u32 %v464, 4294901760
        %7409 = vmatpush2.msra.mxu0 %v7408
        %7410 = vmatprep.subr.mxu0 0.0
        %v7411 = vand.u32 %v463, 4294901760
        %7412 = vmatpush2.msra.mxu0 %v7411
        %7413 = vmatprep.subr.mxu0 0.0
        %v7414 = vand.u32 %v462, 4294901760
        %7415 = vmatpush2.msra.mxu0 %v7414
        %v7416 = vand.u32 %v218, 4294901760
        %7417 = vmatprep.mubr.f32.mxu0 %v7416
        %v7418 = vand.u32 %v217, 4294901760
        %7419 = vmatmul.mubr.f32.gmra.mxu0 %v7418
        %v7420 = vpop.f32.mrf.mxu0
        %v7421 = vadd.f32 %v7317, %v7420
        %v7422 = vpop.f32.mrf.mxu0
        %7423 = vdwg.mxu0
        %7424 = vmatprep.subr.mxu0 0.0
        %v7425 = vand.u32 %v493, 4294901760
        %7426 = vmatpush1.msra.mxu0 %v7425
        %7427 = vmatprep.subr.mxu0 0.0
        %v7428 = vand.u32 %v492, 4294901760
        %7429 = vmatpush1.msra.mxu0 %v7428
        %7430 = vmatprep.subr.mxu0 0.0
        %v7431 = vand.u32 %v491, 4294901760
        %7432 = vmatpush1.msra.mxu0 %v7431
        %7433 = vmatprep.subr.mxu0 0.0
        %v7434 = vand.u32 %v490, 4294901760
        %7435 = vmatpush1.msra.mxu0 %v7434
        %7436 = vmatprep.subr.mxu0 0.0
        %v7437 = vand.u32 %v489, 4294901760
        %7438 = vmatpush1.msra.mxu0 %v7437
        %7439 = vmatprep.subr.mxu0 0.0
        %v7440 = vand.u32 %v488, 4294901760
        %7441 = vmatpush1.msra.mxu0 %v7440
        %7442 = vmatprep.subr.mxu0 0.0
        %v7443 = vand.u32 %v487, 4294901760
        %7444 = vmatpush1.msra.mxu0 %v7443
        %7445 = vmatprep.subr.mxu0 0.0
        %v7446 = vand.u32 %v486, 4294901760
        %7447 = vmatpush1.msra.mxu0 %v7446
        %7448 = vmatprep.subr.mxu0 0.0
        %v7449 = vand.u32 %v485, 4294901760
        %7450 = vmatpush1.msra.mxu0 %v7449
        %7451 = vmatprep.subr.mxu0 0.0
        %v7452 = vand.u32 %v484, 4294901760
        %7453 = vmatpush1.msra.mxu0 %v7452
        %7454 = vmatprep.subr.mxu0 0.0
        %v7455 = vand.u32 %v483, 4294901760
        %7456 = vmatpush1.msra.mxu0 %v7455
        %7457 = vmatprep.subr.mxu0 0.0
        %v7458 = vand.u32 %v482, 4294901760
        %7459 = vmatpush1.msra.mxu0 %v7458
        %7460 = vmatprep.subr.mxu0 0.0
        %v7461 = vand.u32 %v481, 4294901760
        %7462 = vmatpush1.msra.mxu0 %v7461
        %7463 = vmatprep.subr.mxu0 0.0
        %v7464 = vand.u32 %v480, 4294901760
        %7465 = vmatpush1.msra.mxu0 %v7464
        %7466 = vmatprep.subr.mxu0 0.0
        %v7467 = vand.u32 %v479, 4294901760
        %7468 = vmatpush1.msra.mxu0 %v7467
        %7469 = vmatprep.subr.mxu0 0.0
        %v7470 = vand.u32 %v478, 4294901760
        %7471 = vmatpush1.msra.mxu0 %v7470
        %7472 = vmatprep.subr.mxu0 0.0
        %v7473 = vand.u32 %v509, 4294901760
        %7474 = vmatpush2.msra.mxu0 %v7473
        %7475 = vmatprep.subr.mxu0 0.0
        %v7476 = vand.u32 %v508, 4294901760
        %7477 = vmatpush2.msra.mxu0 %v7476
        %7478 = vmatprep.subr.mxu0 0.0
        %v7479 = vand.u32 %v507, 4294901760
        %7480 = vmatpush2.msra.mxu0 %v7479
        %7481 = vmatprep.subr.mxu0 0.0
        %v7482 = vand.u32 %v506, 4294901760
        %7483 = vmatpush2.msra.mxu0 %v7482
        %7484 = vmatprep.subr.mxu0 0.0
        %v7485 = vand.u32 %v505, 4294901760
        %7486 = vmatpush2.msra.mxu0 %v7485
        %7487 = vmatprep.subr.mxu0 0.0
        %v7488 = vand.u32 %v504, 4294901760
        %7489 = vmatpush2.msra.mxu0 %v7488
        %7490 = vmatprep.subr.mxu0 0.0
        %v7491 = vand.u32 %v503, 4294901760
        %7492 = vmatpush2.msra.mxu0 %v7491
        %7493 = vmatprep.subr.mxu0 0.0
        %v7494 = vand.u32 %v502, 4294901760
        %7495 = vmatpush2.msra.mxu0 %v7494
        %7496 = vmatprep.subr.mxu0 0.0
        %v7497 = vand.u32 %v501, 4294901760
        %7498 = vmatpush2.msra.mxu0 %v7497
        %7499 = vmatprep.subr.mxu0 0.0
        %v7500 = vand.u32 %v500, 4294901760
        %7501 = vmatpush2.msra.mxu0 %v7500
        %7502 = vmatprep.subr.mxu0 0.0
        %v7503 = vand.u32 %v499, 4294901760
        %7504 = vmatpush2.msra.mxu0 %v7503
        %7505 = vmatprep.subr.mxu0 0.0
        %v7506 = vand.u32 %v498, 4294901760
        %7507 = vmatpush2.msra.mxu0 %v7506
        %7508 = vmatprep.subr.mxu0 0.0
        %v7509 = vand.u32 %v497, 4294901760
        %7510 = vmatpush2.msra.mxu0 %v7509
        %7511 = vmatprep.subr.mxu0 0.0
        %v7512 = vand.u32 %v496, 4294901760
        %7513 = vmatpush2.msra.mxu0 %v7512
        %7514 = vmatprep.subr.mxu0 0.0
        %v7515 = vand.u32 %v495, 4294901760
        %7516 = vmatpush2.msra.mxu0 %v7515
        %7517 = vmatprep.subr.mxu0 0.0
        %v7518 = vand.u32 %v494, 4294901760
        %7519 = vmatpush2.msra.mxu0 %v7518
        %v7520 = vand.u32 %v220, 4294901760
        %v7521 = vsub.f32 %v220, %v7520
        %v7522 = vand.u32 %v7521, 4294901760
        %v7523 = vsub.f32 %v7521, %v7522
        %v7524 = vand.u32 %v7523, 4294901760
        %7525 = vmatprep.mubr.f32.mxu0 %v7524
        %v7526 = vand.u32 %v219, 4294901760
        %v7527 = vsub.f32 %v219, %v7526
        %v7528 = vand.u32 %v7527, 4294901760
        %v7529 = vsub.f32 %v7527, %v7528
        %v7530 = vand.u32 %v7529, 4294901760
        %7531 = vmatmul.mubr.f32.gmra.mxu0 %v7530
        %v7532 = vpop.f32.mrf.mxu0
        %v7533 = vadd.f32 %v7421, %v7532
        %v7534 = vpop.f32.mrf.mxu0
        %7535 = vdwg.mxu0
        %7536 = vmatprep.subr.mxu0 0.0
        %v7537 = vand.u32 %v493, 4294901760
        %v7538 = vsub.f32 %v493, %v7537
        %v7539 = vand.u32 %v7538, 4294901760
        %v7540 = vsub.f32 %v7538, %v7539
        %v7541 = vand.u32 %v7540, 4294901760
        %7542 = vmatpush1.msra.mxu0 %v7541
        %7543 = vmatprep.subr.mxu0 0.0
        %v7544 = vand.u32 %v492, 4294901760
        %v7545 = vsub.f32 %v492, %v7544
        %v7546 = vand.u32 %v7545, 4294901760
        %v7547 = vsub.f32 %v7545, %v7546
        %v7548 = vand.u32 %v7547, 4294901760
        %7549 = vmatpush1.msra.mxu0 %v7548
        %7550 = vmatprep.subr.mxu0 0.0
        %v7551 = vand.u32 %v491, 4294901760
        %v7552 = vsub.f32 %v491, %v7551
        %v7553 = vand.u32 %v7552, 4294901760
        %v7554 = vsub.f32 %v7552, %v7553
        %v7555 = vand.u32 %v7554, 4294901760
        %7556 = vmatpush1.msra.mxu0 %v7555
        %7557 = vmatprep.subr.mxu0 0.0
        %v7558 = vand.u32 %v490, 4294901760
        %v7559 = vsub.f32 %v490, %v7558
        %v7560 = vand.u32 %v7559, 4294901760
        %v7561 = vsub.f32 %v7559, %v7560
        %v7562 = vand.u32 %v7561, 4294901760
        %7563 = vmatpush1.msra.mxu0 %v7562
        %7564 = vmatprep.subr.mxu0 0.0
        %v7565 = vand.u32 %v489, 4294901760
        %v7566 = vsub.f32 %v489, %v7565
        %v7567 = vand.u32 %v7566, 4294901760
        %v7568 = vsub.f32 %v7566, %v7567
        %v7569 = vand.u32 %v7568, 4294901760
        %7570 = vmatpush1.msra.mxu0 %v7569
        %7571 = vmatprep.subr.mxu0 0.0
        %v7572 = vand.u32 %v488, 4294901760
        %v7573 = vsub.f32 %v488, %v7572
        %v7574 = vand.u32 %v7573, 4294901760
        %v7575 = vsub.f32 %v7573, %v7574
        %v7576 = vand.u32 %v7575, 4294901760
        %7577 = vmatpush1.msra.mxu0 %v7576
        %7578 = vmatprep.subr.mxu0 0.0
        %v7579 = vand.u32 %v487, 4294901760
        %v7580 = vsub.f32 %v487, %v7579
        %v7581 = vand.u32 %v7580, 4294901760
        %v7582 = vsub.f32 %v7580, %v7581
        %v7583 = vand.u32 %v7582, 4294901760
        %7584 = vmatpush1.msra.mxu0 %v7583
        %7585 = vmatprep.subr.mxu0 0.0
        %v7586 = vand.u32 %v486, 4294901760
        %v7587 = vsub.f32 %v486, %v7586
        %v7588 = vand.u32 %v7587, 4294901760
        %v7589 = vsub.f32 %v7587, %v7588
        %v7590 = vand.u32 %v7589, 4294901760
        %7591 = vmatpush1.msra.mxu0 %v7590
        %7592 = vmatprep.subr.mxu0 0.0
        %v7593 = vand.u32 %v485, 4294901760
        %v7594 = vsub.f32 %v485, %v7593
        %v7595 = vand.u32 %v7594, 4294901760
        %v7596 = vsub.f32 %v7594, %v7595
        %v7597 = vand.u32 %v7596, 4294901760
        %7598 = vmatpush1.msra.mxu0 %v7597
        %7599 = vmatprep.subr.mxu0 0.0
        %v7600 = vand.u32 %v484, 4294901760
        %v7601 = vsub.f32 %v484, %v7600
        %v7602 = vand.u32 %v7601, 4294901760
        %v7603 = vsub.f32 %v7601, %v7602
        %v7604 = vand.u32 %v7603, 4294901760
        %7605 = vmatpush1.msra.mxu0 %v7604
        %7606 = vmatprep.subr.mxu0 0.0
        %v7607 = vand.u32 %v483, 4294901760
        %v7608 = vsub.f32 %v483, %v7607
        %v7609 = vand.u32 %v7608, 4294901760
        %v7610 = vsub.f32 %v7608, %v7609
        %v7611 = vand.u32 %v7610, 4294901760
        %7612 = vmatpush1.msra.mxu0 %v7611
        %7613 = vmatprep.subr.mxu0 0.0
        %v7614 = vand.u32 %v482, 4294901760
        %v7615 = vsub.f32 %v482, %v7614
        %v7616 = vand.u32 %v7615, 4294901760
        %v7617 = vsub.f32 %v7615, %v7616
        %v7618 = vand.u32 %v7617, 4294901760
        %7619 = vmatpush1.msra.mxu0 %v7618
        %7620 = vmatprep.subr.mxu0 0.0
        %v7621 = vand.u32 %v481, 4294901760
        %v7622 = vsub.f32 %v481, %v7621
        %v7623 = vand.u32 %v7622, 4294901760
        %v7624 = vsub.f32 %v7622, %v7623
        %v7625 = vand.u32 %v7624, 4294901760
        %7626 = vmatpush1.msra.mxu0 %v7625
        %7627 = vmatprep.subr.mxu0 0.0
        %v7628 = vand.u32 %v480, 4294901760
        %v7629 = vsub.f32 %v480, %v7628
        %v7630 = vand.u32 %v7629, 4294901760
        %v7631 = vsub.f32 %v7629, %v7630
        %v7632 = vand.u32 %v7631, 4294901760
        %7633 = vmatpush1.msra.mxu0 %v7632
        %7634 = vmatprep.subr.mxu0 0.0
        %v7635 = vand.u32 %v479, 4294901760
        %v7636 = vsub.f32 %v479, %v7635
        %v7637 = vand.u32 %v7636, 4294901760
        %v7638 = vsub.f32 %v7636, %v7637
        %v7639 = vand.u32 %v7638, 4294901760
        %7640 = vmatpush1.msra.mxu0 %v7639
        %7641 = vmatprep.subr.mxu0 0.0
        %v7642 = vand.u32 %v478, 4294901760
        %v7643 = vsub.f32 %v478, %v7642
        %v7644 = vand.u32 %v7643, 4294901760
        %v7645 = vsub.f32 %v7643, %v7644
        %v7646 = vand.u32 %v7645, 4294901760
        %7647 = vmatpush1.msra.mxu0 %v7646
        %7648 = vmatprep.subr.mxu0 0.0
        %v7649 = vand.u32 %v509, 4294901760
        %v7650 = vsub.f32 %v509, %v7649
        %v7651 = vand.u32 %v7650, 4294901760
        %v7652 = vsub.f32 %v7650, %v7651
        %v7653 = vand.u32 %v7652, 4294901760
        %7654 = vmatpush2.msra.mxu0 %v7653
        %7655 = vmatprep.subr.mxu0 0.0
        %v7656 = vand.u32 %v508, 4294901760
        %v7657 = vsub.f32 %v508, %v7656
        %v7658 = vand.u32 %v7657, 4294901760
        %v7659 = vsub.f32 %v7657, %v7658
        %v7660 = vand.u32 %v7659, 4294901760
        %7661 = vmatpush2.msra.mxu0 %v7660
        %7662 = vmatprep.subr.mxu0 0.0
        %v7663 = vand.u32 %v507, 4294901760
        %v7664 = vsub.f32 %v507, %v7663
        %v7665 = vand.u32 %v7664, 4294901760
        %v7666 = vsub.f32 %v7664, %v7665
        %v7667 = vand.u32 %v7666, 4294901760
        %7668 = vmatpush2.msra.mxu0 %v7667
        %7669 = vmatprep.subr.mxu0 0.0
        %v7670 = vand.u32 %v506, 4294901760
        %v7671 = vsub.f32 %v506, %v7670
        %v7672 = vand.u32 %v7671, 4294901760
        %v7673 = vsub.f32 %v7671, %v7672
        %v7674 = vand.u32 %v7673, 4294901760
        %7675 = vmatpush2.msra.mxu0 %v7674
        %7676 = vmatprep.subr.mxu0 0.0
        %v7677 = vand.u32 %v505, 4294901760
        %v7678 = vsub.f32 %v505, %v7677
        %v7679 = vand.u32 %v7678, 4294901760
        %v7680 = vsub.f32 %v7678, %v7679
        %v7681 = vand.u32 %v7680, 4294901760
        %7682 = vmatpush2.msra.mxu0 %v7681
        %7683 = vmatprep.subr.mxu0 0.0
        %v7684 = vand.u32 %v504, 4294901760
        %v7685 = vsub.f32 %v504, %v7684
        %v7686 = vand.u32 %v7685, 4294901760
        %v7687 = vsub.f32 %v7685, %v7686
        %v7688 = vand.u32 %v7687, 4294901760
        %7689 = vmatpush2.msra.mxu0 %v7688
        %7690 = vmatprep.subr.mxu0 0.0
        %v7691 = vand.u32 %v503, 4294901760
        %v7692 = vsub.f32 %v503, %v7691
        %v7693 = vand.u32 %v7692, 4294901760
        %v7694 = vsub.f32 %v7692, %v7693
        %v7695 = vand.u32 %v7694, 4294901760
        %7696 = vmatpush2.msra.mxu0 %v7695
        %7697 = vmatprep.subr.mxu0 0.0
        %v7698 = vand.u32 %v502, 4294901760
        %v7699 = vsub.f32 %v502, %v7698
        %v7700 = vand.u32 %v7699, 4294901760
        %v7701 = vsub.f32 %v7699, %v7700
        %v7702 = vand.u32 %v7701, 4294901760
        %7703 = vmatpush2.msra.mxu0 %v7702
        %7704 = vmatprep.subr.mxu0 0.0
        %v7705 = vand.u32 %v501, 4294901760
        %v7706 = vsub.f32 %v501, %v7705
        %v7707 = vand.u32 %v7706, 4294901760
        %v7708 = vsub.f32 %v7706, %v7707
        %v7709 = vand.u32 %v7708, 4294901760
        %7710 = vmatpush2.msra.mxu0 %v7709
        %7711 = vmatprep.subr.mxu0 0.0
        %v7712 = vand.u32 %v500, 4294901760
        %v7713 = vsub.f32 %v500, %v7712
        %v7714 = vand.u32 %v7713, 4294901760
        %v7715 = vsub.f32 %v7713, %v7714
        %v7716 = vand.u32 %v7715, 4294901760
        %7717 = vmatpush2.msra.mxu0 %v7716
        %7718 = vmatprep.subr.mxu0 0.0
        %v7719 = vand.u32 %v499, 4294901760
        %v7720 = vsub.f32 %v499, %v7719
        %v7721 = vand.u32 %v7720, 4294901760
        %v7722 = vsub.f32 %v7720, %v7721
        %v7723 = vand.u32 %v7722, 4294901760
        %7724 = vmatpush2.msra.mxu0 %v7723
        %7725 = vmatprep.subr.mxu0 0.0
        %v7726 = vand.u32 %v498, 4294901760
        %v7727 = vsub.f32 %v498, %v7726
        %v7728 = vand.u32 %v7727, 4294901760
        %v7729 = vsub.f32 %v7727, %v7728
        %v7730 = vand.u32 %v7729, 4294901760
        %7731 = vmatpush2.msra.mxu0 %v7730
        %7732 = vmatprep.subr.mxu0 0.0
        %v7733 = vand.u32 %v497, 4294901760
        %v7734 = vsub.f32 %v497, %v7733
        %v7735 = vand.u32 %v7734, 4294901760
        %v7736 = vsub.f32 %v7734, %v7735
        %v7737 = vand.u32 %v7736, 4294901760
        %7738 = vmatpush2.msra.mxu0 %v7737
        %7739 = vmatprep.subr.mxu0 0.0
        %v7740 = vand.u32 %v496, 4294901760
        %v7741 = vsub.f32 %v496, %v7740
        %v7742 = vand.u32 %v7741, 4294901760
        %v7743 = vsub.f32 %v7741, %v7742
        %v7744 = vand.u32 %v7743, 4294901760
        %7745 = vmatpush2.msra.mxu0 %v7744
        %7746 = vmatprep.subr.mxu0 0.0
        %v7747 = vand.u32 %v495, 4294901760
        %v7748 = vsub.f32 %v495, %v7747
        %v7749 = vand.u32 %v7748, 4294901760
        %v7750 = vsub.f32 %v7748, %v7749
        %v7751 = vand.u32 %v7750, 4294901760
        %7752 = vmatpush2.msra.mxu0 %v7751
        %7753 = vmatprep.subr.mxu0 0.0
        %v7754 = vand.u32 %v494, 4294901760
        %v7755 = vsub.f32 %v494, %v7754
        %v7756 = vand.u32 %v7755, 4294901760
        %v7757 = vsub.f32 %v7755, %v7756
        %v7758 = vand.u32 %v7757, 4294901760
        %7759 = vmatpush2.msra.mxu0 %v7758
        %v7760 = vand.u32 %v220, 4294901760
        %7761 = vmatprep.mubr.f32.mxu0 %v7760
        %v7762 = vand.u32 %v219, 4294901760
        %7763 = vmatmul.mubr.f32.gmra.mxu0 %v7762
        %v7764 = vpop.f32.mrf.mxu0
        %v7765 = vadd.f32 %v7533, %v7764
        %v7766 = vpop.f32.mrf.mxu0
        %7767 = vdwg.mxu0
        %7768 = vmatprep.subr.mxu0 0.0
        %v7769 = vand.u32 %v493, 4294901760
        %v7770 = vsub.f32 %v493, %v7769
        %7771 = vmatpush1.msra.mxu0 %v7770
        %7772 = vmatprep.subr.mxu0 0.0
        %v7773 = vand.u32 %v492, 4294901760
        %v7774 = vsub.f32 %v492, %v7773
        %7775 = vmatpush1.msra.mxu0 %v7774
        %7776 = vmatprep.subr.mxu0 0.0
        %v7777 = vand.u32 %v491, 4294901760
        %v7778 = vsub.f32 %v491, %v7777
        %7779 = vmatpush1.msra.mxu0 %v7778
        %7780 = vmatprep.subr.mxu0 0.0
        %v7781 = vand.u32 %v490, 4294901760
        %v7782 = vsub.f32 %v490, %v7781
        %7783 = vmatpush1.msra.mxu0 %v7782
        %7784 = vmatprep.subr.mxu0 0.0
        %v7785 = vand.u32 %v489, 4294901760
        %v7786 = vsub.f32 %v489, %v7785
        %7787 = vmatpush1.msra.mxu0 %v7786
        %7788 = vmatprep.subr.mxu0 0.0
        %v7789 = vand.u32 %v488, 4294901760
        %v7790 = vsub.f32 %v488, %v7789
        %7791 = vmatpush1.msra.mxu0 %v7790
        %7792 = vmatprep.subr.mxu0 0.0
        %v7793 = vand.u32 %v487, 4294901760
        %v7794 = vsub.f32 %v487, %v7793
        %7795 = vmatpush1.msra.mxu0 %v7794
        %7796 = vmatprep.subr.mxu0 0.0
        %v7797 = vand.u32 %v486, 4294901760
        %v7798 = vsub.f32 %v486, %v7797
        %7799 = vmatpush1.msra.mxu0 %v7798
        %7800 = vmatprep.subr.mxu0 0.0
        %v7801 = vand.u32 %v485, 4294901760
        %v7802 = vsub.f32 %v485, %v7801
        %7803 = vmatpush1.msra.mxu0 %v7802
        %7804 = vmatprep.subr.mxu0 0.0
        %v7805 = vand.u32 %v484, 4294901760
        %v7806 = vsub.f32 %v484, %v7805
        %7807 = vmatpush1.msra.mxu0 %v7806
        %7808 = vmatprep.subr.mxu0 0.0
        %v7809 = vand.u32 %v483, 4294901760
        %v7810 = vsub.f32 %v483, %v7809
        %7811 = vmatpush1.msra.mxu0 %v7810
        %7812 = vmatprep.subr.mxu0 0.0
        %v7813 = vand.u32 %v482, 4294901760
        %v7814 = vsub.f32 %v482, %v7813
        %7815 = vmatpush1.msra.mxu0 %v7814
        %7816 = vmatprep.subr.mxu0 0.0
        %v7817 = vand.u32 %v481, 4294901760
        %v7818 = vsub.f32 %v481, %v7817
        %7819 = vmatpush1.msra.mxu0 %v7818
        %7820 = vmatprep.subr.mxu0 0.0
        %v7821 = vand.u32 %v480, 4294901760
        %v7822 = vsub.f32 %v480, %v7821
        %7823 = vmatpush1.msra.mxu0 %v7822
        %7824 = vmatprep.subr.mxu0 0.0
        %v7825 = vand.u32 %v479, 4294901760
        %v7826 = vsub.f32 %v479, %v7825
        %7827 = vmatpush1.msra.mxu0 %v7826
        %7828 = vmatprep.subr.mxu0 0.0
        %v7829 = vand.u32 %v478, 4294901760
        %v7830 = vsub.f32 %v478, %v7829
        %7831 = vmatpush1.msra.mxu0 %v7830
        %7832 = vmatprep.subr.mxu0 0.0
        %v7833 = vand.u32 %v509, 4294901760
        %v7834 = vsub.f32 %v509, %v7833
        %7835 = vmatpush2.msra.mxu0 %v7834
        %7836 = vmatprep.subr.mxu0 0.0
        %v7837 = vand.u32 %v508, 4294901760
        %v7838 = vsub.f32 %v508, %v7837
        %7839 = vmatpush2.msra.mxu0 %v7838
        %7840 = vmatprep.subr.mxu0 0.0
        %v7841 = vand.u32 %v507, 4294901760
        %v7842 = vsub.f32 %v507, %v7841
        %7843 = vmatpush2.msra.mxu0 %v7842
        %7844 = vmatprep.subr.mxu0 0.0
        %v7845 = vand.u32 %v506, 4294901760
        %v7846 = vsub.f32 %v506, %v7845
        %7847 = vmatpush2.msra.mxu0 %v7846
        %7848 = vmatprep.subr.mxu0 0.0
        %v7849 = vand.u32 %v505, 4294901760
        %v7850 = vsub.f32 %v505, %v7849
        %7851 = vmatpush2.msra.mxu0 %v7850
        %7852 = vmatprep.subr.mxu0 0.0
        %v7853 = vand.u32 %v504, 4294901760
        %v7854 = vsub.f32 %v504, %v7853
        %7855 = vmatpush2.msra.mxu0 %v7854
        %7856 = vmatprep.subr.mxu0 0.0
        %v7857 = vand.u32 %v503, 4294901760
        %v7858 = vsub.f32 %v503, %v7857
        %7859 = vmatpush2.msra.mxu0 %v7858
        %7860 = vmatprep.subr.mxu0 0.0
        %v7861 = vand.u32 %v502, 4294901760
        %v7862 = vsub.f32 %v502, %v7861
        %7863 = vmatpush2.msra.mxu0 %v7862
        %7864 = vmatprep.subr.mxu0 0.0
        %v7865 = vand.u32 %v501, 4294901760
        %v7866 = vsub.f32 %v501, %v7865
        %7867 = vmatpush2.msra.mxu0 %v7866
        %7868 = vmatprep.subr.mxu0 0.0
        %v7869 = vand.u32 %v500, 4294901760
        %v7870 = vsub.f32 %v500, %v7869
        %7871 = vmatpush2.msra.mxu0 %v7870
        %7872 = vmatprep.subr.mxu0 0.0
        %v7873 = vand.u32 %v499, 4294901760
        %v7874 = vsub.f32 %v499, %v7873
        %7875 = vmatpush2.msra.mxu0 %v7874
        %7876 = vmatprep.subr.mxu0 0.0
        %v7877 = vand.u32 %v498, 4294901760
        %v7878 = vsub.f32 %v498, %v7877
        %7879 = vmatpush2.msra.mxu0 %v7878
        %7880 = vmatprep.subr.mxu0 0.0
        %v7881 = vand.u32 %v497, 4294901760
        %v7882 = vsub.f32 %v497, %v7881
        %7883 = vmatpush2.msra.mxu0 %v7882
        %7884 = vmatprep.subr.mxu0 0.0
        %v7885 = vand.u32 %v496, 4294901760
        %v7886 = vsub.f32 %v496, %v7885
        %7887 = vmatpush2.msra.mxu0 %v7886
        %7888 = vmatprep.subr.mxu0 0.0
        %v7889 = vand.u32 %v495, 4294901760
        %v7890 = vsub.f32 %v495, %v7889
        %7891 = vmatpush2.msra.mxu0 %v7890
        %7892 = vmatprep.subr.mxu0 0.0
        %v7893 = vand.u32 %v494, 4294901760
        %v7894 = vsub.f32 %v494, %v7893
        %7895 = vmatpush2.msra.mxu0 %v7894
        %v7896 = vand.u32 %v220, 4294901760
        %v7897 = vsub.f32 %v220, %v7896
        %7898 = vmatprep.mubr.f32.mxu0 %v7897
        %v7899 = vand.u32 %v219, 4294901760
        %v7900 = vsub.f32 %v219, %v7899
        %7901 = vmatmul.mubr.f32.gmra.mxu0 %v7900
        %v7902 = vpop.f32.mrf.mxu0
        %v7903 = vadd.f32 %v7765, %v7902
        %v7904 = vpop.f32.mrf.mxu0
        %7905 = vdwg.mxu0
        %7906 = vmatprep.subr.mxu0 0.0
        %v7907 = vand.u32 %v493, 4294901760
        %7908 = vmatpush1.msra.mxu0 %v7907
        %7909 = vmatprep.subr.mxu0 0.0
        %v7910 = vand.u32 %v492, 4294901760
        %7911 = vmatpush1.msra.mxu0 %v7910
        %7912 = vmatprep.subr.mxu0 0.0
        %v7913 = vand.u32 %v491, 4294901760
        %7914 = vmatpush1.msra.mxu0 %v7913
        %7915 = vmatprep.subr.mxu0 0.0
        %v7916 = vand.u32 %v490, 4294901760
        %7917 = vmatpush1.msra.mxu0 %v7916
        %7918 = vmatprep.subr.mxu0 0.0
        %v7919 = vand.u32 %v489, 4294901760
        %7920 = vmatpush1.msra.mxu0 %v7919
        %7921 = vmatprep.subr.mxu0 0.0
        %v7922 = vand.u32 %v488, 4294901760
        %7923 = vmatpush1.msra.mxu0 %v7922
        %7924 = vmatprep.subr.mxu0 0.0
        %v7925 = vand.u32 %v487, 4294901760
        %7926 = vmatpush1.msra.mxu0 %v7925
        %7927 = vmatprep.subr.mxu0 0.0
        %v7928 = vand.u32 %v486, 4294901760
        %7929 = vmatpush1.msra.mxu0 %v7928
        %7930 = vmatprep.subr.mxu0 0.0
        %v7931 = vand.u32 %v485, 4294901760
        %7932 = vmatpush1.msra.mxu0 %v7931
        %7933 = vmatprep.subr.mxu0 0.0
        %v7934 = vand.u32 %v484, 4294901760
        %7935 = vmatpush1.msra.mxu0 %v7934
        %7936 = vmatprep.subr.mxu0 0.0
        %v7937 = vand.u32 %v483, 4294901760
        %7938 = vmatpush1.msra.mxu0 %v7937
        %7939 = vmatprep.subr.mxu0 0.0
        %v7940 = vand.u32 %v482, 4294901760
        %7941 = vmatpush1.msra.mxu0 %v7940
        %7942 = vmatprep.subr.mxu0 0.0
        %v7943 = vand.u32 %v481, 4294901760
        %7944 = vmatpush1.msra.mxu0 %v7943
        %7945 = vmatprep.subr.mxu0 0.0
        %v7946 = vand.u32 %v480, 4294901760
        %7947 = vmatpush1.msra.mxu0 %v7946
        %7948 = vmatprep.subr.mxu0 0.0
        %v7949 = vand.u32 %v479, 4294901760
        %7950 = vmatpush1.msra.mxu0 %v7949
        %7951 = vmatprep.subr.mxu0 0.0
        %v7952 = vand.u32 %v478, 4294901760
        %7953 = vmatpush1.msra.mxu0 %v7952
        %7954 = vmatprep.subr.mxu0 0.0
        %v7955 = vand.u32 %v509, 4294901760
        %7956 = vmatpush2.msra.mxu0 %v7955
        %7957 = vmatprep.subr.mxu0 0.0
        %v7958 = vand.u32 %v508, 4294901760
        %7959 = vmatpush2.msra.mxu0 %v7958
        %7960 = vmatprep.subr.mxu0 0.0
        %v7961 = vand.u32 %v507, 4294901760
        %7962 = vmatpush2.msra.mxu0 %v7961
        %7963 = vmatprep.subr.mxu0 0.0
        %v7964 = vand.u32 %v506, 4294901760
        %7965 = vmatpush2.msra.mxu0 %v7964
        %7966 = vmatprep.subr.mxu0 0.0
        %v7967 = vand.u32 %v505, 4294901760
        %7968 = vmatpush2.msra.mxu0 %v7967
        %7969 = vmatprep.subr.mxu0 0.0
        %v7970 = vand.u32 %v504, 4294901760
        %7971 = vmatpush2.msra.mxu0 %v7970
        %7972 = vmatprep.subr.mxu0 0.0
        %v7973 = vand.u32 %v503, 4294901760
        %7974 = vmatpush2.msra.mxu0 %v7973
        %7975 = vmatprep.subr.mxu0 0.0
        %v7976 = vand.u32 %v502, 4294901760
        %7977 = vmatpush2.msra.mxu0 %v7976
        %7978 = vmatprep.subr.mxu0 0.0
        %v7979 = vand.u32 %v501, 4294901760
        %7980 = vmatpush2.msra.mxu0 %v7979
        %7981 = vmatprep.subr.mxu0 0.0
        %v7982 = vand.u32 %v500, 4294901760
        %7983 = vmatpush2.msra.mxu0 %v7982
        %7984 = vmatprep.subr.mxu0 0.0
        %v7985 = vand.u32 %v499, 4294901760
        %7986 = vmatpush2.msra.mxu0 %v7985
        %7987 = vmatprep.subr.mxu0 0.0
        %v7988 = vand.u32 %v498, 4294901760
        %7989 = vmatpush2.msra.mxu0 %v7988
        %7990 = vmatprep.subr.mxu0 0.0
        %v7991 = vand.u32 %v497, 4294901760
        %7992 = vmatpush2.msra.mxu0 %v7991
        %7993 = vmatprep.subr.mxu0 0.0
        %v7994 = vand.u32 %v496, 4294901760
        %7995 = vmatpush2.msra.mxu0 %v7994
        %7996 = vmatprep.subr.mxu0 0.0
        %v7997 = vand.u32 %v495, 4294901760
        %7998 = vmatpush2.msra.mxu0 %v7997
        %7999 = vmatprep.subr.mxu0 0.0
        %v8000 = vand.u32 %v494, 4294901760
        %8001 = vmatpush2.msra.mxu0 %v8000
        %v8002 = vand.u32 %v220, 4294901760
        %v8003 = vsub.f32 %v220, %v8002
        %v8004 = vand.u32 %v8003, 4294901760
        %8005 = vmatprep.mubr.f32.mxu0 %v8004
        %v8006 = vand.u32 %v219, 4294901760
        %v8007 = vsub.f32 %v219, %v8006
        %v8008 = vand.u32 %v8007, 4294901760
        %8009 = vmatmul.mubr.f32.gmra.mxu0 %v8008
        %v8010 = vpop.f32.mrf.mxu0
        %v8011 = vadd.f32 %v7903, %v8010
        %v8012 = vpop.f32.mrf.mxu0
        %8013 = vdwg.mxu0
        %8014 = vmatprep.subr.mxu0 0.0
        %v8015 = vand.u32 %v493, 4294901760
        %v8016 = vsub.f32 %v493, %v8015
        %v8017 = vand.u32 %v8016, 4294901760
        %8018 = vmatpush1.msra.mxu0 %v8017
        %8019 = vmatprep.subr.mxu0 0.0
        %v8020 = vand.u32 %v492, 4294901760
        %v8021 = vsub.f32 %v492, %v8020
        %v8022 = vand.u32 %v8021, 4294901760
        %8023 = vmatpush1.msra.mxu0 %v8022
        %8024 = vmatprep.subr.mxu0 0.0
        %v8025 = vand.u32 %v491, 4294901760
        %v8026 = vsub.f32 %v491, %v8025
        %v8027 = vand.u32 %v8026, 4294901760
        %8028 = vmatpush1.msra.mxu0 %v8027
        %8029 = vmatprep.subr.mxu0 0.0
        %v8030 = vand.u32 %v490, 4294901760
        %v8031 = vsub.f32 %v490, %v8030
        %v8032 = vand.u32 %v8031, 4294901760
        %8033 = vmatpush1.msra.mxu0 %v8032
        %8034 = vmatprep.subr.mxu0 0.0
        %v8035 = vand.u32 %v489, 4294901760
        %v8036 = vsub.f32 %v489, %v8035
        %v8037 = vand.u32 %v8036, 4294901760
        %8038 = vmatpush1.msra.mxu0 %v8037
        %8039 = vmatprep.subr.mxu0 0.0
        %v8040 = vand.u32 %v488, 4294901760
        %v8041 = vsub.f32 %v488, %v8040
        %v8042 = vand.u32 %v8041, 4294901760
        %8043 = vmatpush1.msra.mxu0 %v8042
        %8044 = vmatprep.subr.mxu0 0.0
        %v8045 = vand.u32 %v487, 4294901760
        %v8046 = vsub.f32 %v487, %v8045
        %v8047 = vand.u32 %v8046, 4294901760
        %8048 = vmatpush1.msra.mxu0 %v8047
        %8049 = vmatprep.subr.mxu0 0.0
        %v8050 = vand.u32 %v486, 4294901760
        %v8051 = vsub.f32 %v486, %v8050
        %v8052 = vand.u32 %v8051, 4294901760
        %8053 = vmatpush1.msra.mxu0 %v8052
        %8054 = vmatprep.subr.mxu0 0.0
        %v8055 = vand.u32 %v485, 4294901760
        %v8056 = vsub.f32 %v485, %v8055
        %v8057 = vand.u32 %v8056, 4294901760
        %8058 = vmatpush1.msra.mxu0 %v8057
        %8059 = vmatprep.subr.mxu0 0.0
        %v8060 = vand.u32 %v484, 4294901760
        %v8061 = vsub.f32 %v484, %v8060
        %v8062 = vand.u32 %v8061, 4294901760
        %8063 = vmatpush1.msra.mxu0 %v8062
        %8064 = vmatprep.subr.mxu0 0.0
        %v8065 = vand.u32 %v483, 4294901760
        %v8066 = vsub.f32 %v483, %v8065
        %v8067 = vand.u32 %v8066, 4294901760
        %8068 = vmatpush1.msra.mxu0 %v8067
        %8069 = vmatprep.subr.mxu0 0.0
        %v8070 = vand.u32 %v482, 4294901760
        %v8071 = vsub.f32 %v482, %v8070
        %v8072 = vand.u32 %v8071, 4294901760
        %8073 = vmatpush1.msra.mxu0 %v8072
        %8074 = vmatprep.subr.mxu0 0.0
        %v8075 = vand.u32 %v481, 4294901760
        %v8076 = vsub.f32 %v481, %v8075
        %v8077 = vand.u32 %v8076, 4294901760
        %8078 = vmatpush1.msra.mxu0 %v8077
        %8079 = vmatprep.subr.mxu0 0.0
        %v8080 = vand.u32 %v480, 4294901760
        %v8081 = vsub.f32 %v480, %v8080
        %v8082 = vand.u32 %v8081, 4294901760
        %8083 = vmatpush1.msra.mxu0 %v8082
        %8084 = vmatprep.subr.mxu0 0.0
        %v8085 = vand.u32 %v479, 4294901760
        %v8086 = vsub.f32 %v479, %v8085
        %v8087 = vand.u32 %v8086, 4294901760
        %8088 = vmatpush1.msra.mxu0 %v8087
        %8089 = vmatprep.subr.mxu0 0.0
        %v8090 = vand.u32 %v478, 4294901760
        %v8091 = vsub.f32 %v478, %v8090
        %v8092 = vand.u32 %v8091, 4294901760
        %8093 = vmatpush1.msra.mxu0 %v8092
        %8094 = vmatprep.subr.mxu0 0.0
        %v8095 = vand.u32 %v509, 4294901760
        %v8096 = vsub.f32 %v509, %v8095
        %v8097 = vand.u32 %v8096, 4294901760
        %8098 = vmatpush2.msra.mxu0 %v8097
        %8099 = vmatprep.subr.mxu0 0.0
        %v8100 = vand.u32 %v508, 4294901760
        %v8101 = vsub.f32 %v508, %v8100
        %v8102 = vand.u32 %v8101, 4294901760
        %8103 = vmatpush2.msra.mxu0 %v8102
        %8104 = vmatprep.subr.mxu0 0.0
        %v8105 = vand.u32 %v507, 4294901760
        %v8106 = vsub.f32 %v507, %v8105
        %v8107 = vand.u32 %v8106, 4294901760
        %8108 = vmatpush2.msra.mxu0 %v8107
        %8109 = vmatprep.subr.mxu0 0.0
        %v8110 = vand.u32 %v506, 4294901760
        %v8111 = vsub.f32 %v506, %v8110
        %v8112 = vand.u32 %v8111, 4294901760
        %8113 = vmatpush2.msra.mxu0 %v8112
        %8114 = vmatprep.subr.mxu0 0.0
        %v8115 = vand.u32 %v505, 4294901760
        %v8116 = vsub.f32 %v505, %v8115
        %v8117 = vand.u32 %v8116, 4294901760
        %8118 = vmatpush2.msra.mxu0 %v8117
        %8119 = vmatprep.subr.mxu0 0.0
        %v8120 = vand.u32 %v504, 4294901760
        %v8121 = vsub.f32 %v504, %v8120
        %v8122 = vand.u32 %v8121, 4294901760
        %8123 = vmatpush2.msra.mxu0 %v8122
        %8124 = vmatprep.subr.mxu0 0.0
        %v8125 = vand.u32 %v503, 4294901760
        %v8126 = vsub.f32 %v503, %v8125
        %v8127 = vand.u32 %v8126, 4294901760
        %8128 = vmatpush2.msra.mxu0 %v8127
        %8129 = vmatprep.subr.mxu0 0.0
        %v8130 = vand.u32 %v502, 4294901760
        %v8131 = vsub.f32 %v502, %v8130
        %v8132 = vand.u32 %v8131, 4294901760
        %8133 = vmatpush2.msra.mxu0 %v8132
        %8134 = vmatprep.subr.mxu0 0.0
        %v8135 = vand.u32 %v501, 4294901760
        %v8136 = vsub.f32 %v501, %v8135
        %v8137 = vand.u32 %v8136, 4294901760
        %8138 = vmatpush2.msra.mxu0 %v8137
        %8139 = vmatprep.subr.mxu0 0.0
        %v8140 = vand.u32 %v500, 4294901760
        %v8141 = vsub.f32 %v500, %v8140
        %v8142 = vand.u32 %v8141, 4294901760
        %8143 = vmatpush2.msra.mxu0 %v8142
        %8144 = vmatprep.subr.mxu0 0.0
        %v8145 = vand.u32 %v499, 4294901760
        %v8146 = vsub.f32 %v499, %v8145
        %v8147 = vand.u32 %v8146, 4294901760
        %8148 = vmatpush2.msra.mxu0 %v8147
        %8149 = vmatprep.subr.mxu0 0.0
        %v8150 = vand.u32 %v498, 4294901760
        %v8151 = vsub.f32 %v498, %v8150
        %v8152 = vand.u32 %v8151, 4294901760
        %8153 = vmatpush2.msra.mxu0 %v8152
        %8154 = vmatprep.subr.mxu0 0.0
        %v8155 = vand.u32 %v497, 4294901760
        %v8156 = vsub.f32 %v497, %v8155
        %v8157 = vand.u32 %v8156, 4294901760
        %8158 = vmatpush2.msra.mxu0 %v8157
        %8159 = vmatprep.subr.mxu0 0.0
        %v8160 = vand.u32 %v496, 4294901760
        %v8161 = vsub.f32 %v496, %v8160
        %v8162 = vand.u32 %v8161, 4294901760
        %8163 = vmatpush2.msra.mxu0 %v8162
        %8164 = vmatprep.subr.mxu0 0.0
        %v8165 = vand.u32 %v495, 4294901760
        %v8166 = vsub.f32 %v495, %v8165
        %v8167 = vand.u32 %v8166, 4294901760
        %8168 = vmatpush2.msra.mxu0 %v8167
        %8169 = vmatprep.subr.mxu0 0.0
        %v8170 = vand.u32 %v494, 4294901760
        %v8171 = vsub.f32 %v494, %v8170
        %v8172 = vand.u32 %v8171, 4294901760
        %8173 = vmatpush2.msra.mxu0 %v8172
        %v8174 = vand.u32 %v220, 4294901760
        %8175 = vmatprep.mubr.f32.mxu0 %v8174
        %v8176 = vand.u32 %v219, 4294901760
        %8177 = vmatmul.mubr.f32.gmra.mxu0 %v8176
        %v8178 = vpop.f32.mrf.mxu0
        %v8179 = vadd.f32 %v8011, %v8178
        %v8180 = vpop.f32.mrf.mxu0
        %8181 = vdwg.mxu0
        %8182 = vmatprep.subr.mxu0 0.0
        %v8183 = vand.u32 %v493, 4294901760
        %8184 = vmatpush1.msra.mxu0 %v8183
        %8185 = vmatprep.subr.mxu0 0.0
        %v8186 = vand.u32 %v492, 4294901760
        %8187 = vmatpush1.msra.mxu0 %v8186
        %8188 = vmatprep.subr.mxu0 0.0
        %v8189 = vand.u32 %v491, 4294901760
        %8190 = vmatpush1.msra.mxu0 %v8189
        %8191 = vmatprep.subr.mxu0 0.0
        %v8192 = vand.u32 %v490, 4294901760
        %8193 = vmatpush1.msra.mxu0 %v8192
        %8194 = vmatprep.subr.mxu0 0.0
        %v8195 = vand.u32 %v489, 4294901760
        %8196 = vmatpush1.msra.mxu0 %v8195
        %8197 = vmatprep.subr.mxu0 0.0
        %v8198 = vand.u32 %v488, 4294901760
        %8199 = vmatpush1.msra.mxu0 %v8198
        %8200 = vmatprep.subr.mxu0 0.0
        %v8201 = vand.u32 %v487, 4294901760
        %8202 = vmatpush1.msra.mxu0 %v8201
        %8203 = vmatprep.subr.mxu0 0.0
        %v8204 = vand.u32 %v486, 4294901760
        %8205 = vmatpush1.msra.mxu0 %v8204
        %8206 = vmatprep.subr.mxu0 0.0
        %v8207 = vand.u32 %v485, 4294901760
        %8208 = vmatpush1.msra.mxu0 %v8207
        %8209 = vmatprep.subr.mxu0 0.0
        %v8210 = vand.u32 %v484, 4294901760
        %8211 = vmatpush1.msra.mxu0 %v8210
        %8212 = vmatprep.subr.mxu0 0.0
        %v8213 = vand.u32 %v483, 4294901760
        %8214 = vmatpush1.msra.mxu0 %v8213
        %8215 = vmatprep.subr.mxu0 0.0
        %v8216 = vand.u32 %v482, 4294901760
        %8217 = vmatpush1.msra.mxu0 %v8216
        %8218 = vmatprep.subr.mxu0 0.0
        %v8219 = vand.u32 %v481, 4294901760
        %8220 = vmatpush1.msra.mxu0 %v8219
        %8221 = vmatprep.subr.mxu0 0.0
        %v8222 = vand.u32 %v480, 4294901760
        %8223 = vmatpush1.msra.mxu0 %v8222
        %8224 = vmatprep.subr.mxu0 0.0
        %v8225 = vand.u32 %v479, 4294901760
        %8226 = vmatpush1.msra.mxu0 %v8225
        %8227 = vmatprep.subr.mxu0 0.0
        %v8228 = vand.u32 %v478, 4294901760
        %8229 = vmatpush1.msra.mxu0 %v8228
        %8230 = vmatprep.subr.mxu0 0.0
        %v8231 = vand.u32 %v509, 4294901760
        %8232 = vmatpush2.msra.mxu0 %v8231
        %8233 = vmatprep.subr.mxu0 0.0
        %v8234 = vand.u32 %v508, 4294901760
        %8235 = vmatpush2.msra.mxu0 %v8234
        %8236 = vmatprep.subr.mxu0 0.0
        %v8237 = vand.u32 %v507, 4294901760
        %8238 = vmatpush2.msra.mxu0 %v8237
        %8239 = vmatprep.subr.mxu0 0.0
        %v8240 = vand.u32 %v506, 4294901760
        %8241 = vmatpush2.msra.mxu0 %v8240
        %8242 = vmatprep.subr.mxu0 0.0
        %v8243 = vand.u32 %v505, 4294901760
        %8244 = vmatpush2.msra.mxu0 %v8243
        %8245 = vmatprep.subr.mxu0 0.0
        %v8246 = vand.u32 %v504, 4294901760
        %8247 = vmatpush2.msra.mxu0 %v8246
        %8248 = vmatprep.subr.mxu0 0.0
        %v8249 = vand.u32 %v503, 4294901760
        %8250 = vmatpush2.msra.mxu0 %v8249
        %8251 = vmatprep.subr.mxu0 0.0
        %v8252 = vand.u32 %v502, 4294901760
        %8253 = vmatpush2.msra.mxu0 %v8252
        %8254 = vmatprep.subr.mxu0 0.0
        %v8255 = vand.u32 %v501, 4294901760
        %8256 = vmatpush2.msra.mxu0 %v8255
        %8257 = vmatprep.subr.mxu0 0.0
        %v8258 = vand.u32 %v500, 4294901760
        %8259 = vmatpush2.msra.mxu0 %v8258
        %8260 = vmatprep.subr.mxu0 0.0
        %v8261 = vand.u32 %v499, 4294901760
        %8262 = vmatpush2.msra.mxu0 %v8261
        %8263 = vmatprep.subr.mxu0 0.0
        %v8264 = vand.u32 %v498, 4294901760
        %8265 = vmatpush2.msra.mxu0 %v8264
        %8266 = vmatprep.subr.mxu0 0.0
        %v8267 = vand.u32 %v497, 4294901760
        %8268 = vmatpush2.msra.mxu0 %v8267
        %8269 = vmatprep.subr.mxu0 0.0
        %v8270 = vand.u32 %v496, 4294901760
        %8271 = vmatpush2.msra.mxu0 %v8270
        %8272 = vmatprep.subr.mxu0 0.0
        %v8273 = vand.u32 %v495, 4294901760
        %8274 = vmatpush2.msra.mxu0 %v8273
        %8275 = vmatprep.subr.mxu0 0.0
        %v8276 = vand.u32 %v494, 4294901760
        %8277 = vmatpush2.msra.mxu0 %v8276
        %v8278 = vand.u32 %v220, 4294901760
        %8279 = vmatprep.mubr.f32.mxu0 %v8278
        %v8280 = vand.u32 %v219, 4294901760
        %8281 = vmatmul.mubr.f32.gmra.mxu0 %v8280
        %v8282 = vpop.f32.mrf.mxu0
        %v8283 = vadd.f32 %v8179, %v8282
        %v8284 = vpop.f32.mrf.mxu0
        %8285 = vdwg.mxu0
        %8286 = vmatprep.subr.mxu0 0.0
        %v8287 = vand.u32 %v525, 4294901760
        %8288 = vmatpush1.msra.mxu0 %v8287
        %8289 = vmatprep.subr.mxu0 0.0
        %v8290 = vand.u32 %v524, 4294901760
        %8291 = vmatpush1.msra.mxu0 %v8290
        %8292 = vmatprep.subr.mxu0 0.0
        %v8293 = vand.u32 %v523, 4294901760
        %8294 = vmatpush1.msra.mxu0 %v8293
        %8295 = vmatprep.subr.mxu0 0.0
        %v8296 = vand.u32 %v522, 4294901760
        %8297 = vmatpush1.msra.mxu0 %v8296
        %8298 = vmatprep.subr.mxu0 0.0
        %v8299 = vand.u32 %v521, 4294901760
        %8300 = vmatpush1.msra.mxu0 %v8299
        %8301 = vmatprep.subr.mxu0 0.0
        %v8302 = vand.u32 %v520, 4294901760
        %8303 = vmatpush1.msra.mxu0 %v8302
        %8304 = vmatprep.subr.mxu0 0.0
        %v8305 = vand.u32 %v519, 4294901760
        %8306 = vmatpush1.msra.mxu0 %v8305
        %8307 = vmatprep.subr.mxu0 0.0
        %v8308 = vand.u32 %v518, 4294901760
        %8309 = vmatpush1.msra.mxu0 %v8308
        %8310 = vmatprep.subr.mxu0 0.0
        %v8311 = vand.u32 %v517, 4294901760
        %8312 = vmatpush1.msra.mxu0 %v8311
        %8313 = vmatprep.subr.mxu0 0.0
        %v8314 = vand.u32 %v516, 4294901760
        %8315 = vmatpush1.msra.mxu0 %v8314
        %8316 = vmatprep.subr.mxu0 0.0
        %v8317 = vand.u32 %v515, 4294901760
        %8318 = vmatpush1.msra.mxu0 %v8317
        %8319 = vmatprep.subr.mxu0 0.0
        %v8320 = vand.u32 %v514, 4294901760
        %8321 = vmatpush1.msra.mxu0 %v8320
        %8322 = vmatprep.subr.mxu0 0.0
        %v8323 = vand.u32 %v513, 4294901760
        %8324 = vmatpush1.msra.mxu0 %v8323
        %8325 = vmatprep.subr.mxu0 0.0
        %v8326 = vand.u32 %v512, 4294901760
        %8327 = vmatpush1.msra.mxu0 %v8326
        %8328 = vmatprep.subr.mxu0 0.0
        %v8329 = vand.u32 %v511, 4294901760
        %8330 = vmatpush1.msra.mxu0 %v8329
        %8331 = vmatprep.subr.mxu0 0.0
        %v8332 = vand.u32 %v510, 4294901760
        %8333 = vmatpush1.msra.mxu0 %v8332
        %8334 = vmatprep.subr.mxu0 0.0
        %8335 = vmatpush2.msra.mxu0 0.0
        %8336 = vmatprep.subr.mxu0 0.0
        %8337 = vmatpush2.msra.mxu0 0.0
        %8338 = vmatprep.subr.mxu0 0.0
        %8339 = vmatpush2.msra.mxu0 0.0
        %8340 = vmatprep.subr.mxu0 0.0
        %8341 = vmatpush2.msra.mxu0 0.0
        %8342 = vmatprep.subr.mxu0 0.0
        %8343 = vmatpush2.msra.mxu0 0.0
        %8344 = vmatprep.subr.mxu0 0.0
        %8345 = vmatpush2.msra.mxu0 0.0
        %8346 = vmatprep.subr.mxu0 0.0
        %8347 = vmatpush2.msra.mxu0 0.0
        %8348 = vmatprep.subr.mxu0 0.0
        %8349 = vmatpush2.msra.mxu0 0.0
        %8350 = vmatprep.subr.mxu0 0.0
        %8351 = vmatpush2.msra.mxu0 0.0
        %8352 = vmatprep.subr.mxu0 0.0
        %8353 = vmatpush2.msra.mxu0 0.0
        %8354 = vmatprep.subr.mxu0 0.0
        %8355 = vmatpush2.msra.mxu0 0.0
        %8356 = vmatprep.subr.mxu0 0.0
        %8357 = vmatpush2.msra.mxu0 0.0
        %8358 = vmatprep.subr.mxu0 0.0
        %8359 = vmatpush2.msra.mxu0 0.0
        %8360 = vmatprep.subr.mxu0 0.0
        %8361 = vmatpush2.msra.mxu0 0.0
        %8362 = vmatprep.subr.mxu0 0.0
        %8363 = vmatpush2.msra.mxu0 0.0
        %8364 = vmatprep.subr.mxu0 0.0
        %8365 = vmatpush2.msra.mxu0 0.0
        %8366 = vmatprep.mubr.f32.mxu0 0.0
        %v8367 = vand.u32 %v221, 4294901760
        %v8368 = vsub.f32 %v221, %v8367
        %v8369 = vand.u32 %v8368, 4294901760
        %v8370 = vsub.f32 %v8368, %v8369
        %v8371 = vand.u32 %v8370, 4294901760
        %8372 = vmatmul.mubr.f32.gmra.mxu0 %v8371
        %v8373 = vpop.f32.mrf.mxu0
        %v8374 = vadd.f32 %v8283, %v8373
        %v8375 = vpop.f32.mrf.mxu0
        %8376 = vdwg.mxu0
        %8377 = vmatprep.subr.mxu0 0.0
        %v8378 = vand.u32 %v525, 4294901760
        %v8379 = vsub.f32 %v525, %v8378
        %v8380 = vand.u32 %v8379, 4294901760
        %v8381 = vsub.f32 %v8379, %v8380
        %v8382 = vand.u32 %v8381, 4294901760
        %8383 = vmatpush1.msra.mxu0 %v8382
        %8384 = vmatprep.subr.mxu0 0.0
        %v8385 = vand.u32 %v524, 4294901760
        %v8386 = vsub.f32 %v524, %v8385
        %v8387 = vand.u32 %v8386, 4294901760
        %v8388 = vsub.f32 %v8386, %v8387
        %v8389 = vand.u32 %v8388, 4294901760
        %8390 = vmatpush1.msra.mxu0 %v8389
        %8391 = vmatprep.subr.mxu0 0.0
        %v8392 = vand.u32 %v523, 4294901760
        %v8393 = vsub.f32 %v523, %v8392
        %v8394 = vand.u32 %v8393, 4294901760
        %v8395 = vsub.f32 %v8393, %v8394
        %v8396 = vand.u32 %v8395, 4294901760
        %8397 = vmatpush1.msra.mxu0 %v8396
        %8398 = vmatprep.subr.mxu0 0.0
        %v8399 = vand.u32 %v522, 4294901760
        %v8400 = vsub.f32 %v522, %v8399
        %v8401 = vand.u32 %v8400, 4294901760
        %v8402 = vsub.f32 %v8400, %v8401
        %v8403 = vand.u32 %v8402, 4294901760
        %8404 = vmatpush1.msra.mxu0 %v8403
        %8405 = vmatprep.subr.mxu0 0.0
        %v8406 = vand.u32 %v521, 4294901760
        %v8407 = vsub.f32 %v521, %v8406
        %v8408 = vand.u32 %v8407, 4294901760
        %v8409 = vsub.f32 %v8407, %v8408
        %v8410 = vand.u32 %v8409, 4294901760
        %8411 = vmatpush1.msra.mxu0 %v8410
        %8412 = vmatprep.subr.mxu0 0.0
        %v8413 = vand.u32 %v520, 4294901760
        %v8414 = vsub.f32 %v520, %v8413
        %v8415 = vand.u32 %v8414, 4294901760
        %v8416 = vsub.f32 %v8414, %v8415
        %v8417 = vand.u32 %v8416, 4294901760
        %8418 = vmatpush1.msra.mxu0 %v8417
        %8419 = vmatprep.subr.mxu0 0.0
        %v8420 = vand.u32 %v519, 4294901760
        %v8421 = vsub.f32 %v519, %v8420
        %v8422 = vand.u32 %v8421, 4294901760
        %v8423 = vsub.f32 %v8421, %v8422
        %v8424 = vand.u32 %v8423, 4294901760
        %8425 = vmatpush1.msra.mxu0 %v8424
        %8426 = vmatprep.subr.mxu0 0.0
        %v8427 = vand.u32 %v518, 4294901760
        %v8428 = vsub.f32 %v518, %v8427
        %v8429 = vand.u32 %v8428, 4294901760
        %v8430 = vsub.f32 %v8428, %v8429
        %v8431 = vand.u32 %v8430, 4294901760
        %8432 = vmatpush1.msra.mxu0 %v8431
        %8433 = vmatprep.subr.mxu0 0.0
        %v8434 = vand.u32 %v517, 4294901760
        %v8435 = vsub.f32 %v517, %v8434
        %v8436 = vand.u32 %v8435, 4294901760
        %v8437 = vsub.f32 %v8435, %v8436
        %v8438 = vand.u32 %v8437, 4294901760
        %8439 = vmatpush1.msra.mxu0 %v8438
        %8440 = vmatprep.subr.mxu0 0.0
        %v8441 = vand.u32 %v516, 4294901760
        %v8442 = vsub.f32 %v516, %v8441
        %v8443 = vand.u32 %v8442, 4294901760
        %v8444 = vsub.f32 %v8442, %v8443
        %v8445 = vand.u32 %v8444, 4294901760
        %8446 = vmatpush1.msra.mxu0 %v8445
        %8447 = vmatprep.subr.mxu0 0.0
        %v8448 = vand.u32 %v515, 4294901760
        %v8449 = vsub.f32 %v515, %v8448
        %v8450 = vand.u32 %v8449, 4294901760
        %v8451 = vsub.f32 %v8449, %v8450
        %v8452 = vand.u32 %v8451, 4294901760
        %8453 = vmatpush1.msra.mxu0 %v8452
        %8454 = vmatprep.subr.mxu0 0.0
        %v8455 = vand.u32 %v514, 4294901760
        %v8456 = vsub.f32 %v514, %v8455
        %v8457 = vand.u32 %v8456, 4294901760
        %v8458 = vsub.f32 %v8456, %v8457
        %v8459 = vand.u32 %v8458, 4294901760
        %8460 = vmatpush1.msra.mxu0 %v8459
        %8461 = vmatprep.subr.mxu0 0.0
        %v8462 = vand.u32 %v513, 4294901760
        %v8463 = vsub.f32 %v513, %v8462
        %v8464 = vand.u32 %v8463, 4294901760
        %v8465 = vsub.f32 %v8463, %v8464
        %v8466 = vand.u32 %v8465, 4294901760
        %8467 = vmatpush1.msra.mxu0 %v8466
        %8468 = vmatprep.subr.mxu0 0.0
        %v8469 = vand.u32 %v512, 4294901760
        %v8470 = vsub.f32 %v512, %v8469
        %v8471 = vand.u32 %v8470, 4294901760
        %v8472 = vsub.f32 %v8470, %v8471
        %v8473 = vand.u32 %v8472, 4294901760
        %8474 = vmatpush1.msra.mxu0 %v8473
        %8475 = vmatprep.subr.mxu0 0.0
        %v8476 = vand.u32 %v511, 4294901760
        %v8477 = vsub.f32 %v511, %v8476
        %v8478 = vand.u32 %v8477, 4294901760
        %v8479 = vsub.f32 %v8477, %v8478
        %v8480 = vand.u32 %v8479, 4294901760
        %8481 = vmatpush1.msra.mxu0 %v8480
        %8482 = vmatprep.subr.mxu0 0.0
        %v8483 = vand.u32 %v510, 4294901760
        %v8484 = vsub.f32 %v510, %v8483
        %v8485 = vand.u32 %v8484, 4294901760
        %v8486 = vsub.f32 %v8484, %v8485
        %v8487 = vand.u32 %v8486, 4294901760
        %8488 = vmatpush1.msra.mxu0 %v8487
        %8489 = vmatprep.subr.mxu0 0.0
        %8490 = vmatpush2.msra.mxu0 0.0
        %8491 = vmatprep.subr.mxu0 0.0
        %8492 = vmatpush2.msra.mxu0 0.0
        %8493 = vmatprep.subr.mxu0 0.0
        %8494 = vmatpush2.msra.mxu0 0.0
        %8495 = vmatprep.subr.mxu0 0.0
        %8496 = vmatpush2.msra.mxu0 0.0
        %8497 = vmatprep.subr.mxu0 0.0
        %8498 = vmatpush2.msra.mxu0 0.0
        %8499 = vmatprep.subr.mxu0 0.0
        %8500 = vmatpush2.msra.mxu0 0.0
        %8501 = vmatprep.subr.mxu0 0.0
        %8502 = vmatpush2.msra.mxu0 0.0
        %8503 = vmatprep.subr.mxu0 0.0
        %8504 = vmatpush2.msra.mxu0 0.0
        %8505 = vmatprep.subr.mxu0 0.0
        %8506 = vmatpush2.msra.mxu0 0.0
        %8507 = vmatprep.subr.mxu0 0.0
        %8508 = vmatpush2.msra.mxu0 0.0
        %8509 = vmatprep.subr.mxu0 0.0
        %8510 = vmatpush2.msra.mxu0 0.0
        %8511 = vmatprep.subr.mxu0 0.0
        %8512 = vmatpush2.msra.mxu0 0.0
        %8513 = vmatprep.subr.mxu0 0.0
        %8514 = vmatpush2.msra.mxu0 0.0
        %8515 = vmatprep.subr.mxu0 0.0
        %8516 = vmatpush2.msra.mxu0 0.0
        %8517 = vmatprep.subr.mxu0 0.0
        %8518 = vmatpush2.msra.mxu0 0.0
        %8519 = vmatprep.subr.mxu0 0.0
        %8520 = vmatpush2.msra.mxu0 0.0
        %8521 = vmatprep.mubr.f32.mxu0 0.0
        %v8522 = vand.u32 %v221, 4294901760
        %8523 = vmatmul.mubr.f32.gmra.mxu0 %v8522
        %v8524 = vpop.f32.mrf.mxu0
        %v8525 = vadd.f32 %v8374, %v8524
        %v8526 = vpop.f32.mrf.mxu0
        %8527 = vdwg.mxu0
        %8528 = vmatprep.subr.mxu0 0.0
        %v8529 = vand.u32 %v525, 4294901760
        %v8530 = vsub.f32 %v525, %v8529
        %8531 = vmatpush1.msra.mxu0 %v8530
        %8532 = vmatprep.subr.mxu0 0.0
        %v8533 = vand.u32 %v524, 4294901760
        %v8534 = vsub.f32 %v524, %v8533
        %8535 = vmatpush1.msra.mxu0 %v8534
        %8536 = vmatprep.subr.mxu0 0.0
        %v8537 = vand.u32 %v523, 4294901760
        %v8538 = vsub.f32 %v523, %v8537
        %8539 = vmatpush1.msra.mxu0 %v8538
        %8540 = vmatprep.subr.mxu0 0.0
        %v8541 = vand.u32 %v522, 4294901760
        %v8542 = vsub.f32 %v522, %v8541
        %8543 = vmatpush1.msra.mxu0 %v8542
        %8544 = vmatprep.subr.mxu0 0.0
        %v8545 = vand.u32 %v521, 4294901760
        %v8546 = vsub.f32 %v521, %v8545
        %8547 = vmatpush1.msra.mxu0 %v8546
        %8548 = vmatprep.subr.mxu0 0.0
        %v8549 = vand.u32 %v520, 4294901760
        %v8550 = vsub.f32 %v520, %v8549
        %8551 = vmatpush1.msra.mxu0 %v8550
        %8552 = vmatprep.subr.mxu0 0.0
        %v8553 = vand.u32 %v519, 4294901760
        %v8554 = vsub.f32 %v519, %v8553
        %8555 = vmatpush1.msra.mxu0 %v8554
        %8556 = vmatprep.subr.mxu0 0.0
        %v8557 = vand.u32 %v518, 4294901760
        %v8558 = vsub.f32 %v518, %v8557
        %8559 = vmatpush1.msra.mxu0 %v8558
        %8560 = vmatprep.subr.mxu0 0.0
        %v8561 = vand.u32 %v517, 4294901760
        %v8562 = vsub.f32 %v517, %v8561
        %8563 = vmatpush1.msra.mxu0 %v8562
        %8564 = vmatprep.subr.mxu0 0.0
        %v8565 = vand.u32 %v516, 4294901760
        %v8566 = vsub.f32 %v516, %v8565
        %8567 = vmatpush1.msra.mxu0 %v8566
        %8568 = vmatprep.subr.mxu0 0.0
        %v8569 = vand.u32 %v515, 4294901760
        %v8570 = vsub.f32 %v515, %v8569
        %8571 = vmatpush1.msra.mxu0 %v8570
        %8572 = vmatprep.subr.mxu0 0.0
        %v8573 = vand.u32 %v514, 4294901760
        %v8574 = vsub.f32 %v514, %v8573
        %8575 = vmatpush1.msra.mxu0 %v8574
        %8576 = vmatprep.subr.mxu0 0.0
        %v8577 = vand.u32 %v513, 4294901760
        %v8578 = vsub.f32 %v513, %v8577
        %8579 = vmatpush1.msra.mxu0 %v8578
        %8580 = vmatprep.subr.mxu0 0.0
        %v8581 = vand.u32 %v512, 4294901760
        %v8582 = vsub.f32 %v512, %v8581
        %8583 = vmatpush1.msra.mxu0 %v8582
        %8584 = vmatprep.subr.mxu0 0.0
        %v8585 = vand.u32 %v511, 4294901760
        %v8586 = vsub.f32 %v511, %v8585
        %8587 = vmatpush1.msra.mxu0 %v8586
        %8588 = vmatprep.subr.mxu0 0.0
        %v8589 = vand.u32 %v510, 4294901760
        %v8590 = vsub.f32 %v510, %v8589
        %8591 = vmatpush1.msra.mxu0 %v8590
        %8592 = vmatprep.subr.mxu0 0.0
        %8593 = vmatpush2.msra.mxu0 0.0
        %8594 = vmatprep.subr.mxu0 0.0
        %8595 = vmatpush2.msra.mxu0 0.0
        %8596 = vmatprep.subr.mxu0 0.0
        %8597 = vmatpush2.msra.mxu0 0.0
        %8598 = vmatprep.subr.mxu0 0.0
        %8599 = vmatpush2.msra.mxu0 0.0
        %8600 = vmatprep.subr.mxu0 0.0
        %8601 = vmatpush2.msra.mxu0 0.0
        %8602 = vmatprep.subr.mxu0 0.0
        %8603 = vmatpush2.msra.mxu0 0.0
        %8604 = vmatprep.subr.mxu0 0.0
        %8605 = vmatpush2.msra.mxu0 0.0
        %8606 = vmatprep.subr.mxu0 0.0
        %8607 = vmatpush2.msra.mxu0 0.0
        %8608 = vmatprep.subr.mxu0 0.0
        %8609 = vmatpush2.msra.mxu0 0.0
        %8610 = vmatprep.subr.mxu0 0.0
        %8611 = vmatpush2.msra.mxu0 0.0
        %8612 = vmatprep.subr.mxu0 0.0
        %8613 = vmatpush2.msra.mxu0 0.0
        %8614 = vmatprep.subr.mxu0 0.0
        %8615 = vmatpush2.msra.mxu0 0.0
        %8616 = vmatprep.subr.mxu0 0.0
        %8617 = vmatpush2.msra.mxu0 0.0
        %8618 = vmatprep.subr.mxu0 0.0
        %8619 = vmatpush2.msra.mxu0 0.0
        %8620 = vmatprep.subr.mxu0 0.0
        %8621 = vmatpush2.msra.mxu0 0.0
        %8622 = vmatprep.subr.mxu0 0.0
        %8623 = vmatpush2.msra.mxu0 0.0
        %8624 = vmatprep.mubr.f32.mxu0 0.0
        %v8625 = vand.u32 %v221, 4294901760
        %v8626 = vsub.f32 %v221, %v8625
        %8627 = vmatmul.mubr.f32.gmra.mxu0 %v8626
        %v8628 = vpop.f32.mrf.mxu0
        %v8629 = vadd.f32 %v8525, %v8628
        %v8630 = vpop.f32.mrf.mxu0
        %8631 = vdwg.mxu0
        %8632 = vmatprep.subr.mxu0 0.0
        %v8633 = vand.u32 %v525, 4294901760
        %8634 = vmatpush1.msra.mxu0 %v8633
        %8635 = vmatprep.subr.mxu0 0.0
        %v8636 = vand.u32 %v524, 4294901760
        %8637 = vmatpush1.msra.mxu0 %v8636
        %8638 = vmatprep.subr.mxu0 0.0
        %v8639 = vand.u32 %v523, 4294901760
        %8640 = vmatpush1.msra.mxu0 %v8639
        %8641 = vmatprep.subr.mxu0 0.0
        %v8642 = vand.u32 %v522, 4294901760
        %8643 = vmatpush1.msra.mxu0 %v8642
        %8644 = vmatprep.subr.mxu0 0.0
        %v8645 = vand.u32 %v521, 4294901760
        %8646 = vmatpush1.msra.mxu0 %v8645
        %8647 = vmatprep.subr.mxu0 0.0
        %v8648 = vand.u32 %v520, 4294901760
        %8649 = vmatpush1.msra.mxu0 %v8648
        %8650 = vmatprep.subr.mxu0 0.0
        %v8651 = vand.u32 %v519, 4294901760
        %8652 = vmatpush1.msra.mxu0 %v8651
        %8653 = vmatprep.subr.mxu0 0.0
        %v8654 = vand.u32 %v518, 4294901760
        %8655 = vmatpush1.msra.mxu0 %v8654
        %8656 = vmatprep.subr.mxu0 0.0
        %v8657 = vand.u32 %v517, 4294901760
        %8658 = vmatpush1.msra.mxu0 %v8657
        %8659 = vmatprep.subr.mxu0 0.0
        %v8660 = vand.u32 %v516, 4294901760
        %8661 = vmatpush1.msra.mxu0 %v8660
        %8662 = vmatprep.subr.mxu0 0.0
        %v8663 = vand.u32 %v515, 4294901760
        %8664 = vmatpush1.msra.mxu0 %v8663
        %8665 = vmatprep.subr.mxu0 0.0
        %v8666 = vand.u32 %v514, 4294901760
        %8667 = vmatpush1.msra.mxu0 %v8666
        %8668 = vmatprep.subr.mxu0 0.0
        %v8669 = vand.u32 %v513, 4294901760
        %8670 = vmatpush1.msra.mxu0 %v8669
        %8671 = vmatprep.subr.mxu0 0.0
        %v8672 = vand.u32 %v512, 4294901760
        %8673 = vmatpush1.msra.mxu0 %v8672
        %8674 = vmatprep.subr.mxu0 0.0
        %v8675 = vand.u32 %v511, 4294901760
        %8676 = vmatpush1.msra.mxu0 %v8675
        %8677 = vmatprep.subr.mxu0 0.0
        %v8678 = vand.u32 %v510, 4294901760
        %8679 = vmatpush1.msra.mxu0 %v8678
        %8680 = vmatprep.subr.mxu0 0.0
        %8681 = vmatpush2.msra.mxu0 0.0
        %8682 = vmatprep.subr.mxu0 0.0
        %8683 = vmatpush2.msra.mxu0 0.0
        %8684 = vmatprep.subr.mxu0 0.0
        %8685 = vmatpush2.msra.mxu0 0.0
        %8686 = vmatprep.subr.mxu0 0.0
        %8687 = vmatpush2.msra.mxu0 0.0
        %8688 = vmatprep.subr.mxu0 0.0
        %8689 = vmatpush2.msra.mxu0 0.0
        %8690 = vmatprep.subr.mxu0 0.0
        %8691 = vmatpush2.msra.mxu0 0.0
        %8692 = vmatprep.subr.mxu0 0.0
        %8693 = vmatpush2.msra.mxu0 0.0
        %8694 = vmatprep.subr.mxu0 0.0
        %8695 = vmatpush2.msra.mxu0 0.0
        %8696 = vmatprep.subr.mxu0 0.0
        %8697 = vmatpush2.msra.mxu0 0.0
        %8698 = vmatprep.subr.mxu0 0.0
        %8699 = vmatpush2.msra.mxu0 0.0
        %8700 = vmatprep.subr.mxu0 0.0
        %8701 = vmatpush2.msra.mxu0 0.0
        %8702 = vmatprep.subr.mxu0 0.0
        %8703 = vmatpush2.msra.mxu0 0.0
        %8704 = vmatprep.subr.mxu0 0.0
        %8705 = vmatpush2.msra.mxu0 0.0
        %8706 = vmatprep.subr.mxu0 0.0
        %8707 = vmatpush2.msra.mxu0 0.0
        %8708 = vmatprep.subr.mxu0 0.0
        %8709 = vmatpush2.msra.mxu0 0.0
        %8710 = vmatprep.subr.mxu0 0.0
        %8711 = vmatpush2.msra.mxu0 0.0
        %8712 = vmatprep.mubr.f32.mxu0 0.0
        %v8713 = vand.u32 %v221, 4294901760
        %v8714 = vsub.f32 %v221, %v8713
        %v8715 = vand.u32 %v8714, 4294901760
        %8716 = vmatmul.mubr.f32.gmra.mxu0 %v8715
        %v8717 = vpop.f32.mrf.mxu0
        %v8718 = vadd.f32 %v8629, %v8717
        %v8719 = vpop.f32.mrf.mxu0
        %8720 = vdwg.mxu0
        %8721 = vmatprep.subr.mxu0 0.0
        %v8722 = vand.u32 %v525, 4294901760
        %v8723 = vsub.f32 %v525, %v8722
        %v8724 = vand.u32 %v8723, 4294901760
        %8725 = vmatpush1.msra.mxu0 %v8724
        %8726 = vmatprep.subr.mxu0 0.0
        %v8727 = vand.u32 %v524, 4294901760
        %v8728 = vsub.f32 %v524, %v8727
        %v8729 = vand.u32 %v8728, 4294901760
        %8730 = vmatpush1.msra.mxu0 %v8729
        %8731 = vmatprep.subr.mxu0 0.0
        %v8732 = vand.u32 %v523, 4294901760
        %v8733 = vsub.f32 %v523, %v8732
        %v8734 = vand.u32 %v8733, 4294901760
        %8735 = vmatpush1.msra.mxu0 %v8734
        %8736 = vmatprep.subr.mxu0 0.0
        %v8737 = vand.u32 %v522, 4294901760
        %v8738 = vsub.f32 %v522, %v8737
        %v8739 = vand.u32 %v8738, 4294901760
        %8740 = vmatpush1.msra.mxu0 %v8739
        %8741 = vmatprep.subr.mxu0 0.0
        %v8742 = vand.u32 %v521, 4294901760
        %v8743 = vsub.f32 %v521, %v8742
        %v8744 = vand.u32 %v8743, 4294901760
        %8745 = vmatpush1.msra.mxu0 %v8744
        %8746 = vmatprep.subr.mxu0 0.0
        %v8747 = vand.u32 %v520, 4294901760
        %v8748 = vsub.f32 %v520, %v8747
        %v8749 = vand.u32 %v8748, 4294901760
        %8750 = vmatpush1.msra.mxu0 %v8749
        %8751 = vmatprep.subr.mxu0 0.0
        %v8752 = vand.u32 %v519, 4294901760
        %v8753 = vsub.f32 %v519, %v8752
        %v8754 = vand.u32 %v8753, 4294901760
        %8755 = vmatpush1.msra.mxu0 %v8754
        %8756 = vmatprep.subr.mxu0 0.0
        %v8757 = vand.u32 %v518, 4294901760
        %v8758 = vsub.f32 %v518, %v8757
        %v8759 = vand.u32 %v8758, 4294901760
        %8760 = vmatpush1.msra.mxu0 %v8759
        %8761 = vmatprep.subr.mxu0 0.0
        %v8762 = vand.u32 %v517, 4294901760
        %v8763 = vsub.f32 %v517, %v8762
        %v8764 = vand.u32 %v8763, 4294901760
        %8765 = vmatpush1.msra.mxu0 %v8764
        %8766 = vmatprep.subr.mxu0 0.0
        %v8767 = vand.u32 %v516, 4294901760
        %v8768 = vsub.f32 %v516, %v8767
        %v8769 = vand.u32 %v8768, 4294901760
        %8770 = vmatpush1.msra.mxu0 %v8769
        %8771 = vmatprep.subr.mxu0 0.0
        %v8772 = vand.u32 %v515, 4294901760
        %v8773 = vsub.f32 %v515, %v8772
        %v8774 = vand.u32 %v8773, 4294901760
        %8775 = vmatpush1.msra.mxu0 %v8774
        %8776 = vmatprep.subr.mxu0 0.0
        %v8777 = vand.u32 %v514, 4294901760
        %v8778 = vsub.f32 %v514, %v8777
        %v8779 = vand.u32 %v8778, 4294901760
        %8780 = vmatpush1.msra.mxu0 %v8779
        %8781 = vmatprep.subr.mxu0 0.0
        %v8782 = vand.u32 %v513, 4294901760
        %v8783 = vsub.f32 %v513, %v8782
        %v8784 = vand.u32 %v8783, 4294901760
        %8785 = vmatpush1.msra.mxu0 %v8784
        %8786 = vmatprep.subr.mxu0 0.0
        %v8787 = vand.u32 %v512, 4294901760
        %v8788 = vsub.f32 %v512, %v8787
        %v8789 = vand.u32 %v8788, 4294901760
        %8790 = vmatpush1.msra.mxu0 %v8789
        %8791 = vmatprep.subr.mxu0 0.0
        %v8792 = vand.u32 %v511, 4294901760
        %v8793 = vsub.f32 %v511, %v8792
        %v8794 = vand.u32 %v8793, 4294901760
        %8795 = vmatpush1.msra.mxu0 %v8794
        %8796 = vmatprep.subr.mxu0 0.0
        %v8797 = vand.u32 %v510, 4294901760
        %v8798 = vsub.f32 %v510, %v8797
        %v8799 = vand.u32 %v8798, 4294901760
        %8800 = vmatpush1.msra.mxu0 %v8799
        %8801 = vmatprep.subr.mxu0 0.0
        %8802 = vmatpush2.msra.mxu0 0.0
        %8803 = vmatprep.subr.mxu0 0.0
        %8804 = vmatpush2.msra.mxu0 0.0
        %8805 = vmatprep.subr.mxu0 0.0
        %8806 = vmatpush2.msra.mxu0 0.0
        %8807 = vmatprep.subr.mxu0 0.0
        %8808 = vmatpush2.msra.mxu0 0.0
        %8809 = vmatprep.subr.mxu0 0.0
        %8810 = vmatpush2.msra.mxu0 0.0
        %8811 = vmatprep.subr.mxu0 0.0
        %8812 = vmatpush2.msra.mxu0 0.0
        %8813 = vmatprep.subr.mxu0 0.0
        %8814 = vmatpush2.msra.mxu0 0.0
        %8815 = vmatprep.subr.mxu0 0.0
        %8816 = vmatpush2.msra.mxu0 0.0
        %8817 = vmatprep.subr.mxu0 0.0
        %8818 = vmatpush2.msra.mxu0 0.0
        %8819 = vmatprep.subr.mxu0 0.0
        %8820 = vmatpush2.msra.mxu0 0.0
        %8821 = vmatprep.subr.mxu0 0.0
        %8822 = vmatpush2.msra.mxu0 0.0
        %8823 = vmatprep.subr.mxu0 0.0
        %8824 = vmatpush2.msra.mxu0 0.0
        %8825 = vmatprep.subr.mxu0 0.0
        %8826 = vmatpush2.msra.mxu0 0.0
        %8827 = vmatprep.subr.mxu0 0.0
        %8828 = vmatpush2.msra.mxu0 0.0
        %8829 = vmatprep.subr.mxu0 0.0
        %8830 = vmatpush2.msra.mxu0 0.0
        %8831 = vmatprep.subr.mxu0 0.0
        %8832 = vmatpush2.msra.mxu0 0.0
        %8833 = vmatprep.mubr.f32.mxu0 0.0
        %v8834 = vand.u32 %v221, 4294901760
        %8835 = vmatmul.mubr.f32.gmra.mxu0 %v8834
        %v8836 = vpop.f32.mrf.mxu0
        %v8837 = vadd.f32 %v8718, %v8836
        %v8838 = vpop.f32.mrf.mxu0
        %8839 = vdwg.mxu0
        %8840 = vmatprep.subr.mxu0 0.0
        %v8841 = vand.u32 %v525, 4294901760
        %8842 = vmatpush1.msra.mxu0 %v8841
        %8843 = vmatprep.subr.mxu0 0.0
        %v8844 = vand.u32 %v524, 4294901760
        %8845 = vmatpush1.msra.mxu0 %v8844
        %8846 = vmatprep.subr.mxu0 0.0
        %v8847 = vand.u32 %v523, 4294901760
        %8848 = vmatpush1.msra.mxu0 %v8847
        %8849 = vmatprep.subr.mxu0 0.0
        %v8850 = vand.u32 %v522, 4294901760
        %8851 = vmatpush1.msra.mxu0 %v8850
        %8852 = vmatprep.subr.mxu0 0.0
        %v8853 = vand.u32 %v521, 4294901760
        %8854 = vmatpush1.msra.mxu0 %v8853
        %8855 = vmatprep.subr.mxu0 0.0
        %v8856 = vand.u32 %v520, 4294901760
        %8857 = vmatpush1.msra.mxu0 %v8856
        %8858 = vmatprep.subr.mxu0 0.0
        %v8859 = vand.u32 %v519, 4294901760
        %8860 = vmatpush1.msra.mxu0 %v8859
        %8861 = vmatprep.subr.mxu0 0.0
        %v8862 = vand.u32 %v518, 4294901760
        %8863 = vmatpush1.msra.mxu0 %v8862
        %8864 = vmatprep.subr.mxu0 0.0
        %v8865 = vand.u32 %v517, 4294901760
        %8866 = vmatpush1.msra.mxu0 %v8865
        %8867 = vmatprep.subr.mxu0 0.0
        %v8868 = vand.u32 %v516, 4294901760
        %8869 = vmatpush1.msra.mxu0 %v8868
        %8870 = vmatprep.subr.mxu0 0.0
        %v8871 = vand.u32 %v515, 4294901760
        %8872 = vmatpush1.msra.mxu0 %v8871
        %8873 = vmatprep.subr.mxu0 0.0
        %v8874 = vand.u32 %v514, 4294901760
        %8875 = vmatpush1.msra.mxu0 %v8874
        %8876 = vmatprep.subr.mxu0 0.0
        %v8877 = vand.u32 %v513, 4294901760
        %8878 = vmatpush1.msra.mxu0 %v8877
        %8879 = vmatprep.subr.mxu0 0.0
        %v8880 = vand.u32 %v512, 4294901760
        %8881 = vmatpush1.msra.mxu0 %v8880
        %8882 = vmatprep.subr.mxu0 0.0
        %v8883 = vand.u32 %v511, 4294901760
        %8884 = vmatpush1.msra.mxu0 %v8883
        %8885 = vmatprep.subr.mxu0 0.0
        %v8886 = vand.u32 %v510, 4294901760
        %8887 = vmatpush1.msra.mxu0 %v8886
        %8888 = vmatprep.subr.mxu0 0.0
        %8889 = vmatpush2.msra.mxu0 0.0
        %8890 = vmatprep.subr.mxu0 0.0
        %8891 = vmatpush2.msra.mxu0 0.0
        %8892 = vmatprep.subr.mxu0 0.0
        %8893 = vmatpush2.msra.mxu0 0.0
        %8894 = vmatprep.subr.mxu0 0.0
        %8895 = vmatpush2.msra.mxu0 0.0
        %8896 = vmatprep.subr.mxu0 0.0
        %8897 = vmatpush2.msra.mxu0 0.0
        %8898 = vmatprep.subr.mxu0 0.0
        %8899 = vmatpush2.msra.mxu0 0.0
        %8900 = vmatprep.subr.mxu0 0.0
        %8901 = vmatpush2.msra.mxu0 0.0
        %8902 = vmatprep.subr.mxu0 0.0
        %8903 = vmatpush2.msra.mxu0 0.0
        %8904 = vmatprep.subr.mxu0 0.0
        %8905 = vmatpush2.msra.mxu0 0.0
        %8906 = vmatprep.subr.mxu0 0.0
        %8907 = vmatpush2.msra.mxu0 0.0
        %8908 = vmatprep.subr.mxu0 0.0
        %8909 = vmatpush2.msra.mxu0 0.0
        %8910 = vmatprep.subr.mxu0 0.0
        %8911 = vmatpush2.msra.mxu0 0.0
        %8912 = vmatprep.subr.mxu0 0.0
        %8913 = vmatpush2.msra.mxu0 0.0
        %8914 = vmatprep.subr.mxu0 0.0
        %8915 = vmatpush2.msra.mxu0 0.0
        %8916 = vmatprep.subr.mxu0 0.0
        %8917 = vmatpush2.msra.mxu0 0.0
        %8918 = vmatprep.subr.mxu0 0.0
        %8919 = vmatpush2.msra.mxu0 0.0
        %8920 = vmatprep.mubr.f32.mxu0 0.0
        %v8921 = vand.u32 %v221, 4294901760
        %8922 = vmatmul.mubr.f32.gmra.mxu0 %v8921
        %v8923 = vpop.f32.mrf.mxu0
        %v8924 = vadd.f32 %v8837, %v8923
        %v8925 = vpop.f32.mrf.mxu0
        %8926 = vdwg.mxu0
        %v8927 = vxor.u32 %v8924, 2147483648
        %v8928 = vmul.f32 %v8927, 1.442695
        %v8929 = vpow.pop %v8928
        %v8930 = vadd.f32 %v8929, 1.0
        %v8931 = vrcp.pop %v8930
        %v8932 = vmul.f32 1.0, %v8931
        %8933 = vst [vmem:[%s202] sm:$0xff] %v8932
        %s8934 = sand.u32 %s98, 1
        %s8935 = scalar_lea.sflag [#allocation5], %s8934
        %s8936 = sand.u32 %s98, 1
        %s8937 = smul.addr %s8936, 8
        %s8938 = scalar_lea.vmem [#allocation8], %s8937
        // Predicated region
        $region41: #{tpu_custom_call.1} parent=31 // pred_check
          %p8939 = pneg %p108
        $region42: #{tpu_custom_call.1} parent=31 // pred_check_branch
          %8941 = sbr.rel (%p8939) target = $region44
        $region43: #{tpu_custom_call.1} parent=31 // pred_region
          %s8943 = ssub.s32 128, 128
          %8944 = vsyncadd %s8935, %s8943
          %s8945 = smul.addr %s22, 128
          %s8946 = scalar_lea.hbm %s3, %s8945
          %s8948 = sshll.u32 %s8938, 4
          %s8949 = int_to_ptr.vmem [resolvable:$true] %s8948
          %8951 = dma.vmem_to_hbm [thread:$0]  %s8949, 128, %s8946, %s8935
        $region44: #{tpu_custom_call.1} parent=31 // pred_fallthru
          _
      $region32: #{tpu_custom_call.1} parent=5 // pred_fallthru
        _
      %p8952 = scmp.le.s32.totalorder 2, %s17
      // Predicated region
      $region45: #{tpu_custom_call.1} parent=5 // pred_check
        %p8953 = pneg %p8952
      $region46: #{tpu_custom_call.1} parent=5 // pred_check_branch
        %8955 = sbr.rel (%p8953) target = $region48
      $region47: #{tpu_custom_call.1} parent=5 // pred_region
        %s8956 = ssub.s32 %s17, 2
        // Predicated region
        $region49: #{tpu_custom_call.1} parent=47 // pred_check
          %p8957 = pneg %p114
        $region50: #{tpu_custom_call.1} parent=47 // pred_check_branch
          %8959 = sbr.rel (%p8957) target = $region52
        $region51: #{tpu_custom_call.1} parent=47 // pred_region
          %s8960 = sand.u32 %s99, 1
          %s8961 = scalar_lea.sflag [#allocation5], %s8960
          %s8962 = sand.u32 %s99, 1
          %s8963 = smul.addr %s8962, 8
          %s8964 = scalar_lea.vmem [#allocation8], %s8963
          %8965 = dma.done %s8961, 128
        $region52: #{tpu_custom_call.1} parent=47 // pred_fallthru
          _
      $region48: #{tpu_custom_call.1} parent=5 // pred_fallthru
        _
    $region6: #{tpu_custom_call.1} parent=1 // loop_footer
      %s21 = sadd.s32 1, %s17
    $region7: #{tpu_custom_call.1} parent=1 // loop_footer_branch
      %16 = sbr.rel target = $region3
    $region8: #{tpu_custom_call.1} parent=1 // loop_exit
      _
    %8966 = vsyncpa [#allocation4], 1
    %s8967 = scalar_lea.sflag [#allocation4], 1
    %8968 = vsyncpa %s8967, 1
    %8969 = vsyncpa [#allocation7], 1
    %8970 = vsyncpa [#allocation5], 1
    %s8971 = scalar_lea.sflag [#allocation5], 1
    %8972 = vsyncpa %s8971, 1

</llo_original>
